<compile_context>
chip_gen: v6e
topology: v6e:2x2x1
jax: 0.10.0
libtpu: 0.0.40
codegen_flags: <defaults>
</compile_context>

<pallas_src>
import functools

import jax
import jax.numpy as jnp
from jax.experimental import pallas as pl
from jax.experimental.pallas import tpu as pltpu

INPUT_SIZE = 2
HIDDEN_SIZE = 256
OUTPUT_SIZE = 3
OUT_PAD = 128            # lane-dense padded output width (sliced to 3 outside)
N_LAYERS = 8
N_HIDDEN = N_LAYERS - 2  # 6 hidden 256x256 layers


def mlp_kernel(x_ref, w0_ref, wh_ref, wout_ref, o_ref):
    # x_ref:    (TB, 2)        f32   VMEM
    # w0_ref:   (2, 256)       f32   VMEM (used on the VPU)
    # wh_ref:   (6, 256, 256)  bf16  VMEM (MXU operands, resident across grid)
    # wout_ref: (256, 128)     bf16  VMEM (padded from 3 -> 128 lanes)
    # o_ref:    (TB, 128)      f32   VMEM
    tb = x_ref.shape[0]
    half = tb // 2

    x = x_ref[...]
    w0 = w0_ref[...]

    # Layer 0: contraction depth is only 2 -> VPU outer product instead of a
    # full MXU systolic pass (MXU is the bottleneck unit for this kernel).
    h = x[:, 0:1] * w0[0:1, :] + x[:, 1:2] * w0[1:2, :]
    h = jnp.maximum(h, 0.0).astype(jnp.bfloat16)  # ReLU then single cast

    # Two independent M sub-blocks interleaved through the layer chain so the
    # VPU (ReLU/cast) of one half hides under the MXU pass of the other.
    ha = h[:half]
    hb = h[half:]
    for l in range(N_HIDDEN):  # statically unrolled (6 iterations)
        w = wh_ref[l]
        ya = jnp.dot(ha, w, preferred_element_type=jnp.float32)
        yb = jnp.dot(hb, w, preferred_element_type=jnp.float32)
        ha = jnp.maximum(ya, 0.0).astype(jnp.bfloat16)
        hb = jnp.maximum(yb, 0.0).astype(jnp.bfloat16)

    wout = wout_ref[...]
    za = jnp.dot(ha, wout, preferred_element_type=jnp.float32)
    zb = jnp.dot(hb, wout, preferred_element_type=jnp.float32)
    o_ref[pl.ds(0, half), :] = jax.nn.sigmoid(za)      # Sigmoid on the EUP (f32)
    o_ref[pl.ds(half, half), :] = jax.nn.sigmoid(zb)


@functools.partial(jax.jit, static_argnames=("tile_b",))
def mlp_forward(x, w0, wh, wout, *, tile_b=1024):
    """x: [N, 2] f32 -> [N, 3] f32 (matches the torch MLP forward)."""
    assert tile_b % 16 == 0, "tile_b must be even and a multiple of 8"
    N = x.shape[0]
    n_tiles = pl.cdiv(N, tile_b)
    n_pad = n_tiles * tile_b
    if n_pad != N:
        x = jnp.pad(x, ((0, n_pad - N), (0, 0)))

    # bf16 MXU operands (accumulation stays f32 inside the kernel).
    wh_bf16 = wh.astype(jnp.bfloat16)
    # Pad the 3-wide output weights to a lane-dense 128-wide slab.
    wout_p = jnp.pad(wout, ((0, 0), (0, OUT_PAD - OUTPUT_SIZE))).astype(jnp.bfloat16)

    flops_per_row = 2 * (INPUT_SIZE * HIDDEN_SIZE
                         + N_HIDDEN * HIDDEN_SIZE * HIDDEN_SIZE
                         + HIDDEN_SIZE * OUT_PAD)
    cost = pl.CostEstimate(
        flops=flops_per_row * n_pad,
        transcendentals=n_pad * OUT_PAD,
        bytes_accessed=(n_pad * INPUT_SIZE * 4 + n_pad * OUT_PAD * 4
                        + wh_bf16.size * 2 + wout_p.size * 2 + w0.size * 4),
    )

    out = pl.pallas_call(
        mlp_kernel,
        out_shape=jax.ShapeDtypeStruct((n_pad, OUT_PAD), jnp.float32),
        grid_spec=pltpu.PrefetchScalarGridSpec(
            num_scalar_prefetch=0,
            grid=(n_tiles,),
            in_specs=[
                pl.BlockSpec((tile_b, INPUT_SIZE), lambda i: (i, 0)),
                pl.BlockSpec((INPUT_SIZE, HIDDEN_SIZE), lambda i: (0, 0)),
                pl.BlockSpec((N_HIDDEN, HIDDEN_SIZE, HIDDEN_SIZE), lambda i: (0, 0, 0)),
                pl.BlockSpec((HIDDEN_SIZE, OUT_PAD), lambda i: (0, 0)),
            ],
            out_specs=pl.BlockSpec((tile_b, OUT_PAD), lambda i: (i, 0)),
        ),
        compiler_params=pltpu.CompilerParams(
            dimension_semantics=("parallel",),      # megacore sharding of the batch axis
            vmem_limit_bytes=48 * 1024 * 1024,      # headroom for large tiles, < v7x 64 MiB
        ),
        cost_estimate=cost,
    )(x, w0, wh_bf16, wout_p)

    return out[:N, :OUTPUT_SIZE]


def init_params(key):
    """Deterministic synthetic weights with the torch module's shapes
    (stored transposed: [in, out])."""
    k0, k1, k2 = jax.random.split(key, 3)
    w0 = jax.random.uniform(k0, (INPUT_SIZE, HIDDEN_SIZE), jnp.float32,
                            -1.0 / INPUT_SIZE ** 0.5, 1.0 / INPUT_SIZE ** 0.5)
    wh = jax.random.uniform(k1, (N_HIDDEN, HIDDEN_SIZE, HIDDEN_SIZE), jnp.float32,
                            -1.0 / HIDDEN_SIZE ** 0.5, 1.0 / HIDDEN_SIZE ** 0.5)
    wout = jax.random.uniform(k2, (HIDDEN_SIZE, OUTPUT_SIZE), jnp.float32,
                              -1.0 / HIDDEN_SIZE ** 0.5, 1.0 / HIDDEN_SIZE ** 0.5)
    return w0, wh, wout


def mlp_reference(x, w0, wh, wout):
    h = jnp.maximum(x @ w0, 0.0)
    for l in range(N_HIDDEN):
        h = jnp.maximum(h @ wh[l], 0.0)
    return jax.nn.sigmoid(h @ wout)


if __name__ == "__main__":
    key = jax.random.PRNGKey(0)
    kx, kp = jax.random.split(key)

    batch = 2048  # small batch for the test (real workload uses 2<<18 positions)
    x = jax.random.uniform(kx, (batch, INPUT_SIZE), jnp.float32)  # positions in [0,1)^2

    w0, wh, wout = init_params(kp)

    out = mlp_forward(x, w0, wh, wout, tile_b=1024)
    out = jax.block_until_ready(out)

    # correctness check against the pure-JAX f32 reference
    # (bf16 matmul operands => loosened tolerance)
    ref = mlp_reference(x, w0, wh, wout)
    assert out.shape == (batch, OUTPUT_SIZE)
    assert jnp.allclose(out, ref, atol=2e-2, rtol=2e-2), float(jnp.max(jnp.abs(out - ref)))

    print("KERNEL_OK")
</pallas_src>

<mosaic_0001>
module attributes {stable_mosaic.version = 11 : i64} {
  func.func @mlp_kernel(%arg0: i32, %arg1: memref<1024x2xf32, #tpu.memory_space<vmem>>, %arg2: memref<2x256xf32, #tpu.memory_space<vmem>>, %arg3: memref<6x256x256xbf16, #tpu.memory_space<vmem>>, %arg4: memref<256x128xbf16, #tpu.memory_space<vmem>>, %arg5: memref<1024x128xf32, #tpu.memory_space<vmem>>) attributes {dimension_semantics = [#tpu.dimension_semantics<parallel>], iteration_bounds = array<i64: 2>, scalar_prefetch = 0 : i64, scratch_operands = 0 : i64, tpu.core_type = #tpu.core_type<tc>, window_params = [{transform_indices = @transform_0, window_bounds = array<i64: 1024, 2>}, {pipeline_mode = #tpu.pipeline_mode<synchronous>, transform_indices = @transform_1, window_bounds = array<i64: 2, 256>}, {pipeline_mode = #tpu.pipeline_mode<synchronous>, transform_indices = @transform_2, window_bounds = array<i64: 6, 256, 256>}, {pipeline_mode = #tpu.pipeline_mode<synchronous>, transform_indices = @transform_3, window_bounds = array<i64: 256, 128>}, {transform_indices = @transform_4, window_bounds = array<i64: 1024, 128>}]} {
    %c0 = arith.constant 0 : index
    %c0_0 = arith.constant 0 : index
    %0 = vector.load %arg1[%c0, %c0_0] : memref<1024x2xf32, #tpu.memory_space<vmem>>, vector<1024x2xf32>
    %c0_1 = arith.constant 0 : index
    %c0_2 = arith.constant 0 : index
    %1 = vector.load %arg2[%c0_1, %c0_2] : memref<2x256xf32, #tpu.memory_space<vmem>>, vector<2x256xf32>
    %2 = vector.extract_strided_slice %0 {offsets = [0, 0], sizes = [1024, 1], strides = [1, 1]} : vector<1024x2xf32> to vector<1024x1xf32>
    %3 = vector.extract_strided_slice %1 {offsets = [0, 0], sizes = [1, 256], strides = [1, 1]} : vector<2x256xf32> to vector<1x256xf32>
    %4 = vector.broadcast %2 : vector<1024x1xf32> to vector<1024x256xf32>
    %5 = vector.broadcast %3 : vector<1x256xf32> to vector<1024x256xf32>
    %6 = arith.mulf %4, %5 : vector<1024x256xf32>
    %7 = vector.extract_strided_slice %0 {offsets = [0, 1], sizes = [1024, 1], strides = [1, 1]} : vector<1024x2xf32> to vector<1024x1xf32>
    %8 = vector.extract_strided_slice %1 {offsets = [1, 0], sizes = [1, 256], strides = [1, 1]} : vector<2x256xf32> to vector<1x256xf32>
    %9 = vector.broadcast %7 : vector<1024x1xf32> to vector<1024x256xf32>
    %10 = vector.broadcast %8 : vector<1x256xf32> to vector<1024x256xf32>
    %11 = arith.mulf %9, %10 : vector<1024x256xf32>
    %12 = arith.addf %6, %11 : vector<1024x256xf32>
    %cst = arith.constant 0.000000e+00 : f32
    %13 = vector.broadcast %cst : f32 to vector<1024x256xf32>
    %14 = arith.maximumf %12, %13 : vector<1024x256xf32>
    %15 = arith.truncf %14 : vector<1024x256xf32> to vector<1024x256xbf16>
    %16 = vector.extract_strided_slice %15 {offsets = [0, 0], sizes = [512, 256], strides = [1, 1]} : vector<1024x256xbf16> to vector<512x256xbf16>
    %17 = vector.extract_strided_slice %15 {offsets = [512, 0], sizes = [512, 256], strides = [1, 1]} : vector<1024x256xbf16> to vector<512x256xbf16>
    %c0_3 = arith.constant 0 : index
    %c0_4 = arith.constant 0 : index
    %c0_5 = arith.constant 0 : index
    %18 = vector.load %arg3[%c0_3, %c0_4, %c0_5] : memref<6x256x256xbf16, #tpu.memory_space<vmem>>, vector<1x256x256xbf16>
    %19 = vector.shape_cast %18 : vector<1x256x256xbf16> to vector<256x256xbf16>
    %cst_6 = arith.constant dense<0.000000e+00> : vector<512x256xf32>
    %20 = tpu.matmul %16, %19, %cst_6 {dimension_numbers = #tpu.dot_dimension_numbers<[1], [0], [0], [1], [0, 0, 1, 1], [], []>} : vector<512x256xbf16>, vector<256x256xbf16>, vector<512x256xf32> -> vector<512x256xf32>
    %cst_7 = arith.constant dense<0.000000e+00> : vector<512x256xf32>
    %21 = tpu.matmul %17, %19, %cst_7 {dimension_numbers = #tpu.dot_dimension_numbers<[1], [0], [0], [1], [0, 0, 1, 1], [], []>} : vector<512x256xbf16>, vector<256x256xbf16>, vector<512x256xf32> -> vector<512x256xf32>
    %cst_8 = arith.constant 0.000000e+00 : f32
    %22 = vector.broadcast %cst_8 : f32 to vector<512x256xf32>
    %23 = arith.maximumf %20, %22 : vector<512x256xf32>
    %24 = arith.truncf %23 : vector<512x256xf32> to vector<512x256xbf16>
    %cst_9 = arith.constant 0.000000e+00 : f32
    %25 = vector.broadcast %cst_9 : f32 to vector<512x256xf32>
    %26 = arith.maximumf %21, %25 : vector<512x256xf32>
    %27 = arith.truncf %26 : vector<512x256xf32> to vector<512x256xbf16>
    %c1 = arith.constant 1 : index
    %c0_10 = arith.constant 0 : index
    %c0_11 = arith.constant 0 : index
    %28 = vector.load %arg3[%c1, %c0_10, %c0_11] : memref<6x256x256xbf16, #tpu.memory_space<vmem>>, vector<1x256x256xbf16>
    %29 = vector.shape_cast %28 : vector<1x256x256xbf16> to vector<256x256xbf16>
    %cst_12 = arith.constant dense<0.000000e+00> : vector<512x256xf32>
    %30 = tpu.matmul %24, %29, %cst_12 {dimension_numbers = #tpu.dot_dimension_numbers<[1], [0], [0], [1], [0, 0, 1, 1], [], []>} : vector<512x256xbf16>, vector<256x256xbf16>, vector<512x256xf32> -> vector<512x256xf32>
    %cst_13 = arith.constant dense<0.000000e+00> : vector<512x256xf32>
    %31 = tpu.matmul %27, %29, %cst_13 {dimension_numbers = #tpu.dot_dimension_numbers<[1], [0], [0], [1], [0, 0, 1, 1], [], []>} : vector<512x256xbf16>, vector<256x256xbf16>, vector<512x256xf32> -> vector<512x256xf32>
    %cst_14 = arith.constant 0.000000e+00 : f32
    %32 = vector.broadcast %cst_14 : f32 to vector<512x256xf32>
    %33 = arith.maximumf %30, %32 : vector<512x256xf32>
    %34 = arith.truncf %33 : vector<512x256xf32> to vector<512x256xbf16>
    %cst_15 = arith.constant 0.000000e+00 : f32
    %35 = vector.broadcast %cst_15 : f32 to vector<512x256xf32>
    %36 = arith.maximumf %31, %35 : vector<512x256xf32>
    %37 = arith.truncf %36 : vector<512x256xf32> to vector<512x256xbf16>
    %c2 = arith.constant 2 : index
    %c0_16 = arith.constant 0 : index
    %c0_17 = arith.constant 0 : index
    %38 = vector.load %arg3[%c2, %c0_16, %c0_17] : memref<6x256x256xbf16, #tpu.memory_space<vmem>>, vector<1x256x256xbf16>
    %39 = vector.shape_cast %38 : vector<1x256x256xbf16> to vector<256x256xbf16>
    %cst_18 = arith.constant dense<0.000000e+00> : vector<512x256xf32>
    %40 = tpu.matmul %34, %39, %cst_18 {dimension_numbers = #tpu.dot_dimension_numbers<[1], [0], [0], [1], [0, 0, 1, 1], [], []>} : vector<512x256xbf16>, vector<256x256xbf16>, vector<512x256xf32> -> vector<512x256xf32>
    %cst_19 = arith.constant dense<0.000000e+00> : vector<512x256xf32>
    %41 = tpu.matmul %37, %39, %cst_19 {dimension_numbers = #tpu.dot_dimension_numbers<[1], [0], [0], [1], [0, 0, 1, 1], [], []>} : vector<512x256xbf16>, vector<256x256xbf16>, vector<512x256xf32> -> vector<512x256xf32>
    %cst_20 = arith.constant 0.000000e+00 : f32
    %42 = vector.broadcast %cst_20 : f32 to vector<512x256xf32>
    %43 = arith.maximumf %40, %42 : vector<512x256xf32>
    %44 = arith.truncf %43 : vector<512x256xf32> to vector<512x256xbf16>
    %cst_21 = arith.constant 0.000000e+00 : f32
    %45 = vector.broadcast %cst_21 : f32 to vector<512x256xf32>
    %46 = arith.maximumf %41, %45 : vector<512x256xf32>
    %47 = arith.truncf %46 : vector<512x256xf32> to vector<512x256xbf16>
    %c3 = arith.constant 3 : index
    %c0_22 = arith.constant 0 : index
    %c0_23 = arith.constant 0 : index
    %48 = vector.load %arg3[%c3, %c0_22, %c0_23] : memref<6x256x256xbf16, #tpu.memory_space<vmem>>, vector<1x256x256xbf16>
    %49 = vector.shape_cast %48 : vector<1x256x256xbf16> to vector<256x256xbf16>
    %cst_24 = arith.constant dense<0.000000e+00> : vector<512x256xf32>
    %50 = tpu.matmul %44, %49, %cst_24 {dimension_numbers = #tpu.dot_dimension_numbers<[1], [0], [0], [1], [0, 0, 1, 1], [], []>} : vector<512x256xbf16>, vector<256x256xbf16>, vector<512x256xf32> -> vector<512x256xf32>
    %cst_25 = arith.constant dense<0.000000e+00> : vector<512x256xf32>
    %51 = tpu.matmul %47, %49, %cst_25 {dimension_numbers = #tpu.dot_dimension_numbers<[1], [0], [0], [1], [0, 0, 1, 1], [], []>} : vector<512x256xbf16>, vector<256x256xbf16>, vector<512x256xf32> -> vector<512x256xf32>
    %cst_26 = arith.constant 0.000000e+00 : f32
    %52 = vector.broadcast %cst_26 : f32 to vector<512x256xf32>
    %53 = arith.maximumf %50, %52 : vector<512x256xf32>
    %54 = arith.truncf %53 : vector<512x256xf32> to vector<512x256xbf16>
    %cst_27 = arith.constant 0.000000e+00 : f32
    %55 = vector.broadcast %cst_27 : f32 to vector<512x256xf32>
    %56 = arith.maximumf %51, %55 : vector<512x256xf32>
    %57 = arith.truncf %56 : vector<512x256xf32> to vector<512x256xbf16>
    %c4 = arith.constant 4 : index
    %c0_28 = arith.constant 0 : index
    %c0_29 = arith.constant 0 : index
    %58 = vector.load %arg3[%c4, %c0_28, %c0_29] : memref<6x256x256xbf16, #tpu.memory_space<vmem>>, vector<1x256x256xbf16>
    %59 = vector.shape_cast %58 : vector<1x256x256xbf16> to vector<256x256xbf16>
    %cst_30 = arith.constant dense<0.000000e+00> : vector<512x256xf32>
    %60 = tpu.matmul %54, %59, %cst_30 {dimension_numbers = #tpu.dot_dimension_numbers<[1], [0], [0], [1], [0, 0, 1, 1], [], []>} : vector<512x256xbf16>, vector<256x256xbf16>, vector<512x256xf32> -> vector<512x256xf32>
    %cst_31 = arith.constant dense<0.000000e+00> : vector<512x256xf32>
    %61 = tpu.matmul %57, %59, %cst_31 {dimension_numbers = #tpu.dot_dimension_numbers<[1], [0], [0], [1], [0, 0, 1, 1], [], []>} : vector<512x256xbf16>, vector<256x256xbf16>, vector<512x256xf32> -> vector<512x256xf32>
    %cst_32 = arith.constant 0.000000e+00 : f32
    %62 = vector.broadcast %cst_32 : f32 to vector<512x256xf32>
    %63 = arith.maximumf %60, %62 : vector<512x256xf32>
    %64 = arith.truncf %63 : vector<512x256xf32> to vector<512x256xbf16>
    %cst_33 = arith.constant 0.000000e+00 : f32
    %65 = vector.broadcast %cst_33 : f32 to vector<512x256xf32>
    %66 = arith.maximumf %61, %65 : vector<512x256xf32>
    %67 = arith.truncf %66 : vector<512x256xf32> to vector<512x256xbf16>
    %c5 = arith.constant 5 : index
    %c0_34 = arith.constant 0 : index
    %c0_35 = arith.constant 0 : index
    %68 = vector.load %arg3[%c5, %c0_34, %c0_35] : memref<6x256x256xbf16, #tpu.memory_space<vmem>>, vector<1x256x256xbf16>
    %69 = vector.shape_cast %68 : vector<1x256x256xbf16> to vector<256x256xbf16>
    %cst_36 = arith.constant dense<0.000000e+00> : vector<512x256xf32>
    %70 = tpu.matmul %64, %69, %cst_36 {dimension_numbers = #tpu.dot_dimension_numbers<[1], [0], [0], [1], [0, 0, 1, 1], [], []>} : vector<512x256xbf16>, vector<256x256xbf16>, vector<512x256xf32> -> vector<512x256xf32>
    %cst_37 = arith.constant dense<0.000000e+00> : vector<512x256xf32>
    %71 = tpu.matmul %67, %69, %cst_37 {dimension_numbers = #tpu.dot_dimension_numbers<[1], [0], [0], [1], [0, 0, 1, 1], [], []>} : vector<512x256xbf16>, vector<256x256xbf16>, vector<512x256xf32> -> vector<512x256xf32>
    %cst_38 = arith.constant 0.000000e+00 : f32
    %72 = vector.broadcast %cst_38 : f32 to vector<512x256xf32>
    %73 = arith.maximumf %70, %72 : vector<512x256xf32>
    %74 = arith.truncf %73 : vector<512x256xf32> to vector<512x256xbf16>
    %cst_39 = arith.constant 0.000000e+00 : f32
    %75 = vector.broadcast %cst_39 : f32 to vector<512x256xf32>
    %76 = arith.maximumf %71, %75 : vector<512x256xf32>
    %77 = arith.truncf %76 : vector<512x256xf32> to vector<512x256xbf16>
    %c0_40 = arith.constant 0 : index
    %c0_41 = arith.constant 0 : index
    %78 = vector.load %arg4[%c0_40, %c0_41] : memref<256x128xbf16, #tpu.memory_space<vmem>>, vector<256x128xbf16>
    %cst_42 = arith.constant dense<0.000000e+00> : vector<512x128xf32>
    %79 = tpu.matmul %74, %78, %cst_42 {dimension_numbers = #tpu.dot_dimension_numbers<[1], [0], [0], [1], [0, 0, 1, 1], [], []>} : vector<512x256xbf16>, vector<256x128xbf16>, vector<512x128xf32> -> vector<512x128xf32>
    %cst_43 = arith.constant dense<0.000000e+00> : vector<512x128xf32>
    %80 = tpu.matmul %77, %78, %cst_43 {dimension_numbers = #tpu.dot_dimension_numbers<[1], [0], [0], [1], [0, 0, 1, 1], [], []>} : vector<512x256xbf16>, vector<256x128xbf16>, vector<512x128xf32> -> vector<512x128xf32>
    %81 = arith.negf %79 : vector<512x128xf32>
    %82 = math.exp %81 : vector<512x128xf32>
    %cst_44 = arith.constant 1.000000e+00 : f32
    %83 = vector.broadcast %cst_44 : f32 to vector<512x128xf32>
    %84 = arith.addf %83, %82 : vector<512x128xf32>
    %85 = arith.divf %83, %84 : vector<512x128xf32>
    %c0_45 = arith.constant 0 : index
    %c0_46 = arith.constant 0 : index
    %86 = vector.load %arg5[%c0_45, %c0_46] : memref<1024x128xf32, #tpu.memory_space<vmem>>, vector<512x128xf32>
    tpu.vector_store %arg5[%c0_45, %c0_46], %85 {strides = array<i32>} : memref<1024x128xf32, #tpu.memory_space<vmem>>, vector<512x128xf32>,
    %87 = arith.negf %80 : vector<512x128xf32>
    %88 = math.exp %87 : vector<512x128xf32>
    %cst_47 = arith.constant 1.000000e+00 : f32
    %89 = vector.broadcast %cst_47 : f32 to vector<512x128xf32>
    %90 = arith.addf %89, %88 : vector<512x128xf32>
    %91 = arith.divf %89, %90 : vector<512x128xf32>
    %c512 = arith.constant 512 : index
    %c0_48 = arith.constant 0 : index
    %92 = vector.load %arg5[%c512, %c0_48] : memref<1024x128xf32, #tpu.memory_space<vmem>>, vector<512x128xf32>
    tpu.vector_store %arg5[%c512, %c0_48], %91 {strides = array<i32>} : memref<1024x128xf32, #tpu.memory_space<vmem>>, vector<512x128xf32>,
    return
  }
  func.func @transform_0(%arg0: i32) -> (i32, i32) {
    %c0_i32 = arith.constant 0 : i32
    %c0_i32_0 = arith.constant 0 : i32
    return %arg0, %c0_i32 : i32, i32
  }
  func.func @transform_1(%arg0: i32) -> (i32, i32) {
    %c0_i32 = arith.constant 0 : i32
    %c0_i32_0 = arith.constant 0 : i32
    %c0_i32_1 = arith.constant 0 : i32
    return %c0_i32, %c0_i32_0 : i32, i32
  }
  func.func @transform_2(%arg0: i32) -> (i32, i32, i32) {
    %c0_i32 = arith.constant 0 : i32
    %c0_i32_0 = arith.constant 0 : i32
    %c0_i32_1 = arith.constant 0 : i32
    %c0_i32_2 = arith.constant 0 : i32
    return %c0_i32, %c0_i32_0, %c0_i32_1 : i32, i32, i32
  }
  func.func @transform_3(%arg0: i32) -> (i32, i32) {
    %c0_i32 = arith.constant 0 : i32
    %c0_i32_0 = arith.constant 0 : i32
    %c0_i32_1 = arith.constant 0 : i32
    return %c0_i32, %c0_i32_0 : i32, i32
  }
  func.func @transform_4(%arg0: i32) -> (i32, i32) {
    %c0_i32 = arith.constant 0 : i32
    %c0_i32_0 = arith.constant 0 : i32
    return %arg0, %c0_i32 : i32, i32
  }
}

</mosaic_0001>

<llo_original>
// kernel: mlp_forward.1
$region0: #{mlp_forward.1}
  #allocation0 [shape = 'u32[]', space=smem, size = 0x4, offset = 0x4, fixed_abs, tag = 'smem constant byte address 0x4 - core index']
  #allocation1 [shape = 'u32[144,128]{1,0:T(1,128)}', space=vmem, size = 0x12000, scoped, tag = 'internal scratch']
  %s0 = inlined_call_operand.vmem [shape: f32[2048,2], index: 0, kind: input, shape index: {}]
  %s1 = inlined_call_operand.vmem [shape: f32[2,256], index: 1, kind: input, shape index: {}]
  %s2 = inlined_call_operand.vmem [shape: bf16[6,256,256], index: 2, kind: input, shape index: {}]
  %s3 = inlined_call_operand.vmem [shape: bf16[256,128], index: 3, kind: input, shape index: {}]
  %s4 = inlined_call_operand.vmem [shape: f32[2048,128], index: 4, kind: output, shape index: {}]
  %s5 = sld [smem:[#allocation0]]
  $region49: #{mlp_forward.1} parent=0
    _
  %s7 = ssub.s32 1, %s5
  %s8 = scalar_select 0, %s7, %s5
  loop: start=0, step=1, limit=4
  $region2: #{mlp_forward.1} parent=0 // loop_pre_header
    _
  $region3: #{mlp_forward.1} parent=0 // loop_header
    %s10 = sphi 0, %s14
    %p11 = scmp.ge.s32.totalorder %s10, 4
    %s20 = sphi 0, %s22
    %s23 = sphi 0, %s20
    %s24 = sphi 0, %s23
    %s40 = sphi 0, %s24
    %s44 = sphi 0, %s44
    %s46 = sphi 0, %s44
    %s47 = sphi 0, %s46
    %s61 = sphi 0, %s47
    %s65 = sphi 0, %s65
    %s67 = sphi 0, %s65
    %s68 = sphi 0, %s67
    %s82 = sphi 0, %s68
    %s86 = sphi 0, %s86
    %s88 = sphi 0, %s86
    %s89 = sphi 0, %s88
    %s103 = sphi 0, %s89
    %s109 = sphi 0, %s111
    %s112 = sphi 0, %s109
    %s113 = sphi 0, %s112
    %s129 = sphi 0, %s113
  $region4: #{mlp_forward.1} parent=0 // loop_header_branch
    %13 = sbr.rel (%p11) target = $region8
  $region5: #{mlp_forward.1} parent=0 // loop_body
    %s15 = ssub.s32 %s10, 1
    %s16 = ssub.s32 %s10, 2
    %s17 = sadd.s32 %s10, 1
    %s18 = ssub.s32 %s10, %s17
    %p19 = scmp.eq.s32.totalorder %s18, 0
    %s21 = sadd.s32 %s20, 1
    %s22 = scalar_select %p19, %s20, %s21
    %p25 = pneg %p19
    %p26 = scmp.eq.s32.totalorder %s10, 1
    %p27 = por %p25, %p26
    %p28 = scmp.ne.s32.totalorder %s20, %s23
    %p29 = scmp.eq.s32.totalorder %s10, 0
    %p30 = por %p28, %p29
    %p31 = scmp.ne.s32.totalorder %s20, %s23
    %p32 = scmp.eq.s32.totalorder %s15, 1
    %p33 = por %p31, %p32
    %p34 = scmp.ne.s32.totalorder %s23, %s24
    %p35 = scmp.eq.s32.totalorder %s15, 0
    %p36 = por %p34, %p35
    %p37 = scmp.ne.s32.totalorder %s23, %s24
    %p38 = scmp.eq.s32.totalorder %s16, 1
    %p39 = por %p37, %p38
    %p41 = scmp.ne.s32.totalorder %s24, %s40
    %p42 = scmp.eq.s32.totalorder %s16, 0
    %p43 = por %p41, %p42
    %s45 = sadd.s32 %s44, 1
    %p48 = scmp.eq.s32.totalorder %s10, 1
    %p49 = scmp.ne.s32.totalorder %s44, %s46
    %p50 = scmp.eq.s32.totalorder %s10, 0
    %p51 = por %p49, %p50
    %p52 = scmp.ne.s32.totalorder %s44, %s46
    %p53 = scmp.eq.s32.totalorder %s15, 1
    %p54 = por %p52, %p53
    %p55 = scmp.ne.s32.totalorder %s46, %s47
    %p56 = scmp.eq.s32.totalorder %s15, 0
    %p57 = por %p55, %p56
    %p58 = scmp.ne.s32.totalorder %s46, %s47
    %p59 = scmp.eq.s32.totalorder %s16, 1
    %p60 = por %p58, %p59
    %p62 = scmp.ne.s32.totalorder %s47, %s61
    %p63 = scmp.eq.s32.totalorder %s16, 0
    %p64 = por %p62, %p63
    %s66 = sadd.s32 %s65, 1
    %p69 = scmp.eq.s32.totalorder %s10, 1
    %p70 = scmp.ne.s32.totalorder %s65, %s67
    %p71 = scmp.eq.s32.totalorder %s10, 0
    %p72 = por %p70, %p71
    %p73 = scmp.ne.s32.totalorder %s65, %s67
    %p74 = scmp.eq.s32.totalorder %s15, 1
    %p75 = por %p73, %p74
    %p76 = scmp.ne.s32.totalorder %s67, %s68
    %p77 = scmp.eq.s32.totalorder %s15, 0
    %p78 = por %p76, %p77
    %p79 = scmp.ne.s32.totalorder %s67, %s68
    %p80 = scmp.eq.s32.totalorder %s16, 1
    %p81 = por %p79, %p80
    %p83 = scmp.ne.s32.totalorder %s68, %s82
    %p84 = scmp.eq.s32.totalorder %s16, 0
    %p85 = por %p83, %p84
    %s87 = sadd.s32 %s86, 1
    %p90 = scmp.eq.s32.totalorder %s10, 1
    %p91 = scmp.ne.s32.totalorder %s86, %s88
    %p92 = scmp.eq.s32.totalorder %s10, 0
    %p93 = por %p91, %p92
    %p94 = scmp.ne.s32.totalorder %s86, %s88
    %p95 = scmp.eq.s32.totalorder %s15, 1
    %p96 = por %p94, %p95
    %p97 = scmp.ne.s32.totalorder %s88, %s89
    %p98 = scmp.eq.s32.totalorder %s15, 0
    %p99 = por %p97, %p98
    %p100 = scmp.ne.s32.totalorder %s88, %s89
    %p101 = scmp.eq.s32.totalorder %s16, 1
    %p102 = por %p100, %p101
    %p104 = scmp.ne.s32.totalorder %s89, %s103
    %p105 = scmp.eq.s32.totalorder %s16, 0
    %p106 = por %p104, %p105
    %s107 = ssub.s32 %s10, %s17
    %p108 = scmp.eq.s32.totalorder %s107, 0
    %s110 = sadd.s32 %s109, 1
    %s111 = scalar_select %p108, %s109, %s110
    %p114 = pneg %p108
    %p115 = scmp.eq.s32.totalorder %s10, 1
    %p116 = por %p114, %p115
    %p117 = scmp.ne.s32.totalorder %s109, %s112
    %p118 = scmp.eq.s32.totalorder %s10, 0
    %p119 = por %p117, %p118
    %p120 = scmp.ne.s32.totalorder %s109, %s112
    %p121 = scmp.eq.s32.totalorder %s15, 1
    %p122 = por %p120, %p121
    %p123 = scmp.ne.s32.totalorder %s112, %s113
    %p124 = scmp.eq.s32.totalorder %s15, 0
    %p125 = por %p123, %p124
    %p126 = scmp.ne.s32.totalorder %s112, %s113
    %p127 = scmp.eq.s32.totalorder %s16, 1
    %p128 = por %p126, %p127
    %p130 = scmp.ne.s32.totalorder %s113, %s129
    %p131 = scmp.eq.s32.totalorder %s16, 0
    %p132 = por %p130, %p131
    %p133 = scmp.le.s32.totalorder 1, %s10
    %p134 = scmp.lt.s32.totalorder %s10, 3
    %p135 = pnand %p133, %p134
    %p136 = pneg %p135
    // Predicated region
    $region9: #{mlp_forward.1} parent=5 // pred_check
      _
    $region10: #{mlp_forward.1} parent=5 // pred_check_branch
      %138 = sbr.rel (%p135) target = $region12
    $region11: #{mlp_forward.1} parent=5 // pred_region
      %s139 = ssub.s32 %s10, 1
      // Predicated region
      $region13: #{mlp_forward.1} parent=11 // pred_check
        %p140 = pneg %p57
      $region14: #{mlp_forward.1} parent=11 // pred_check_branch
        %142 = sbr.rel (%p140) target = $region16
      $region15: #{mlp_forward.1} parent=11 // pred_region
        _
      $region16: #{mlp_forward.1} parent=11 // pred_fallthru
        _
      // Predicated region
      $region17: #{mlp_forward.1} parent=11 // pred_check
        %p143 = pneg %p78
      $region18: #{mlp_forward.1} parent=11 // pred_check_branch
        %145 = sbr.rel (%p143) target = $region20
      $region19: #{mlp_forward.1} parent=11 // pred_region
        _
      $region20: #{mlp_forward.1} parent=11 // pred_fallthru
        _
      // Predicated region
      $region21: #{mlp_forward.1} parent=11 // pred_check
        %p146 = pneg %p99
      $region22: #{mlp_forward.1} parent=11 // pred_check_branch
        %148 = sbr.rel (%p146) target = $region24
      $region23: #{mlp_forward.1} parent=11 // pred_region
        _
      $region24: #{mlp_forward.1} parent=11 // pred_fallthru
        _
    $region12: #{mlp_forward.1} parent=5 // pred_fallthru
      _
    %p149 = scmp.lt.s32.totalorder %s10, 2
    // Predicated region
    $region25: #{mlp_forward.1} parent=5 // pred_check
      %p150 = pneg %p149
    $region26: #{mlp_forward.1} parent=5 // pred_check_branch
      %152 = sbr.rel (%p150) target = $region28
    $region27: #{mlp_forward.1} parent=5 // pred_region
      // Predicated region
      $region29: #{mlp_forward.1} parent=27 // pred_check
        %p153 = pneg %p30
      $region30: #{mlp_forward.1} parent=27 // pred_check_branch
        %155 = sbr.rel (%p153) target = $region32
      $region31: #{mlp_forward.1} parent=27 // pred_region
        %s156 = smul.u32 128, %s10
        %p157 = scmp.lt.s32.totalorder %s156, 255
        %s158 = scalar_select %p157, %s156, 255
        %s159 = smul.addr %s158, 8
        %s160 = scalar_lea.vmem %s0, %s159
        %s161 = smul.u32 128, %s10
      $region32: #{mlp_forward.1} parent=27 // pred_fallthru
        _
    $region28: #{mlp_forward.1} parent=5 // pred_fallthru
      _
    %p162 = scmp.le.s32.totalorder 1, %s10
    %p163 = scmp.lt.s32.totalorder %s10, 3
    %p164 = pnand %p162, %p163
    %p165 = pneg %p164
    // Predicated region
    $region33: #{mlp_forward.1} parent=5 // pred_check
      _
    $region34: #{mlp_forward.1} parent=5 // pred_check_branch
      %167 = sbr.rel (%p164) target = $region36
    $region35: #{mlp_forward.1} parent=5 // pred_region
      %s168 = ssub.s32 %s10, 1
      %s169 = smul.u32 128, %s15
      %p170 = scmp.lt.s32.totalorder %s169, 255
      %s171 = scalar_select %p170, %s169, 255
      %s172 = smul.addr %s171, 8
      %s173 = scalar_lea.vmem %s0, %s172
      %p174 = pneg %p36
      %p175 = pneg %p33
      %p176 = pneg %p57
      %p177 = pneg %p54
      %p178 = pneg %p78
      %p179 = pneg %p75
      %p180 = pneg %p99
      %p181 = pneg %p96
      %p182 = pneg %p125
      %p183 = pneg %p122
      %s184 = smul.u32 128, %s15
      %p185 = scmp.lt.s32.totalorder %s184, 255
      %s186 = scalar_select %p185, %s184, 255
      %s187 = smul.addr %s186, 8
      %s188 = scalar_lea.vmem %s4, %s187
      %s189 = smul.u32 128, %s15
      %p190 = scmp.lt.s32.totalorder %s189, 255
      %s191 = scalar_select %p190, %s189, 255
      %s192 = smul.addr %s191, 8
      %s193 = scalar_lea.vmem %s0, %s192
      %s194 = smul.u32 128, %s15
      %s195 = smul.u32 128, %s15
      %p196 = scmp.lt.s32.totalorder %s195, 255
      %s197 = scalar_select %p196, %s195, 255
      %s198 = smul.addr %s197, 8
      %s199 = scalar_lea.vmem %s4, %s198
      %s200 = smul.u32 128, %s15
      %v202 = vld [vmem:[%s193] sm:$0xff]
      %v203 = vld [vmem:[%s193 + $0x8] sm:$0xff]
      %v204 = vld [vmem:[%s193 + $0x10] sm:$0xff]
      %v205 = vld [vmem:[%s193 + $0x18] sm:$0xff]
      %v206 = vld [vmem:[%s193 + $0x20] sm:$0xff]
      %v207 = vld [vmem:[%s193 + $0x28] sm:$0xff]
      %v208 = vld [vmem:[%s193 + $0x30] sm:$0xff]
      %v209 = vld [vmem:[%s193 + $0x38] sm:$0xff]
      %v210 = vld [vmem:[%s193 + $0x40] sm:$0xff]
      %v211 = vld [vmem:[%s193 + $0x48] sm:$0xff]
      %v212 = vld [vmem:[%s193 + $0x50] sm:$0xff]
      %v213 = vld [vmem:[%s193 + $0x58] sm:$0xff]
      %v214 = vld [vmem:[%s193 + $0x60] sm:$0xff]
      %v215 = vld [vmem:[%s193 + $0x68] sm:$0xff]
      %v216 = vld [vmem:[%s193 + $0x70] sm:$0xff]
      %v217 = vld [vmem:[%s193 + $0x78] sm:$0xff]
      %v218 = vld [vmem:[%s193 + $0x80] sm:$0xff]
      %v219 = vld [vmem:[%s193 + $0x88] sm:$0xff]
      %v220 = vld [vmem:[%s193 + $0x90] sm:$0xff]
      %v221 = vld [vmem:[%s193 + $0x98] sm:$0xff]
      %v222 = vld [vmem:[%s193 + $0xa0] sm:$0xff]
      %v223 = vld [vmem:[%s193 + $0xa8] sm:$0xff]
      %v224 = vld [vmem:[%s193 + $0xb0] sm:$0xff]
      %v225 = vld [vmem:[%s193 + $0xb8] sm:$0xff]
      %v226 = vld [vmem:[%s193 + $0xc0] sm:$0xff]
      %v227 = vld [vmem:[%s193 + $0xc8] sm:$0xff]
      %v228 = vld [vmem:[%s193 + $0xd0] sm:$0xff]
      %v229 = vld [vmem:[%s193 + $0xd8] sm:$0xff]
      %v230 = vld [vmem:[%s193 + $0xe0] sm:$0xff]
      %v231 = vld [vmem:[%s193 + $0xe8] sm:$0xff]
      %v232 = vld [vmem:[%s193 + $0xf0] sm:$0xff]
      %v233 = vld [vmem:[%s193 + $0xf8] sm:$0xff]
      %v234 = vld [vmem:[%s193 + $0x100] sm:$0xff]
      %v235 = vld [vmem:[%s193 + $0x108] sm:$0xff]
      %v236 = vld [vmem:[%s193 + $0x110] sm:$0xff]
      %v237 = vld [vmem:[%s193 + $0x118] sm:$0xff]
      %v238 = vld [vmem:[%s193 + $0x120] sm:$0xff]
      %v239 = vld [vmem:[%s193 + $0x128] sm:$0xff]
      %v240 = vld [vmem:[%s193 + $0x130] sm:$0xff]
      %v241 = vld [vmem:[%s193 + $0x138] sm:$0xff]
      %v242 = vld [vmem:[%s193 + $0x140] sm:$0xff]
      %v243 = vld [vmem:[%s193 + $0x148] sm:$0xff]
      %v244 = vld [vmem:[%s193 + $0x150] sm:$0xff]
      %v245 = vld [vmem:[%s193 + $0x158] sm:$0xff]
      %v246 = vld [vmem:[%s193 + $0x160] sm:$0xff]
      %v247 = vld [vmem:[%s193 + $0x168] sm:$0xff]
      %v248 = vld [vmem:[%s193 + $0x170] sm:$0xff]
      %v249 = vld [vmem:[%s193 + $0x178] sm:$0xff]
      %v250 = vld [vmem:[%s193 + $0x180] sm:$0xff]
      %v251 = vld [vmem:[%s193 + $0x188] sm:$0xff]
      %v252 = vld [vmem:[%s193 + $0x190] sm:$0xff]
      %v253 = vld [vmem:[%s193 + $0x198] sm:$0xff]
      %v254 = vld [vmem:[%s193 + $0x1a0] sm:$0xff]
      %v255 = vld [vmem:[%s193 + $0x1a8] sm:$0xff]
      %v256 = vld [vmem:[%s193 + $0x1b0] sm:$0xff]
      %v257 = vld [vmem:[%s193 + $0x1b8] sm:$0xff]
      %v258 = vld [vmem:[%s193 + $0x1c0] sm:$0xff]
      %v259 = vld [vmem:[%s193 + $0x1c8] sm:$0xff]
      %v260 = vld [vmem:[%s193 + $0x1d0] sm:$0xff]
      %v261 = vld [vmem:[%s193 + $0x1d8] sm:$0xff]
      %v262 = vld [vmem:[%s193 + $0x1e0] sm:$0xff]
      %v263 = vld [vmem:[%s193 + $0x1e8] sm:$0xff]
      %v264 = vld [vmem:[%s193 + $0x1f0] sm:$0xff]
      %v265 = vld [vmem:[%s193 + $0x1f8] sm:$0xff]
      %v266 = vld [vmem:[%s193 + $0x200] sm:$0xff]
      %v267 = vld [vmem:[%s193 + $0x208] sm:$0xff]
      %v268 = vld [vmem:[%s193 + $0x210] sm:$0xff]
      %v269 = vld [vmem:[%s193 + $0x218] sm:$0xff]
      %v270 = vld [vmem:[%s193 + $0x220] sm:$0xff]
      %v271 = vld [vmem:[%s193 + $0x228] sm:$0xff]
      %v272 = vld [vmem:[%s193 + $0x230] sm:$0xff]
      %v273 = vld [vmem:[%s193 + $0x238] sm:$0xff]
      %v274 = vld [vmem:[%s193 + $0x240] sm:$0xff]
      %v275 = vld [vmem:[%s193 + $0x248] sm:$0xff]
      %v276 = vld [vmem:[%s193 + $0x250] sm:$0xff]
      %v277 = vld [vmem:[%s193 + $0x258] sm:$0xff]
      %v278 = vld [vmem:[%s193 + $0x260] sm:$0xff]
      %v279 = vld [vmem:[%s193 + $0x268] sm:$0xff]
      %v280 = vld [vmem:[%s193 + $0x270] sm:$0xff]
      %v281 = vld [vmem:[%s193 + $0x278] sm:$0xff]
      %v282 = vld [vmem:[%s193 + $0x280] sm:$0xff]
      %v283 = vld [vmem:[%s193 + $0x288] sm:$0xff]
      %v284 = vld [vmem:[%s193 + $0x290] sm:$0xff]
      %v285 = vld [vmem:[%s193 + $0x298] sm:$0xff]
      %v286 = vld [vmem:[%s193 + $0x2a0] sm:$0xff]
      %v287 = vld [vmem:[%s193 + $0x2a8] sm:$0xff]
      %v288 = vld [vmem:[%s193 + $0x2b0] sm:$0xff]
      %v289 = vld [vmem:[%s193 + $0x2b8] sm:$0xff]
      %v290 = vld [vmem:[%s193 + $0x2c0] sm:$0xff]
      %v291 = vld [vmem:[%s193 + $0x2c8] sm:$0xff]
      %v292 = vld [vmem:[%s193 + $0x2d0] sm:$0xff]
      %v293 = vld [vmem:[%s193 + $0x2d8] sm:$0xff]
      %v294 = vld [vmem:[%s193 + $0x2e0] sm:$0xff]
      %v295 = vld [vmem:[%s193 + $0x2e8] sm:$0xff]
      %v296 = vld [vmem:[%s193 + $0x2f0] sm:$0xff]
      %v297 = vld [vmem:[%s193 + $0x2f8] sm:$0xff]
      %v298 = vld [vmem:[%s193 + $0x300] sm:$0xff]
      %v299 = vld [vmem:[%s193 + $0x308] sm:$0xff]
      %v300 = vld [vmem:[%s193 + $0x310] sm:$0xff]
      %v301 = vld [vmem:[%s193 + $0x318] sm:$0xff]
      %v302 = vld [vmem:[%s193 + $0x320] sm:$0xff]
      %v303 = vld [vmem:[%s193 + $0x328] sm:$0xff]
      %v304 = vld [vmem:[%s193 + $0x330] sm:$0xff]
      %v305 = vld [vmem:[%s193 + $0x338] sm:$0xff]
      %v306 = vld [vmem:[%s193 + $0x340] sm:$0xff]
      %v307 = vld [vmem:[%s193 + $0x348] sm:$0xff]
      %v308 = vld [vmem:[%s193 + $0x350] sm:$0xff]
      %v309 = vld [vmem:[%s193 + $0x358] sm:$0xff]
      %v310 = vld [vmem:[%s193 + $0x360] sm:$0xff]
      %v311 = vld [vmem:[%s193 + $0x368] sm:$0xff]
      %v312 = vld [vmem:[%s193 + $0x370] sm:$0xff]
      %v313 = vld [vmem:[%s193 + $0x378] sm:$0xff]
      %v314 = vld [vmem:[%s193 + $0x380] sm:$0xff]
      %v315 = vld [vmem:[%s193 + $0x388] sm:$0xff]
      %v316 = vld [vmem:[%s193 + $0x390] sm:$0xff]
      %v317 = vld [vmem:[%s193 + $0x398] sm:$0xff]
      %v318 = vld [vmem:[%s193 + $0x3a0] sm:$0xff]
      %v319 = vld [vmem:[%s193 + $0x3a8] sm:$0xff]
      %v320 = vld [vmem:[%s193 + $0x3b0] sm:$0xff]
      %v321 = vld [vmem:[%s193 + $0x3b8] sm:$0xff]
      %v322 = vld [vmem:[%s193 + $0x3c0] sm:$0xff]
      %v323 = vld [vmem:[%s193 + $0x3c8] sm:$0xff]
      %v324 = vld [vmem:[%s193 + $0x3d0] sm:$0xff]
      %v325 = vld [vmem:[%s193 + $0x3d8] sm:$0xff]
      %v326 = vld [vmem:[%s193 + $0x3e0] sm:$0xff]
      %v327 = vld [vmem:[%s193 + $0x3e8] sm:$0xff]
      %v328 = vld [vmem:[%s193 + $0x3f0] sm:$0xff]
      %v329 = vld [vmem:[%s193 + $0x3f8] sm:$0xff]
      %v330 = vld [vmem:[%s1] sm:$0xf]
      %332 = vset.pattern.permute.xlu0 0
      %333 = vperm.xlu0 %332, %v202
      %v334 = vpop.permute.xlu0 %333
      %337 = vset.pattern.permute.xlu0 0
      %338 = vperm.xlu0 %337, %v203
      %v339 = vpop.permute.xlu0 %338
      %342 = vset.pattern.permute.xlu0 0
      %343 = vperm.xlu0 %342, %v204
      %v344 = vpop.permute.xlu0 %343
      %347 = vset.pattern.permute.xlu0 0
      %348 = vperm.xlu0 %347, %v205
      %v349 = vpop.permute.xlu0 %348
      %352 = vset.pattern.permute.xlu0 0
      %353 = vperm.xlu0 %352, %v206
      %v354 = vpop.permute.xlu0 %353
      %357 = vset.pattern.permute.xlu0 0
      %358 = vperm.xlu0 %357, %v207
      %v359 = vpop.permute.xlu0 %358
      %362 = vset.pattern.permute.xlu0 0
      %363 = vperm.xlu0 %362, %v208
      %v364 = vpop.permute.xlu0 %363
      %367 = vset.pattern.permute.xlu0 0
      %368 = vperm.xlu0 %367, %v209
      %v369 = vpop.permute.xlu0 %368
      %372 = vset.pattern.permute.xlu0 0
      %373 = vperm.xlu0 %372, %v210
      %v374 = vpop.permute.xlu0 %373
      %377 = vset.pattern.permute.xlu0 0
      %378 = vperm.xlu0 %377, %v211
      %v379 = vpop.permute.xlu0 %378
      %382 = vset.pattern.permute.xlu0 0
      %383 = vperm.xlu0 %382, %v212
      %v384 = vpop.permute.xlu0 %383
      %387 = vset.pattern.permute.xlu0 0
      %388 = vperm.xlu0 %387, %v213
      %v389 = vpop.permute.xlu0 %388
      %392 = vset.pattern.permute.xlu0 0
      %393 = vperm.xlu0 %392, %v214
      %v394 = vpop.permute.xlu0 %393
      %397 = vset.pattern.permute.xlu0 0
      %398 = vperm.xlu0 %397, %v215
      %v399 = vpop.permute.xlu0 %398
      %402 = vset.pattern.permute.xlu0 0
      %403 = vperm.xlu0 %402, %v216
      %v404 = vpop.permute.xlu0 %403
      %407 = vset.pattern.permute.xlu0 0
      %408 = vperm.xlu0 %407, %v217
      %v409 = vpop.permute.xlu0 %408
      %412 = vset.pattern.permute.xlu0 0
      %413 = vperm.xlu0 %412, %v218
      %v414 = vpop.permute.xlu0 %413
      %417 = vset.pattern.permute.xlu0 0
      %418 = vperm.xlu0 %417, %v219
      %v419 = vpop.permute.xlu0 %418
      %422 = vset.pattern.permute.xlu0 0
      %423 = vperm.xlu0 %422, %v220
      %v424 = vpop.permute.xlu0 %423
      %427 = vset.pattern.permute.xlu0 0
      %428 = vperm.xlu0 %427, %v221
      %v429 = vpop.permute.xlu0 %428
      %432 = vset.pattern.permute.xlu0 0
      %433 = vperm.xlu0 %432, %v222
      %v434 = vpop.permute.xlu0 %433
      %437 = vset.pattern.permute.xlu0 0
      %438 = vperm.xlu0 %437, %v223
      %v439 = vpop.permute.xlu0 %438
      %442 = vset.pattern.permute.xlu0 0
      %443 = vperm.xlu0 %442, %v224
      %v444 = vpop.permute.xlu0 %443
      %447 = vset.pattern.permute.xlu0 0
      %448 = vperm.xlu0 %447, %v225
      %v449 = vpop.permute.xlu0 %448
      %452 = vset.pattern.permute.xlu0 0
      %453 = vperm.xlu0 %452, %v226
      %v454 = vpop.permute.xlu0 %453
      %457 = vset.pattern.permute.xlu0 0
      %458 = vperm.xlu0 %457, %v227
      %v459 = vpop.permute.xlu0 %458
      %462 = vset.pattern.permute.xlu0 0
      %463 = vperm.xlu0 %462, %v228
      %v464 = vpop.permute.xlu0 %463
      %467 = vset.pattern.permute.xlu0 0
      %468 = vperm.xlu0 %467, %v229
      %v469 = vpop.permute.xlu0 %468
      %472 = vset.pattern.permute.xlu0 0
      %473 = vperm.xlu0 %472, %v230
      %v474 = vpop.permute.xlu0 %473
      %477 = vset.pattern.permute.xlu0 0
      %478 = vperm.xlu0 %477, %v231
      %v479 = vpop.permute.xlu0 %478
      %482 = vset.pattern.permute.xlu0 0
      %483 = vperm.xlu0 %482, %v232
      %v484 = vpop.permute.xlu0 %483
      %487 = vset.pattern.permute.xlu0 0
      %488 = vperm.xlu0 %487, %v233
      %v489 = vpop.permute.xlu0 %488
      %492 = vset.pattern.permute.xlu0 0
      %493 = vperm.xlu0 %492, %v234
      %v494 = vpop.permute.xlu0 %493
      %497 = vset.pattern.permute.xlu0 0
      %498 = vperm.xlu0 %497, %v235
      %v499 = vpop.permute.xlu0 %498
      %502 = vset.pattern.permute.xlu0 0
      %503 = vperm.xlu0 %502, %v236
      %v504 = vpop.permute.xlu0 %503
      %507 = vset.pattern.permute.xlu0 0
      %508 = vperm.xlu0 %507, %v237
      %v509 = vpop.permute.xlu0 %508
      %512 = vset.pattern.permute.xlu0 0
      %513 = vperm.xlu0 %512, %v238
      %v514 = vpop.permute.xlu0 %513
      %517 = vset.pattern.permute.xlu0 0
      %518 = vperm.xlu0 %517, %v239
      %v519 = vpop.permute.xlu0 %518
      %522 = vset.pattern.permute.xlu0 0
      %523 = vperm.xlu0 %522, %v240
      %v524 = vpop.permute.xlu0 %523
      %527 = vset.pattern.permute.xlu0 0
      %528 = vperm.xlu0 %527, %v241
      %v529 = vpop.permute.xlu0 %528
      %532 = vset.pattern.permute.xlu0 0
      %533 = vperm.xlu0 %532, %v242
      %v534 = vpop.permute.xlu0 %533
      %537 = vset.pattern.permute.xlu0 0
      %538 = vperm.xlu0 %537, %v243
      %v539 = vpop.permute.xlu0 %538
      %542 = vset.pattern.permute.xlu0 0
      %543 = vperm.xlu0 %542, %v244
      %v544 = vpop.permute.xlu0 %543
      %547 = vset.pattern.permute.xlu0 0
      %548 = vperm.xlu0 %547, %v245
      %v549 = vpop.permute.xlu0 %548
      %552 = vset.pattern.permute.xlu0 0
      %553 = vperm.xlu0 %552, %v246
      %v554 = vpop.permute.xlu0 %553
      %557 = vset.pattern.permute.xlu0 0
      %558 = vperm.xlu0 %557, %v247
      %v559 = vpop.permute.xlu0 %558
      %562 = vset.pattern.permute.xlu0 0
      %563 = vperm.xlu0 %562, %v248
      %v564 = vpop.permute.xlu0 %563
      %567 = vset.pattern.permute.xlu0 0
      %568 = vperm.xlu0 %567, %v249
      %v569 = vpop.permute.xlu0 %568
      %572 = vset.pattern.permute.xlu0 0
      %573 = vperm.xlu0 %572, %v250
      %v574 = vpop.permute.xlu0 %573
      %577 = vset.pattern.permute.xlu0 0
      %578 = vperm.xlu0 %577, %v251
      %v579 = vpop.permute.xlu0 %578
      %582 = vset.pattern.permute.xlu0 0
      %583 = vperm.xlu0 %582, %v252
      %v584 = vpop.permute.xlu0 %583
      %587 = vset.pattern.permute.xlu0 0
      %588 = vperm.xlu0 %587, %v253
      %v589 = vpop.permute.xlu0 %588
      %592 = vset.pattern.permute.xlu0 0
      %593 = vperm.xlu0 %592, %v254
      %v594 = vpop.permute.xlu0 %593
      %597 = vset.pattern.permute.xlu0 0
      %598 = vperm.xlu0 %597, %v255
      %v599 = vpop.permute.xlu0 %598
      %602 = vset.pattern.permute.xlu0 0
      %603 = vperm.xlu0 %602, %v256
      %v604 = vpop.permute.xlu0 %603
      %607 = vset.pattern.permute.xlu0 0
      %608 = vperm.xlu0 %607, %v257
      %v609 = vpop.permute.xlu0 %608
      %612 = vset.pattern.permute.xlu0 0
      %613 = vperm.xlu0 %612, %v258
      %v614 = vpop.permute.xlu0 %613
      %617 = vset.pattern.permute.xlu0 0
      %618 = vperm.xlu0 %617, %v259
      %v619 = vpop.permute.xlu0 %618
      %622 = vset.pattern.permute.xlu0 0
      %623 = vperm.xlu0 %622, %v260
      %v624 = vpop.permute.xlu0 %623
      %627 = vset.pattern.permute.xlu0 0
      %628 = vperm.xlu0 %627, %v261
      %v629 = vpop.permute.xlu0 %628
      %632 = vset.pattern.permute.xlu0 0
      %633 = vperm.xlu0 %632, %v262
      %v634 = vpop.permute.xlu0 %633
      %637 = vset.pattern.permute.xlu0 0
      %638 = vperm.xlu0 %637, %v263
      %v639 = vpop.permute.xlu0 %638
      %642 = vset.pattern.permute.xlu0 0
      %643 = vperm.xlu0 %642, %v264
      %v644 = vpop.permute.xlu0 %643
      %647 = vset.pattern.permute.xlu0 0
      %648 = vperm.xlu0 %647, %v265
      %v649 = vpop.permute.xlu0 %648
      %652 = vset.pattern.permute.xlu0 0
      %653 = vperm.xlu0 %652, %v266
      %v654 = vpop.permute.xlu0 %653
      %657 = vset.pattern.permute.xlu0 0
      %658 = vperm.xlu0 %657, %v267
      %v659 = vpop.permute.xlu0 %658
      %662 = vset.pattern.permute.xlu0 0
      %663 = vperm.xlu0 %662, %v268
      %v664 = vpop.permute.xlu0 %663
      %667 = vset.pattern.permute.xlu0 0
      %668 = vperm.xlu0 %667, %v269
      %v669 = vpop.permute.xlu0 %668
      %672 = vset.pattern.permute.xlu0 0
      %673 = vperm.xlu0 %672, %v270
      %v674 = vpop.permute.xlu0 %673
      %677 = vset.pattern.permute.xlu0 0
      %678 = vperm.xlu0 %677, %v271
      %v679 = vpop.permute.xlu0 %678
      %682 = vset.pattern.permute.xlu0 0
      %683 = vperm.xlu0 %682, %v272
      %v684 = vpop.permute.xlu0 %683
      %687 = vset.pattern.permute.xlu0 0
      %688 = vperm.xlu0 %687, %v273
      %v689 = vpop.permute.xlu0 %688
      %692 = vset.pattern.permute.xlu0 0
      %693 = vperm.xlu0 %692, %v274
      %v694 = vpop.permute.xlu0 %693
      %697 = vset.pattern.permute.xlu0 0
      %698 = vperm.xlu0 %697, %v275
      %v699 = vpop.permute.xlu0 %698
      %702 = vset.pattern.permute.xlu0 0
      %703 = vperm.xlu0 %702, %v276
      %v704 = vpop.permute.xlu0 %703
      %707 = vset.pattern.permute.xlu0 0
      %708 = vperm.xlu0 %707, %v277
      %v709 = vpop.permute.xlu0 %708
      %712 = vset.pattern.permute.xlu0 0
      %713 = vperm.xlu0 %712, %v278
      %v714 = vpop.permute.xlu0 %713
      %717 = vset.pattern.permute.xlu0 0
      %718 = vperm.xlu0 %717, %v279
      %v719 = vpop.permute.xlu0 %718
      %722 = vset.pattern.permute.xlu0 0
      %723 = vperm.xlu0 %722, %v280
      %v724 = vpop.permute.xlu0 %723
      %727 = vset.pattern.permute.xlu0 0
      %728 = vperm.xlu0 %727, %v281
      %v729 = vpop.permute.xlu0 %728
      %732 = vset.pattern.permute.xlu0 0
      %733 = vperm.xlu0 %732, %v282
      %v734 = vpop.permute.xlu0 %733
      %737 = vset.pattern.permute.xlu0 0
      %738 = vperm.xlu0 %737, %v283
      %v739 = vpop.permute.xlu0 %738
      %742 = vset.pattern.permute.xlu0 0
      %743 = vperm.xlu0 %742, %v284
      %v744 = vpop.permute.xlu0 %743
      %747 = vset.pattern.permute.xlu0 0
      %748 = vperm.xlu0 %747, %v285
      %v749 = vpop.permute.xlu0 %748
      %752 = vset.pattern.permute.xlu0 0
      %753 = vperm.xlu0 %752, %v286
      %v754 = vpop.permute.xlu0 %753
      %757 = vset.pattern.permute.xlu0 0
      %758 = vperm.xlu0 %757, %v287
      %v759 = vpop.permute.xlu0 %758
      %762 = vset.pattern.permute.xlu0 0
      %763 = vperm.xlu0 %762, %v288
      %v764 = vpop.permute.xlu0 %763
      %767 = vset.pattern.permute.xlu0 0
      %768 = vperm.xlu0 %767, %v289
      %v769 = vpop.permute.xlu0 %768
      %772 = vset.pattern.permute.xlu0 0
      %773 = vperm.xlu0 %772, %v290
      %v774 = vpop.permute.xlu0 %773
      %777 = vset.pattern.permute.xlu0 0
      %778 = vperm.xlu0 %777, %v291
      %v779 = vpop.permute.xlu0 %778
      %782 = vset.pattern.permute.xlu0 0
      %783 = vperm.xlu0 %782, %v292
      %v784 = vpop.permute.xlu0 %783
      %787 = vset.pattern.permute.xlu0 0
      %788 = vperm.xlu0 %787, %v293
      %v789 = vpop.permute.xlu0 %788
      %792 = vset.pattern.permute.xlu0 0
      %793 = vperm.xlu0 %792, %v294
      %v794 = vpop.permute.xlu0 %793
      %797 = vset.pattern.permute.xlu0 0
      %798 = vperm.xlu0 %797, %v295
      %v799 = vpop.permute.xlu0 %798
      %802 = vset.pattern.permute.xlu0 0
      %803 = vperm.xlu0 %802, %v296
      %v804 = vpop.permute.xlu0 %803
      %807 = vset.pattern.permute.xlu0 0
      %808 = vperm.xlu0 %807, %v297
      %v809 = vpop.permute.xlu0 %808
      %812 = vset.pattern.permute.xlu0 0
      %813 = vperm.xlu0 %812, %v298
      %v814 = vpop.permute.xlu0 %813
      %817 = vset.pattern.permute.xlu0 0
      %818 = vperm.xlu0 %817, %v299
      %v819 = vpop.permute.xlu0 %818
      %822 = vset.pattern.permute.xlu0 0
      %823 = vperm.xlu0 %822, %v300
      %v824 = vpop.permute.xlu0 %823
      %827 = vset.pattern.permute.xlu0 0
      %828 = vperm.xlu0 %827, %v301
      %v829 = vpop.permute.xlu0 %828
      %832 = vset.pattern.permute.xlu0 0
      %833 = vperm.xlu0 %832, %v302
      %v834 = vpop.permute.xlu0 %833
      %837 = vset.pattern.permute.xlu0 0
      %838 = vperm.xlu0 %837, %v303
      %v839 = vpop.permute.xlu0 %838
      %842 = vset.pattern.permute.xlu0 0
      %843 = vperm.xlu0 %842, %v304
      %v844 = vpop.permute.xlu0 %843
      %847 = vset.pattern.permute.xlu0 0
      %848 = vperm.xlu0 %847, %v305
      %v849 = vpop.permute.xlu0 %848
      %852 = vset.pattern.permute.xlu0 0
      %853 = vperm.xlu0 %852, %v306
      %v854 = vpop.permute.xlu0 %853
      %857 = vset.pattern.permute.xlu0 0
      %858 = vperm.xlu0 %857, %v307
      %v859 = vpop.permute.xlu0 %858
      %862 = vset.pattern.permute.xlu0 0
      %863 = vperm.xlu0 %862, %v308
      %v864 = vpop.permute.xlu0 %863
      %867 = vset.pattern.permute.xlu0 0
      %868 = vperm.xlu0 %867, %v309
      %v869 = vpop.permute.xlu0 %868
      %872 = vset.pattern.permute.xlu0 0
      %873 = vperm.xlu0 %872, %v310
      %v874 = vpop.permute.xlu0 %873
      %877 = vset.pattern.permute.xlu0 0
      %878 = vperm.xlu0 %877, %v311
      %v879 = vpop.permute.xlu0 %878
      %882 = vset.pattern.permute.xlu0 0
      %883 = vperm.xlu0 %882, %v312
      %v884 = vpop.permute.xlu0 %883
      %887 = vset.pattern.permute.xlu0 0
      %888 = vperm.xlu0 %887, %v313
      %v889 = vpop.permute.xlu0 %888
      %892 = vset.pattern.permute.xlu0 0
      %893 = vperm.xlu0 %892, %v314
      %v894 = vpop.permute.xlu0 %893
      %897 = vset.pattern.permute.xlu0 0
      %898 = vperm.xlu0 %897, %v315
      %v899 = vpop.permute.xlu0 %898
      %902 = vset.pattern.permute.xlu0 0
      %903 = vperm.xlu0 %902, %v316
      %v904 = vpop.permute.xlu0 %903
      %907 = vset.pattern.permute.xlu0 0
      %908 = vperm.xlu0 %907, %v317
      %v909 = vpop.permute.xlu0 %908
      %912 = vset.pattern.permute.xlu0 0
      %913 = vperm.xlu0 %912, %v318
      %v914 = vpop.permute.xlu0 %913
      %917 = vset.pattern.permute.xlu0 0
      %918 = vperm.xlu0 %917, %v319
      %v919 = vpop.permute.xlu0 %918
      %922 = vset.pattern.permute.xlu0 0
      %923 = vperm.xlu0 %922, %v320
      %v924 = vpop.permute.xlu0 %923
      %927 = vset.pattern.permute.xlu0 0
      %928 = vperm.xlu0 %927, %v321
      %v929 = vpop.permute.xlu0 %928
      %932 = vset.pattern.permute.xlu0 0
      %933 = vperm.xlu0 %932, %v322
      %v934 = vpop.permute.xlu0 %933
      %937 = vset.pattern.permute.xlu0 0
      %938 = vperm.xlu0 %937, %v323
      %v939 = vpop.permute.xlu0 %938
      %942 = vset.pattern.permute.xlu0 0
      %943 = vperm.xlu0 %942, %v324
      %v944 = vpop.permute.xlu0 %943
      %947 = vset.pattern.permute.xlu0 0
      %948 = vperm.xlu0 %947, %v325
      %v949 = vpop.permute.xlu0 %948
      %952 = vset.pattern.permute.xlu0 0
      %953 = vperm.xlu0 %952, %v326
      %v954 = vpop.permute.xlu0 %953
      %957 = vset.pattern.permute.xlu0 0
      %958 = vperm.xlu0 %957, %v327
      %v959 = vpop.permute.xlu0 %958
      %962 = vset.pattern.permute.xlu0 0
      %963 = vperm.xlu0 %962, %v328
      %v964 = vpop.permute.xlu0 %963
      %967 = vset.pattern.permute.xlu0 0
      %968 = vperm.xlu0 %967, %v329
      %v969 = vpop.permute.xlu0 %968
      %v972 = vlaneseq
      %v973 = vshrl.u32 %v972, 7
      %v974 = vsub.s32 0, %v973
      %v975 = vrot.slane %v330, %v974
      %v976 = vlaneseq
      %v977 = vshrl.u32 %v976, 7
      %v978 = vsub.s32 2, %v977
      %v979 = vrot.slane %v330, %v978
      %v982 = vlaneseq
      %v983 = vshrl.u32 %v982, 7
      %v984 = vsub.s32 0, %v983
      %v985 = vrot.slane %v975, %v984
      %v986 = vlaneseq
      %v987 = vshrl.u32 %v986, 7
      %v988 = vsub.s32 0, %v987
      %v989 = vrot.slane %v979, %v988
      %v990 = vmul.f32 %v334, %v985
      %v991 = vmul.f32 %v334, %v989
      %v992 = vmul.f32 %v339, %v985
      %v993 = vmul.f32 %v339, %v989
      %v994 = vmul.f32 %v344, %v985
      %v995 = vmul.f32 %v344, %v989
      %v996 = vmul.f32 %v349, %v985
      %v997 = vmul.f32 %v349, %v989
      %v998 = vmul.f32 %v354, %v985
      %v999 = vmul.f32 %v354, %v989
      %v1000 = vmul.f32 %v359, %v985
      %v1001 = vmul.f32 %v359, %v989
      %v1002 = vmul.f32 %v364, %v985
      %v1003 = vmul.f32 %v364, %v989
      %v1004 = vmul.f32 %v369, %v985
      %v1005 = vmul.f32 %v369, %v989
      %v1006 = vmul.f32 %v374, %v985
      %v1007 = vmul.f32 %v374, %v989
      %v1008 = vmul.f32 %v379, %v985
      %v1009 = vmul.f32 %v379, %v989
      %v1010 = vmul.f32 %v384, %v985
      %v1011 = vmul.f32 %v384, %v989
      %v1012 = vmul.f32 %v389, %v985
      %v1013 = vmul.f32 %v389, %v989
      %v1014 = vmul.f32 %v394, %v985
      %v1015 = vmul.f32 %v394, %v989
      %v1016 = vmul.f32 %v399, %v985
      %v1017 = vmul.f32 %v399, %v989
      %v1018 = vmul.f32 %v404, %v985
      %v1019 = vmul.f32 %v404, %v989
      %v1020 = vmul.f32 %v409, %v985
      %v1021 = vmul.f32 %v409, %v989
      %v1022 = vmul.f32 %v414, %v985
      %v1023 = vmul.f32 %v414, %v989
      %v1024 = vmul.f32 %v419, %v985
      %v1025 = vmul.f32 %v419, %v989
      %v1026 = vmul.f32 %v424, %v985
      %v1027 = vmul.f32 %v424, %v989
      %v1028 = vmul.f32 %v429, %v985
      %v1029 = vmul.f32 %v429, %v989
      %v1030 = vmul.f32 %v434, %v985
      %v1031 = vmul.f32 %v434, %v989
      %v1032 = vmul.f32 %v439, %v985
      %v1033 = vmul.f32 %v439, %v989
      %v1034 = vmul.f32 %v444, %v985
      %v1035 = vmul.f32 %v444, %v989
      %v1036 = vmul.f32 %v449, %v985
      %v1037 = vmul.f32 %v449, %v989
      %v1038 = vmul.f32 %v454, %v985
      %v1039 = vmul.f32 %v454, %v989
      %v1040 = vmul.f32 %v459, %v985
      %v1041 = vmul.f32 %v459, %v989
      %v1042 = vmul.f32 %v464, %v985
      %v1043 = vmul.f32 %v464, %v989
      %v1044 = vmul.f32 %v469, %v985
      %v1045 = vmul.f32 %v469, %v989
      %v1046 = vmul.f32 %v474, %v985
      %v1047 = vmul.f32 %v474, %v989
      %v1048 = vmul.f32 %v479, %v985
      %v1049 = vmul.f32 %v479, %v989
      %v1050 = vmul.f32 %v484, %v985
      %v1051 = vmul.f32 %v484, %v989
      %v1052 = vmul.f32 %v489, %v985
      %v1053 = vmul.f32 %v489, %v989
      %v1054 = vmul.f32 %v494, %v985
      %v1055 = vmul.f32 %v494, %v989
      %v1056 = vmul.f32 %v499, %v985
      %v1057 = vmul.f32 %v499, %v989
      %v1058 = vmul.f32 %v504, %v985
      %v1059 = vmul.f32 %v504, %v989
      %v1060 = vmul.f32 %v509, %v985
      %v1061 = vmul.f32 %v509, %v989
      %v1062 = vmul.f32 %v514, %v985
      %v1063 = vmul.f32 %v514, %v989
      %v1064 = vmul.f32 %v519, %v985
      %v1065 = vmul.f32 %v519, %v989
      %v1066 = vmul.f32 %v524, %v985
      %v1067 = vmul.f32 %v524, %v989
      %v1068 = vmul.f32 %v529, %v985
      %v1069 = vmul.f32 %v529, %v989
      %v1070 = vmul.f32 %v534, %v985
      %v1071 = vmul.f32 %v534, %v989
      %v1072 = vmul.f32 %v539, %v985
      %v1073 = vmul.f32 %v539, %v989
      %v1074 = vmul.f32 %v544, %v985
      %v1075 = vmul.f32 %v544, %v989
      %v1076 = vmul.f32 %v549, %v985
      %v1077 = vmul.f32 %v549, %v989
      %v1078 = vmul.f32 %v554, %v985
      %v1079 = vmul.f32 %v554, %v989
      %v1080 = vmul.f32 %v559, %v985
      %v1081 = vmul.f32 %v559, %v989
      %v1082 = vmul.f32 %v564, %v985
      %v1083 = vmul.f32 %v564, %v989
      %v1084 = vmul.f32 %v569, %v985
      %v1085 = vmul.f32 %v569, %v989
      %v1086 = vmul.f32 %v574, %v985
      %v1087 = vmul.f32 %v574, %v989
      %v1088 = vmul.f32 %v579, %v985
      %v1089 = vmul.f32 %v579, %v989
      %v1090 = vmul.f32 %v584, %v985
      %v1091 = vmul.f32 %v584, %v989
      %v1092 = vmul.f32 %v589, %v985
      %v1093 = vmul.f32 %v589, %v989
      %v1094 = vmul.f32 %v594, %v985
      %v1095 = vmul.f32 %v594, %v989
      %v1096 = vmul.f32 %v599, %v985
      %v1097 = vmul.f32 %v599, %v989
      %v1098 = vmul.f32 %v604, %v985
      %v1099 = vmul.f32 %v604, %v989
      %v1100 = vmul.f32 %v609, %v985
      %v1101 = vmul.f32 %v609, %v989
      %v1102 = vmul.f32 %v614, %v985
      %v1103 = vmul.f32 %v614, %v989
      %v1104 = vmul.f32 %v619, %v985
      %v1105 = vmul.f32 %v619, %v989
      %v1106 = vmul.f32 %v624, %v985
      %v1107 = vmul.f32 %v624, %v989
      %v1108 = vmul.f32 %v629, %v985
      %v1109 = vmul.f32 %v629, %v989
      %v1110 = vmul.f32 %v634, %v985
      %v1111 = vmul.f32 %v634, %v989
      %v1112 = vmul.f32 %v639, %v985
      %v1113 = vmul.f32 %v639, %v989
      %v1114 = vmul.f32 %v644, %v985
      %v1115 = vmul.f32 %v644, %v989
      %v1116 = vmul.f32 %v649, %v985
      %v1117 = vmul.f32 %v649, %v989
      %v1118 = vmul.f32 %v654, %v985
      %v1119 = vmul.f32 %v654, %v989
      %v1120 = vmul.f32 %v659, %v985
      %v1121 = vmul.f32 %v659, %v989
      %v1122 = vmul.f32 %v664, %v985
      %v1123 = vmul.f32 %v664, %v989
      %v1124 = vmul.f32 %v669, %v985
      %v1125 = vmul.f32 %v669, %v989
      %v1126 = vmul.f32 %v674, %v985
      %v1127 = vmul.f32 %v674, %v989
      %v1128 = vmul.f32 %v679, %v985
      %v1129 = vmul.f32 %v679, %v989
      %v1130 = vmul.f32 %v684, %v985
      %v1131 = vmul.f32 %v684, %v989
      %v1132 = vmul.f32 %v689, %v985
      %v1133 = vmul.f32 %v689, %v989
      %v1134 = vmul.f32 %v694, %v985
      %v1135 = vmul.f32 %v694, %v989
      %v1136 = vmul.f32 %v699, %v985
      %v1137 = vmul.f32 %v699, %v989
      %v1138 = vmul.f32 %v704, %v985
      %v1139 = vmul.f32 %v704, %v989
      %v1140 = vmul.f32 %v709, %v985
      %v1141 = vmul.f32 %v709, %v989
      %v1142 = vmul.f32 %v714, %v985
      %v1143 = vmul.f32 %v714, %v989
      %v1144 = vmul.f32 %v719, %v985
      %v1145 = vmul.f32 %v719, %v989
      %v1146 = vmul.f32 %v724, %v985
      %v1147 = vmul.f32 %v724, %v989
      %v1148 = vmul.f32 %v729, %v985
      %v1149 = vmul.f32 %v729, %v989
      %v1150 = vmul.f32 %v734, %v985
      %v1151 = vmul.f32 %v734, %v989
      %v1152 = vmul.f32 %v739, %v985
      %v1153 = vmul.f32 %v739, %v989
      %v1154 = vmul.f32 %v744, %v985
      %v1155 = vmul.f32 %v744, %v989
      %v1156 = vmul.f32 %v749, %v985
      %v1157 = vmul.f32 %v749, %v989
      %v1158 = vmul.f32 %v754, %v985
      %v1159 = vmul.f32 %v754, %v989
      %v1160 = vmul.f32 %v759, %v985
      %v1161 = vmul.f32 %v759, %v989
      %v1162 = vmul.f32 %v764, %v985
      %v1163 = vmul.f32 %v764, %v989
      %v1164 = vmul.f32 %v769, %v985
      %v1165 = vmul.f32 %v769, %v989
      %v1166 = vmul.f32 %v774, %v985
      %v1167 = vmul.f32 %v774, %v989
      %v1168 = vmul.f32 %v779, %v985
      %v1169 = vmul.f32 %v779, %v989
      %v1170 = vmul.f32 %v784, %v985
      %v1171 = vmul.f32 %v784, %v989
      %v1172 = vmul.f32 %v789, %v985
      %v1173 = vmul.f32 %v789, %v989
      %v1174 = vmul.f32 %v794, %v985
      %v1175 = vmul.f32 %v794, %v989
      %v1176 = vmul.f32 %v799, %v985
      %v1177 = vmul.f32 %v799, %v989
      %v1178 = vmul.f32 %v804, %v985
      %v1179 = vmul.f32 %v804, %v989
      %v1180 = vmul.f32 %v809, %v985
      %v1181 = vmul.f32 %v809, %v989
      %v1182 = vmul.f32 %v814, %v985
      %v1183 = vmul.f32 %v814, %v989
      %v1184 = vmul.f32 %v819, %v985
      %v1185 = vmul.f32 %v819, %v989
      %v1186 = vmul.f32 %v824, %v985
      %v1187 = vmul.f32 %v824, %v989
      %v1188 = vmul.f32 %v829, %v985
      %v1189 = vmul.f32 %v829, %v989
      %v1190 = vmul.f32 %v834, %v985
      %v1191 = vmul.f32 %v834, %v989
      %v1192 = vmul.f32 %v839, %v985
      %v1193 = vmul.f32 %v839, %v989
      %v1194 = vmul.f32 %v844, %v985
      %v1195 = vmul.f32 %v844, %v989
      %v1196 = vmul.f32 %v849, %v985
      %v1197 = vmul.f32 %v849, %v989
      %v1198 = vmul.f32 %v854, %v985
      %v1199 = vmul.f32 %v854, %v989
      %v1200 = vmul.f32 %v859, %v985
      %v1201 = vmul.f32 %v859, %v989
      %v1202 = vmul.f32 %v864, %v985
      %v1203 = vmul.f32 %v864, %v989
      %v1204 = vmul.f32 %v869, %v985
      %v1205 = vmul.f32 %v869, %v989
      %v1206 = vmul.f32 %v874, %v985
      %v1207 = vmul.f32 %v874, %v989
      %v1208 = vmul.f32 %v879, %v985
      %v1209 = vmul.f32 %v879, %v989
      %v1210 = vmul.f32 %v884, %v985
      %v1211 = vmul.f32 %v884, %v989
      %v1212 = vmul.f32 %v889, %v985
      %v1213 = vmul.f32 %v889, %v989
      %v1214 = vmul.f32 %v894, %v985
      %v1215 = vmul.f32 %v894, %v989
      %v1216 = vmul.f32 %v899, %v985
      %v1217 = vmul.f32 %v899, %v989
      %v1218 = vmul.f32 %v904, %v985
      %v1219 = vmul.f32 %v904, %v989
      %v1220 = vmul.f32 %v909, %v985
      %v1221 = vmul.f32 %v909, %v989
      %v1222 = vmul.f32 %v914, %v985
      %v1223 = vmul.f32 %v914, %v989
      %v1224 = vmul.f32 %v919, %v985
      %v1225 = vmul.f32 %v919, %v989
      %v1226 = vmul.f32 %v924, %v985
      %v1227 = vmul.f32 %v924, %v989
      %v1228 = vmul.f32 %v929, %v985
      %v1229 = vmul.f32 %v929, %v989
      %v1230 = vmul.f32 %v934, %v985
      %v1231 = vmul.f32 %v934, %v989
      %v1232 = vmul.f32 %v939, %v985
      %v1233 = vmul.f32 %v939, %v989
      %v1234 = vmul.f32 %v944, %v985
      %v1235 = vmul.f32 %v944, %v989
      %v1236 = vmul.f32 %v949, %v985
      %v1237 = vmul.f32 %v949, %v989
      %v1238 = vmul.f32 %v954, %v985
      %v1239 = vmul.f32 %v954, %v989
      %v1240 = vmul.f32 %v959, %v985
      %v1241 = vmul.f32 %v959, %v989
      %v1242 = vmul.f32 %v964, %v985
      %v1243 = vmul.f32 %v964, %v989
      %v1244 = vmul.f32 %v969, %v985
      %v1245 = vmul.f32 %v969, %v989
      %1246 = vset.pattern.permute.xlu0 1
      %1247 = vperm.xlu0 %1246, %v202
      %v1248 = vpop.permute.xlu0 %1247
      %1250 = vset.pattern.permute.xlu0 1
      %1251 = vperm.xlu0 %1250, %v203
      %v1252 = vpop.permute.xlu0 %1251
      %1254 = vset.pattern.permute.xlu0 1
      %1255 = vperm.xlu0 %1254, %v204
      %v1256 = vpop.permute.xlu0 %1255
      %1258 = vset.pattern.permute.xlu0 1
      %1259 = vperm.xlu0 %1258, %v205
      %v1260 = vpop.permute.xlu0 %1259
      %1262 = vset.pattern.permute.xlu0 1
      %1263 = vperm.xlu0 %1262, %v206
      %v1264 = vpop.permute.xlu0 %1263
      %1266 = vset.pattern.permute.xlu0 1
      %1267 = vperm.xlu0 %1266, %v207
      %v1268 = vpop.permute.xlu0 %1267
      %1270 = vset.pattern.permute.xlu0 1
      %1271 = vperm.xlu0 %1270, %v208
      %v1272 = vpop.permute.xlu0 %1271
      %1274 = vset.pattern.permute.xlu0 1
      %1275 = vperm.xlu0 %1274, %v209
      %v1276 = vpop.permute.xlu0 %1275
      %1278 = vset.pattern.permute.xlu0 1
      %1279 = vperm.xlu0 %1278, %v210
      %v1280 = vpop.permute.xlu0 %1279
      %1282 = vset.pattern.permute.xlu0 1
      %1283 = vperm.xlu0 %1282, %v211
      %v1284 = vpop.permute.xlu0 %1283
      %1286 = vset.pattern.permute.xlu0 1
      %1287 = vperm.xlu0 %1286, %v212
      %v1288 = vpop.permute.xlu0 %1287
      %1290 = vset.pattern.permute.xlu0 1
      %1291 = vperm.xlu0 %1290, %v213
      %v1292 = vpop.permute.xlu0 %1291
      %1294 = vset.pattern.permute.xlu0 1
      %1295 = vperm.xlu0 %1294, %v214
      %v1296 = vpop.permute.xlu0 %1295
      %1298 = vset.pattern.permute.xlu0 1
      %1299 = vperm.xlu0 %1298, %v215
      %v1300 = vpop.permute.xlu0 %1299
      %1302 = vset.pattern.permute.xlu0 1
      %1303 = vperm.xlu0 %1302, %v216
      %v1304 = vpop.permute.xlu0 %1303
      %1306 = vset.pattern.permute.xlu0 1
      %1307 = vperm.xlu0 %1306, %v217
      %v1308 = vpop.permute.xlu0 %1307
      %1310 = vset.pattern.permute.xlu0 1
      %1311 = vperm.xlu0 %1310, %v218
      %v1312 = vpop.permute.xlu0 %1311
      %1314 = vset.pattern.permute.xlu0 1
      %1315 = vperm.xlu0 %1314, %v219
      %v1316 = vpop.permute.xlu0 %1315
      %1318 = vset.pattern.permute.xlu0 1
      %1319 = vperm.xlu0 %1318, %v220
      %v1320 = vpop.permute.xlu0 %1319
      %1322 = vset.pattern.permute.xlu0 1
      %1323 = vperm.xlu0 %1322, %v221
      %v1324 = vpop.permute.xlu0 %1323
      %1326 = vset.pattern.permute.xlu0 1
      %1327 = vperm.xlu0 %1326, %v222
      %v1328 = vpop.permute.xlu0 %1327
      %1330 = vset.pattern.permute.xlu0 1
      %1331 = vperm.xlu0 %1330, %v223
      %v1332 = vpop.permute.xlu0 %1331
      %1334 = vset.pattern.permute.xlu0 1
      %1335 = vperm.xlu0 %1334, %v224
      %v1336 = vpop.permute.xlu0 %1335
      %1338 = vset.pattern.permute.xlu0 1
      %1339 = vperm.xlu0 %1338, %v225
      %v1340 = vpop.permute.xlu0 %1339
      %1342 = vset.pattern.permute.xlu0 1
      %1343 = vperm.xlu0 %1342, %v226
      %v1344 = vpop.permute.xlu0 %1343
      %1346 = vset.pattern.permute.xlu0 1
      %1347 = vperm.xlu0 %1346, %v227
      %v1348 = vpop.permute.xlu0 %1347
      %1350 = vset.pattern.permute.xlu0 1
      %1351 = vperm.xlu0 %1350, %v228
      %v1352 = vpop.permute.xlu0 %1351
      %1354 = vset.pattern.permute.xlu0 1
      %1355 = vperm.xlu0 %1354, %v229
      %v1356 = vpop.permute.xlu0 %1355
      %1358 = vset.pattern.permute.xlu0 1
      %1359 = vperm.xlu0 %1358, %v230
      %v1360 = vpop.permute.xlu0 %1359
      %1362 = vset.pattern.permute.xlu0 1
      %1363 = vperm.xlu0 %1362, %v231
      %v1364 = vpop.permute.xlu0 %1363
      %1366 = vset.pattern.permute.xlu0 1
      %1367 = vperm.xlu0 %1366, %v232
      %v1368 = vpop.permute.xlu0 %1367
      %1370 = vset.pattern.permute.xlu0 1
      %1371 = vperm.xlu0 %1370, %v233
      %v1372 = vpop.permute.xlu0 %1371
      %1374 = vset.pattern.permute.xlu0 1
      %1375 = vperm.xlu0 %1374, %v234
      %v1376 = vpop.permute.xlu0 %1375
      %1378 = vset.pattern.permute.xlu0 1
      %1379 = vperm.xlu0 %1378, %v235
      %v1380 = vpop.permute.xlu0 %1379
      %1382 = vset.pattern.permute.xlu0 1
      %1383 = vperm.xlu0 %1382, %v236
      %v1384 = vpop.permute.xlu0 %1383
      %1386 = vset.pattern.permute.xlu0 1
      %1387 = vperm.xlu0 %1386, %v237
      %v1388 = vpop.permute.xlu0 %1387
      %1390 = vset.pattern.permute.xlu0 1
      %1391 = vperm.xlu0 %1390, %v238
      %v1392 = vpop.permute.xlu0 %1391
      %1394 = vset.pattern.permute.xlu0 1
      %1395 = vperm.xlu0 %1394, %v239
      %v1396 = vpop.permute.xlu0 %1395
      %1398 = vset.pattern.permute.xlu0 1
      %1399 = vperm.xlu0 %1398, %v240
      %v1400 = vpop.permute.xlu0 %1399
      %1402 = vset.pattern.permute.xlu0 1
      %1403 = vperm.xlu0 %1402, %v241
      %v1404 = vpop.permute.xlu0 %1403
      %1406 = vset.pattern.permute.xlu0 1
      %1407 = vperm.xlu0 %1406, %v242
      %v1408 = vpop.permute.xlu0 %1407
      %1410 = vset.pattern.permute.xlu0 1
      %1411 = vperm.xlu0 %1410, %v243
      %v1412 = vpop.permute.xlu0 %1411
      %1414 = vset.pattern.permute.xlu0 1
      %1415 = vperm.xlu0 %1414, %v244
      %v1416 = vpop.permute.xlu0 %1415
      %1418 = vset.pattern.permute.xlu0 1
      %1419 = vperm.xlu0 %1418, %v245
      %v1420 = vpop.permute.xlu0 %1419
      %1422 = vset.pattern.permute.xlu0 1
      %1423 = vperm.xlu0 %1422, %v246
      %v1424 = vpop.permute.xlu0 %1423
      %1426 = vset.pattern.permute.xlu0 1
      %1427 = vperm.xlu0 %1426, %v247
      %v1428 = vpop.permute.xlu0 %1427
      %1430 = vset.pattern.permute.xlu0 1
      %1431 = vperm.xlu0 %1430, %v248
      %v1432 = vpop.permute.xlu0 %1431
      %1434 = vset.pattern.permute.xlu0 1
      %1435 = vperm.xlu0 %1434, %v249
      %v1436 = vpop.permute.xlu0 %1435
      %1438 = vset.pattern.permute.xlu0 1
      %1439 = vperm.xlu0 %1438, %v250
      %v1440 = vpop.permute.xlu0 %1439
      %1442 = vset.pattern.permute.xlu0 1
      %1443 = vperm.xlu0 %1442, %v251
      %v1444 = vpop.permute.xlu0 %1443
      %1446 = vset.pattern.permute.xlu0 1
      %1447 = vperm.xlu0 %1446, %v252
      %v1448 = vpop.permute.xlu0 %1447
      %1450 = vset.pattern.permute.xlu0 1
      %1451 = vperm.xlu0 %1450, %v253
      %v1452 = vpop.permute.xlu0 %1451
      %1454 = vset.pattern.permute.xlu0 1
      %1455 = vperm.xlu0 %1454, %v254
      %v1456 = vpop.permute.xlu0 %1455
      %1458 = vset.pattern.permute.xlu0 1
      %1459 = vperm.xlu0 %1458, %v255
      %v1460 = vpop.permute.xlu0 %1459
      %1462 = vset.pattern.permute.xlu0 1
      %1463 = vperm.xlu0 %1462, %v256
      %v1464 = vpop.permute.xlu0 %1463
      %1466 = vset.pattern.permute.xlu0 1
      %1467 = vperm.xlu0 %1466, %v257
      %v1468 = vpop.permute.xlu0 %1467
      %1470 = vset.pattern.permute.xlu0 1
      %1471 = vperm.xlu0 %1470, %v258
      %v1472 = vpop.permute.xlu0 %1471
      %1474 = vset.pattern.permute.xlu0 1
      %1475 = vperm.xlu0 %1474, %v259
      %v1476 = vpop.permute.xlu0 %1475
      %1478 = vset.pattern.permute.xlu0 1
      %1479 = vperm.xlu0 %1478, %v260
      %v1480 = vpop.permute.xlu0 %1479
      %1482 = vset.pattern.permute.xlu0 1
      %1483 = vperm.xlu0 %1482, %v261
      %v1484 = vpop.permute.xlu0 %1483
      %1486 = vset.pattern.permute.xlu0 1
      %1487 = vperm.xlu0 %1486, %v262
      %v1488 = vpop.permute.xlu0 %1487
      %1490 = vset.pattern.permute.xlu0 1
      %1491 = vperm.xlu0 %1490, %v263
      %v1492 = vpop.permute.xlu0 %1491
      %1494 = vset.pattern.permute.xlu0 1
      %1495 = vperm.xlu0 %1494, %v264
      %v1496 = vpop.permute.xlu0 %1495
      %1498 = vset.pattern.permute.xlu0 1
      %1499 = vperm.xlu0 %1498, %v265
      %v1500 = vpop.permute.xlu0 %1499
      %1502 = vset.pattern.permute.xlu0 1
      %1503 = vperm.xlu0 %1502, %v266
      %v1504 = vpop.permute.xlu0 %1503
      %1506 = vset.pattern.permute.xlu0 1
      %1507 = vperm.xlu0 %1506, %v267
      %v1508 = vpop.permute.xlu0 %1507
      %1510 = vset.pattern.permute.xlu0 1
      %1511 = vperm.xlu0 %1510, %v268
      %v1512 = vpop.permute.xlu0 %1511
      %1514 = vset.pattern.permute.xlu0 1
      %1515 = vperm.xlu0 %1514, %v269
      %v1516 = vpop.permute.xlu0 %1515
      %1518 = vset.pattern.permute.xlu0 1
      %1519 = vperm.xlu0 %1518, %v270
      %v1520 = vpop.permute.xlu0 %1519
      %1522 = vset.pattern.permute.xlu0 1
      %1523 = vperm.xlu0 %1522, %v271
      %v1524 = vpop.permute.xlu0 %1523
      %1526 = vset.pattern.permute.xlu0 1
      %1527 = vperm.xlu0 %1526, %v272
      %v1528 = vpop.permute.xlu0 %1527
      %1530 = vset.pattern.permute.xlu0 1
      %1531 = vperm.xlu0 %1530, %v273
      %v1532 = vpop.permute.xlu0 %1531
      %1534 = vset.pattern.permute.xlu0 1
      %1535 = vperm.xlu0 %1534, %v274
      %v1536 = vpop.permute.xlu0 %1535
      %1538 = vset.pattern.permute.xlu0 1
      %1539 = vperm.xlu0 %1538, %v275
      %v1540 = vpop.permute.xlu0 %1539
      %1542 = vset.pattern.permute.xlu0 1
      %1543 = vperm.xlu0 %1542, %v276
      %v1544 = vpop.permute.xlu0 %1543
      %1546 = vset.pattern.permute.xlu0 1
      %1547 = vperm.xlu0 %1546, %v277
      %v1548 = vpop.permute.xlu0 %1547
      %1550 = vset.pattern.permute.xlu0 1
      %1551 = vperm.xlu0 %1550, %v278
      %v1552 = vpop.permute.xlu0 %1551
      %1554 = vset.pattern.permute.xlu0 1
      %1555 = vperm.xlu0 %1554, %v279
      %v1556 = vpop.permute.xlu0 %1555
      %1558 = vset.pattern.permute.xlu0 1
      %1559 = vperm.xlu0 %1558, %v280
      %v1560 = vpop.permute.xlu0 %1559
      %1562 = vset.pattern.permute.xlu0 1
      %1563 = vperm.xlu0 %1562, %v281
      %v1564 = vpop.permute.xlu0 %1563
      %1566 = vset.pattern.permute.xlu0 1
      %1567 = vperm.xlu0 %1566, %v282
      %v1568 = vpop.permute.xlu0 %1567
      %1570 = vset.pattern.permute.xlu0 1
      %1571 = vperm.xlu0 %1570, %v283
      %v1572 = vpop.permute.xlu0 %1571
      %1574 = vset.pattern.permute.xlu0 1
      %1575 = vperm.xlu0 %1574, %v284
      %v1576 = vpop.permute.xlu0 %1575
      %1578 = vset.pattern.permute.xlu0 1
      %1579 = vperm.xlu0 %1578, %v285
      %v1580 = vpop.permute.xlu0 %1579
      %1582 = vset.pattern.permute.xlu0 1
      %1583 = vperm.xlu0 %1582, %v286
      %v1584 = vpop.permute.xlu0 %1583
      %1586 = vset.pattern.permute.xlu0 1
      %1587 = vperm.xlu0 %1586, %v287
      %v1588 = vpop.permute.xlu0 %1587
      %1590 = vset.pattern.permute.xlu0 1
      %1591 = vperm.xlu0 %1590, %v288
      %v1592 = vpop.permute.xlu0 %1591
      %1594 = vset.pattern.permute.xlu0 1
      %1595 = vperm.xlu0 %1594, %v289
      %v1596 = vpop.permute.xlu0 %1595
      %1598 = vset.pattern.permute.xlu0 1
      %1599 = vperm.xlu0 %1598, %v290
      %v1600 = vpop.permute.xlu0 %1599
      %1602 = vset.pattern.permute.xlu0 1
      %1603 = vperm.xlu0 %1602, %v291
      %v1604 = vpop.permute.xlu0 %1603
      %1606 = vset.pattern.permute.xlu0 1
      %1607 = vperm.xlu0 %1606, %v292
      %v1608 = vpop.permute.xlu0 %1607
      %1610 = vset.pattern.permute.xlu0 1
      %1611 = vperm.xlu0 %1610, %v293
      %v1612 = vpop.permute.xlu0 %1611
      %1614 = vset.pattern.permute.xlu0 1
      %1615 = vperm.xlu0 %1614, %v294
      %v1616 = vpop.permute.xlu0 %1615
      %1618 = vset.pattern.permute.xlu0 1
      %1619 = vperm.xlu0 %1618, %v295
      %v1620 = vpop.permute.xlu0 %1619
      %1622 = vset.pattern.permute.xlu0 1
      %1623 = vperm.xlu0 %1622, %v296
      %v1624 = vpop.permute.xlu0 %1623
      %1626 = vset.pattern.permute.xlu0 1
      %1627 = vperm.xlu0 %1626, %v297
      %v1628 = vpop.permute.xlu0 %1627
      %1630 = vset.pattern.permute.xlu0 1
      %1631 = vperm.xlu0 %1630, %v298
      %v1632 = vpop.permute.xlu0 %1631
      %1634 = vset.pattern.permute.xlu0 1
      %1635 = vperm.xlu0 %1634, %v299
      %v1636 = vpop.permute.xlu0 %1635
      %1638 = vset.pattern.permute.xlu0 1
      %1639 = vperm.xlu0 %1638, %v300
      %v1640 = vpop.permute.xlu0 %1639
      %1642 = vset.pattern.permute.xlu0 1
      %1643 = vperm.xlu0 %1642, %v301
      %v1644 = vpop.permute.xlu0 %1643
      %1646 = vset.pattern.permute.xlu0 1
      %1647 = vperm.xlu0 %1646, %v302
      %v1648 = vpop.permute.xlu0 %1647
      %1650 = vset.pattern.permute.xlu0 1
      %1651 = vperm.xlu0 %1650, %v303
      %v1652 = vpop.permute.xlu0 %1651
      %1654 = vset.pattern.permute.xlu0 1
      %1655 = vperm.xlu0 %1654, %v304
      %v1656 = vpop.permute.xlu0 %1655
      %1658 = vset.pattern.permute.xlu0 1
      %1659 = vperm.xlu0 %1658, %v305
      %v1660 = vpop.permute.xlu0 %1659
      %1662 = vset.pattern.permute.xlu0 1
      %1663 = vperm.xlu0 %1662, %v306
      %v1664 = vpop.permute.xlu0 %1663
      %1666 = vset.pattern.permute.xlu0 1
      %1667 = vperm.xlu0 %1666, %v307
      %v1668 = vpop.permute.xlu0 %1667
      %1670 = vset.pattern.permute.xlu0 1
      %1671 = vperm.xlu0 %1670, %v308
      %v1672 = vpop.permute.xlu0 %1671
      %1674 = vset.pattern.permute.xlu0 1
      %1675 = vperm.xlu0 %1674, %v309
      %v1676 = vpop.permute.xlu0 %1675
      %1678 = vset.pattern.permute.xlu0 1
      %1679 = vperm.xlu0 %1678, %v310
      %v1680 = vpop.permute.xlu0 %1679
      %1682 = vset.pattern.permute.xlu0 1
      %1683 = vperm.xlu0 %1682, %v311
      %v1684 = vpop.permute.xlu0 %1683
      %1686 = vset.pattern.permute.xlu0 1
      %1687 = vperm.xlu0 %1686, %v312
      %v1688 = vpop.permute.xlu0 %1687
      %1690 = vset.pattern.permute.xlu0 1
      %1691 = vperm.xlu0 %1690, %v313
      %v1692 = vpop.permute.xlu0 %1691
      %1694 = vset.pattern.permute.xlu0 1
      %1695 = vperm.xlu0 %1694, %v314
      %v1696 = vpop.permute.xlu0 %1695
      %1698 = vset.pattern.permute.xlu0 1
      %1699 = vperm.xlu0 %1698, %v315
      %v1700 = vpop.permute.xlu0 %1699
      %1702 = vset.pattern.permute.xlu0 1
      %1703 = vperm.xlu0 %1702, %v316
      %v1704 = vpop.permute.xlu0 %1703
      %1706 = vset.pattern.permute.xlu0 1
      %1707 = vperm.xlu0 %1706, %v317
      %v1708 = vpop.permute.xlu0 %1707
      %1710 = vset.pattern.permute.xlu0 1
      %1711 = vperm.xlu0 %1710, %v318
      %v1712 = vpop.permute.xlu0 %1711
      %1714 = vset.pattern.permute.xlu0 1
      %1715 = vperm.xlu0 %1714, %v319
      %v1716 = vpop.permute.xlu0 %1715
      %1718 = vset.pattern.permute.xlu0 1
      %1719 = vperm.xlu0 %1718, %v320
      %v1720 = vpop.permute.xlu0 %1719
      %1722 = vset.pattern.permute.xlu0 1
      %1723 = vperm.xlu0 %1722, %v321
      %v1724 = vpop.permute.xlu0 %1723
      %1726 = vset.pattern.permute.xlu0 1
      %1727 = vperm.xlu0 %1726, %v322
      %v1728 = vpop.permute.xlu0 %1727
      %1730 = vset.pattern.permute.xlu0 1
      %1731 = vperm.xlu0 %1730, %v323
      %v1732 = vpop.permute.xlu0 %1731
      %1734 = vset.pattern.permute.xlu0 1
      %1735 = vperm.xlu0 %1734, %v324
      %v1736 = vpop.permute.xlu0 %1735
      %1738 = vset.pattern.permute.xlu0 1
      %1739 = vperm.xlu0 %1738, %v325
      %v1740 = vpop.permute.xlu0 %1739
      %1742 = vset.pattern.permute.xlu0 1
      %1743 = vperm.xlu0 %1742, %v326
      %v1744 = vpop.permute.xlu0 %1743
      %1746 = vset.pattern.permute.xlu0 1
      %1747 = vperm.xlu0 %1746, %v327
      %v1748 = vpop.permute.xlu0 %1747
      %1750 = vset.pattern.permute.xlu0 1
      %1751 = vperm.xlu0 %1750, %v328
      %v1752 = vpop.permute.xlu0 %1751
      %1754 = vset.pattern.permute.xlu0 1
      %1755 = vperm.xlu0 %1754, %v329
      %v1756 = vpop.permute.xlu0 %1755
      %v1758 = vlaneseq
      %v1759 = vshrl.u32 %v1758, 7
      %v1760 = vsub.s32 1, %v1759
      %v1761 = vrot.slane %v330, %v1760
      %v1762 = vlaneseq
      %v1763 = vshrl.u32 %v1762, 7
      %v1764 = vsub.s32 3, %v1763
      %v1765 = vrot.slane %v330, %v1764
      %v1768 = vlaneseq
      %v1769 = vshrl.u32 %v1768, 7
      %v1770 = vsub.s32 1, %v1769
      %v1771 = vrot.slane %v1761, %v1770
      %v1772 = vlaneseq
      %v1773 = vshrl.u32 %v1772, 7
      %v1774 = vsub.s32 1, %v1773
      %v1775 = vrot.slane %v1765, %v1774
      %v1776 = vmul.f32 %v1248, %v1771
      %v1777 = vmul.f32 %v1248, %v1775
      %v1778 = vmul.f32 %v1252, %v1771
      %v1779 = vmul.f32 %v1252, %v1775
      %v1780 = vmul.f32 %v1256, %v1771
      %v1781 = vmul.f32 %v1256, %v1775
      %v1782 = vmul.f32 %v1260, %v1771
      %v1783 = vmul.f32 %v1260, %v1775
      %v1784 = vmul.f32 %v1264, %v1771
      %v1785 = vmul.f32 %v1264, %v1775
      %v1786 = vmul.f32 %v1268, %v1771
      %v1787 = vmul.f32 %v1268, %v1775
      %v1788 = vmul.f32 %v1272, %v1771
      %v1789 = vmul.f32 %v1272, %v1775
      %v1790 = vmul.f32 %v1276, %v1771
      %v1791 = vmul.f32 %v1276, %v1775
      %v1792 = vmul.f32 %v1280, %v1771
      %v1793 = vmul.f32 %v1280, %v1775
      %v1794 = vmul.f32 %v1284, %v1771
      %v1795 = vmul.f32 %v1284, %v1775
      %v1796 = vmul.f32 %v1288, %v1771
      %v1797 = vmul.f32 %v1288, %v1775
      %v1798 = vmul.f32 %v1292, %v1771
      %v1799 = vmul.f32 %v1292, %v1775
      %v1800 = vmul.f32 %v1296, %v1771
      %v1801 = vmul.f32 %v1296, %v1775
      %v1802 = vmul.f32 %v1300, %v1771
      %v1803 = vmul.f32 %v1300, %v1775
      %v1804 = vmul.f32 %v1304, %v1771
      %v1805 = vmul.f32 %v1304, %v1775
      %v1806 = vmul.f32 %v1308, %v1771
      %v1807 = vmul.f32 %v1308, %v1775
      %v1808 = vmul.f32 %v1312, %v1771
      %v1809 = vmul.f32 %v1312, %v1775
      %v1810 = vmul.f32 %v1316, %v1771
      %v1811 = vmul.f32 %v1316, %v1775
      %v1812 = vmul.f32 %v1320, %v1771
      %v1813 = vmul.f32 %v1320, %v1775
      %v1814 = vmul.f32 %v1324, %v1771
      %v1815 = vmul.f32 %v1324, %v1775
      %v1816 = vmul.f32 %v1328, %v1771
      %v1817 = vmul.f32 %v1328, %v1775
      %v1818 = vmul.f32 %v1332, %v1771
      %v1819 = vmul.f32 %v1332, %v1775
      %v1820 = vmul.f32 %v1336, %v1771
      %v1821 = vmul.f32 %v1336, %v1775
      %v1822 = vmul.f32 %v1340, %v1771
      %v1823 = vmul.f32 %v1340, %v1775
      %v1824 = vmul.f32 %v1344, %v1771
      %v1825 = vmul.f32 %v1344, %v1775
      %v1826 = vmul.f32 %v1348, %v1771
      %v1827 = vmul.f32 %v1348, %v1775
      %v1828 = vmul.f32 %v1352, %v1771
      %v1829 = vmul.f32 %v1352, %v1775
      %v1830 = vmul.f32 %v1356, %v1771
      %v1831 = vmul.f32 %v1356, %v1775
      %v1832 = vmul.f32 %v1360, %v1771
      %v1833 = vmul.f32 %v1360, %v1775
      %v1834 = vmul.f32 %v1364, %v1771
      %v1835 = vmul.f32 %v1364, %v1775
      %v1836 = vmul.f32 %v1368, %v1771
      %v1837 = vmul.f32 %v1368, %v1775
      %v1838 = vmul.f32 %v1372, %v1771
      %v1839 = vmul.f32 %v1372, %v1775
      %v1840 = vmul.f32 %v1376, %v1771
      %v1841 = vmul.f32 %v1376, %v1775
      %v1842 = vmul.f32 %v1380, %v1771
      %v1843 = vmul.f32 %v1380, %v1775
      %v1844 = vmul.f32 %v1384, %v1771
      %v1845 = vmul.f32 %v1384, %v1775
      %v1846 = vmul.f32 %v1388, %v1771
      %v1847 = vmul.f32 %v1388, %v1775
      %v1848 = vmul.f32 %v1392, %v1771
      %v1849 = vmul.f32 %v1392, %v1775
      %v1850 = vmul.f32 %v1396, %v1771
      %v1851 = vmul.f32 %v1396, %v1775
      %v1852 = vmul.f32 %v1400, %v1771
      %v1853 = vmul.f32 %v1400, %v1775
      %v1854 = vmul.f32 %v1404, %v1771
      %v1855 = vmul.f32 %v1404, %v1775
      %v1856 = vmul.f32 %v1408, %v1771
      %v1857 = vmul.f32 %v1408, %v1775
      %v1858 = vmul.f32 %v1412, %v1771
      %v1859 = vmul.f32 %v1412, %v1775
      %v1860 = vmul.f32 %v1416, %v1771
      %v1861 = vmul.f32 %v1416, %v1775
      %v1862 = vmul.f32 %v1420, %v1771
      %v1863 = vmul.f32 %v1420, %v1775
      %v1864 = vmul.f32 %v1424, %v1771
      %v1865 = vmul.f32 %v1424, %v1775
      %v1866 = vmul.f32 %v1428, %v1771
      %v1867 = vmul.f32 %v1428, %v1775
      %v1868 = vmul.f32 %v1432, %v1771
      %v1869 = vmul.f32 %v1432, %v1775
      %v1870 = vmul.f32 %v1436, %v1771
      %v1871 = vmul.f32 %v1436, %v1775
      %v1872 = vmul.f32 %v1440, %v1771
      %v1873 = vmul.f32 %v1440, %v1775
      %v1874 = vmul.f32 %v1444, %v1771
      %v1875 = vmul.f32 %v1444, %v1775
      %v1876 = vmul.f32 %v1448, %v1771
      %v1877 = vmul.f32 %v1448, %v1775
      %v1878 = vmul.f32 %v1452, %v1771
      %v1879 = vmul.f32 %v1452, %v1775
      %v1880 = vmul.f32 %v1456, %v1771
      %v1881 = vmul.f32 %v1456, %v1775
      %v1882 = vmul.f32 %v1460, %v1771
      %v1883 = vmul.f32 %v1460, %v1775
      %v1884 = vmul.f32 %v1464, %v1771
      %v1885 = vmul.f32 %v1464, %v1775
      %v1886 = vmul.f32 %v1468, %v1771
      %v1887 = vmul.f32 %v1468, %v1775
      %v1888 = vmul.f32 %v1472, %v1771
      %v1889 = vmul.f32 %v1472, %v1775
      %v1890 = vmul.f32 %v1476, %v1771
      %v1891 = vmul.f32 %v1476, %v1775
      %v1892 = vmul.f32 %v1480, %v1771
      %v1893 = vmul.f32 %v1480, %v1775
      %v1894 = vmul.f32 %v1484, %v1771
      %v1895 = vmul.f32 %v1484, %v1775
      %v1896 = vmul.f32 %v1488, %v1771
      %v1897 = vmul.f32 %v1488, %v1775
      %v1898 = vmul.f32 %v1492, %v1771
      %v1899 = vmul.f32 %v1492, %v1775
      %v1900 = vmul.f32 %v1496, %v1771
      %v1901 = vmul.f32 %v1496, %v1775
      %v1902 = vmul.f32 %v1500, %v1771
      %v1903 = vmul.f32 %v1500, %v1775
      %v1904 = vmul.f32 %v1504, %v1771
      %v1905 = vmul.f32 %v1504, %v1775
      %v1906 = vmul.f32 %v1508, %v1771
      %v1907 = vmul.f32 %v1508, %v1775
      %v1908 = vmul.f32 %v1512, %v1771
      %v1909 = vmul.f32 %v1512, %v1775
      %v1910 = vmul.f32 %v1516, %v1771
      %v1911 = vmul.f32 %v1516, %v1775
      %v1912 = vmul.f32 %v1520, %v1771
      %v1913 = vmul.f32 %v1520, %v1775
      %v1914 = vmul.f32 %v1524, %v1771
      %v1915 = vmul.f32 %v1524, %v1775
      %v1916 = vmul.f32 %v1528, %v1771
      %v1917 = vmul.f32 %v1528, %v1775
      %v1918 = vmul.f32 %v1532, %v1771
      %v1919 = vmul.f32 %v1532, %v1775
      %v1920 = vmul.f32 %v1536, %v1771
      %v1921 = vmul.f32 %v1536, %v1775
      %v1922 = vmul.f32 %v1540, %v1771
      %v1923 = vmul.f32 %v1540, %v1775
      %v1924 = vmul.f32 %v1544, %v1771
      %v1925 = vmul.f32 %v1544, %v1775
      %v1926 = vmul.f32 %v1548, %v1771
      %v1927 = vmul.f32 %v1548, %v1775
      %v1928 = vmul.f32 %v1552, %v1771
      %v1929 = vmul.f32 %v1552, %v1775
      %v1930 = vmul.f32 %v1556, %v1771
      %v1931 = vmul.f32 %v1556, %v1775
      %v1932 = vmul.f32 %v1560, %v1771
      %v1933 = vmul.f32 %v1560, %v1775
      %v1934 = vmul.f32 %v1564, %v1771
      %v1935 = vmul.f32 %v1564, %v1775
      %v1936 = vmul.f32 %v1568, %v1771
      %v1937 = vmul.f32 %v1568, %v1775
      %v1938 = vmul.f32 %v1572, %v1771
      %v1939 = vmul.f32 %v1572, %v1775
      %v1940 = vmul.f32 %v1576, %v1771
      %v1941 = vmul.f32 %v1576, %v1775
      %v1942 = vmul.f32 %v1580, %v1771
      %v1943 = vmul.f32 %v1580, %v1775
      %v1944 = vmul.f32 %v1584, %v1771
      %v1945 = vmul.f32 %v1584, %v1775
      %v1946 = vmul.f32 %v1588, %v1771
      %v1947 = vmul.f32 %v1588, %v1775
      %v1948 = vmul.f32 %v1592, %v1771
      %v1949 = vmul.f32 %v1592, %v1775
      %v1950 = vmul.f32 %v1596, %v1771
      %v1951 = vmul.f32 %v1596, %v1775
      %v1952 = vmul.f32 %v1600, %v1771
      %v1953 = vmul.f32 %v1600, %v1775
      %v1954 = vmul.f32 %v1604, %v1771
      %v1955 = vmul.f32 %v1604, %v1775
      %v1956 = vmul.f32 %v1608, %v1771
      %v1957 = vmul.f32 %v1608, %v1775
      %v1958 = vmul.f32 %v1612, %v1771
      %v1959 = vmul.f32 %v1612, %v1775
      %v1960 = vmul.f32 %v1616, %v1771
      %v1961 = vmul.f32 %v1616, %v1775
      %v1962 = vmul.f32 %v1620, %v1771
      %v1963 = vmul.f32 %v1620, %v1775
      %v1964 = vmul.f32 %v1624, %v1771
      %v1965 = vmul.f32 %v1624, %v1775
      %v1966 = vmul.f32 %v1628, %v1771
      %v1967 = vmul.f32 %v1628, %v1775
      %v1968 = vmul.f32 %v1632, %v1771
      %v1969 = vmul.f32 %v1632, %v1775
      %v1970 = vmul.f32 %v1636, %v1771
      %v1971 = vmul.f32 %v1636, %v1775
      %v1972 = vmul.f32 %v1640, %v1771
      %v1973 = vmul.f32 %v1640, %v1775
      %v1974 = vmul.f32 %v1644, %v1771
      %v1975 = vmul.f32 %v1644, %v1775
      %v1976 = vmul.f32 %v1648, %v1771
      %v1977 = vmul.f32 %v1648, %v1775
      %v1978 = vmul.f32 %v1652, %v1771
      %v1979 = vmul.f32 %v1652, %v1775
      %v1980 = vmul.f32 %v1656, %v1771
      %v1981 = vmul.f32 %v1656, %v1775
      %v1982 = vmul.f32 %v1660, %v1771
      %v1983 = vmul.f32 %v1660, %v1775
      %v1984 = vmul.f32 %v1664, %v1771
      %v1985 = vmul.f32 %v1664, %v1775
      %v1986 = vmul.f32 %v1668, %v1771
      %v1987 = vmul.f32 %v1668, %v1775
      %v1988 = vmul.f32 %v1672, %v1771
      %v1989 = vmul.f32 %v1672, %v1775
      %v1990 = vmul.f32 %v1676, %v1771
      %v1991 = vmul.f32 %v1676, %v1775
      %v1992 = vmul.f32 %v1680, %v1771
      %v1993 = vmul.f32 %v1680, %v1775
      %v1994 = vmul.f32 %v1684, %v1771
      %v1995 = vmul.f32 %v1684, %v1775
      %v1996 = vmul.f32 %v1688, %v1771
      %v1997 = vmul.f32 %v1688, %v1775
      %v1998 = vmul.f32 %v1692, %v1771
      %v1999 = vmul.f32 %v1692, %v1775
      %v2000 = vmul.f32 %v1696, %v1771
      %v2001 = vmul.f32 %v1696, %v1775
      %v2002 = vmul.f32 %v1700, %v1771
      %v2003 = vmul.f32 %v1700, %v1775
      %v2004 = vmul.f32 %v1704, %v1771
      %v2005 = vmul.f32 %v1704, %v1775
      %v2006 = vmul.f32 %v1708, %v1771
      %v2007 = vmul.f32 %v1708, %v1775
      %v2008 = vmul.f32 %v1712, %v1771
      %v2009 = vmul.f32 %v1712, %v1775
      %v2010 = vmul.f32 %v1716, %v1771
      %v2011 = vmul.f32 %v1716, %v1775
      %v2012 = vmul.f32 %v1720, %v1771
      %v2013 = vmul.f32 %v1720, %v1775
      %v2014 = vmul.f32 %v1724, %v1771
      %v2015 = vmul.f32 %v1724, %v1775
      %v2016 = vmul.f32 %v1728, %v1771
      %v2017 = vmul.f32 %v1728, %v1775
      %v2018 = vmul.f32 %v1732, %v1771
      %v2019 = vmul.f32 %v1732, %v1775
      %v2020 = vmul.f32 %v1736, %v1771
      %v2021 = vmul.f32 %v1736, %v1775
      %v2022 = vmul.f32 %v1740, %v1771
      %v2023 = vmul.f32 %v1740, %v1775
      %v2024 = vmul.f32 %v1744, %v1771
      %v2025 = vmul.f32 %v1744, %v1775
      %v2026 = vmul.f32 %v1748, %v1771
      %v2027 = vmul.f32 %v1748, %v1775
      %v2028 = vmul.f32 %v1752, %v1771
      %v2029 = vmul.f32 %v1752, %v1775
      %v2030 = vmul.f32 %v1756, %v1771
      %v2031 = vmul.f32 %v1756, %v1775
      %v2032 = vadd.f32 %v990, %v1776
      %v2033 = vadd.f32 %v991, %v1777
      %v2034 = vadd.f32 %v992, %v1778
      %v2035 = vadd.f32 %v993, %v1779
      %v2036 = vadd.f32 %v994, %v1780
      %v2037 = vadd.f32 %v995, %v1781
      %v2038 = vadd.f32 %v996, %v1782
      %v2039 = vadd.f32 %v997, %v1783
      %v2040 = vadd.f32 %v998, %v1784
      %v2041 = vadd.f32 %v999, %v1785
      %v2042 = vadd.f32 %v1000, %v1786
      %v2043 = vadd.f32 %v1001, %v1787
      %v2044 = vadd.f32 %v1002, %v1788
      %v2045 = vadd.f32 %v1003, %v1789
      %v2046 = vadd.f32 %v1004, %v1790
      %v2047 = vadd.f32 %v1005, %v1791
      %v2048 = vadd.f32 %v1006, %v1792
      %v2049 = vadd.f32 %v1007, %v1793
      %v2050 = vadd.f32 %v1008, %v1794
      %v2051 = vadd.f32 %v1009, %v1795
      %v2052 = vadd.f32 %v1010, %v1796
      %v2053 = vadd.f32 %v1011, %v1797
      %v2054 = vadd.f32 %v1012, %v1798
      %v2055 = vadd.f32 %v1013, %v1799
      %v2056 = vadd.f32 %v1014, %v1800
      %v2057 = vadd.f32 %v1015, %v1801
      %v2058 = vadd.f32 %v1016, %v1802
      %v2059 = vadd.f32 %v1017, %v1803
      %v2060 = vadd.f32 %v1018, %v1804
      %v2061 = vadd.f32 %v1019, %v1805
      %v2062 = vadd.f32 %v1020, %v1806
      %v2063 = vadd.f32 %v1021, %v1807
      %v2064 = vadd.f32 %v1022, %v1808
      %v2065 = vadd.f32 %v1023, %v1809
      %v2066 = vadd.f32 %v1024, %v1810
      %v2067 = vadd.f32 %v1025, %v1811
      %v2068 = vadd.f32 %v1026, %v1812
      %v2069 = vadd.f32 %v1027, %v1813
      %v2070 = vadd.f32 %v1028, %v1814
      %v2071 = vadd.f32 %v1029, %v1815
      %v2072 = vadd.f32 %v1030, %v1816
      %v2073 = vadd.f32 %v1031, %v1817
      %v2074 = vadd.f32 %v1032, %v1818
      %v2075 = vadd.f32 %v1033, %v1819
      %v2076 = vadd.f32 %v1034, %v1820
      %v2077 = vadd.f32 %v1035, %v1821
      %v2078 = vadd.f32 %v1036, %v1822
      %v2079 = vadd.f32 %v1037, %v1823
      %v2080 = vadd.f32 %v1038, %v1824
      %v2081 = vadd.f32 %v1039, %v1825
      %v2082 = vadd.f32 %v1040, %v1826
      %v2083 = vadd.f32 %v1041, %v1827
      %v2084 = vadd.f32 %v1042, %v1828
      %v2085 = vadd.f32 %v1043, %v1829
      %v2086 = vadd.f32 %v1044, %v1830
      %v2087 = vadd.f32 %v1045, %v1831
      %v2088 = vadd.f32 %v1046, %v1832
      %v2089 = vadd.f32 %v1047, %v1833
      %v2090 = vadd.f32 %v1048, %v1834
      %v2091 = vadd.f32 %v1049, %v1835
      %v2092 = vadd.f32 %v1050, %v1836
      %v2093 = vadd.f32 %v1051, %v1837
      %v2094 = vadd.f32 %v1052, %v1838
      %v2095 = vadd.f32 %v1053, %v1839
      %v2096 = vadd.f32 %v1054, %v1840
      %v2097 = vadd.f32 %v1055, %v1841
      %v2098 = vadd.f32 %v1056, %v1842
      %v2099 = vadd.f32 %v1057, %v1843
      %v2100 = vadd.f32 %v1058, %v1844
      %v2101 = vadd.f32 %v1059, %v1845
      %v2102 = vadd.f32 %v1060, %v1846
      %v2103 = vadd.f32 %v1061, %v1847
      %v2104 = vadd.f32 %v1062, %v1848
      %v2105 = vadd.f32 %v1063, %v1849
      %v2106 = vadd.f32 %v1064, %v1850
      %v2107 = vadd.f32 %v1065, %v1851
      %v2108 = vadd.f32 %v1066, %v1852
      %v2109 = vadd.f32 %v1067, %v1853
      %v2110 = vadd.f32 %v1068, %v1854
      %v2111 = vadd.f32 %v1069, %v1855
      %v2112 = vadd.f32 %v1070, %v1856
      %v2113 = vadd.f32 %v1071, %v1857
      %v2114 = vadd.f32 %v1072, %v1858
      %v2115 = vadd.f32 %v1073, %v1859
      %v2116 = vadd.f32 %v1074, %v1860
      %v2117 = vadd.f32 %v1075, %v1861
      %v2118 = vadd.f32 %v1076, %v1862
      %v2119 = vadd.f32 %v1077, %v1863
      %v2120 = vadd.f32 %v1078, %v1864
      %v2121 = vadd.f32 %v1079, %v1865
      %v2122 = vadd.f32 %v1080, %v1866
      %v2123 = vadd.f32 %v1081, %v1867
      %v2124 = vadd.f32 %v1082, %v1868
      %v2125 = vadd.f32 %v1083, %v1869
      %v2126 = vadd.f32 %v1084, %v1870
      %v2127 = vadd.f32 %v1085, %v1871
      %v2128 = vadd.f32 %v1086, %v1872
      %v2129 = vadd.f32 %v1087, %v1873
      %v2130 = vadd.f32 %v1088, %v1874
      %v2131 = vadd.f32 %v1089, %v1875
      %v2132 = vadd.f32 %v1090, %v1876
      %v2133 = vadd.f32 %v1091, %v1877
      %v2134 = vadd.f32 %v1092, %v1878
      %v2135 = vadd.f32 %v1093, %v1879
      %v2136 = vadd.f32 %v1094, %v1880
      %v2137 = vadd.f32 %v1095, %v1881
      %v2138 = vadd.f32 %v1096, %v1882
      %v2139 = vadd.f32 %v1097, %v1883
      %v2140 = vadd.f32 %v1098, %v1884
      %v2141 = vadd.f32 %v1099, %v1885
      %v2142 = vadd.f32 %v1100, %v1886
      %v2143 = vadd.f32 %v1101, %v1887
      %v2144 = vadd.f32 %v1102, %v1888
      %v2145 = vadd.f32 %v1103, %v1889
      %v2146 = vadd.f32 %v1104, %v1890
      %v2147 = vadd.f32 %v1105, %v1891
      %v2148 = vadd.f32 %v1106, %v1892
      %v2149 = vadd.f32 %v1107, %v1893
      %v2150 = vadd.f32 %v1108, %v1894
      %v2151 = vadd.f32 %v1109, %v1895
      %v2152 = vadd.f32 %v1110, %v1896
      %v2153 = vadd.f32 %v1111, %v1897
      %v2154 = vadd.f32 %v1112, %v1898
      %v2155 = vadd.f32 %v1113, %v1899
      %v2156 = vadd.f32 %v1114, %v1900
      %v2157 = vadd.f32 %v1115, %v1901
      %v2158 = vadd.f32 %v1116, %v1902
      %v2159 = vadd.f32 %v1117, %v1903
      %v2160 = vadd.f32 %v1118, %v1904
      %v2161 = vadd.f32 %v1119, %v1905
      %v2162 = vadd.f32 %v1120, %v1906
      %v2163 = vadd.f32 %v1121, %v1907
      %v2164 = vadd.f32 %v1122, %v1908
      %v2165 = vadd.f32 %v1123, %v1909
      %v2166 = vadd.f32 %v1124, %v1910
      %v2167 = vadd.f32 %v1125, %v1911
      %v2168 = vadd.f32 %v1126, %v1912
      %v2169 = vadd.f32 %v1127, %v1913
      %v2170 = vadd.f32 %v1128, %v1914
      %v2171 = vadd.f32 %v1129, %v1915
      %v2172 = vadd.f32 %v1130, %v1916
      %v2173 = vadd.f32 %v1131, %v1917
      %v2174 = vadd.f32 %v1132, %v1918
      %v2175 = vadd.f32 %v1133, %v1919
      %v2176 = vadd.f32 %v1134, %v1920
      %v2177 = vadd.f32 %v1135, %v1921
      %v2178 = vadd.f32 %v1136, %v1922
      %v2179 = vadd.f32 %v1137, %v1923
      %v2180 = vadd.f32 %v1138, %v1924
      %v2181 = vadd.f32 %v1139, %v1925
      %v2182 = vadd.f32 %v1140, %v1926
      %v2183 = vadd.f32 %v1141, %v1927
      %v2184 = vadd.f32 %v1142, %v1928
      %v2185 = vadd.f32 %v1143, %v1929
      %v2186 = vadd.f32 %v1144, %v1930
      %v2187 = vadd.f32 %v1145, %v1931
      %v2188 = vadd.f32 %v1146, %v1932
      %v2189 = vadd.f32 %v1147, %v1933
      %v2190 = vadd.f32 %v1148, %v1934
      %v2191 = vadd.f32 %v1149, %v1935
      %v2192 = vadd.f32 %v1150, %v1936
      %v2193 = vadd.f32 %v1151, %v1937
      %v2194 = vadd.f32 %v1152, %v1938
      %v2195 = vadd.f32 %v1153, %v1939
      %v2196 = vadd.f32 %v1154, %v1940
      %v2197 = vadd.f32 %v1155, %v1941
      %v2198 = vadd.f32 %v1156, %v1942
      %v2199 = vadd.f32 %v1157, %v1943
      %v2200 = vadd.f32 %v1158, %v1944
      %v2201 = vadd.f32 %v1159, %v1945
      %v2202 = vadd.f32 %v1160, %v1946
      %v2203 = vadd.f32 %v1161, %v1947
      %v2204 = vadd.f32 %v1162, %v1948
      %v2205 = vadd.f32 %v1163, %v1949
      %v2206 = vadd.f32 %v1164, %v1950
      %v2207 = vadd.f32 %v1165, %v1951
      %v2208 = vadd.f32 %v1166, %v1952
      %v2209 = vadd.f32 %v1167, %v1953
      %v2210 = vadd.f32 %v1168, %v1954
      %v2211 = vadd.f32 %v1169, %v1955
      %v2212 = vadd.f32 %v1170, %v1956
      %v2213 = vadd.f32 %v1171, %v1957
      %v2214 = vadd.f32 %v1172, %v1958
      %v2215 = vadd.f32 %v1173, %v1959
      %v2216 = vadd.f32 %v1174, %v1960
      %v2217 = vadd.f32 %v1175, %v1961
      %v2218 = vadd.f32 %v1176, %v1962
      %v2219 = vadd.f32 %v1177, %v1963
      %v2220 = vadd.f32 %v1178, %v1964
      %v2221 = vadd.f32 %v1179, %v1965
      %v2222 = vadd.f32 %v1180, %v1966
      %v2223 = vadd.f32 %v1181, %v1967
      %v2224 = vadd.f32 %v1182, %v1968
      %v2225 = vadd.f32 %v1183, %v1969
      %v2226 = vadd.f32 %v1184, %v1970
      %v2227 = vadd.f32 %v1185, %v1971
      %v2228 = vadd.f32 %v1186, %v1972
      %v2229 = vadd.f32 %v1187, %v1973
      %v2230 = vadd.f32 %v1188, %v1974
      %v2231 = vadd.f32 %v1189, %v1975
      %v2232 = vadd.f32 %v1190, %v1976
      %v2233 = vadd.f32 %v1191, %v1977
      %v2234 = vadd.f32 %v1192, %v1978
      %v2235 = vadd.f32 %v1193, %v1979
      %v2236 = vadd.f32 %v1194, %v1980
      %v2237 = vadd.f32 %v1195, %v1981
      %v2238 = vadd.f32 %v1196, %v1982
      %v2239 = vadd.f32 %v1197, %v1983
      %v2240 = vadd.f32 %v1198, %v1984
      %v2241 = vadd.f32 %v1199, %v1985
      %v2242 = vadd.f32 %v1200, %v1986
      %v2243 = vadd.f32 %v1201, %v1987
      %v2244 = vadd.f32 %v1202, %v1988
      %v2245 = vadd.f32 %v1203, %v1989
      %v2246 = vadd.f32 %v1204, %v1990
      %v2247 = vadd.f32 %v1205, %v1991
      %v2248 = vadd.f32 %v1206, %v1992
      %v2249 = vadd.f32 %v1207, %v1993
      %v2250 = vadd.f32 %v1208, %v1994
      %v2251 = vadd.f32 %v1209, %v1995
      %v2252 = vadd.f32 %v1210, %v1996
      %v2253 = vadd.f32 %v1211, %v1997
      %v2254 = vadd.f32 %v1212, %v1998
      %v2255 = vadd.f32 %v1213, %v1999
      %v2256 = vadd.f32 %v1214, %v2000
      %v2257 = vadd.f32 %v1215, %v2001
      %v2258 = vadd.f32 %v1216, %v2002
      %v2259 = vadd.f32 %v1217, %v2003
      %v2260 = vadd.f32 %v1218, %v2004
      %v2261 = vadd.f32 %v1219, %v2005
      %v2262 = vadd.f32 %v1220, %v2006
      %v2263 = vadd.f32 %v1221, %v2007
      %v2264 = vadd.f32 %v1222, %v2008
      %v2265 = vadd.f32 %v1223, %v2009
      %v2266 = vadd.f32 %v1224, %v2010
      %v2267 = vadd.f32 %v1225, %v2011
      %v2268 = vadd.f32 %v1226, %v2012
      %v2269 = vadd.f32 %v1227, %v2013
      %v2270 = vadd.f32 %v1228, %v2014
      %v2271 = vadd.f32 %v1229, %v2015
      %v2272 = vadd.f32 %v1230, %v2016
      %v2273 = vadd.f32 %v1231, %v2017
      %v2274 = vadd.f32 %v1232, %v2018
      %v2275 = vadd.f32 %v1233, %v2019
      %v2276 = vadd.f32 %v1234, %v2020
      %v2277 = vadd.f32 %v1235, %v2021
      %v2278 = vadd.f32 %v1236, %v2022
      %v2279 = vadd.f32 %v1237, %v2023
      %v2280 = vadd.f32 %v1238, %v2024
      %v2281 = vadd.f32 %v1239, %v2025
      %v2282 = vadd.f32 %v1240, %v2026
      %v2283 = vadd.f32 %v1241, %v2027
      %v2284 = vadd.f32 %v1242, %v2028
      %v2285 = vadd.f32 %v1243, %v2029
      %v2286 = vadd.f32 %v1244, %v2030
      %v2287 = vadd.f32 %v1245, %v2031
      %v2288 = vmax.f32 %v2032, 0.0
      %v2289 = vmax.f32 %v2033, 0.0
      %v2290 = vmax.f32 %v2034, 0.0
      %v2291 = vmax.f32 %v2035, 0.0
      %v2292 = vmax.f32 %v2036, 0.0
      %v2293 = vmax.f32 %v2037, 0.0
      %v2294 = vmax.f32 %v2038, 0.0
      %v2295 = vmax.f32 %v2039, 0.0
      %v2296 = vmax.f32 %v2040, 0.0
      %v2297 = vmax.f32 %v2041, 0.0
      %v2298 = vmax.f32 %v2042, 0.0
      %v2299 = vmax.f32 %v2043, 0.0
      %v2300 = vmax.f32 %v2044, 0.0
      %v2301 = vmax.f32 %v2045, 0.0
      %v2302 = vmax.f32 %v2046, 0.0
      %v2303 = vmax.f32 %v2047, 0.0
      %v2304 = vmax.f32 %v2048, 0.0
      %v2305 = vmax.f32 %v2049, 0.0
      %v2306 = vmax.f32 %v2050, 0.0
      %v2307 = vmax.f32 %v2051, 0.0
      %v2308 = vmax.f32 %v2052, 0.0
      %v2309 = vmax.f32 %v2053, 0.0
      %v2310 = vmax.f32 %v2054, 0.0
      %v2311 = vmax.f32 %v2055, 0.0
      %v2312 = vmax.f32 %v2056, 0.0
      %v2313 = vmax.f32 %v2057, 0.0
      %v2314 = vmax.f32 %v2058, 0.0
      %v2315 = vmax.f32 %v2059, 0.0
      %v2316 = vmax.f32 %v2060, 0.0
      %v2317 = vmax.f32 %v2061, 0.0
      %v2318 = vmax.f32 %v2062, 0.0
      %v2319 = vmax.f32 %v2063, 0.0
      %v2320 = vmax.f32 %v2064, 0.0
      %v2321 = vmax.f32 %v2065, 0.0
      %v2322 = vmax.f32 %v2066, 0.0
      %v2323 = vmax.f32 %v2067, 0.0
      %v2324 = vmax.f32 %v2068, 0.0
      %v2325 = vmax.f32 %v2069, 0.0
      %v2326 = vmax.f32 %v2070, 0.0
      %v2327 = vmax.f32 %v2071, 0.0
      %v2328 = vmax.f32 %v2072, 0.0
      %v2329 = vmax.f32 %v2073, 0.0
      %v2330 = vmax.f32 %v2074, 0.0
      %v2331 = vmax.f32 %v2075, 0.0
      %v2332 = vmax.f32 %v2076, 0.0
      %v2333 = vmax.f32 %v2077, 0.0
      %v2334 = vmax.f32 %v2078, 0.0
      %v2335 = vmax.f32 %v2079, 0.0
      %v2336 = vmax.f32 %v2080, 0.0
      %v2337 = vmax.f32 %v2081, 0.0
      %v2338 = vmax.f32 %v2082, 0.0
      %v2339 = vmax.f32 %v2083, 0.0
      %v2340 = vmax.f32 %v2084, 0.0
      %v2341 = vmax.f32 %v2085, 0.0
      %v2342 = vmax.f32 %v2086, 0.0
      %v2343 = vmax.f32 %v2087, 0.0
      %v2344 = vmax.f32 %v2088, 0.0
      %v2345 = vmax.f32 %v2089, 0.0
      %v2346 = vmax.f32 %v2090, 0.0
      %v2347 = vmax.f32 %v2091, 0.0
      %v2348 = vmax.f32 %v2092, 0.0
      %v2349 = vmax.f32 %v2093, 0.0
      %v2350 = vmax.f32 %v2094, 0.0
      %v2351 = vmax.f32 %v2095, 0.0
      %v2352 = vmax.f32 %v2096, 0.0
      %v2353 = vmax.f32 %v2097, 0.0
      %v2354 = vmax.f32 %v2098, 0.0
      %v2355 = vmax.f32 %v2099, 0.0
      %v2356 = vmax.f32 %v2100, 0.0
      %v2357 = vmax.f32 %v2101, 0.0
      %v2358 = vmax.f32 %v2102, 0.0
      %v2359 = vmax.f32 %v2103, 0.0
      %v2360 = vmax.f32 %v2104, 0.0
      %v2361 = vmax.f32 %v2105, 0.0
      %v2362 = vmax.f32 %v2106, 0.0
      %v2363 = vmax.f32 %v2107, 0.0
      %v2364 = vmax.f32 %v2108, 0.0
      %v2365 = vmax.f32 %v2109, 0.0
      %v2366 = vmax.f32 %v2110, 0.0
      %v2367 = vmax.f32 %v2111, 0.0
      %v2368 = vmax.f32 %v2112, 0.0
      %v2369 = vmax.f32 %v2113, 0.0
      %v2370 = vmax.f32 %v2114, 0.0
      %v2371 = vmax.f32 %v2115, 0.0
      %v2372 = vmax.f32 %v2116, 0.0
      %v2373 = vmax.f32 %v2117, 0.0
      %v2374 = vmax.f32 %v2118, 0.0
      %v2375 = vmax.f32 %v2119, 0.0
      %v2376 = vmax.f32 %v2120, 0.0
      %v2377 = vmax.f32 %v2121, 0.0
      %v2378 = vmax.f32 %v2122, 0.0
      %v2379 = vmax.f32 %v2123, 0.0
      %v2380 = vmax.f32 %v2124, 0.0
      %v2381 = vmax.f32 %v2125, 0.0
      %v2382 = vmax.f32 %v2126, 0.0
      %v2383 = vmax.f32 %v2127, 0.0
      %v2384 = vmax.f32 %v2128, 0.0
      %v2385 = vmax.f32 %v2129, 0.0
      %v2386 = vmax.f32 %v2130, 0.0
      %v2387 = vmax.f32 %v2131, 0.0
      %v2388 = vmax.f32 %v2132, 0.0
      %v2389 = vmax.f32 %v2133, 0.0
      %v2390 = vmax.f32 %v2134, 0.0
      %v2391 = vmax.f32 %v2135, 0.0
      %v2392 = vmax.f32 %v2136, 0.0
      %v2393 = vmax.f32 %v2137, 0.0
      %v2394 = vmax.f32 %v2138, 0.0
      %v2395 = vmax.f32 %v2139, 0.0
      %v2396 = vmax.f32 %v2140, 0.0
      %v2397 = vmax.f32 %v2141, 0.0
      %v2398 = vmax.f32 %v2142, 0.0
      %v2399 = vmax.f32 %v2143, 0.0
      %v2400 = vmax.f32 %v2144, 0.0
      %v2401 = vmax.f32 %v2145, 0.0
      %v2402 = vmax.f32 %v2146, 0.0
      %v2403 = vmax.f32 %v2147, 0.0
      %v2404 = vmax.f32 %v2148, 0.0
      %v2405 = vmax.f32 %v2149, 0.0
      %v2406 = vmax.f32 %v2150, 0.0
      %v2407 = vmax.f32 %v2151, 0.0
      %v2408 = vmax.f32 %v2152, 0.0
      %v2409 = vmax.f32 %v2153, 0.0
      %v2410 = vmax.f32 %v2154, 0.0
      %v2411 = vmax.f32 %v2155, 0.0
      %v2412 = vmax.f32 %v2156, 0.0
      %v2413 = vmax.f32 %v2157, 0.0
      %v2414 = vmax.f32 %v2158, 0.0
      %v2415 = vmax.f32 %v2159, 0.0
      %v2416 = vmax.f32 %v2160, 0.0
      %v2417 = vmax.f32 %v2161, 0.0
      %v2418 = vmax.f32 %v2162, 0.0
      %v2419 = vmax.f32 %v2163, 0.0
      %v2420 = vmax.f32 %v2164, 0.0
      %v2421 = vmax.f32 %v2165, 0.0
      %v2422 = vmax.f32 %v2166, 0.0
      %v2423 = vmax.f32 %v2167, 0.0
      %v2424 = vmax.f32 %v2168, 0.0
      %v2425 = vmax.f32 %v2169, 0.0
      %v2426 = vmax.f32 %v2170, 0.0
      %v2427 = vmax.f32 %v2171, 0.0
      %v2428 = vmax.f32 %v2172, 0.0
      %v2429 = vmax.f32 %v2173, 0.0
      %v2430 = vmax.f32 %v2174, 0.0
      %v2431 = vmax.f32 %v2175, 0.0
      %v2432 = vmax.f32 %v2176, 0.0
      %v2433 = vmax.f32 %v2177, 0.0
      %v2434 = vmax.f32 %v2178, 0.0
      %v2435 = vmax.f32 %v2179, 0.0
      %v2436 = vmax.f32 %v2180, 0.0
      %v2437 = vmax.f32 %v2181, 0.0
      %v2438 = vmax.f32 %v2182, 0.0
      %v2439 = vmax.f32 %v2183, 0.0
      %v2440 = vmax.f32 %v2184, 0.0
      %v2441 = vmax.f32 %v2185, 0.0
      %v2442 = vmax.f32 %v2186, 0.0
      %v2443 = vmax.f32 %v2187, 0.0
      %v2444 = vmax.f32 %v2188, 0.0
      %v2445 = vmax.f32 %v2189, 0.0
      %v2446 = vmax.f32 %v2190, 0.0
      %v2447 = vmax.f32 %v2191, 0.0
      %v2448 = vmax.f32 %v2192, 0.0
      %v2449 = vmax.f32 %v2193, 0.0
      %v2450 = vmax.f32 %v2194, 0.0
      %v2451 = vmax.f32 %v2195, 0.0
      %v2452 = vmax.f32 %v2196, 0.0
      %v2453 = vmax.f32 %v2197, 0.0
      %v2454 = vmax.f32 %v2198, 0.0
      %v2455 = vmax.f32 %v2199, 0.0
      %v2456 = vmax.f32 %v2200, 0.0
      %v2457 = vmax.f32 %v2201, 0.0
      %v2458 = vmax.f32 %v2202, 0.0
      %v2459 = vmax.f32 %v2203, 0.0
      %v2460 = vmax.f32 %v2204, 0.0
      %v2461 = vmax.f32 %v2205, 0.0
      %v2462 = vmax.f32 %v2206, 0.0
      %v2463 = vmax.f32 %v2207, 0.0
      %v2464 = vmax.f32 %v2208, 0.0
      %v2465 = vmax.f32 %v2209, 0.0
      %v2466 = vmax.f32 %v2210, 0.0
      %v2467 = vmax.f32 %v2211, 0.0
      %v2468 = vmax.f32 %v2212, 0.0
      %v2469 = vmax.f32 %v2213, 0.0
      %v2470 = vmax.f32 %v2214, 0.0
      %v2471 = vmax.f32 %v2215, 0.0
      %v2472 = vmax.f32 %v2216, 0.0
      %v2473 = vmax.f32 %v2217, 0.0
      %v2474 = vmax.f32 %v2218, 0.0
      %v2475 = vmax.f32 %v2219, 0.0
      %v2476 = vmax.f32 %v2220, 0.0
      %v2477 = vmax.f32 %v2221, 0.0
      %v2478 = vmax.f32 %v2222, 0.0
      %v2479 = vmax.f32 %v2223, 0.0
      %v2480 = vmax.f32 %v2224, 0.0
      %v2481 = vmax.f32 %v2225, 0.0
      %v2482 = vmax.f32 %v2226, 0.0
      %v2483 = vmax.f32 %v2227, 0.0
      %v2484 = vmax.f32 %v2228, 0.0
      %v2485 = vmax.f32 %v2229, 0.0
      %v2486 = vmax.f32 %v2230, 0.0
      %v2487 = vmax.f32 %v2231, 0.0
      %v2488 = vmax.f32 %v2232, 0.0
      %v2489 = vmax.f32 %v2233, 0.0
      %v2490 = vmax.f32 %v2234, 0.0
      %v2491 = vmax.f32 %v2235, 0.0
      %v2492 = vmax.f32 %v2236, 0.0
      %v2493 = vmax.f32 %v2237, 0.0
      %v2494 = vmax.f32 %v2238, 0.0
      %v2495 = vmax.f32 %v2239, 0.0
      %v2496 = vmax.f32 %v2240, 0.0
      %v2497 = vmax.f32 %v2241, 0.0
      %v2498 = vmax.f32 %v2242, 0.0
      %v2499 = vmax.f32 %v2243, 0.0
      %v2500 = vmax.f32 %v2244, 0.0
      %v2501 = vmax.f32 %v2245, 0.0
      %v2502 = vmax.f32 %v2246, 0.0
      %v2503 = vmax.f32 %v2247, 0.0
      %v2504 = vmax.f32 %v2248, 0.0
      %v2505 = vmax.f32 %v2249, 0.0
      %v2506 = vmax.f32 %v2250, 0.0
      %v2507 = vmax.f32 %v2251, 0.0
      %v2508 = vmax.f32 %v2252, 0.0
      %v2509 = vmax.f32 %v2253, 0.0
      %v2510 = vmax.f32 %v2254, 0.0
      %v2511 = vmax.f32 %v2255, 0.0
      %v2512 = vmax.f32 %v2256, 0.0
      %v2513 = vmax.f32 %v2257, 0.0
      %v2514 = vmax.f32 %v2258, 0.0
      %v2515 = vmax.f32 %v2259, 0.0
      %v2516 = vmax.f32 %v2260, 0.0
      %v2517 = vmax.f32 %v2261, 0.0
      %v2518 = vmax.f32 %v2262, 0.0
      %v2519 = vmax.f32 %v2263, 0.0
      %v2520 = vmax.f32 %v2264, 0.0
      %v2521 = vmax.f32 %v2265, 0.0
      %v2522 = vmax.f32 %v2266, 0.0
      %v2523 = vmax.f32 %v2267, 0.0
      %v2524 = vmax.f32 %v2268, 0.0
      %v2525 = vmax.f32 %v2269, 0.0
      %v2526 = vmax.f32 %v2270, 0.0
      %v2527 = vmax.f32 %v2271, 0.0
      %v2528 = vmax.f32 %v2272, 0.0
      %v2529 = vmax.f32 %v2273, 0.0
      %v2530 = vmax.f32 %v2274, 0.0
      %v2531 = vmax.f32 %v2275, 0.0
      %v2532 = vmax.f32 %v2276, 0.0
      %v2533 = vmax.f32 %v2277, 0.0
      %v2534 = vmax.f32 %v2278, 0.0
      %v2535 = vmax.f32 %v2279, 0.0
      %v2536 = vmax.f32 %v2280, 0.0
      %v2537 = vmax.f32 %v2281, 0.0
      %v2538 = vmax.f32 %v2282, 0.0
      %v2539 = vmax.f32 %v2283, 0.0
      %v2540 = vmax.f32 %v2284, 0.0
      %v2541 = vmax.f32 %v2285, 0.0
      %v2542 = vmax.f32 %v2286, 0.0
      %v2543 = vmax.f32 %v2287, 0.0
      %v2544 = vpack.c.bf16 %v2290, %v2288
      %v2545 = vpack.c.bf16 %v2291, %v2289
      %v2546 = vpack.c.bf16 %v2294, %v2292
      %v2547 = vpack.c.bf16 %v2295, %v2293
      %v2548 = vpack.c.bf16 %v2298, %v2296
      %v2549 = vpack.c.bf16 %v2299, %v2297
      %v2550 = vpack.c.bf16 %v2302, %v2300
      %v2551 = vpack.c.bf16 %v2303, %v2301
      %v2552 = vpack.c.bf16 %v2306, %v2304
      %v2553 = vpack.c.bf16 %v2307, %v2305
      %v2554 = vpack.c.bf16 %v2310, %v2308
      %v2555 = vpack.c.bf16 %v2311, %v2309
      %v2556 = vpack.c.bf16 %v2314, %v2312
      %v2557 = vpack.c.bf16 %v2315, %v2313
      %v2558 = vpack.c.bf16 %v2318, %v2316
      %v2559 = vpack.c.bf16 %v2319, %v2317
      %v2560 = vpack.c.bf16 %v2322, %v2320
      %v2561 = vpack.c.bf16 %v2323, %v2321
      %v2562 = vpack.c.bf16 %v2326, %v2324
      %v2563 = vpack.c.bf16 %v2327, %v2325
      %v2564 = vpack.c.bf16 %v2330, %v2328
      %v2565 = vpack.c.bf16 %v2331, %v2329
      %v2566 = vpack.c.bf16 %v2334, %v2332
      %v2567 = vpack.c.bf16 %v2335, %v2333
      %v2568 = vpack.c.bf16 %v2338, %v2336
      %v2569 = vpack.c.bf16 %v2339, %v2337
      %v2570 = vpack.c.bf16 %v2342, %v2340
      %v2571 = vpack.c.bf16 %v2343, %v2341
      %v2572 = vpack.c.bf16 %v2346, %v2344
      %v2573 = vpack.c.bf16 %v2347, %v2345
      %v2574 = vpack.c.bf16 %v2350, %v2348
      %v2575 = vpack.c.bf16 %v2351, %v2349
      %v2576 = vpack.c.bf16 %v2354, %v2352
      %v2577 = vpack.c.bf16 %v2355, %v2353
      %v2578 = vpack.c.bf16 %v2358, %v2356
      %v2579 = vpack.c.bf16 %v2359, %v2357
      %v2580 = vpack.c.bf16 %v2362, %v2360
      %v2581 = vpack.c.bf16 %v2363, %v2361
      %v2582 = vpack.c.bf16 %v2366, %v2364
      %v2583 = vpack.c.bf16 %v2367, %v2365
      %v2584 = vpack.c.bf16 %v2370, %v2368
      %v2585 = vpack.c.bf16 %v2371, %v2369
      %v2586 = vpack.c.bf16 %v2374, %v2372
      %v2587 = vpack.c.bf16 %v2375, %v2373
      %v2588 = vpack.c.bf16 %v2378, %v2376
      %v2589 = vpack.c.bf16 %v2379, %v2377
      %v2590 = vpack.c.bf16 %v2382, %v2380
      %v2591 = vpack.c.bf16 %v2383, %v2381
      %v2592 = vpack.c.bf16 %v2386, %v2384
      %v2593 = vpack.c.bf16 %v2387, %v2385
      %v2594 = vpack.c.bf16 %v2390, %v2388
      %v2595 = vpack.c.bf16 %v2391, %v2389
      %v2596 = vpack.c.bf16 %v2394, %v2392
      %v2597 = vpack.c.bf16 %v2395, %v2393
      %v2598 = vpack.c.bf16 %v2398, %v2396
      %v2599 = vpack.c.bf16 %v2399, %v2397
      %v2600 = vpack.c.bf16 %v2402, %v2400
      %v2601 = vpack.c.bf16 %v2403, %v2401
      %v2602 = vpack.c.bf16 %v2406, %v2404
      %v2603 = vpack.c.bf16 %v2407, %v2405
      %v2604 = vpack.c.bf16 %v2410, %v2408
      %v2605 = vpack.c.bf16 %v2411, %v2409
      %v2606 = vpack.c.bf16 %v2414, %v2412
      %v2607 = vpack.c.bf16 %v2415, %v2413
      %v2608 = vpack.c.bf16 %v2418, %v2416
      %v2609 = vpack.c.bf16 %v2419, %v2417
      %v2610 = vpack.c.bf16 %v2422, %v2420
      %v2611 = vpack.c.bf16 %v2423, %v2421
      %v2612 = vpack.c.bf16 %v2426, %v2424
      %v2613 = vpack.c.bf16 %v2427, %v2425
      %v2614 = vpack.c.bf16 %v2430, %v2428
      %v2615 = vpack.c.bf16 %v2431, %v2429
      %v2616 = vpack.c.bf16 %v2434, %v2432
      %v2617 = vpack.c.bf16 %v2435, %v2433
      %v2618 = vpack.c.bf16 %v2438, %v2436
      %v2619 = vpack.c.bf16 %v2439, %v2437
      %v2620 = vpack.c.bf16 %v2442, %v2440
      %v2621 = vpack.c.bf16 %v2443, %v2441
      %v2622 = vpack.c.bf16 %v2446, %v2444
      %v2623 = vpack.c.bf16 %v2447, %v2445
      %v2624 = vpack.c.bf16 %v2450, %v2448
      %v2625 = vpack.c.bf16 %v2451, %v2449
      %v2626 = vpack.c.bf16 %v2454, %v2452
      %v2627 = vpack.c.bf16 %v2455, %v2453
      %v2628 = vpack.c.bf16 %v2458, %v2456
      %v2629 = vpack.c.bf16 %v2459, %v2457
      %v2630 = vpack.c.bf16 %v2462, %v2460
      %v2631 = vpack.c.bf16 %v2463, %v2461
      %v2632 = vpack.c.bf16 %v2466, %v2464
      %v2633 = vpack.c.bf16 %v2467, %v2465
      %v2634 = vpack.c.bf16 %v2470, %v2468
      %v2635 = vpack.c.bf16 %v2471, %v2469
      %v2636 = vpack.c.bf16 %v2474, %v2472
      %v2637 = vpack.c.bf16 %v2475, %v2473
      %v2638 = vpack.c.bf16 %v2478, %v2476
      %v2639 = vpack.c.bf16 %v2479, %v2477
      %v2640 = vpack.c.bf16 %v2482, %v2480
      %v2641 = vpack.c.bf16 %v2483, %v2481
      %v2642 = vpack.c.bf16 %v2486, %v2484
      %v2643 = vpack.c.bf16 %v2487, %v2485
      %v2644 = vpack.c.bf16 %v2490, %v2488
      %v2645 = vpack.c.bf16 %v2491, %v2489
      %v2646 = vpack.c.bf16 %v2494, %v2492
      %v2647 = vpack.c.bf16 %v2495, %v2493
      %v2648 = vpack.c.bf16 %v2498, %v2496
      %v2649 = vpack.c.bf16 %v2499, %v2497
      %v2650 = vpack.c.bf16 %v2502, %v2500
      %v2651 = vpack.c.bf16 %v2503, %v2501
      %v2652 = vpack.c.bf16 %v2506, %v2504
      %v2653 = vpack.c.bf16 %v2507, %v2505
      %v2654 = vpack.c.bf16 %v2510, %v2508
      %v2655 = vpack.c.bf16 %v2511, %v2509
      %v2656 = vpack.c.bf16 %v2514, %v2512
      %v2657 = vpack.c.bf16 %v2515, %v2513
      %v2658 = vpack.c.bf16 %v2518, %v2516
      %v2659 = vpack.c.bf16 %v2519, %v2517
      %v2660 = vpack.c.bf16 %v2522, %v2520
      %v2661 = vpack.c.bf16 %v2523, %v2521
      %v2662 = vpack.c.bf16 %v2526, %v2524
      %v2663 = vpack.c.bf16 %v2527, %v2525
      %v2664 = vpack.c.bf16 %v2530, %v2528
      %v2665 = vpack.c.bf16 %v2531, %v2529
      %v2666 = vpack.c.bf16 %v2534, %v2532
      %v2667 = vpack.c.bf16 %v2535, %v2533
      %v2668 = vpack.c.bf16 %v2538, %v2536
      %v2669 = vpack.c.bf16 %v2539, %v2537
      %v2670 = vpack.c.bf16 %v2542, %v2540
      %v2671 = vpack.c.bf16 %v2543, %v2541
      %v2672 = vld [vmem:[%s2] sm:$0xff]
      %v2673 = vld [vmem:[%s2 + $0x8] sm:$0xff]
      %v2674 = vld [vmem:[%s2 + $0x10] sm:$0xff]
      %v2675 = vld [vmem:[%s2 + $0x18] sm:$0xff]
      %v2676 = vld [vmem:[%s2 + $0x20] sm:$0xff]
      %v2677 = vld [vmem:[%s2 + $0x28] sm:$0xff]
      %v2678 = vld [vmem:[%s2 + $0x30] sm:$0xff]
      %v2679 = vld [vmem:[%s2 + $0x38] sm:$0xff]
      %v2680 = vld [vmem:[%s2 + $0x40] sm:$0xff]
      %v2681 = vld [vmem:[%s2 + $0x48] sm:$0xff]
      %v2682 = vld [vmem:[%s2 + $0x50] sm:$0xff]
      %v2683 = vld [vmem:[%s2 + $0x58] sm:$0xff]
      %v2684 = vld [vmem:[%s2 + $0x60] sm:$0xff]
      %v2685 = vld [vmem:[%s2 + $0x68] sm:$0xff]
      %v2686 = vld [vmem:[%s2 + $0x70] sm:$0xff]
      %v2687 = vld [vmem:[%s2 + $0x78] sm:$0xff]
      %v2688 = vld [vmem:[%s2 + $0x80] sm:$0xff]
      %v2689 = vld [vmem:[%s2 + $0x88] sm:$0xff]
      %v2690 = vld [vmem:[%s2 + $0x90] sm:$0xff]
      %v2691 = vld [vmem:[%s2 + $0x98] sm:$0xff]
      %v2692 = vld [vmem:[%s2 + $0xa0] sm:$0xff]
      %v2693 = vld [vmem:[%s2 + $0xa8] sm:$0xff]
      %v2694 = vld [vmem:[%s2 + $0xb0] sm:$0xff]
      %v2695 = vld [vmem:[%s2 + $0xb8] sm:$0xff]
      %v2696 = vld [vmem:[%s2 + $0xc0] sm:$0xff]
      %v2697 = vld [vmem:[%s2 + $0xc8] sm:$0xff]
      %v2698 = vld [vmem:[%s2 + $0xd0] sm:$0xff]
      %v2699 = vld [vmem:[%s2 + $0xd8] sm:$0xff]
      %v2700 = vld [vmem:[%s2 + $0xe0] sm:$0xff]
      %v2701 = vld [vmem:[%s2 + $0xe8] sm:$0xff]
      %v2702 = vld [vmem:[%s2 + $0xf0] sm:$0xff]
      %v2703 = vld [vmem:[%s2 + $0xf8] sm:$0xff]
      %v2736 = vunpack.c.l.b16 %v2672
      %v2737 = vunpack.c.h.b16 %v2672
      %v2738 = vunpack.c.l.b16 %v2673
      %v2739 = vunpack.c.h.b16 %v2673
      %v2740 = vunpack.c.l.b16 %v2674
      %v2741 = vunpack.c.h.b16 %v2674
      %v2742 = vunpack.c.l.b16 %v2675
      %v2743 = vunpack.c.h.b16 %v2675
      %v2744 = vunpack.c.l.b16 %v2676
      %v2745 = vunpack.c.h.b16 %v2676
      %v2746 = vunpack.c.l.b16 %v2677
      %v2747 = vunpack.c.h.b16 %v2677
      %v2748 = vunpack.c.l.b16 %v2678
      %v2749 = vunpack.c.h.b16 %v2678
      %v2750 = vunpack.c.l.b16 %v2679
      %v2751 = vunpack.c.h.b16 %v2679
      %v2752 = vunpack.c.l.b16 %v2680
      %v2753 = vunpack.c.h.b16 %v2680
      %v2754 = vunpack.c.l.b16 %v2681
      %v2755 = vunpack.c.h.b16 %v2681
      %v2756 = vunpack.c.l.b16 %v2682
      %v2757 = vunpack.c.h.b16 %v2682
      %v2758 = vunpack.c.l.b16 %v2683
      %v2759 = vunpack.c.h.b16 %v2683
      %v2760 = vunpack.c.l.b16 %v2684
      %v2761 = vunpack.c.h.b16 %v2684
      %v2762 = vunpack.c.l.b16 %v2685
      %v2763 = vunpack.c.h.b16 %v2685
      %v2764 = vunpack.c.l.b16 %v2686
      %v2765 = vunpack.c.h.b16 %v2686
      %v2766 = vunpack.c.l.b16 %v2687
      %v2767 = vunpack.c.h.b16 %v2687
      %v2768 = vunpack.c.l.b16 %v2688
      %v2769 = vunpack.c.h.b16 %v2688
      %v2770 = vunpack.c.l.b16 %v2689
      %v2771 = vunpack.c.h.b16 %v2689
      %v2772 = vunpack.c.l.b16 %v2690
      %v2773 = vunpack.c.h.b16 %v2690
      %v2774 = vunpack.c.l.b16 %v2691
      %v2775 = vunpack.c.h.b16 %v2691
      %v2776 = vunpack.c.l.b16 %v2692
      %v2777 = vunpack.c.h.b16 %v2692
      %v2778 = vunpack.c.l.b16 %v2693
      %v2779 = vunpack.c.h.b16 %v2693
      %v2780 = vunpack.c.l.b16 %v2694
      %v2781 = vunpack.c.h.b16 %v2694
      %v2782 = vunpack.c.l.b16 %v2695
      %v2783 = vunpack.c.h.b16 %v2695
      %v2784 = vunpack.c.l.b16 %v2696
      %v2785 = vunpack.c.h.b16 %v2696
      %v2786 = vunpack.c.l.b16 %v2697
      %v2787 = vunpack.c.h.b16 %v2697
      %v2788 = vunpack.c.l.b16 %v2698
      %v2789 = vunpack.c.h.b16 %v2698
      %v2790 = vunpack.c.l.b16 %v2699
      %v2791 = vunpack.c.h.b16 %v2699
      %v2792 = vunpack.c.l.b16 %v2700
      %v2793 = vunpack.c.h.b16 %v2700
      %v2794 = vunpack.c.l.b16 %v2701
      %v2795 = vunpack.c.h.b16 %v2701
      %v2796 = vunpack.c.l.b16 %v2702
      %v2797 = vunpack.c.h.b16 %v2702
      %v2798 = vunpack.c.l.b16 %v2703
      %v2799 = vunpack.c.h.b16 %v2703
      %v2800 = vpack.c.b16 %v2738, %v2736
      %v2801 = vpack.c.b16 %v2739, %v2737
      %v2802 = vpack.c.b16 %v2742, %v2740
      %v2803 = vpack.c.b16 %v2743, %v2741
      %v2804 = vpack.c.b16 %v2746, %v2744
      %v2805 = vpack.c.b16 %v2747, %v2745
      %v2806 = vpack.c.b16 %v2750, %v2748
      %v2807 = vpack.c.b16 %v2751, %v2749
      %v2808 = vpack.c.b16 %v2754, %v2752
      %v2809 = vpack.c.b16 %v2755, %v2753
      %v2810 = vpack.c.b16 %v2758, %v2756
      %v2811 = vpack.c.b16 %v2759, %v2757
      %v2812 = vpack.c.b16 %v2762, %v2760
      %v2813 = vpack.c.b16 %v2763, %v2761
      %v2814 = vpack.c.b16 %v2766, %v2764
      %v2815 = vpack.c.b16 %v2767, %v2765
      %v2816 = vpack.c.b16 %v2770, %v2768
      %v2817 = vpack.c.b16 %v2771, %v2769
      %v2818 = vpack.c.b16 %v2774, %v2772
      %v2819 = vpack.c.b16 %v2775, %v2773
      %v2820 = vpack.c.b16 %v2778, %v2776
      %v2821 = vpack.c.b16 %v2779, %v2777
      %v2822 = vpack.c.b16 %v2782, %v2780
      %v2823 = vpack.c.b16 %v2783, %v2781
      %v2824 = vpack.c.b16 %v2786, %v2784
      %v2825 = vpack.c.b16 %v2787, %v2785
      %v2826 = vpack.c.b16 %v2790, %v2788
      %v2827 = vpack.c.b16 %v2791, %v2789
      %v2828 = vpack.c.b16 %v2794, %v2792
      %v2829 = vpack.c.b16 %v2795, %v2793
      %v2830 = vpack.c.b16 %v2798, %v2796
      %v2831 = vpack.c.b16 %v2799, %v2797
      %2864 = vmatprep.subr.bf16.mxu0 %v2815
      %2865 = vmatpush1.bf16.msra.mxu0 %v2814
      %2866 = vmatprep.subr.bf16.mxu0 %v2813
      %2867 = vmatpush1.bf16.msra.mxu0 %v2812
      %2868 = vmatprep.subr.bf16.mxu0 %v2811
      %2869 = vmatpush1.bf16.msra.mxu0 %v2810
      %2870 = vmatprep.subr.bf16.mxu0 %v2809
      %2871 = vmatpush1.bf16.msra.mxu0 %v2808
      %2872 = vmatprep.subr.bf16.mxu0 %v2807
      %2873 = vmatpush1.bf16.msra.mxu0 %v2806
      %2874 = vmatprep.subr.bf16.mxu0 %v2805
      %2875 = vmatpush1.bf16.msra.mxu0 %v2804
      %2876 = vmatprep.subr.bf16.mxu0 %v2803
      %2877 = vmatpush1.bf16.msra.mxu0 %v2802
      %2878 = vmatprep.subr.bf16.mxu0 %v2801
      %2879 = vmatpush1.bf16.msra.mxu0 %v2800
      %2880 = vmatprep.subr.bf16.mxu0 %v2831
      %2881 = vmatpush2.bf16.msra.mxu0 %v2830
      %2882 = vmatprep.subr.bf16.mxu0 %v2829
      %2883 = vmatpush2.bf16.msra.mxu0 %v2828
      %2884 = vmatprep.subr.bf16.mxu0 %v2827
      %2885 = vmatpush2.bf16.msra.mxu0 %v2826
      %2886 = vmatprep.subr.bf16.mxu0 %v2825
      %2887 = vmatpush2.bf16.msra.mxu0 %v2824
      %2888 = vmatprep.subr.bf16.mxu0 %v2823
      %2889 = vmatpush2.bf16.msra.mxu0 %v2822
      %2890 = vmatprep.subr.bf16.mxu0 %v2821
      %2891 = vmatpush2.bf16.msra.mxu0 %v2820
      %2892 = vmatprep.subr.bf16.mxu0 %v2819
      %2893 = vmatpush2.bf16.msra.mxu0 %v2818
      %2894 = vmatprep.subr.bf16.mxu0 %v2817
      %2895 = vmatpush2.bf16.msra.mxu0 %v2816
      %2896 = vmatprep.mubr.bf16.mxu0 %v2545
      %2897 = vmatmul.mubr.bf16.gmra.mxu0 %v2544
      %v2898 = vpop.f32.mrf.mxu0
      %v2899 = vadd.f32 0.0, %v2898
      %v2900 = vpop.f32.mrf.mxu0
      %v2901 = vadd.f32 0.0, %v2900
      %v2902 = vpop.f32.mrf.mxu0
      %v2903 = vadd.f32 0.0, %v2902
      %v2904 = vpop.f32.mrf.mxu0
      %v2905 = vadd.f32 0.0, %v2904
      %2906 = vmatprep.mubr.bf16.mxu0 %v2547
      %2907 = vmatmul.mubr.bf16.gmra.mxu0 %v2546
      %v2908 = vpop.f32.mrf.mxu0
      %v2909 = vadd.f32 0.0, %v2908
      %v2910 = vpop.f32.mrf.mxu0
      %v2911 = vadd.f32 0.0, %v2910
      %v2912 = vpop.f32.mrf.mxu0
      %v2913 = vadd.f32 0.0, %v2912
      %v2914 = vpop.f32.mrf.mxu0
      %v2915 = vadd.f32 0.0, %v2914
      %2916 = vmatprep.mubr.bf16.mxu0 %v2549
      %2917 = vmatmul.mubr.bf16.gmra.mxu0 %v2548
      %v2918 = vpop.f32.mrf.mxu0
      %v2919 = vadd.f32 0.0, %v2918
      %v2920 = vpop.f32.mrf.mxu0
      %v2921 = vadd.f32 0.0, %v2920
      %v2922 = vpop.f32.mrf.mxu0
      %v2923 = vadd.f32 0.0, %v2922
      %v2924 = vpop.f32.mrf.mxu0
      %v2925 = vadd.f32 0.0, %v2924
      %2926 = vmatprep.mubr.bf16.mxu0 %v2551
      %2927 = vmatmul.mubr.bf16.gmra.mxu0 %v2550
      %v2928 = vpop.f32.mrf.mxu0
      %v2929 = vadd.f32 0.0, %v2928
      %v2930 = vpop.f32.mrf.mxu0
      %v2931 = vadd.f32 0.0, %v2930
      %v2932 = vpop.f32.mrf.mxu0
      %v2933 = vadd.f32 0.0, %v2932
      %v2934 = vpop.f32.mrf.mxu0
      %v2935 = vadd.f32 0.0, %v2934
      %2936 = vmatprep.mubr.bf16.mxu0 %v2553
      %2937 = vmatmul.mubr.bf16.gmra.mxu0 %v2552
      %v2938 = vpop.f32.mrf.mxu0
      %v2939 = vadd.f32 0.0, %v2938
      %v2940 = vpop.f32.mrf.mxu0
      %v2941 = vadd.f32 0.0, %v2940
      %v2942 = vpop.f32.mrf.mxu0
      %v2943 = vadd.f32 0.0, %v2942
      %v2944 = vpop.f32.mrf.mxu0
      %v2945 = vadd.f32 0.0, %v2944
      %2946 = vmatprep.mubr.bf16.mxu0 %v2555
      %2947 = vmatmul.mubr.bf16.gmra.mxu0 %v2554
      %v2948 = vpop.f32.mrf.mxu0
      %v2949 = vadd.f32 0.0, %v2948
      %v2950 = vpop.f32.mrf.mxu0
      %v2951 = vadd.f32 0.0, %v2950
      %v2952 = vpop.f32.mrf.mxu0
      %v2953 = vadd.f32 0.0, %v2952
      %v2954 = vpop.f32.mrf.mxu0
      %v2955 = vadd.f32 0.0, %v2954
      %2956 = vmatprep.mubr.bf16.mxu0 %v2557
      %2957 = vmatmul.mubr.bf16.gmra.mxu0 %v2556
      %v2958 = vpop.f32.mrf.mxu0
      %v2959 = vadd.f32 0.0, %v2958
      %v2960 = vpop.f32.mrf.mxu0
      %v2961 = vadd.f32 0.0, %v2960
      %v2962 = vpop.f32.mrf.mxu0
      %v2963 = vadd.f32 0.0, %v2962
      %v2964 = vpop.f32.mrf.mxu0
      %v2965 = vadd.f32 0.0, %v2964
      %2966 = vmatprep.mubr.bf16.mxu0 %v2559
      %2967 = vmatmul.mubr.bf16.gmra.mxu0 %v2558
      %v2968 = vpop.f32.mrf.mxu0
      %v2969 = vadd.f32 0.0, %v2968
      %v2970 = vpop.f32.mrf.mxu0
      %v2971 = vadd.f32 0.0, %v2970
      %v2972 = vpop.f32.mrf.mxu0
      %v2973 = vadd.f32 0.0, %v2972
      %v2974 = vpop.f32.mrf.mxu0
      %v2975 = vadd.f32 0.0, %v2974
      %2976 = vmatprep.mubr.bf16.mxu0 %v2561
      %2977 = vmatmul.mubr.bf16.gmra.mxu0 %v2560
      %v2978 = vpop.f32.mrf.mxu0
      %v2979 = vadd.f32 0.0, %v2978
      %v2980 = vpop.f32.mrf.mxu0
      %v2981 = vadd.f32 0.0, %v2980
      %v2982 = vpop.f32.mrf.mxu0
      %v2983 = vadd.f32 0.0, %v2982
      %v2984 = vpop.f32.mrf.mxu0
      %v2985 = vadd.f32 0.0, %v2984
      %2986 = vmatprep.mubr.bf16.mxu0 %v2563
      %2987 = vmatmul.mubr.bf16.gmra.mxu0 %v2562
      %v2988 = vpop.f32.mrf.mxu0
      %v2989 = vadd.f32 0.0, %v2988
      %v2990 = vpop.f32.mrf.mxu0
      %v2991 = vadd.f32 0.0, %v2990
      %v2992 = vpop.f32.mrf.mxu0
      %v2993 = vadd.f32 0.0, %v2992
      %v2994 = vpop.f32.mrf.mxu0
      %v2995 = vadd.f32 0.0, %v2994
      %2996 = vmatprep.mubr.bf16.mxu0 %v2565
      %2997 = vmatmul.mubr.bf16.gmra.mxu0 %v2564
      %v2998 = vpop.f32.mrf.mxu0
      %v2999 = vadd.f32 0.0, %v2998
      %v3000 = vpop.f32.mrf.mxu0
      %v3001 = vadd.f32 0.0, %v3000
      %v3002 = vpop.f32.mrf.mxu0
      %v3003 = vadd.f32 0.0, %v3002
      %v3004 = vpop.f32.mrf.mxu0
      %v3005 = vadd.f32 0.0, %v3004
      %3006 = vmatprep.mubr.bf16.mxu0 %v2567
      %3007 = vmatmul.mubr.bf16.gmra.mxu0 %v2566
      %v3008 = vpop.f32.mrf.mxu0
      %v3009 = vadd.f32 0.0, %v3008
      %v3010 = vpop.f32.mrf.mxu0
      %v3011 = vadd.f32 0.0, %v3010
      %v3012 = vpop.f32.mrf.mxu0
      %v3013 = vadd.f32 0.0, %v3012
      %v3014 = vpop.f32.mrf.mxu0
      %v3015 = vadd.f32 0.0, %v3014
      %3016 = vmatprep.mubr.bf16.mxu0 %v2569
      %3017 = vmatmul.mubr.bf16.gmra.mxu0 %v2568
      %v3018 = vpop.f32.mrf.mxu0
      %v3019 = vadd.f32 0.0, %v3018
      %v3020 = vpop.f32.mrf.mxu0
      %v3021 = vadd.f32 0.0, %v3020
      %v3022 = vpop.f32.mrf.mxu0
      %v3023 = vadd.f32 0.0, %v3022
      %v3024 = vpop.f32.mrf.mxu0
      %v3025 = vadd.f32 0.0, %v3024
      %3026 = vmatprep.mubr.bf16.mxu0 %v2571
      %3027 = vmatmul.mubr.bf16.gmra.mxu0 %v2570
      %v3028 = vpop.f32.mrf.mxu0
      %v3029 = vadd.f32 0.0, %v3028
      %v3030 = vpop.f32.mrf.mxu0
      %v3031 = vadd.f32 0.0, %v3030
      %v3032 = vpop.f32.mrf.mxu0
      %v3033 = vadd.f32 0.0, %v3032
      %v3034 = vpop.f32.mrf.mxu0
      %v3035 = vadd.f32 0.0, %v3034
      %3036 = vmatprep.mubr.bf16.mxu0 %v2573
      %3037 = vmatmul.mubr.bf16.gmra.mxu0 %v2572
      %v3038 = vpop.f32.mrf.mxu0
      %v3039 = vadd.f32 0.0, %v3038
      %v3040 = vpop.f32.mrf.mxu0
      %v3041 = vadd.f32 0.0, %v3040
      %v3042 = vpop.f32.mrf.mxu0
      %v3043 = vadd.f32 0.0, %v3042
      %v3044 = vpop.f32.mrf.mxu0
      %v3045 = vadd.f32 0.0, %v3044
      %3046 = vmatprep.mubr.bf16.mxu0 %v2575
      %3047 = vmatmul.mubr.bf16.gmra.mxu0 %v2574
      %v3048 = vpop.f32.mrf.mxu0
      %v3049 = vadd.f32 0.0, %v3048
      %v3050 = vpop.f32.mrf.mxu0
      %v3051 = vadd.f32 0.0, %v3050
      %v3052 = vpop.f32.mrf.mxu0
      %v3053 = vadd.f32 0.0, %v3052
      %v3054 = vpop.f32.mrf.mxu0
      %v3055 = vadd.f32 0.0, %v3054
      %3056 = vmatprep.mubr.bf16.mxu0 %v2577
      %3057 = vmatmul.mubr.bf16.gmra.mxu0 %v2576
      %v3058 = vpop.f32.mrf.mxu0
      %v3059 = vadd.f32 0.0, %v3058
      %v3060 = vpop.f32.mrf.mxu0
      %v3061 = vadd.f32 0.0, %v3060
      %v3062 = vpop.f32.mrf.mxu0
      %v3063 = vadd.f32 0.0, %v3062
      %v3064 = vpop.f32.mrf.mxu0
      %v3065 = vadd.f32 0.0, %v3064
      %3066 = vmatprep.mubr.bf16.mxu0 %v2579
      %3067 = vmatmul.mubr.bf16.gmra.mxu0 %v2578
      %v3068 = vpop.f32.mrf.mxu0
      %v3069 = vadd.f32 0.0, %v3068
      %v3070 = vpop.f32.mrf.mxu0
      %v3071 = vadd.f32 0.0, %v3070
      %v3072 = vpop.f32.mrf.mxu0
      %v3073 = vadd.f32 0.0, %v3072
      %v3074 = vpop.f32.mrf.mxu0
      %v3075 = vadd.f32 0.0, %v3074
      %3076 = vmatprep.mubr.bf16.mxu0 %v2581
      %3077 = vmatmul.mubr.bf16.gmra.mxu0 %v2580
      %v3078 = vpop.f32.mrf.mxu0
      %v3079 = vadd.f32 0.0, %v3078
      %v3080 = vpop.f32.mrf.mxu0
      %v3081 = vadd.f32 0.0, %v3080
      %v3082 = vpop.f32.mrf.mxu0
      %v3083 = vadd.f32 0.0, %v3082
      %v3084 = vpop.f32.mrf.mxu0
      %v3085 = vadd.f32 0.0, %v3084
      %3086 = vmatprep.mubr.bf16.mxu0 %v2583
      %3087 = vmatmul.mubr.bf16.gmra.mxu0 %v2582
      %v3088 = vpop.f32.mrf.mxu0
      %v3089 = vadd.f32 0.0, %v3088
      %v3090 = vpop.f32.mrf.mxu0
      %v3091 = vadd.f32 0.0, %v3090
      %v3092 = vpop.f32.mrf.mxu0
      %v3093 = vadd.f32 0.0, %v3092
      %v3094 = vpop.f32.mrf.mxu0
      %v3095 = vadd.f32 0.0, %v3094
      %3096 = vmatprep.mubr.bf16.mxu0 %v2585
      %3097 = vmatmul.mubr.bf16.gmra.mxu0 %v2584
      %v3098 = vpop.f32.mrf.mxu0
      %v3099 = vadd.f32 0.0, %v3098
      %v3100 = vpop.f32.mrf.mxu0
      %v3101 = vadd.f32 0.0, %v3100
      %v3102 = vpop.f32.mrf.mxu0
      %v3103 = vadd.f32 0.0, %v3102
      %v3104 = vpop.f32.mrf.mxu0
      %v3105 = vadd.f32 0.0, %v3104
      %3106 = vmatprep.mubr.bf16.mxu0 %v2587
      %3107 = vmatmul.mubr.bf16.gmra.mxu0 %v2586
      %v3108 = vpop.f32.mrf.mxu0
      %v3109 = vadd.f32 0.0, %v3108
      %v3110 = vpop.f32.mrf.mxu0
      %v3111 = vadd.f32 0.0, %v3110
      %v3112 = vpop.f32.mrf.mxu0
      %v3113 = vadd.f32 0.0, %v3112
      %v3114 = vpop.f32.mrf.mxu0
      %v3115 = vadd.f32 0.0, %v3114
      %3116 = vmatprep.mubr.bf16.mxu0 %v2589
      %3117 = vmatmul.mubr.bf16.gmra.mxu0 %v2588
      %v3118 = vpop.f32.mrf.mxu0
      %v3119 = vadd.f32 0.0, %v3118
      %v3120 = vpop.f32.mrf.mxu0
      %v3121 = vadd.f32 0.0, %v3120
      %v3122 = vpop.f32.mrf.mxu0
      %v3123 = vadd.f32 0.0, %v3122
      %v3124 = vpop.f32.mrf.mxu0
      %v3125 = vadd.f32 0.0, %v3124
      %3126 = vmatprep.mubr.bf16.mxu0 %v2591
      %3127 = vmatmul.mubr.bf16.gmra.mxu0 %v2590
      %v3128 = vpop.f32.mrf.mxu0
      %v3129 = vadd.f32 0.0, %v3128
      %v3130 = vpop.f32.mrf.mxu0
      %v3131 = vadd.f32 0.0, %v3130
      %v3132 = vpop.f32.mrf.mxu0
      %v3133 = vadd.f32 0.0, %v3132
      %v3134 = vpop.f32.mrf.mxu0
      %v3135 = vadd.f32 0.0, %v3134
      %3136 = vmatprep.mubr.bf16.mxu0 %v2593
      %3137 = vmatmul.mubr.bf16.gmra.mxu0 %v2592
      %v3138 = vpop.f32.mrf.mxu0
      %v3139 = vadd.f32 0.0, %v3138
      %v3140 = vpop.f32.mrf.mxu0
      %v3141 = vadd.f32 0.0, %v3140
      %v3142 = vpop.f32.mrf.mxu0
      %v3143 = vadd.f32 0.0, %v3142
      %v3144 = vpop.f32.mrf.mxu0
      %v3145 = vadd.f32 0.0, %v3144
      %3146 = vmatprep.mubr.bf16.mxu0 %v2595
      %3147 = vmatmul.mubr.bf16.gmra.mxu0 %v2594
      %v3148 = vpop.f32.mrf.mxu0
      %v3149 = vadd.f32 0.0, %v3148
      %v3150 = vpop.f32.mrf.mxu0
      %v3151 = vadd.f32 0.0, %v3150
      %v3152 = vpop.f32.mrf.mxu0
      %v3153 = vadd.f32 0.0, %v3152
      %v3154 = vpop.f32.mrf.mxu0
      %v3155 = vadd.f32 0.0, %v3154
      %3156 = vmatprep.mubr.bf16.mxu0 %v2597
      %3157 = vmatmul.mubr.bf16.gmra.mxu0 %v2596
      %v3158 = vpop.f32.mrf.mxu0
      %v3159 = vadd.f32 0.0, %v3158
      %v3160 = vpop.f32.mrf.mxu0
      %v3161 = vadd.f32 0.0, %v3160
      %v3162 = vpop.f32.mrf.mxu0
      %v3163 = vadd.f32 0.0, %v3162
      %v3164 = vpop.f32.mrf.mxu0
      %v3165 = vadd.f32 0.0, %v3164
      %3166 = vmatprep.mubr.bf16.mxu0 %v2599
      %3167 = vmatmul.mubr.bf16.gmra.mxu0 %v2598
      %v3168 = vpop.f32.mrf.mxu0
      %v3169 = vadd.f32 0.0, %v3168
      %v3170 = vpop.f32.mrf.mxu0
      %v3171 = vadd.f32 0.0, %v3170
      %v3172 = vpop.f32.mrf.mxu0
      %v3173 = vadd.f32 0.0, %v3172
      %v3174 = vpop.f32.mrf.mxu0
      %v3175 = vadd.f32 0.0, %v3174
      %3176 = vmatprep.mubr.bf16.mxu0 %v2601
      %3177 = vmatmul.mubr.bf16.gmra.mxu0 %v2600
      %v3178 = vpop.f32.mrf.mxu0
      %v3179 = vadd.f32 0.0, %v3178
      %v3180 = vpop.f32.mrf.mxu0
      %v3181 = vadd.f32 0.0, %v3180
      %v3182 = vpop.f32.mrf.mxu0
      %v3183 = vadd.f32 0.0, %v3182
      %v3184 = vpop.f32.mrf.mxu0
      %v3185 = vadd.f32 0.0, %v3184
      %3186 = vmatprep.mubr.bf16.mxu0 %v2603
      %3187 = vmatmul.mubr.bf16.gmra.mxu0 %v2602
      %v3188 = vpop.f32.mrf.mxu0
      %v3189 = vadd.f32 0.0, %v3188
      %v3190 = vpop.f32.mrf.mxu0
      %v3191 = vadd.f32 0.0, %v3190
      %v3192 = vpop.f32.mrf.mxu0
      %v3193 = vadd.f32 0.0, %v3192
      %v3194 = vpop.f32.mrf.mxu0
      %v3195 = vadd.f32 0.0, %v3194
      %3196 = vmatprep.mubr.bf16.mxu0 %v2605
      %3197 = vmatmul.mubr.bf16.gmra.mxu0 %v2604
      %v3198 = vpop.f32.mrf.mxu0
      %v3199 = vadd.f32 0.0, %v3198
      %v3200 = vpop.f32.mrf.mxu0
      %v3201 = vadd.f32 0.0, %v3200
      %v3202 = vpop.f32.mrf.mxu0
      %v3203 = vadd.f32 0.0, %v3202
      %v3204 = vpop.f32.mrf.mxu0
      %v3205 = vadd.f32 0.0, %v3204
      %3206 = vmatprep.mubr.bf16.mxu0 %v2607
      %3207 = vmatmul.mubr.bf16.gmra.mxu0 %v2606
      %v3208 = vpop.f32.mrf.mxu0
      %v3209 = vadd.f32 0.0, %v3208
      %v3210 = vpop.f32.mrf.mxu0
      %v3211 = vadd.f32 0.0, %v3210
      %v3212 = vpop.f32.mrf.mxu0
      %v3213 = vadd.f32 0.0, %v3212
      %v3214 = vpop.f32.mrf.mxu0
      %v3215 = vadd.f32 0.0, %v3214
      %3216 = vdwg.mxu0
      %3217 = vmatprep.subr.bf16.mxu0 %v2815
      %3218 = vmatpush1.bf16.msra.mxu0 %v2814
      %3219 = vmatprep.subr.bf16.mxu0 %v2813
      %3220 = vmatpush1.bf16.msra.mxu0 %v2812
      %3221 = vmatprep.subr.bf16.mxu0 %v2811
      %3222 = vmatpush1.bf16.msra.mxu0 %v2810
      %3223 = vmatprep.subr.bf16.mxu0 %v2809
      %3224 = vmatpush1.bf16.msra.mxu0 %v2808
      %3225 = vmatprep.subr.bf16.mxu0 %v2807
      %3226 = vmatpush1.bf16.msra.mxu0 %v2806
      %3227 = vmatprep.subr.bf16.mxu0 %v2805
      %3228 = vmatpush1.bf16.msra.mxu0 %v2804
      %3229 = vmatprep.subr.bf16.mxu0 %v2803
      %3230 = vmatpush1.bf16.msra.mxu0 %v2802
      %3231 = vmatprep.subr.bf16.mxu0 %v2801
      %3232 = vmatpush1.bf16.msra.mxu0 %v2800
      %3233 = vmatprep.subr.bf16.mxu0 %v2831
      %3234 = vmatpush2.bf16.msra.mxu0 %v2830
      %3235 = vmatprep.subr.bf16.mxu0 %v2829
      %3236 = vmatpush2.bf16.msra.mxu0 %v2828
      %3237 = vmatprep.subr.bf16.mxu0 %v2827
      %3238 = vmatpush2.bf16.msra.mxu0 %v2826
      %3239 = vmatprep.subr.bf16.mxu0 %v2825
      %3240 = vmatpush2.bf16.msra.mxu0 %v2824
      %3241 = vmatprep.subr.bf16.mxu0 %v2823
      %3242 = vmatpush2.bf16.msra.mxu0 %v2822
      %3243 = vmatprep.subr.bf16.mxu0 %v2821
      %3244 = vmatpush2.bf16.msra.mxu0 %v2820
      %3245 = vmatprep.subr.bf16.mxu0 %v2819
      %3246 = vmatpush2.bf16.msra.mxu0 %v2818
      %3247 = vmatprep.subr.bf16.mxu0 %v2817
      %3248 = vmatpush2.bf16.msra.mxu0 %v2816
      %3249 = vmatprep.mubr.bf16.mxu0 %v2609
      %3250 = vmatmul.mubr.bf16.gmra.mxu0 %v2608
      %v3251 = vpop.f32.mrf.mxu0
      %v3252 = vadd.f32 0.0, %v3251
      %v3253 = vpop.f32.mrf.mxu0
      %v3254 = vadd.f32 0.0, %v3253
      %v3255 = vpop.f32.mrf.mxu0
      %v3256 = vadd.f32 0.0, %v3255
      %v3257 = vpop.f32.mrf.mxu0
      %v3258 = vadd.f32 0.0, %v3257
      %3259 = vmatprep.mubr.bf16.mxu0 %v2611
      %3260 = vmatmul.mubr.bf16.gmra.mxu0 %v2610
      %v3261 = vpop.f32.mrf.mxu0
      %v3262 = vadd.f32 0.0, %v3261
      %v3263 = vpop.f32.mrf.mxu0
      %v3264 = vadd.f32 0.0, %v3263
      %v3265 = vpop.f32.mrf.mxu0
      %v3266 = vadd.f32 0.0, %v3265
      %v3267 = vpop.f32.mrf.mxu0
      %v3268 = vadd.f32 0.0, %v3267
      %3269 = vmatprep.mubr.bf16.mxu0 %v2613
      %3270 = vmatmul.mubr.bf16.gmra.mxu0 %v2612
      %v3271 = vpop.f32.mrf.mxu0
      %v3272 = vadd.f32 0.0, %v3271
      %v3273 = vpop.f32.mrf.mxu0
      %v3274 = vadd.f32 0.0, %v3273
      %v3275 = vpop.f32.mrf.mxu0
      %v3276 = vadd.f32 0.0, %v3275
      %v3277 = vpop.f32.mrf.mxu0
      %v3278 = vadd.f32 0.0, %v3277
      %3279 = vmatprep.mubr.bf16.mxu0 %v2615
      %3280 = vmatmul.mubr.bf16.gmra.mxu0 %v2614
      %v3281 = vpop.f32.mrf.mxu0
      %v3282 = vadd.f32 0.0, %v3281
      %v3283 = vpop.f32.mrf.mxu0
      %v3284 = vadd.f32 0.0, %v3283
      %v3285 = vpop.f32.mrf.mxu0
      %v3286 = vadd.f32 0.0, %v3285
      %v3287 = vpop.f32.mrf.mxu0
      %v3288 = vadd.f32 0.0, %v3287
      %3289 = vmatprep.mubr.bf16.mxu0 %v2617
      %3290 = vmatmul.mubr.bf16.gmra.mxu0 %v2616
      %v3291 = vpop.f32.mrf.mxu0
      %v3292 = vadd.f32 0.0, %v3291
      %v3293 = vpop.f32.mrf.mxu0
      %v3294 = vadd.f32 0.0, %v3293
      %v3295 = vpop.f32.mrf.mxu0
      %v3296 = vadd.f32 0.0, %v3295
      %v3297 = vpop.f32.mrf.mxu0
      %v3298 = vadd.f32 0.0, %v3297
      %3299 = vmatprep.mubr.bf16.mxu0 %v2619
      %3300 = vmatmul.mubr.bf16.gmra.mxu0 %v2618
      %v3301 = vpop.f32.mrf.mxu0
      %v3302 = vadd.f32 0.0, %v3301
      %v3303 = vpop.f32.mrf.mxu0
      %v3304 = vadd.f32 0.0, %v3303
      %v3305 = vpop.f32.mrf.mxu0
      %v3306 = vadd.f32 0.0, %v3305
      %v3307 = vpop.f32.mrf.mxu0
      %v3308 = vadd.f32 0.0, %v3307
      %3309 = vmatprep.mubr.bf16.mxu0 %v2621
      %3310 = vmatmul.mubr.bf16.gmra.mxu0 %v2620
      %v3311 = vpop.f32.mrf.mxu0
      %v3312 = vadd.f32 0.0, %v3311
      %v3313 = vpop.f32.mrf.mxu0
      %v3314 = vadd.f32 0.0, %v3313
      %v3315 = vpop.f32.mrf.mxu0
      %v3316 = vadd.f32 0.0, %v3315
      %v3317 = vpop.f32.mrf.mxu0
      %v3318 = vadd.f32 0.0, %v3317
      %3319 = vmatprep.mubr.bf16.mxu0 %v2623
      %3320 = vmatmul.mubr.bf16.gmra.mxu0 %v2622
      %v3321 = vpop.f32.mrf.mxu0
      %v3322 = vadd.f32 0.0, %v3321
      %v3323 = vpop.f32.mrf.mxu0
      %v3324 = vadd.f32 0.0, %v3323
      %v3325 = vpop.f32.mrf.mxu0
      %v3326 = vadd.f32 0.0, %v3325
      %v3327 = vpop.f32.mrf.mxu0
      %v3328 = vadd.f32 0.0, %v3327
      %3329 = vmatprep.mubr.bf16.mxu0 %v2625
      %3330 = vmatmul.mubr.bf16.gmra.mxu0 %v2624
      %v3331 = vpop.f32.mrf.mxu0
      %v3332 = vadd.f32 0.0, %v3331
      %v3333 = vpop.f32.mrf.mxu0
      %v3334 = vadd.f32 0.0, %v3333
      %v3335 = vpop.f32.mrf.mxu0
      %v3336 = vadd.f32 0.0, %v3335
      %v3337 = vpop.f32.mrf.mxu0
      %v3338 = vadd.f32 0.0, %v3337
      %3339 = vmatprep.mubr.bf16.mxu0 %v2627
      %3340 = vmatmul.mubr.bf16.gmra.mxu0 %v2626
      %v3341 = vpop.f32.mrf.mxu0
      %v3342 = vadd.f32 0.0, %v3341
      %v3343 = vpop.f32.mrf.mxu0
      %v3344 = vadd.f32 0.0, %v3343
      %v3345 = vpop.f32.mrf.mxu0
      %v3346 = vadd.f32 0.0, %v3345
      %v3347 = vpop.f32.mrf.mxu0
      %v3348 = vadd.f32 0.0, %v3347
      %3349 = vmatprep.mubr.bf16.mxu0 %v2629
      %3350 = vmatmul.mubr.bf16.gmra.mxu0 %v2628
      %v3351 = vpop.f32.mrf.mxu0
      %v3352 = vadd.f32 0.0, %v3351
      %v3353 = vpop.f32.mrf.mxu0
      %v3354 = vadd.f32 0.0, %v3353
      %v3355 = vpop.f32.mrf.mxu0
      %v3356 = vadd.f32 0.0, %v3355
      %v3357 = vpop.f32.mrf.mxu0
      %v3358 = vadd.f32 0.0, %v3357
      %3359 = vmatprep.mubr.bf16.mxu0 %v2631
      %3360 = vmatmul.mubr.bf16.gmra.mxu0 %v2630
      %v3361 = vpop.f32.mrf.mxu0
      %v3362 = vadd.f32 0.0, %v3361
      %v3363 = vpop.f32.mrf.mxu0
      %v3364 = vadd.f32 0.0, %v3363
      %v3365 = vpop.f32.mrf.mxu0
      %v3366 = vadd.f32 0.0, %v3365
      %v3367 = vpop.f32.mrf.mxu0
      %v3368 = vadd.f32 0.0, %v3367
      %3369 = vmatprep.mubr.bf16.mxu0 %v2633
      %3370 = vmatmul.mubr.bf16.gmra.mxu0 %v2632
      %v3371 = vpop.f32.mrf.mxu0
      %v3372 = vadd.f32 0.0, %v3371
      %v3373 = vpop.f32.mrf.mxu0
      %v3374 = vadd.f32 0.0, %v3373
      %v3375 = vpop.f32.mrf.mxu0
      %v3376 = vadd.f32 0.0, %v3375
      %v3377 = vpop.f32.mrf.mxu0
      %v3378 = vadd.f32 0.0, %v3377
      %3379 = vmatprep.mubr.bf16.mxu0 %v2635
      %3380 = vmatmul.mubr.bf16.gmra.mxu0 %v2634
      %v3381 = vpop.f32.mrf.mxu0
      %v3382 = vadd.f32 0.0, %v3381
      %v3383 = vpop.f32.mrf.mxu0
      %v3384 = vadd.f32 0.0, %v3383
      %v3385 = vpop.f32.mrf.mxu0
      %v3386 = vadd.f32 0.0, %v3385
      %v3387 = vpop.f32.mrf.mxu0
      %v3388 = vadd.f32 0.0, %v3387
      %3389 = vmatprep.mubr.bf16.mxu0 %v2637
      %3390 = vmatmul.mubr.bf16.gmra.mxu0 %v2636
      %v3391 = vpop.f32.mrf.mxu0
      %v3392 = vadd.f32 0.0, %v3391
      %v3393 = vpop.f32.mrf.mxu0
      %v3394 = vadd.f32 0.0, %v3393
      %v3395 = vpop.f32.mrf.mxu0
      %v3396 = vadd.f32 0.0, %v3395
      %v3397 = vpop.f32.mrf.mxu0
      %v3398 = vadd.f32 0.0, %v3397
      %3399 = vmatprep.mubr.bf16.mxu0 %v2639
      %3400 = vmatmul.mubr.bf16.gmra.mxu0 %v2638
      %v3401 = vpop.f32.mrf.mxu0
      %v3402 = vadd.f32 0.0, %v3401
      %v3403 = vpop.f32.mrf.mxu0
      %v3404 = vadd.f32 0.0, %v3403
      %v3405 = vpop.f32.mrf.mxu0
      %v3406 = vadd.f32 0.0, %v3405
      %v3407 = vpop.f32.mrf.mxu0
      %v3408 = vadd.f32 0.0, %v3407
      %3409 = vmatprep.mubr.bf16.mxu0 %v2641
      %3410 = vmatmul.mubr.bf16.gmra.mxu0 %v2640
      %v3411 = vpop.f32.mrf.mxu0
      %v3412 = vadd.f32 0.0, %v3411
      %v3413 = vpop.f32.mrf.mxu0
      %v3414 = vadd.f32 0.0, %v3413
      %v3415 = vpop.f32.mrf.mxu0
      %v3416 = vadd.f32 0.0, %v3415
      %v3417 = vpop.f32.mrf.mxu0
      %v3418 = vadd.f32 0.0, %v3417
      %3419 = vmatprep.mubr.bf16.mxu0 %v2643
      %3420 = vmatmul.mubr.bf16.gmra.mxu0 %v2642
      %v3421 = vpop.f32.mrf.mxu0
      %v3422 = vadd.f32 0.0, %v3421
      %v3423 = vpop.f32.mrf.mxu0
      %v3424 = vadd.f32 0.0, %v3423
      %v3425 = vpop.f32.mrf.mxu0
      %v3426 = vadd.f32 0.0, %v3425
      %v3427 = vpop.f32.mrf.mxu0
      %v3428 = vadd.f32 0.0, %v3427
      %3429 = vmatprep.mubr.bf16.mxu0 %v2645
      %3430 = vmatmul.mubr.bf16.gmra.mxu0 %v2644
      %v3431 = vpop.f32.mrf.mxu0
      %v3432 = vadd.f32 0.0, %v3431
      %v3433 = vpop.f32.mrf.mxu0
      %v3434 = vadd.f32 0.0, %v3433
      %v3435 = vpop.f32.mrf.mxu0
      %v3436 = vadd.f32 0.0, %v3435
      %v3437 = vpop.f32.mrf.mxu0
      %v3438 = vadd.f32 0.0, %v3437
      %3439 = vmatprep.mubr.bf16.mxu0 %v2647
      %3440 = vmatmul.mubr.bf16.gmra.mxu0 %v2646
      %v3441 = vpop.f32.mrf.mxu0
      %v3442 = vadd.f32 0.0, %v3441
      %v3443 = vpop.f32.mrf.mxu0
      %v3444 = vadd.f32 0.0, %v3443
      %v3445 = vpop.f32.mrf.mxu0
      %v3446 = vadd.f32 0.0, %v3445
      %v3447 = vpop.f32.mrf.mxu0
      %v3448 = vadd.f32 0.0, %v3447
      %3449 = vmatprep.mubr.bf16.mxu0 %v2649
      %3450 = vmatmul.mubr.bf16.gmra.mxu0 %v2648
      %v3451 = vpop.f32.mrf.mxu0
      %v3452 = vadd.f32 0.0, %v3451
      %v3453 = vpop.f32.mrf.mxu0
      %v3454 = vadd.f32 0.0, %v3453
      %v3455 = vpop.f32.mrf.mxu0
      %v3456 = vadd.f32 0.0, %v3455
      %v3457 = vpop.f32.mrf.mxu0
      %v3458 = vadd.f32 0.0, %v3457
      %3459 = vmatprep.mubr.bf16.mxu0 %v2651
      %3460 = vmatmul.mubr.bf16.gmra.mxu0 %v2650
      %v3461 = vpop.f32.mrf.mxu0
      %v3462 = vadd.f32 0.0, %v3461
      %v3463 = vpop.f32.mrf.mxu0
      %v3464 = vadd.f32 0.0, %v3463
      %v3465 = vpop.f32.mrf.mxu0
      %v3466 = vadd.f32 0.0, %v3465
      %v3467 = vpop.f32.mrf.mxu0
      %v3468 = vadd.f32 0.0, %v3467
      %3469 = vmatprep.mubr.bf16.mxu0 %v2653
      %3470 = vmatmul.mubr.bf16.gmra.mxu0 %v2652
      %v3471 = vpop.f32.mrf.mxu0
      %v3472 = vadd.f32 0.0, %v3471
      %v3473 = vpop.f32.mrf.mxu0
      %v3474 = vadd.f32 0.0, %v3473
      %v3475 = vpop.f32.mrf.mxu0
      %v3476 = vadd.f32 0.0, %v3475
      %v3477 = vpop.f32.mrf.mxu0
      %v3478 = vadd.f32 0.0, %v3477
      %3479 = vmatprep.mubr.bf16.mxu0 %v2655
      %3480 = vmatmul.mubr.bf16.gmra.mxu0 %v2654
      %v3481 = vpop.f32.mrf.mxu0
      %v3482 = vadd.f32 0.0, %v3481
      %v3483 = vpop.f32.mrf.mxu0
      %v3484 = vadd.f32 0.0, %v3483
      %v3485 = vpop.f32.mrf.mxu0
      %v3486 = vadd.f32 0.0, %v3485
      %v3487 = vpop.f32.mrf.mxu0
      %v3488 = vadd.f32 0.0, %v3487
      %3489 = vmatprep.mubr.bf16.mxu0 %v2657
      %3490 = vmatmul.mubr.bf16.gmra.mxu0 %v2656
      %v3491 = vpop.f32.mrf.mxu0
      %v3492 = vadd.f32 0.0, %v3491
      %v3493 = vpop.f32.mrf.mxu0
      %v3494 = vadd.f32 0.0, %v3493
      %v3495 = vpop.f32.mrf.mxu0
      %v3496 = vadd.f32 0.0, %v3495
      %v3497 = vpop.f32.mrf.mxu0
      %v3498 = vadd.f32 0.0, %v3497
      %3499 = vmatprep.mubr.bf16.mxu0 %v2659
      %3500 = vmatmul.mubr.bf16.gmra.mxu0 %v2658
      %v3501 = vpop.f32.mrf.mxu0
      %v3502 = vadd.f32 0.0, %v3501
      %v3503 = vpop.f32.mrf.mxu0
      %v3504 = vadd.f32 0.0, %v3503
      %v3505 = vpop.f32.mrf.mxu0
      %v3506 = vadd.f32 0.0, %v3505
      %v3507 = vpop.f32.mrf.mxu0
      %v3508 = vadd.f32 0.0, %v3507
      %3509 = vmatprep.mubr.bf16.mxu0 %v2661
      %3510 = vmatmul.mubr.bf16.gmra.mxu0 %v2660
      %v3511 = vpop.f32.mrf.mxu0
      %v3512 = vadd.f32 0.0, %v3511
      %v3513 = vpop.f32.mrf.mxu0
      %v3514 = vadd.f32 0.0, %v3513
      %v3515 = vpop.f32.mrf.mxu0
      %v3516 = vadd.f32 0.0, %v3515
      %v3517 = vpop.f32.mrf.mxu0
      %v3518 = vadd.f32 0.0, %v3517
      %3519 = vmatprep.mubr.bf16.mxu0 %v2663
      %3520 = vmatmul.mubr.bf16.gmra.mxu0 %v2662
      %v3521 = vpop.f32.mrf.mxu0
      %v3522 = vadd.f32 0.0, %v3521
      %v3523 = vpop.f32.mrf.mxu0
      %v3524 = vadd.f32 0.0, %v3523
      %v3525 = vpop.f32.mrf.mxu0
      %v3526 = vadd.f32 0.0, %v3525
      %v3527 = vpop.f32.mrf.mxu0
      %v3528 = vadd.f32 0.0, %v3527
      %3529 = vmatprep.mubr.bf16.mxu0 %v2665
      %3530 = vmatmul.mubr.bf16.gmra.mxu0 %v2664
      %v3531 = vpop.f32.mrf.mxu0
      %v3532 = vadd.f32 0.0, %v3531
      %v3533 = vpop.f32.mrf.mxu0
      %v3534 = vadd.f32 0.0, %v3533
      %v3535 = vpop.f32.mrf.mxu0
      %v3536 = vadd.f32 0.0, %v3535
      %v3537 = vpop.f32.mrf.mxu0
      %v3538 = vadd.f32 0.0, %v3537
      %3539 = vmatprep.mubr.bf16.mxu0 %v2667
      %3540 = vmatmul.mubr.bf16.gmra.mxu0 %v2666
      %v3541 = vpop.f32.mrf.mxu0
      %v3542 = vadd.f32 0.0, %v3541
      %v3543 = vpop.f32.mrf.mxu0
      %v3544 = vadd.f32 0.0, %v3543
      %v3545 = vpop.f32.mrf.mxu0
      %v3546 = vadd.f32 0.0, %v3545
      %v3547 = vpop.f32.mrf.mxu0
      %v3548 = vadd.f32 0.0, %v3547
      %3549 = vmatprep.mubr.bf16.mxu0 %v2669
      %3550 = vmatmul.mubr.bf16.gmra.mxu0 %v2668
      %v3551 = vpop.f32.mrf.mxu0
      %v3552 = vadd.f32 0.0, %v3551
      %v3553 = vpop.f32.mrf.mxu0
      %v3554 = vadd.f32 0.0, %v3553
      %v3555 = vpop.f32.mrf.mxu0
      %v3556 = vadd.f32 0.0, %v3555
      %v3557 = vpop.f32.mrf.mxu0
      %v3558 = vadd.f32 0.0, %v3557
      %3559 = vmatprep.mubr.bf16.mxu0 %v2671
      %3560 = vmatmul.mubr.bf16.gmra.mxu0 %v2670
      %v3561 = vpop.f32.mrf.mxu0
      %v3562 = vadd.f32 0.0, %v3561
      %v3563 = vpop.f32.mrf.mxu0
      %v3564 = vadd.f32 0.0, %v3563
      %v3565 = vpop.f32.mrf.mxu0
      %v3566 = vadd.f32 0.0, %v3565
      %v3567 = vpop.f32.mrf.mxu0
      %v3568 = vadd.f32 0.0, %v3567
      %3569 = vdwg.mxu0
      %v3570 = vmax.f32 %v2899, 0.0
      %v3571 = vmax.f32 %v2901, 0.0
      %v3572 = vmax.f32 %v2903, 0.0
      %v3573 = vmax.f32 %v2905, 0.0
      %v3574 = vmax.f32 %v2909, 0.0
      %v3575 = vmax.f32 %v2911, 0.0
      %v3576 = vmax.f32 %v2913, 0.0
      %v3577 = vmax.f32 %v2915, 0.0
      %v3578 = vmax.f32 %v2919, 0.0
      %v3579 = vmax.f32 %v2921, 0.0
      %v3580 = vmax.f32 %v2923, 0.0
      %v3581 = vmax.f32 %v2925, 0.0
      %v3582 = vmax.f32 %v2929, 0.0
      %v3583 = vmax.f32 %v2931, 0.0
      %v3584 = vmax.f32 %v2933, 0.0
      %v3585 = vmax.f32 %v2935, 0.0
      %v3586 = vmax.f32 %v2939, 0.0
      %v3587 = vmax.f32 %v2941, 0.0
      %v3588 = vmax.f32 %v2943, 0.0
      %v3589 = vmax.f32 %v2945, 0.0
      %v3590 = vmax.f32 %v2949, 0.0
      %v3591 = vmax.f32 %v2951, 0.0
      %v3592 = vmax.f32 %v2953, 0.0
      %v3593 = vmax.f32 %v2955, 0.0
      %v3594 = vmax.f32 %v2959, 0.0
      %v3595 = vmax.f32 %v2961, 0.0
      %v3596 = vmax.f32 %v2963, 0.0
      %v3597 = vmax.f32 %v2965, 0.0
      %v3598 = vmax.f32 %v2969, 0.0
      %v3599 = vmax.f32 %v2971, 0.0
      %v3600 = vmax.f32 %v2973, 0.0
      %v3601 = vmax.f32 %v2975, 0.0
      %v3602 = vmax.f32 %v2979, 0.0
      %v3603 = vmax.f32 %v2981, 0.0
      %v3604 = vmax.f32 %v2983, 0.0
      %v3605 = vmax.f32 %v2985, 0.0
      %v3606 = vmax.f32 %v2989, 0.0
      %v3607 = vmax.f32 %v2991, 0.0
      %v3608 = vmax.f32 %v2993, 0.0
      %v3609 = vmax.f32 %v2995, 0.0
      %v3610 = vmax.f32 %v2999, 0.0
      %v3611 = vmax.f32 %v3001, 0.0
      %v3612 = vmax.f32 %v3003, 0.0
      %v3613 = vmax.f32 %v3005, 0.0
      %v3614 = vmax.f32 %v3009, 0.0
      %v3615 = vmax.f32 %v3011, 0.0
      %v3616 = vmax.f32 %v3013, 0.0
      %v3617 = vmax.f32 %v3015, 0.0
      %v3618 = vmax.f32 %v3019, 0.0
      %v3619 = vmax.f32 %v3021, 0.0
      %v3620 = vmax.f32 %v3023, 0.0
      %v3621 = vmax.f32 %v3025, 0.0
      %v3622 = vmax.f32 %v3029, 0.0
      %v3623 = vmax.f32 %v3031, 0.0
      %v3624 = vmax.f32 %v3033, 0.0
      %v3625 = vmax.f32 %v3035, 0.0
      %v3626 = vmax.f32 %v3039, 0.0
      %v3627 = vmax.f32 %v3041, 0.0
      %v3628 = vmax.f32 %v3043, 0.0
      %v3629 = vmax.f32 %v3045, 0.0
      %v3630 = vmax.f32 %v3049, 0.0
      %v3631 = vmax.f32 %v3051, 0.0
      %v3632 = vmax.f32 %v3053, 0.0
      %v3633 = vmax.f32 %v3055, 0.0
      %v3634 = vmax.f32 %v3059, 0.0
      %v3635 = vmax.f32 %v3061, 0.0
      %v3636 = vmax.f32 %v3063, 0.0
      %v3637 = vmax.f32 %v3065, 0.0
      %v3638 = vmax.f32 %v3069, 0.0
      %v3639 = vmax.f32 %v3071, 0.0
      %v3640 = vmax.f32 %v3073, 0.0
      %v3641 = vmax.f32 %v3075, 0.0
      %v3642 = vmax.f32 %v3079, 0.0
      %v3643 = vmax.f32 %v3081, 0.0
      %v3644 = vmax.f32 %v3083, 0.0
      %v3645 = vmax.f32 %v3085, 0.0
      %v3646 = vmax.f32 %v3089, 0.0
      %v3647 = vmax.f32 %v3091, 0.0
      %v3648 = vmax.f32 %v3093, 0.0
      %v3649 = vmax.f32 %v3095, 0.0
      %v3650 = vmax.f32 %v3099, 0.0
      %v3651 = vmax.f32 %v3101, 0.0
      %v3652 = vmax.f32 %v3103, 0.0
      %v3653 = vmax.f32 %v3105, 0.0
      %v3654 = vmax.f32 %v3109, 0.0
      %v3655 = vmax.f32 %v3111, 0.0
      %v3656 = vmax.f32 %v3113, 0.0
      %v3657 = vmax.f32 %v3115, 0.0
      %v3658 = vmax.f32 %v3119, 0.0
      %v3659 = vmax.f32 %v3121, 0.0
      %v3660 = vmax.f32 %v3123, 0.0
      %v3661 = vmax.f32 %v3125, 0.0
      %v3662 = vmax.f32 %v3129, 0.0
      %v3663 = vmax.f32 %v3131, 0.0
      %v3664 = vmax.f32 %v3133, 0.0
      %v3665 = vmax.f32 %v3135, 0.0
      %v3666 = vmax.f32 %v3139, 0.0
      %v3667 = vmax.f32 %v3141, 0.0
      %v3668 = vmax.f32 %v3143, 0.0
      %v3669 = vmax.f32 %v3145, 0.0
      %v3670 = vmax.f32 %v3149, 0.0
      %v3671 = vmax.f32 %v3151, 0.0
      %v3672 = vmax.f32 %v3153, 0.0
      %v3673 = vmax.f32 %v3155, 0.0
      %v3674 = vmax.f32 %v3159, 0.0
      %v3675 = vmax.f32 %v3161, 0.0
      %v3676 = vmax.f32 %v3163, 0.0
      %v3677 = vmax.f32 %v3165, 0.0
      %v3678 = vmax.f32 %v3169, 0.0
      %v3679 = vmax.f32 %v3171, 0.0
      %v3680 = vmax.f32 %v3173, 0.0
      %v3681 = vmax.f32 %v3175, 0.0
      %v3682 = vmax.f32 %v3179, 0.0
      %v3683 = vmax.f32 %v3181, 0.0
      %v3684 = vmax.f32 %v3183, 0.0
      %v3685 = vmax.f32 %v3185, 0.0
      %v3686 = vmax.f32 %v3189, 0.0
      %v3687 = vmax.f32 %v3191, 0.0
      %v3688 = vmax.f32 %v3193, 0.0
      %v3689 = vmax.f32 %v3195, 0.0
      %v3690 = vmax.f32 %v3199, 0.0
      %v3691 = vmax.f32 %v3201, 0.0
      %v3692 = vmax.f32 %v3203, 0.0
      %v3693 = vmax.f32 %v3205, 0.0
      %v3694 = vmax.f32 %v3209, 0.0
      %v3695 = vmax.f32 %v3211, 0.0
      %v3696 = vmax.f32 %v3213, 0.0
      %v3697 = vmax.f32 %v3215, 0.0
      %v3698 = vpack.c.bf16 %v3572, %v3570
      %v3699 = vpack.c.bf16 %v3573, %v3571
      %v3700 = vpack.c.bf16 %v3576, %v3574
      %v3701 = vpack.c.bf16 %v3577, %v3575
      %v3702 = vpack.c.bf16 %v3580, %v3578
      %v3703 = vpack.c.bf16 %v3581, %v3579
      %v3704 = vpack.c.bf16 %v3584, %v3582
      %v3705 = vpack.c.bf16 %v3585, %v3583
      %v3706 = vpack.c.bf16 %v3588, %v3586
      %v3707 = vpack.c.bf16 %v3589, %v3587
      %v3708 = vpack.c.bf16 %v3592, %v3590
      %v3709 = vpack.c.bf16 %v3593, %v3591
      %v3710 = vpack.c.bf16 %v3596, %v3594
      %v3711 = vpack.c.bf16 %v3597, %v3595
      %v3712 = vpack.c.bf16 %v3600, %v3598
      %v3713 = vpack.c.bf16 %v3601, %v3599
      %v3714 = vpack.c.bf16 %v3604, %v3602
      %v3715 = vpack.c.bf16 %v3605, %v3603
      %v3716 = vpack.c.bf16 %v3608, %v3606
      %v3717 = vpack.c.bf16 %v3609, %v3607
      %v3718 = vpack.c.bf16 %v3612, %v3610
      %v3719 = vpack.c.bf16 %v3613, %v3611
      %v3720 = vpack.c.bf16 %v3616, %v3614
      %v3721 = vpack.c.bf16 %v3617, %v3615
      %v3722 = vpack.c.bf16 %v3620, %v3618
      %v3723 = vpack.c.bf16 %v3621, %v3619
      %v3724 = vpack.c.bf16 %v3624, %v3622
      %v3725 = vpack.c.bf16 %v3625, %v3623
      %v3726 = vpack.c.bf16 %v3628, %v3626
      %v3727 = vpack.c.bf16 %v3629, %v3627
      %v3728 = vpack.c.bf16 %v3632, %v3630
      %v3729 = vpack.c.bf16 %v3633, %v3631
      %v3730 = vpack.c.bf16 %v3636, %v3634
      %v3731 = vpack.c.bf16 %v3637, %v3635
      %v3732 = vpack.c.bf16 %v3640, %v3638
      %v3733 = vpack.c.bf16 %v3641, %v3639
      %v3734 = vpack.c.bf16 %v3644, %v3642
      %v3735 = vpack.c.bf16 %v3645, %v3643
      %v3736 = vpack.c.bf16 %v3648, %v3646
      %v3737 = vpack.c.bf16 %v3649, %v3647
      %v3738 = vpack.c.bf16 %v3652, %v3650
      %v3739 = vpack.c.bf16 %v3653, %v3651
      %v3740 = vpack.c.bf16 %v3656, %v3654
      %v3741 = vpack.c.bf16 %v3657, %v3655
      %v3742 = vpack.c.bf16 %v3660, %v3658
      %v3743 = vpack.c.bf16 %v3661, %v3659
      %v3744 = vpack.c.bf16 %v3664, %v3662
      %v3745 = vpack.c.bf16 %v3665, %v3663
      %v3746 = vpack.c.bf16 %v3668, %v3666
      %v3747 = vpack.c.bf16 %v3669, %v3667
      %v3748 = vpack.c.bf16 %v3672, %v3670
      %v3749 = vpack.c.bf16 %v3673, %v3671
      %v3750 = vpack.c.bf16 %v3676, %v3674
      %v3751 = vpack.c.bf16 %v3677, %v3675
      %v3752 = vpack.c.bf16 %v3680, %v3678
      %v3753 = vpack.c.bf16 %v3681, %v3679
      %v3754 = vpack.c.bf16 %v3684, %v3682
      %v3755 = vpack.c.bf16 %v3685, %v3683
      %v3756 = vpack.c.bf16 %v3688, %v3686
      %v3757 = vpack.c.bf16 %v3689, %v3687
      %v3758 = vpack.c.bf16 %v3692, %v3690
      %v3759 = vpack.c.bf16 %v3693, %v3691
      %v3760 = vpack.c.bf16 %v3696, %v3694
      %v3761 = vpack.c.bf16 %v3697, %v3695
      %v3762 = vmax.f32 %v3252, 0.0
      %v3763 = vmax.f32 %v3254, 0.0
      %v3764 = vmax.f32 %v3256, 0.0
      %v3765 = vmax.f32 %v3258, 0.0
      %v3766 = vmax.f32 %v3262, 0.0
      %v3767 = vmax.f32 %v3264, 0.0
      %v3768 = vmax.f32 %v3266, 0.0
      %v3769 = vmax.f32 %v3268, 0.0
      %v3770 = vmax.f32 %v3272, 0.0
      %v3771 = vmax.f32 %v3274, 0.0
      %v3772 = vmax.f32 %v3276, 0.0
      %v3773 = vmax.f32 %v3278, 0.0
      %v3774 = vmax.f32 %v3282, 0.0
      %v3775 = vmax.f32 %v3284, 0.0
      %v3776 = vmax.f32 %v3286, 0.0
      %v3777 = vmax.f32 %v3288, 0.0
      %v3778 = vmax.f32 %v3292, 0.0
      %v3779 = vmax.f32 %v3294, 0.0
      %v3780 = vmax.f32 %v3296, 0.0
      %v3781 = vmax.f32 %v3298, 0.0
      %v3782 = vmax.f32 %v3302, 0.0
      %v3783 = vmax.f32 %v3304, 0.0
      %v3784 = vmax.f32 %v3306, 0.0
      %v3785 = vmax.f32 %v3308, 0.0
      %v3786 = vmax.f32 %v3312, 0.0
      %v3787 = vmax.f32 %v3314, 0.0
      %v3788 = vmax.f32 %v3316, 0.0
      %v3789 = vmax.f32 %v3318, 0.0
      %v3790 = vmax.f32 %v3322, 0.0
      %v3791 = vmax.f32 %v3324, 0.0
      %v3792 = vmax.f32 %v3326, 0.0
      %v3793 = vmax.f32 %v3328, 0.0
      %v3794 = vmax.f32 %v3332, 0.0
      %v3795 = vmax.f32 %v3334, 0.0
      %v3796 = vmax.f32 %v3336, 0.0
      %v3797 = vmax.f32 %v3338, 0.0
      %v3798 = vmax.f32 %v3342, 0.0
      %v3799 = vmax.f32 %v3344, 0.0
      %v3800 = vmax.f32 %v3346, 0.0
      %v3801 = vmax.f32 %v3348, 0.0
      %v3802 = vmax.f32 %v3352, 0.0
      %v3803 = vmax.f32 %v3354, 0.0
      %v3804 = vmax.f32 %v3356, 0.0
      %v3805 = vmax.f32 %v3358, 0.0
      %v3806 = vmax.f32 %v3362, 0.0
      %v3807 = vmax.f32 %v3364, 0.0
      %v3808 = vmax.f32 %v3366, 0.0
      %v3809 = vmax.f32 %v3368, 0.0
      %v3810 = vmax.f32 %v3372, 0.0
      %v3811 = vmax.f32 %v3374, 0.0
      %v3812 = vmax.f32 %v3376, 0.0
      %v3813 = vmax.f32 %v3378, 0.0
      %v3814 = vmax.f32 %v3382, 0.0
      %v3815 = vmax.f32 %v3384, 0.0
      %v3816 = vmax.f32 %v3386, 0.0
      %v3817 = vmax.f32 %v3388, 0.0
      %v3818 = vmax.f32 %v3392, 0.0
      %v3819 = vmax.f32 %v3394, 0.0
      %v3820 = vmax.f32 %v3396, 0.0
      %v3821 = vmax.f32 %v3398, 0.0
      %v3822 = vmax.f32 %v3402, 0.0
      %v3823 = vmax.f32 %v3404, 0.0
      %v3824 = vmax.f32 %v3406, 0.0
      %v3825 = vmax.f32 %v3408, 0.0
      %v3826 = vmax.f32 %v3412, 0.0
      %v3827 = vmax.f32 %v3414, 0.0
      %v3828 = vmax.f32 %v3416, 0.0
      %v3829 = vmax.f32 %v3418, 0.0
      %v3830 = vmax.f32 %v3422, 0.0
      %v3831 = vmax.f32 %v3424, 0.0
      %v3832 = vmax.f32 %v3426, 0.0
      %v3833 = vmax.f32 %v3428, 0.0
      %v3834 = vmax.f32 %v3432, 0.0
      %v3835 = vmax.f32 %v3434, 0.0
      %v3836 = vmax.f32 %v3436, 0.0
      %v3837 = vmax.f32 %v3438, 0.0
      %v3838 = vmax.f32 %v3442, 0.0
      %v3839 = vmax.f32 %v3444, 0.0
      %v3840 = vmax.f32 %v3446, 0.0
      %v3841 = vmax.f32 %v3448, 0.0
      %v3842 = vmax.f32 %v3452, 0.0
      %v3843 = vmax.f32 %v3454, 0.0
      %v3844 = vmax.f32 %v3456, 0.0
      %v3845 = vmax.f32 %v3458, 0.0
      %v3846 = vmax.f32 %v3462, 0.0
      %v3847 = vmax.f32 %v3464, 0.0
      %v3848 = vmax.f32 %v3466, 0.0
      %v3849 = vmax.f32 %v3468, 0.0
      %v3850 = vmax.f32 %v3472, 0.0
      %v3851 = vmax.f32 %v3474, 0.0
      %v3852 = vmax.f32 %v3476, 0.0
      %v3853 = vmax.f32 %v3478, 0.0
      %v3854 = vmax.f32 %v3482, 0.0
      %v3855 = vmax.f32 %v3484, 0.0
      %v3856 = vmax.f32 %v3486, 0.0
      %v3857 = vmax.f32 %v3488, 0.0
      %v3858 = vmax.f32 %v3492, 0.0
      %v3859 = vmax.f32 %v3494, 0.0
      %v3860 = vmax.f32 %v3496, 0.0
      %v3861 = vmax.f32 %v3498, 0.0
      %v3862 = vmax.f32 %v3502, 0.0
      %v3863 = vmax.f32 %v3504, 0.0
      %v3864 = vmax.f32 %v3506, 0.0
      %v3865 = vmax.f32 %v3508, 0.0
      %v3866 = vmax.f32 %v3512, 0.0
      %v3867 = vmax.f32 %v3514, 0.0
      %v3868 = vmax.f32 %v3516, 0.0
      %v3869 = vmax.f32 %v3518, 0.0
      %v3870 = vmax.f32 %v3522, 0.0
      %v3871 = vmax.f32 %v3524, 0.0
      %v3872 = vmax.f32 %v3526, 0.0
      %v3873 = vmax.f32 %v3528, 0.0
      %v3874 = vmax.f32 %v3532, 0.0
      %v3875 = vmax.f32 %v3534, 0.0
      %v3876 = vmax.f32 %v3536, 0.0
      %v3877 = vmax.f32 %v3538, 0.0
      %v3878 = vmax.f32 %v3542, 0.0
      %v3879 = vmax.f32 %v3544, 0.0
      %v3880 = vmax.f32 %v3546, 0.0
      %v3881 = vmax.f32 %v3548, 0.0
      %v3882 = vmax.f32 %v3552, 0.0
      %v3883 = vmax.f32 %v3554, 0.0
      %v3884 = vmax.f32 %v3556, 0.0
      %v3885 = vmax.f32 %v3558, 0.0
      %v3886 = vmax.f32 %v3562, 0.0
      %v3887 = vmax.f32 %v3564, 0.0
      %v3888 = vmax.f32 %v3566, 0.0
      %v3889 = vmax.f32 %v3568, 0.0
      %v3890 = vpack.c.bf16 %v3764, %v3762
      %v3891 = vpack.c.bf16 %v3765, %v3763
      %v3892 = vpack.c.bf16 %v3768, %v3766
      %v3893 = vpack.c.bf16 %v3769, %v3767
      %v3894 = vpack.c.bf16 %v3772, %v3770
      %v3895 = vpack.c.bf16 %v3773, %v3771
      %v3896 = vpack.c.bf16 %v3776, %v3774
      %v3897 = vpack.c.bf16 %v3777, %v3775
      %v3898 = vpack.c.bf16 %v3780, %v3778
      %v3899 = vpack.c.bf16 %v3781, %v3779
      %v3900 = vpack.c.bf16 %v3784, %v3782
      %v3901 = vpack.c.bf16 %v3785, %v3783
      %v3902 = vpack.c.bf16 %v3788, %v3786
      %v3903 = vpack.c.bf16 %v3789, %v3787
      %v3904 = vpack.c.bf16 %v3792, %v3790
      %v3905 = vpack.c.bf16 %v3793, %v3791
      %v3906 = vpack.c.bf16 %v3796, %v3794
      %v3907 = vpack.c.bf16 %v3797, %v3795
      %v3908 = vpack.c.bf16 %v3800, %v3798
      %v3909 = vpack.c.bf16 %v3801, %v3799
      %v3910 = vpack.c.bf16 %v3804, %v3802
      %v3911 = vpack.c.bf16 %v3805, %v3803
      %v3912 = vpack.c.bf16 %v3808, %v3806
      %v3913 = vpack.c.bf16 %v3809, %v3807
      %v3914 = vpack.c.bf16 %v3812, %v3810
      %v3915 = vpack.c.bf16 %v3813, %v3811
      %v3916 = vpack.c.bf16 %v3816, %v3814
      %v3917 = vpack.c.bf16 %v3817, %v3815
      %v3918 = vpack.c.bf16 %v3820, %v3818
      %v3919 = vpack.c.bf16 %v3821, %v3819
      %v3920 = vpack.c.bf16 %v3824, %v3822
      %v3921 = vpack.c.bf16 %v3825, %v3823
      %v3922 = vpack.c.bf16 %v3828, %v3826
      %v3923 = vpack.c.bf16 %v3829, %v3827
      %v3924 = vpack.c.bf16 %v3832, %v3830
      %v3925 = vpack.c.bf16 %v3833, %v3831
      %v3926 = vpack.c.bf16 %v3836, %v3834
      %v3927 = vpack.c.bf16 %v3837, %v3835
      %v3928 = vpack.c.bf16 %v3840, %v3838
      %v3929 = vpack.c.bf16 %v3841, %v3839
      %v3930 = vpack.c.bf16 %v3844, %v3842
      %v3931 = vpack.c.bf16 %v3845, %v3843
      %v3932 = vpack.c.bf16 %v3848, %v3846
      %v3933 = vpack.c.bf16 %v3849, %v3847
      %v3934 = vpack.c.bf16 %v3852, %v3850
      %v3935 = vpack.c.bf16 %v3853, %v3851
      %v3936 = vpack.c.bf16 %v3856, %v3854
      %v3937 = vpack.c.bf16 %v3857, %v3855
      %v3938 = vpack.c.bf16 %v3860, %v3858
      %v3939 = vpack.c.bf16 %v3861, %v3859
      %v3940 = vpack.c.bf16 %v3864, %v3862
      %v3941 = vpack.c.bf16 %v3865, %v3863
      %v3942 = vpack.c.bf16 %v3868, %v3866
      %v3943 = vpack.c.bf16 %v3869, %v3867
      %v3944 = vpack.c.bf16 %v3872, %v3870
      %v3945 = vpack.c.bf16 %v3873, %v3871
      %v3946 = vpack.c.bf16 %v3876, %v3874
      %v3947 = vpack.c.bf16 %v3877, %v3875
      %v3948 = vpack.c.bf16 %v3880, %v3878
      %v3949 = vpack.c.bf16 %v3881, %v3879
      %v3950 = vpack.c.bf16 %v3884, %v3882
      %v3951 = vpack.c.bf16 %v3885, %v3883
      %v3952 = vpack.c.bf16 %v3888, %v3886
      %v3953 = vpack.c.bf16 %v3889, %v3887
      %s3954 = scalar_lea.vmem %s2, 256
      %v3955 = vld [vmem:[%s3954] sm:$0xff]
      %v3956 = vld [vmem:[%s3954 + $0x8] sm:$0xff]
      %v3957 = vld [vmem:[%s3954 + $0x10] sm:$0xff]
      %v3958 = vld [vmem:[%s3954 + $0x18] sm:$0xff]
      %v3959 = vld [vmem:[%s3954 + $0x20] sm:$0xff]
      %v3960 = vld [vmem:[%s3954 + $0x28] sm:$0xff]
      %v3961 = vld [vmem:[%s3954 + $0x30] sm:$0xff]
      %v3962 = vld [vmem:[%s3954 + $0x38] sm:$0xff]
      %v3963 = vld [vmem:[%s3954 + $0x40] sm:$0xff]
      %v3964 = vld [vmem:[%s3954 + $0x48] sm:$0xff]
      %v3965 = vld [vmem:[%s3954 + $0x50] sm:$0xff]
      %v3966 = vld [vmem:[%s3954 + $0x58] sm:$0xff]
      %v3967 = vld [vmem:[%s3954 + $0x60] sm:$0xff]
      %v3968 = vld [vmem:[%s3954 + $0x68] sm:$0xff]
      %v3969 = vld [vmem:[%s3954 + $0x70] sm:$0xff]
      %v3970 = vld [vmem:[%s3954 + $0x78] sm:$0xff]
      %v3971 = vld [vmem:[%s3954 + $0x80] sm:$0xff]
      %v3972 = vld [vmem:[%s3954 + $0x88] sm:$0xff]
      %v3973 = vld [vmem:[%s3954 + $0x90] sm:$0xff]
      %v3974 = vld [vmem:[%s3954 + $0x98] sm:$0xff]
      %v3975 = vld [vmem:[%s3954 + $0xa0] sm:$0xff]
      %v3976 = vld [vmem:[%s3954 + $0xa8] sm:$0xff]
      %v3977 = vld [vmem:[%s3954 + $0xb0] sm:$0xff]
      %v3978 = vld [vmem:[%s3954 + $0xb8] sm:$0xff]
      %v3979 = vld [vmem:[%s3954 + $0xc0] sm:$0xff]
      %v3980 = vld [vmem:[%s3954 + $0xc8] sm:$0xff]
      %v3981 = vld [vmem:[%s3954 + $0xd0] sm:$0xff]
      %v3982 = vld [vmem:[%s3954 + $0xd8] sm:$0xff]
      %v3983 = vld [vmem:[%s3954 + $0xe0] sm:$0xff]
      %v3984 = vld [vmem:[%s3954 + $0xe8] sm:$0xff]
      %v3985 = vld [vmem:[%s3954 + $0xf0] sm:$0xff]
      %v3986 = vld [vmem:[%s3954 + $0xf8] sm:$0xff]
      %v4019 = vunpack.c.l.b16 %v3955
      %v4020 = vunpack.c.h.b16 %v3955
      %v4021 = vunpack.c.l.b16 %v3956
      %v4022 = vunpack.c.h.b16 %v3956
      %v4023 = vunpack.c.l.b16 %v3957
      %v4024 = vunpack.c.h.b16 %v3957
      %v4025 = vunpack.c.l.b16 %v3958
      %v4026 = vunpack.c.h.b16 %v3958
      %v4027 = vunpack.c.l.b16 %v3959
      %v4028 = vunpack.c.h.b16 %v3959
      %v4029 = vunpack.c.l.b16 %v3960
      %v4030 = vunpack.c.h.b16 %v3960
      %v4031 = vunpack.c.l.b16 %v3961
      %v4032 = vunpack.c.h.b16 %v3961
      %v4033 = vunpack.c.l.b16 %v3962
      %v4034 = vunpack.c.h.b16 %v3962
      %v4035 = vunpack.c.l.b16 %v3963
      %v4036 = vunpack.c.h.b16 %v3963
      %v4037 = vunpack.c.l.b16 %v3964
      %v4038 = vunpack.c.h.b16 %v3964
      %v4039 = vunpack.c.l.b16 %v3965
      %v4040 = vunpack.c.h.b16 %v3965
      %v4041 = vunpack.c.l.b16 %v3966
      %v4042 = vunpack.c.h.b16 %v3966
      %v4043 = vunpack.c.l.b16 %v3967
      %v4044 = vunpack.c.h.b16 %v3967
      %v4045 = vunpack.c.l.b16 %v3968
      %v4046 = vunpack.c.h.b16 %v3968
      %v4047 = vunpack.c.l.b16 %v3969
      %v4048 = vunpack.c.h.b16 %v3969
      %v4049 = vunpack.c.l.b16 %v3970
      %v4050 = vunpack.c.h.b16 %v3970
      %v4051 = vunpack.c.l.b16 %v3971
      %v4052 = vunpack.c.h.b16 %v3971
      %v4053 = vunpack.c.l.b16 %v3972
      %v4054 = vunpack.c.h.b16 %v3972
      %v4055 = vunpack.c.l.b16 %v3973
      %v4056 = vunpack.c.h.b16 %v3973
      %v4057 = vunpack.c.l.b16 %v3974
      %v4058 = vunpack.c.h.b16 %v3974
      %v4059 = vunpack.c.l.b16 %v3975
      %v4060 = vunpack.c.h.b16 %v3975
      %v4061 = vunpack.c.l.b16 %v3976
      %v4062 = vunpack.c.h.b16 %v3976
      %v4063 = vunpack.c.l.b16 %v3977
      %v4064 = vunpack.c.h.b16 %v3977
      %v4065 = vunpack.c.l.b16 %v3978
      %v4066 = vunpack.c.h.b16 %v3978
      %v4067 = vunpack.c.l.b16 %v3979
      %v4068 = vunpack.c.h.b16 %v3979
      %v4069 = vunpack.c.l.b16 %v3980
      %v4070 = vunpack.c.h.b16 %v3980
      %v4071 = vunpack.c.l.b16 %v3981
      %v4072 = vunpack.c.h.b16 %v3981
      %v4073 = vunpack.c.l.b16 %v3982
      %v4074 = vunpack.c.h.b16 %v3982
      %v4075 = vunpack.c.l.b16 %v3983
      %v4076 = vunpack.c.h.b16 %v3983
      %v4077 = vunpack.c.l.b16 %v3984
      %v4078 = vunpack.c.h.b16 %v3984
      %v4079 = vunpack.c.l.b16 %v3985
      %v4080 = vunpack.c.h.b16 %v3985
      %v4081 = vunpack.c.l.b16 %v3986
      %v4082 = vunpack.c.h.b16 %v3986
      %v4083 = vpack.c.b16 %v4021, %v4019
      %v4084 = vpack.c.b16 %v4022, %v4020
      %v4085 = vpack.c.b16 %v4025, %v4023
      %v4086 = vpack.c.b16 %v4026, %v4024
      %v4087 = vpack.c.b16 %v4029, %v4027
      %v4088 = vpack.c.b16 %v4030, %v4028
      %v4089 = vpack.c.b16 %v4033, %v4031
      %v4090 = vpack.c.b16 %v4034, %v4032
      %v4091 = vpack.c.b16 %v4037, %v4035
      %v4092 = vpack.c.b16 %v4038, %v4036
      %v4093 = vpack.c.b16 %v4041, %v4039
      %v4094 = vpack.c.b16 %v4042, %v4040
      %v4095 = vpack.c.b16 %v4045, %v4043
      %v4096 = vpack.c.b16 %v4046, %v4044
      %v4097 = vpack.c.b16 %v4049, %v4047
      %v4098 = vpack.c.b16 %v4050, %v4048
      %v4099 = vpack.c.b16 %v4053, %v4051
      %v4100 = vpack.c.b16 %v4054, %v4052
      %v4101 = vpack.c.b16 %v4057, %v4055
      %v4102 = vpack.c.b16 %v4058, %v4056
      %v4103 = vpack.c.b16 %v4061, %v4059
      %v4104 = vpack.c.b16 %v4062, %v4060
      %v4105 = vpack.c.b16 %v4065, %v4063
      %v4106 = vpack.c.b16 %v4066, %v4064
      %v4107 = vpack.c.b16 %v4069, %v4067
      %v4108 = vpack.c.b16 %v4070, %v4068
      %v4109 = vpack.c.b16 %v4073, %v4071
      %v4110 = vpack.c.b16 %v4074, %v4072
      %v4111 = vpack.c.b16 %v4077, %v4075
      %v4112 = vpack.c.b16 %v4078, %v4076
      %v4113 = vpack.c.b16 %v4081, %v4079
      %v4114 = vpack.c.b16 %v4082, %v4080
      %4147 = vmatprep.subr.bf16.mxu0 %v4098
      %4148 = vmatpush1.bf16.msra.mxu0 %v4097
      %4149 = vmatprep.subr.bf16.mxu0 %v4096
      %4150 = vmatpush1.bf16.msra.mxu0 %v4095
      %4151 = vmatprep.subr.bf16.mxu0 %v4094
      %4152 = vmatpush1.bf16.msra.mxu0 %v4093
      %4153 = vmatprep.subr.bf16.mxu0 %v4092
      %4154 = vmatpush1.bf16.msra.mxu0 %v4091
      %4155 = vmatprep.subr.bf16.mxu0 %v4090
      %4156 = vmatpush1.bf16.msra.mxu0 %v4089
      %4157 = vmatprep.subr.bf16.mxu0 %v4088
      %4158 = vmatpush1.bf16.msra.mxu0 %v4087
      %4159 = vmatprep.subr.bf16.mxu0 %v4086
      %4160 = vmatpush1.bf16.msra.mxu0 %v4085
      %4161 = vmatprep.subr.bf16.mxu0 %v4084
      %4162 = vmatpush1.bf16.msra.mxu0 %v4083
      %4163 = vmatprep.subr.bf16.mxu0 %v4114
      %4164 = vmatpush2.bf16.msra.mxu0 %v4113
      %4165 = vmatprep.subr.bf16.mxu0 %v4112
      %4166 = vmatpush2.bf16.msra.mxu0 %v4111
      %4167 = vmatprep.subr.bf16.mxu0 %v4110
      %4168 = vmatpush2.bf16.msra.mxu0 %v4109
      %4169 = vmatprep.subr.bf16.mxu0 %v4108
      %4170 = vmatpush2.bf16.msra.mxu0 %v4107
      %4171 = vmatprep.subr.bf16.mxu0 %v4106
      %4172 = vmatpush2.bf16.msra.mxu0 %v4105
      %4173 = vmatprep.subr.bf16.mxu0 %v4104
      %4174 = vmatpush2.bf16.msra.mxu0 %v4103
      %4175 = vmatprep.subr.bf16.mxu0 %v4102
      %4176 = vmatpush2.bf16.msra.mxu0 %v4101
      %4177 = vmatprep.subr.bf16.mxu0 %v4100
      %4178 = vmatpush2.bf16.msra.mxu0 %v4099
      %4179 = vmatprep.mubr.bf16.mxu0 %v3699
      %4180 = vmatmul.mubr.bf16.gmra.mxu0 %v3698
      %v4181 = vpop.f32.mrf.mxu0
      %v4182 = vadd.f32 0.0, %v4181
      %v4183 = vpop.f32.mrf.mxu0
      %v4184 = vadd.f32 0.0, %v4183
      %v4185 = vpop.f32.mrf.mxu0
      %v4186 = vadd.f32 0.0, %v4185
      %v4187 = vpop.f32.mrf.mxu0
      %v4188 = vadd.f32 0.0, %v4187
      %4189 = vmatprep.mubr.bf16.mxu0 %v3701
      %4190 = vmatmul.mubr.bf16.gmra.mxu0 %v3700
      %v4191 = vpop.f32.mrf.mxu0
      %v4192 = vadd.f32 0.0, %v4191
      %v4193 = vpop.f32.mrf.mxu0
      %v4194 = vadd.f32 0.0, %v4193
      %v4195 = vpop.f32.mrf.mxu0
      %v4196 = vadd.f32 0.0, %v4195
      %v4197 = vpop.f32.mrf.mxu0
      %v4198 = vadd.f32 0.0, %v4197
      %4199 = vmatprep.mubr.bf16.mxu0 %v3703
      %4200 = vmatmul.mubr.bf16.gmra.mxu0 %v3702
      %v4201 = vpop.f32.mrf.mxu0
      %v4202 = vadd.f32 0.0, %v4201
      %v4203 = vpop.f32.mrf.mxu0
      %v4204 = vadd.f32 0.0, %v4203
      %v4205 = vpop.f32.mrf.mxu0
      %v4206 = vadd.f32 0.0, %v4205
      %v4207 = vpop.f32.mrf.mxu0
      %v4208 = vadd.f32 0.0, %v4207
      %4209 = vmatprep.mubr.bf16.mxu0 %v3705
      %4210 = vmatmul.mubr.bf16.gmra.mxu0 %v3704
      %v4211 = vpop.f32.mrf.mxu0
      %v4212 = vadd.f32 0.0, %v4211
      %v4213 = vpop.f32.mrf.mxu0
      %v4214 = vadd.f32 0.0, %v4213
      %v4215 = vpop.f32.mrf.mxu0
      %v4216 = vadd.f32 0.0, %v4215
      %v4217 = vpop.f32.mrf.mxu0
      %v4218 = vadd.f32 0.0, %v4217
      %4219 = vmatprep.mubr.bf16.mxu0 %v3707
      %4220 = vmatmul.mubr.bf16.gmra.mxu0 %v3706
      %v4221 = vpop.f32.mrf.mxu0
      %v4222 = vadd.f32 0.0, %v4221
      %v4223 = vpop.f32.mrf.mxu0
      %v4224 = vadd.f32 0.0, %v4223
      %v4225 = vpop.f32.mrf.mxu0
      %v4226 = vadd.f32 0.0, %v4225
      %v4227 = vpop.f32.mrf.mxu0
      %v4228 = vadd.f32 0.0, %v4227
      %4229 = vmatprep.mubr.bf16.mxu0 %v3709
      %4230 = vmatmul.mubr.bf16.gmra.mxu0 %v3708
      %v4231 = vpop.f32.mrf.mxu0
      %v4232 = vadd.f32 0.0, %v4231
      %v4233 = vpop.f32.mrf.mxu0
      %v4234 = vadd.f32 0.0, %v4233
      %v4235 = vpop.f32.mrf.mxu0
      %v4236 = vadd.f32 0.0, %v4235
      %v4237 = vpop.f32.mrf.mxu0
      %v4238 = vadd.f32 0.0, %v4237
      %4239 = vmatprep.mubr.bf16.mxu0 %v3711
      %4240 = vmatmul.mubr.bf16.gmra.mxu0 %v3710
      %v4241 = vpop.f32.mrf.mxu0
      %v4242 = vadd.f32 0.0, %v4241
      %v4243 = vpop.f32.mrf.mxu0
      %v4244 = vadd.f32 0.0, %v4243
      %v4245 = vpop.f32.mrf.mxu0
      %v4246 = vadd.f32 0.0, %v4245
      %v4247 = vpop.f32.mrf.mxu0
      %v4248 = vadd.f32 0.0, %v4247
      %4249 = vmatprep.mubr.bf16.mxu0 %v3713
      %4250 = vmatmul.mubr.bf16.gmra.mxu0 %v3712
      %v4251 = vpop.f32.mrf.mxu0
      %v4252 = vadd.f32 0.0, %v4251
      %v4253 = vpop.f32.mrf.mxu0
      %v4254 = vadd.f32 0.0, %v4253
      %v4255 = vpop.f32.mrf.mxu0
      %v4256 = vadd.f32 0.0, %v4255
      %v4257 = vpop.f32.mrf.mxu0
      %v4258 = vadd.f32 0.0, %v4257
      %4259 = vmatprep.mubr.bf16.mxu0 %v3715
      %4260 = vmatmul.mubr.bf16.gmra.mxu0 %v3714
      %v4261 = vpop.f32.mrf.mxu0
      %v4262 = vadd.f32 0.0, %v4261
      %v4263 = vpop.f32.mrf.mxu0
      %v4264 = vadd.f32 0.0, %v4263
      %v4265 = vpop.f32.mrf.mxu0
      %v4266 = vadd.f32 0.0, %v4265
      %v4267 = vpop.f32.mrf.mxu0
      %v4268 = vadd.f32 0.0, %v4267
      %4269 = vmatprep.mubr.bf16.mxu0 %v3717
      %4270 = vmatmul.mubr.bf16.gmra.mxu0 %v3716
      %v4271 = vpop.f32.mrf.mxu0
      %v4272 = vadd.f32 0.0, %v4271
      %v4273 = vpop.f32.mrf.mxu0
      %v4274 = vadd.f32 0.0, %v4273
      %v4275 = vpop.f32.mrf.mxu0
      %v4276 = vadd.f32 0.0, %v4275
      %v4277 = vpop.f32.mrf.mxu0
      %v4278 = vadd.f32 0.0, %v4277
      %4279 = vmatprep.mubr.bf16.mxu0 %v3719
      %4280 = vmatmul.mubr.bf16.gmra.mxu0 %v3718
      %v4281 = vpop.f32.mrf.mxu0
      %v4282 = vadd.f32 0.0, %v4281
      %v4283 = vpop.f32.mrf.mxu0
      %v4284 = vadd.f32 0.0, %v4283
      %v4285 = vpop.f32.mrf.mxu0
      %v4286 = vadd.f32 0.0, %v4285
      %v4287 = vpop.f32.mrf.mxu0
      %v4288 = vadd.f32 0.0, %v4287
      %4289 = vmatprep.mubr.bf16.mxu0 %v3721
      %4290 = vmatmul.mubr.bf16.gmra.mxu0 %v3720
      %v4291 = vpop.f32.mrf.mxu0
      %v4292 = vadd.f32 0.0, %v4291
      %v4293 = vpop.f32.mrf.mxu0
      %v4294 = vadd.f32 0.0, %v4293
      %v4295 = vpop.f32.mrf.mxu0
      %v4296 = vadd.f32 0.0, %v4295
      %v4297 = vpop.f32.mrf.mxu0
      %v4298 = vadd.f32 0.0, %v4297
      %4299 = vmatprep.mubr.bf16.mxu0 %v3723
      %4300 = vmatmul.mubr.bf16.gmra.mxu0 %v3722
      %v4301 = vpop.f32.mrf.mxu0
      %v4302 = vadd.f32 0.0, %v4301
      %v4303 = vpop.f32.mrf.mxu0
      %v4304 = vadd.f32 0.0, %v4303
      %v4305 = vpop.f32.mrf.mxu0
      %v4306 = vadd.f32 0.0, %v4305
      %v4307 = vpop.f32.mrf.mxu0
      %v4308 = vadd.f32 0.0, %v4307
      %4309 = vmatprep.mubr.bf16.mxu0 %v3725
      %4310 = vmatmul.mubr.bf16.gmra.mxu0 %v3724
      %v4311 = vpop.f32.mrf.mxu0
      %v4312 = vadd.f32 0.0, %v4311
      %v4313 = vpop.f32.mrf.mxu0
      %v4314 = vadd.f32 0.0, %v4313
      %v4315 = vpop.f32.mrf.mxu0
      %v4316 = vadd.f32 0.0, %v4315
      %v4317 = vpop.f32.mrf.mxu0
      %v4318 = vadd.f32 0.0, %v4317
      %4319 = vmatprep.mubr.bf16.mxu0 %v3727
      %4320 = vmatmul.mubr.bf16.gmra.mxu0 %v3726
      %v4321 = vpop.f32.mrf.mxu0
      %v4322 = vadd.f32 0.0, %v4321
      %v4323 = vpop.f32.mrf.mxu0
      %v4324 = vadd.f32 0.0, %v4323
      %v4325 = vpop.f32.mrf.mxu0
      %v4326 = vadd.f32 0.0, %v4325
      %v4327 = vpop.f32.mrf.mxu0
      %v4328 = vadd.f32 0.0, %v4327
      %4329 = vmatprep.mubr.bf16.mxu0 %v3729
      %4330 = vmatmul.mubr.bf16.gmra.mxu0 %v3728
      %v4331 = vpop.f32.mrf.mxu0
      %v4332 = vadd.f32 0.0, %v4331
      %v4333 = vpop.f32.mrf.mxu0
      %v4334 = vadd.f32 0.0, %v4333
      %v4335 = vpop.f32.mrf.mxu0
      %v4336 = vadd.f32 0.0, %v4335
      %v4337 = vpop.f32.mrf.mxu0
      %v4338 = vadd.f32 0.0, %v4337
      %4339 = vmatprep.mubr.bf16.mxu0 %v3731
      %4340 = vmatmul.mubr.bf16.gmra.mxu0 %v3730
      %v4341 = vpop.f32.mrf.mxu0
      %v4342 = vadd.f32 0.0, %v4341
      %v4343 = vpop.f32.mrf.mxu0
      %v4344 = vadd.f32 0.0, %v4343
      %v4345 = vpop.f32.mrf.mxu0
      %v4346 = vadd.f32 0.0, %v4345
      %v4347 = vpop.f32.mrf.mxu0
      %v4348 = vadd.f32 0.0, %v4347
      %4349 = vmatprep.mubr.bf16.mxu0 %v3733
      %4350 = vmatmul.mubr.bf16.gmra.mxu0 %v3732
      %v4351 = vpop.f32.mrf.mxu0
      %v4352 = vadd.f32 0.0, %v4351
      %v4353 = vpop.f32.mrf.mxu0
      %v4354 = vadd.f32 0.0, %v4353
      %v4355 = vpop.f32.mrf.mxu0
      %v4356 = vadd.f32 0.0, %v4355
      %v4357 = vpop.f32.mrf.mxu0
      %v4358 = vadd.f32 0.0, %v4357
      %4359 = vmatprep.mubr.bf16.mxu0 %v3735
      %4360 = vmatmul.mubr.bf16.gmra.mxu0 %v3734
      %v4361 = vpop.f32.mrf.mxu0
      %v4362 = vadd.f32 0.0, %v4361
      %v4363 = vpop.f32.mrf.mxu0
      %v4364 = vadd.f32 0.0, %v4363
      %v4365 = vpop.f32.mrf.mxu0
      %v4366 = vadd.f32 0.0, %v4365
      %v4367 = vpop.f32.mrf.mxu0
      %v4368 = vadd.f32 0.0, %v4367
      %4369 = vmatprep.mubr.bf16.mxu0 %v3737
      %4370 = vmatmul.mubr.bf16.gmra.mxu0 %v3736
      %v4371 = vpop.f32.mrf.mxu0
      %v4372 = vadd.f32 0.0, %v4371
      %v4373 = vpop.f32.mrf.mxu0
      %v4374 = vadd.f32 0.0, %v4373
      %v4375 = vpop.f32.mrf.mxu0
      %v4376 = vadd.f32 0.0, %v4375
      %v4377 = vpop.f32.mrf.mxu0
      %v4378 = vadd.f32 0.0, %v4377
      %4379 = vmatprep.mubr.bf16.mxu0 %v3739
      %4380 = vmatmul.mubr.bf16.gmra.mxu0 %v3738
      %v4381 = vpop.f32.mrf.mxu0
      %v4382 = vadd.f32 0.0, %v4381
      %v4383 = vpop.f32.mrf.mxu0
      %v4384 = vadd.f32 0.0, %v4383
      %v4385 = vpop.f32.mrf.mxu0
      %v4386 = vadd.f32 0.0, %v4385
      %v4387 = vpop.f32.mrf.mxu0
      %v4388 = vadd.f32 0.0, %v4387
      %4389 = vmatprep.mubr.bf16.mxu0 %v3741
      %4390 = vmatmul.mubr.bf16.gmra.mxu0 %v3740
      %v4391 = vpop.f32.mrf.mxu0
      %v4392 = vadd.f32 0.0, %v4391
      %v4393 = vpop.f32.mrf.mxu0
      %v4394 = vadd.f32 0.0, %v4393
      %v4395 = vpop.f32.mrf.mxu0
      %v4396 = vadd.f32 0.0, %v4395
      %v4397 = vpop.f32.mrf.mxu0
      %v4398 = vadd.f32 0.0, %v4397
      %4399 = vmatprep.mubr.bf16.mxu0 %v3743
      %4400 = vmatmul.mubr.bf16.gmra.mxu0 %v3742
      %v4401 = vpop.f32.mrf.mxu0
      %v4402 = vadd.f32 0.0, %v4401
      %v4403 = vpop.f32.mrf.mxu0
      %v4404 = vadd.f32 0.0, %v4403
      %v4405 = vpop.f32.mrf.mxu0
      %v4406 = vadd.f32 0.0, %v4405
      %v4407 = vpop.f32.mrf.mxu0
      %v4408 = vadd.f32 0.0, %v4407
      %4409 = vmatprep.mubr.bf16.mxu0 %v3745
      %4410 = vmatmul.mubr.bf16.gmra.mxu0 %v3744
      %v4411 = vpop.f32.mrf.mxu0
      %v4412 = vadd.f32 0.0, %v4411
      %v4413 = vpop.f32.mrf.mxu0
      %v4414 = vadd.f32 0.0, %v4413
      %v4415 = vpop.f32.mrf.mxu0
      %v4416 = vadd.f32 0.0, %v4415
      %v4417 = vpop.f32.mrf.mxu0
      %v4418 = vadd.f32 0.0, %v4417
      %4419 = vmatprep.mubr.bf16.mxu0 %v3747
      %4420 = vmatmul.mubr.bf16.gmra.mxu0 %v3746
      %v4421 = vpop.f32.mrf.mxu0
      %v4422 = vadd.f32 0.0, %v4421
      %v4423 = vpop.f32.mrf.mxu0
      %v4424 = vadd.f32 0.0, %v4423
      %v4425 = vpop.f32.mrf.mxu0
      %v4426 = vadd.f32 0.0, %v4425
      %v4427 = vpop.f32.mrf.mxu0
      %v4428 = vadd.f32 0.0, %v4427
      %4429 = vmatprep.mubr.bf16.mxu0 %v3749
      %4430 = vmatmul.mubr.bf16.gmra.mxu0 %v3748
      %v4431 = vpop.f32.mrf.mxu0
      %v4432 = vadd.f32 0.0, %v4431
      %v4433 = vpop.f32.mrf.mxu0
      %v4434 = vadd.f32 0.0, %v4433
      %v4435 = vpop.f32.mrf.mxu0
      %v4436 = vadd.f32 0.0, %v4435
      %v4437 = vpop.f32.mrf.mxu0
      %v4438 = vadd.f32 0.0, %v4437
      %4439 = vmatprep.mubr.bf16.mxu0 %v3751
      %4440 = vmatmul.mubr.bf16.gmra.mxu0 %v3750
      %v4441 = vpop.f32.mrf.mxu0
      %v4442 = vadd.f32 0.0, %v4441
      %v4443 = vpop.f32.mrf.mxu0
      %v4444 = vadd.f32 0.0, %v4443
      %v4445 = vpop.f32.mrf.mxu0
      %v4446 = vadd.f32 0.0, %v4445
      %v4447 = vpop.f32.mrf.mxu0
      %v4448 = vadd.f32 0.0, %v4447
      %4449 = vmatprep.mubr.bf16.mxu0 %v3753
      %4450 = vmatmul.mubr.bf16.gmra.mxu0 %v3752
      %v4451 = vpop.f32.mrf.mxu0
      %v4452 = vadd.f32 0.0, %v4451
      %v4453 = vpop.f32.mrf.mxu0
      %v4454 = vadd.f32 0.0, %v4453
      %v4455 = vpop.f32.mrf.mxu0
      %v4456 = vadd.f32 0.0, %v4455
      %v4457 = vpop.f32.mrf.mxu0
      %v4458 = vadd.f32 0.0, %v4457
      %4459 = vmatprep.mubr.bf16.mxu0 %v3755
      %4460 = vmatmul.mubr.bf16.gmra.mxu0 %v3754
      %v4461 = vpop.f32.mrf.mxu0
      %v4462 = vadd.f32 0.0, %v4461
      %v4463 = vpop.f32.mrf.mxu0
      %v4464 = vadd.f32 0.0, %v4463
      %v4465 = vpop.f32.mrf.mxu0
      %v4466 = vadd.f32 0.0, %v4465
      %v4467 = vpop.f32.mrf.mxu0
      %v4468 = vadd.f32 0.0, %v4467
      %4469 = vmatprep.mubr.bf16.mxu0 %v3757
      %4470 = vmatmul.mubr.bf16.gmra.mxu0 %v3756
      %v4471 = vpop.f32.mrf.mxu0
      %v4472 = vadd.f32 0.0, %v4471
      %v4473 = vpop.f32.mrf.mxu0
      %v4474 = vadd.f32 0.0, %v4473
      %v4475 = vpop.f32.mrf.mxu0
      %v4476 = vadd.f32 0.0, %v4475
      %v4477 = vpop.f32.mrf.mxu0
      %v4478 = vadd.f32 0.0, %v4477
      %4479 = vmatprep.mubr.bf16.mxu0 %v3759
      %4480 = vmatmul.mubr.bf16.gmra.mxu0 %v3758
      %v4481 = vpop.f32.mrf.mxu0
      %v4482 = vadd.f32 0.0, %v4481
      %v4483 = vpop.f32.mrf.mxu0
      %v4484 = vadd.f32 0.0, %v4483
      %v4485 = vpop.f32.mrf.mxu0
      %v4486 = vadd.f32 0.0, %v4485
      %v4487 = vpop.f32.mrf.mxu0
      %v4488 = vadd.f32 0.0, %v4487
      %4489 = vmatprep.mubr.bf16.mxu0 %v3761
      %4490 = vmatmul.mubr.bf16.gmra.mxu0 %v3760
      %v4491 = vpop.f32.mrf.mxu0
      %v4492 = vadd.f32 0.0, %v4491
      %v4493 = vpop.f32.mrf.mxu0
      %v4494 = vadd.f32 0.0, %v4493
      %v4495 = vpop.f32.mrf.mxu0
      %v4496 = vadd.f32 0.0, %v4495
      %v4497 = vpop.f32.mrf.mxu0
      %v4498 = vadd.f32 0.0, %v4497
      %4499 = vdwg.mxu0
      %4500 = vmatprep.subr.bf16.mxu0 %v4098
      %4501 = vmatpush1.bf16.msra.mxu0 %v4097
      %4502 = vmatprep.subr.bf16.mxu0 %v4096
      %4503 = vmatpush1.bf16.msra.mxu0 %v4095
      %4504 = vmatprep.subr.bf16.mxu0 %v4094
      %4505 = vmatpush1.bf16.msra.mxu0 %v4093
      %4506 = vmatprep.subr.bf16.mxu0 %v4092
      %4507 = vmatpush1.bf16.msra.mxu0 %v4091
      %4508 = vmatprep.subr.bf16.mxu0 %v4090
      %4509 = vmatpush1.bf16.msra.mxu0 %v4089
      %4510 = vmatprep.subr.bf16.mxu0 %v4088
      %4511 = vmatpush1.bf16.msra.mxu0 %v4087
      %4512 = vmatprep.subr.bf16.mxu0 %v4086
      %4513 = vmatpush1.bf16.msra.mxu0 %v4085
      %4514 = vmatprep.subr.bf16.mxu0 %v4084
      %4515 = vmatpush1.bf16.msra.mxu0 %v4083
      %4516 = vmatprep.subr.bf16.mxu0 %v4114
      %4517 = vmatpush2.bf16.msra.mxu0 %v4113
      %4518 = vmatprep.subr.bf16.mxu0 %v4112
      %4519 = vmatpush2.bf16.msra.mxu0 %v4111
      %4520 = vmatprep.subr.bf16.mxu0 %v4110
      %4521 = vmatpush2.bf16.msra.mxu0 %v4109
      %4522 = vmatprep.subr.bf16.mxu0 %v4108
      %4523 = vmatpush2.bf16.msra.mxu0 %v4107
      %4524 = vmatprep.subr.bf16.mxu0 %v4106
      %4525 = vmatpush2.bf16.msra.mxu0 %v4105
      %4526 = vmatprep.subr.bf16.mxu0 %v4104
      %4527 = vmatpush2.bf16.msra.mxu0 %v4103
      %4528 = vmatprep.subr.bf16.mxu0 %v4102
      %4529 = vmatpush2.bf16.msra.mxu0 %v4101
      %4530 = vmatprep.subr.bf16.mxu0 %v4100
      %4531 = vmatpush2.bf16.msra.mxu0 %v4099
      %4532 = vmatprep.mubr.bf16.mxu0 %v3891
      %4533 = vmatmul.mubr.bf16.gmra.mxu0 %v3890
      %v4534 = vpop.f32.mrf.mxu0
      %v4535 = vadd.f32 0.0, %v4534
      %v4536 = vpop.f32.mrf.mxu0
      %v4537 = vadd.f32 0.0, %v4536
      %v4538 = vpop.f32.mrf.mxu0
      %v4539 = vadd.f32 0.0, %v4538
      %v4540 = vpop.f32.mrf.mxu0
      %v4541 = vadd.f32 0.0, %v4540
      %4542 = vmatprep.mubr.bf16.mxu0 %v3893
      %4543 = vmatmul.mubr.bf16.gmra.mxu0 %v3892
      %v4544 = vpop.f32.mrf.mxu0
      %v4545 = vadd.f32 0.0, %v4544
      %v4546 = vpop.f32.mrf.mxu0
      %v4547 = vadd.f32 0.0, %v4546
      %v4548 = vpop.f32.mrf.mxu0
      %v4549 = vadd.f32 0.0, %v4548
      %v4550 = vpop.f32.mrf.mxu0
      %v4551 = vadd.f32 0.0, %v4550
      %4552 = vmatprep.mubr.bf16.mxu0 %v3895
      %4553 = vmatmul.mubr.bf16.gmra.mxu0 %v3894
      %v4554 = vpop.f32.mrf.mxu0
      %v4555 = vadd.f32 0.0, %v4554
      %v4556 = vpop.f32.mrf.mxu0
      %v4557 = vadd.f32 0.0, %v4556
      %v4558 = vpop.f32.mrf.mxu0
      %v4559 = vadd.f32 0.0, %v4558
      %v4560 = vpop.f32.mrf.mxu0
      %v4561 = vadd.f32 0.0, %v4560
      %4562 = vmatprep.mubr.bf16.mxu0 %v3897
      %4563 = vmatmul.mubr.bf16.gmra.mxu0 %v3896
      %v4564 = vpop.f32.mrf.mxu0
      %v4565 = vadd.f32 0.0, %v4564
      %v4566 = vpop.f32.mrf.mxu0
      %v4567 = vadd.f32 0.0, %v4566
      %v4568 = vpop.f32.mrf.mxu0
      %v4569 = vadd.f32 0.0, %v4568
      %v4570 = vpop.f32.mrf.mxu0
      %v4571 = vadd.f32 0.0, %v4570
      %4572 = vmatprep.mubr.bf16.mxu0 %v3899
      %4573 = vmatmul.mubr.bf16.gmra.mxu0 %v3898
      %v4574 = vpop.f32.mrf.mxu0
      %v4575 = vadd.f32 0.0, %v4574
      %v4576 = vpop.f32.mrf.mxu0
      %v4577 = vadd.f32 0.0, %v4576
      %v4578 = vpop.f32.mrf.mxu0
      %v4579 = vadd.f32 0.0, %v4578
      %v4580 = vpop.f32.mrf.mxu0
      %v4581 = vadd.f32 0.0, %v4580
      %4582 = vmatprep.mubr.bf16.mxu0 %v3901
      %4583 = vmatmul.mubr.bf16.gmra.mxu0 %v3900
      %v4584 = vpop.f32.mrf.mxu0
      %v4585 = vadd.f32 0.0, %v4584
      %v4586 = vpop.f32.mrf.mxu0
      %v4587 = vadd.f32 0.0, %v4586
      %v4588 = vpop.f32.mrf.mxu0
      %v4589 = vadd.f32 0.0, %v4588
      %v4590 = vpop.f32.mrf.mxu0
      %v4591 = vadd.f32 0.0, %v4590
      %4592 = vmatprep.mubr.bf16.mxu0 %v3903
      %4593 = vmatmul.mubr.bf16.gmra.mxu0 %v3902
      %v4594 = vpop.f32.mrf.mxu0
      %v4595 = vadd.f32 0.0, %v4594
      %v4596 = vpop.f32.mrf.mxu0
      %v4597 = vadd.f32 0.0, %v4596
      %v4598 = vpop.f32.mrf.mxu0
      %v4599 = vadd.f32 0.0, %v4598
      %v4600 = vpop.f32.mrf.mxu0
      %v4601 = vadd.f32 0.0, %v4600
      %4602 = vmatprep.mubr.bf16.mxu0 %v3905
      %4603 = vmatmul.mubr.bf16.gmra.mxu0 %v3904
      %v4604 = vpop.f32.mrf.mxu0
      %v4605 = vadd.f32 0.0, %v4604
      %v4606 = vpop.f32.mrf.mxu0
      %v4607 = vadd.f32 0.0, %v4606
      %v4608 = vpop.f32.mrf.mxu0
      %v4609 = vadd.f32 0.0, %v4608
      %v4610 = vpop.f32.mrf.mxu0
      %v4611 = vadd.f32 0.0, %v4610
      %4612 = vmatprep.mubr.bf16.mxu0 %v3907
      %4613 = vmatmul.mubr.bf16.gmra.mxu0 %v3906
      %v4614 = vpop.f32.mrf.mxu0
      %v4615 = vadd.f32 0.0, %v4614
      %v4616 = vpop.f32.mrf.mxu0
      %v4617 = vadd.f32 0.0, %v4616
      %v4618 = vpop.f32.mrf.mxu0
      %v4619 = vadd.f32 0.0, %v4618
      %v4620 = vpop.f32.mrf.mxu0
      %v4621 = vadd.f32 0.0, %v4620
      %4622 = vmatprep.mubr.bf16.mxu0 %v3909
      %4623 = vmatmul.mubr.bf16.gmra.mxu0 %v3908
      %v4624 = vpop.f32.mrf.mxu0
      %v4625 = vadd.f32 0.0, %v4624
      %v4626 = vpop.f32.mrf.mxu0
      %v4627 = vadd.f32 0.0, %v4626
      %v4628 = vpop.f32.mrf.mxu0
      %v4629 = vadd.f32 0.0, %v4628
      %v4630 = vpop.f32.mrf.mxu0
      %v4631 = vadd.f32 0.0, %v4630
      %4632 = vmatprep.mubr.bf16.mxu0 %v3911
      %4633 = vmatmul.mubr.bf16.gmra.mxu0 %v3910
      %v4634 = vpop.f32.mrf.mxu0
      %v4635 = vadd.f32 0.0, %v4634
      %v4636 = vpop.f32.mrf.mxu0
      %v4637 = vadd.f32 0.0, %v4636
      %v4638 = vpop.f32.mrf.mxu0
      %v4639 = vadd.f32 0.0, %v4638
      %v4640 = vpop.f32.mrf.mxu0
      %v4641 = vadd.f32 0.0, %v4640
      %4642 = vmatprep.mubr.bf16.mxu0 %v3913
      %4643 = vmatmul.mubr.bf16.gmra.mxu0 %v3912
      %v4644 = vpop.f32.mrf.mxu0
      %v4645 = vadd.f32 0.0, %v4644
      %v4646 = vpop.f32.mrf.mxu0
      %v4647 = vadd.f32 0.0, %v4646
      %v4648 = vpop.f32.mrf.mxu0
      %v4649 = vadd.f32 0.0, %v4648
      %v4650 = vpop.f32.mrf.mxu0
      %v4651 = vadd.f32 0.0, %v4650
      %4652 = vmatprep.mubr.bf16.mxu0 %v3915
      %4653 = vmatmul.mubr.bf16.gmra.mxu0 %v3914
      %v4654 = vpop.f32.mrf.mxu0
      %v4655 = vadd.f32 0.0, %v4654
      %v4656 = vpop.f32.mrf.mxu0
      %v4657 = vadd.f32 0.0, %v4656
      %v4658 = vpop.f32.mrf.mxu0
      %v4659 = vadd.f32 0.0, %v4658
      %v4660 = vpop.f32.mrf.mxu0
      %v4661 = vadd.f32 0.0, %v4660
      %4662 = vmatprep.mubr.bf16.mxu0 %v3917
      %4663 = vmatmul.mubr.bf16.gmra.mxu0 %v3916
      %v4664 = vpop.f32.mrf.mxu0
      %v4665 = vadd.f32 0.0, %v4664
      %v4666 = vpop.f32.mrf.mxu0
      %v4667 = vadd.f32 0.0, %v4666
      %v4668 = vpop.f32.mrf.mxu0
      %v4669 = vadd.f32 0.0, %v4668
      %v4670 = vpop.f32.mrf.mxu0
      %v4671 = vadd.f32 0.0, %v4670
      %4672 = vmatprep.mubr.bf16.mxu0 %v3919
      %4673 = vmatmul.mubr.bf16.gmra.mxu0 %v3918
      %v4674 = vpop.f32.mrf.mxu0
      %v4675 = vadd.f32 0.0, %v4674
      %v4676 = vpop.f32.mrf.mxu0
      %v4677 = vadd.f32 0.0, %v4676
      %v4678 = vpop.f32.mrf.mxu0
      %v4679 = vadd.f32 0.0, %v4678
      %v4680 = vpop.f32.mrf.mxu0
      %v4681 = vadd.f32 0.0, %v4680
      %4682 = vmatprep.mubr.bf16.mxu0 %v3921
      %4683 = vmatmul.mubr.bf16.gmra.mxu0 %v3920
      %v4684 = vpop.f32.mrf.mxu0
      %v4685 = vadd.f32 0.0, %v4684
      %v4686 = vpop.f32.mrf.mxu0
      %v4687 = vadd.f32 0.0, %v4686
      %v4688 = vpop.f32.mrf.mxu0
      %v4689 = vadd.f32 0.0, %v4688
      %v4690 = vpop.f32.mrf.mxu0
      %v4691 = vadd.f32 0.0, %v4690
      %4692 = vmatprep.mubr.bf16.mxu0 %v3923
      %4693 = vmatmul.mubr.bf16.gmra.mxu0 %v3922
      %v4694 = vpop.f32.mrf.mxu0
      %v4695 = vadd.f32 0.0, %v4694
      %v4696 = vpop.f32.mrf.mxu0
      %v4697 = vadd.f32 0.0, %v4696
      %v4698 = vpop.f32.mrf.mxu0
      %v4699 = vadd.f32 0.0, %v4698
      %v4700 = vpop.f32.mrf.mxu0
      %v4701 = vadd.f32 0.0, %v4700
      %4702 = vmatprep.mubr.bf16.mxu0 %v3925
      %4703 = vmatmul.mubr.bf16.gmra.mxu0 %v3924
      %v4704 = vpop.f32.mrf.mxu0
      %v4705 = vadd.f32 0.0, %v4704
      %v4706 = vpop.f32.mrf.mxu0
      %v4707 = vadd.f32 0.0, %v4706
      %v4708 = vpop.f32.mrf.mxu0
      %v4709 = vadd.f32 0.0, %v4708
      %v4710 = vpop.f32.mrf.mxu0
      %v4711 = vadd.f32 0.0, %v4710
      %4712 = vmatprep.mubr.bf16.mxu0 %v3927
      %4713 = vmatmul.mubr.bf16.gmra.mxu0 %v3926
      %v4714 = vpop.f32.mrf.mxu0
      %v4715 = vadd.f32 0.0, %v4714
      %v4716 = vpop.f32.mrf.mxu0
      %v4717 = vadd.f32 0.0, %v4716
      %v4718 = vpop.f32.mrf.mxu0
      %v4719 = vadd.f32 0.0, %v4718
      %v4720 = vpop.f32.mrf.mxu0
      %v4721 = vadd.f32 0.0, %v4720
      %4722 = vmatprep.mubr.bf16.mxu0 %v3929
      %4723 = vmatmul.mubr.bf16.gmra.mxu0 %v3928
      %v4724 = vpop.f32.mrf.mxu0
      %v4725 = vadd.f32 0.0, %v4724
      %v4726 = vpop.f32.mrf.mxu0
      %v4727 = vadd.f32 0.0, %v4726
      %v4728 = vpop.f32.mrf.mxu0
      %v4729 = vadd.f32 0.0, %v4728
      %v4730 = vpop.f32.mrf.mxu0
      %v4731 = vadd.f32 0.0, %v4730
      %4732 = vmatprep.mubr.bf16.mxu0 %v3931
      %4733 = vmatmul.mubr.bf16.gmra.mxu0 %v3930
      %v4734 = vpop.f32.mrf.mxu0
      %v4735 = vadd.f32 0.0, %v4734
      %v4736 = vpop.f32.mrf.mxu0
      %v4737 = vadd.f32 0.0, %v4736
      %v4738 = vpop.f32.mrf.mxu0
      %v4739 = vadd.f32 0.0, %v4738
      %v4740 = vpop.f32.mrf.mxu0
      %v4741 = vadd.f32 0.0, %v4740
      %4742 = vmatprep.mubr.bf16.mxu0 %v3933
      %4743 = vmatmul.mubr.bf16.gmra.mxu0 %v3932
      %v4744 = vpop.f32.mrf.mxu0
      %v4745 = vadd.f32 0.0, %v4744
      %v4746 = vpop.f32.mrf.mxu0
      %v4747 = vadd.f32 0.0, %v4746
      %v4748 = vpop.f32.mrf.mxu0
      %v4749 = vadd.f32 0.0, %v4748
      %v4750 = vpop.f32.mrf.mxu0
      %v4751 = vadd.f32 0.0, %v4750
      %4752 = vmatprep.mubr.bf16.mxu0 %v3935
      %4753 = vmatmul.mubr.bf16.gmra.mxu0 %v3934
      %v4754 = vpop.f32.mrf.mxu0
      %v4755 = vadd.f32 0.0, %v4754
      %v4756 = vpop.f32.mrf.mxu0
      %v4757 = vadd.f32 0.0, %v4756
      %v4758 = vpop.f32.mrf.mxu0
      %v4759 = vadd.f32 0.0, %v4758
      %v4760 = vpop.f32.mrf.mxu0
      %v4761 = vadd.f32 0.0, %v4760
      %4762 = vmatprep.mubr.bf16.mxu0 %v3937
      %4763 = vmatmul.mubr.bf16.gmra.mxu0 %v3936
      %v4764 = vpop.f32.mrf.mxu0
      %v4765 = vadd.f32 0.0, %v4764
      %v4766 = vpop.f32.mrf.mxu0
      %v4767 = vadd.f32 0.0, %v4766
      %v4768 = vpop.f32.mrf.mxu0
      %v4769 = vadd.f32 0.0, %v4768
      %v4770 = vpop.f32.mrf.mxu0
      %v4771 = vadd.f32 0.0, %v4770
      %4772 = vmatprep.mubr.bf16.mxu0 %v3939
      %4773 = vmatmul.mubr.bf16.gmra.mxu0 %v3938
      %v4774 = vpop.f32.mrf.mxu0
      %v4775 = vadd.f32 0.0, %v4774
      %v4776 = vpop.f32.mrf.mxu0
      %v4777 = vadd.f32 0.0, %v4776
      %v4778 = vpop.f32.mrf.mxu0
      %v4779 = vadd.f32 0.0, %v4778
      %v4780 = vpop.f32.mrf.mxu0
      %v4781 = vadd.f32 0.0, %v4780
      %4782 = vmatprep.mubr.bf16.mxu0 %v3941
      %4783 = vmatmul.mubr.bf16.gmra.mxu0 %v3940
      %v4784 = vpop.f32.mrf.mxu0
      %v4785 = vadd.f32 0.0, %v4784
      %v4786 = vpop.f32.mrf.mxu0
      %v4787 = vadd.f32 0.0, %v4786
      %v4788 = vpop.f32.mrf.mxu0
      %v4789 = vadd.f32 0.0, %v4788
      %v4790 = vpop.f32.mrf.mxu0
      %v4791 = vadd.f32 0.0, %v4790
      %4792 = vmatprep.mubr.bf16.mxu0 %v3943
      %4793 = vmatmul.mubr.bf16.gmra.mxu0 %v3942
      %v4794 = vpop.f32.mrf.mxu0
      %v4795 = vadd.f32 0.0, %v4794
      %v4796 = vpop.f32.mrf.mxu0
      %v4797 = vadd.f32 0.0, %v4796
      %v4798 = vpop.f32.mrf.mxu0
      %v4799 = vadd.f32 0.0, %v4798
      %v4800 = vpop.f32.mrf.mxu0
      %v4801 = vadd.f32 0.0, %v4800
      %4802 = vmatprep.mubr.bf16.mxu0 %v3945
      %4803 = vmatmul.mubr.bf16.gmra.mxu0 %v3944
      %v4804 = vpop.f32.mrf.mxu0
      %v4805 = vadd.f32 0.0, %v4804
      %v4806 = vpop.f32.mrf.mxu0
      %v4807 = vadd.f32 0.0, %v4806
      %v4808 = vpop.f32.mrf.mxu0
      %v4809 = vadd.f32 0.0, %v4808
      %v4810 = vpop.f32.mrf.mxu0
      %v4811 = vadd.f32 0.0, %v4810
      %4812 = vmatprep.mubr.bf16.mxu0 %v3947
      %4813 = vmatmul.mubr.bf16.gmra.mxu0 %v3946
      %v4814 = vpop.f32.mrf.mxu0
      %v4815 = vadd.f32 0.0, %v4814
      %v4816 = vpop.f32.mrf.mxu0
      %v4817 = vadd.f32 0.0, %v4816
      %v4818 = vpop.f32.mrf.mxu0
      %v4819 = vadd.f32 0.0, %v4818
      %v4820 = vpop.f32.mrf.mxu0
      %v4821 = vadd.f32 0.0, %v4820
      %4822 = vmatprep.mubr.bf16.mxu0 %v3949
      %4823 = vmatmul.mubr.bf16.gmra.mxu0 %v3948
      %v4824 = vpop.f32.mrf.mxu0
      %v4825 = vadd.f32 0.0, %v4824
      %v4826 = vpop.f32.mrf.mxu0
      %v4827 = vadd.f32 0.0, %v4826
      %v4828 = vpop.f32.mrf.mxu0
      %v4829 = vadd.f32 0.0, %v4828
      %v4830 = vpop.f32.mrf.mxu0
      %v4831 = vadd.f32 0.0, %v4830
      %4832 = vmatprep.mubr.bf16.mxu0 %v3951
      %4833 = vmatmul.mubr.bf16.gmra.mxu0 %v3950
      %v4834 = vpop.f32.mrf.mxu0
      %v4835 = vadd.f32 0.0, %v4834
      %v4836 = vpop.f32.mrf.mxu0
      %v4837 = vadd.f32 0.0, %v4836
      %v4838 = vpop.f32.mrf.mxu0
      %v4839 = vadd.f32 0.0, %v4838
      %v4840 = vpop.f32.mrf.mxu0
      %v4841 = vadd.f32 0.0, %v4840
      %4842 = vmatprep.mubr.bf16.mxu0 %v3953
      %4843 = vmatmul.mubr.bf16.gmra.mxu0 %v3952
      %v4844 = vpop.f32.mrf.mxu0
      %v4845 = vadd.f32 0.0, %v4844
      %v4846 = vpop.f32.mrf.mxu0
      %v4847 = vadd.f32 0.0, %v4846
      %v4848 = vpop.f32.mrf.mxu0
      %v4849 = vadd.f32 0.0, %v4848
      %v4850 = vpop.f32.mrf.mxu0
      %v4851 = vadd.f32 0.0, %v4850
      %4852 = vdwg.mxu0
      %v4853 = vmax.f32 %v4182, 0.0
      %v4854 = vmax.f32 %v4184, 0.0
      %v4855 = vmax.f32 %v4186, 0.0
      %v4856 = vmax.f32 %v4188, 0.0
      %v4857 = vmax.f32 %v4192, 0.0
      %v4858 = vmax.f32 %v4194, 0.0
      %v4859 = vmax.f32 %v4196, 0.0
      %v4860 = vmax.f32 %v4198, 0.0
      %v4861 = vmax.f32 %v4202, 0.0
      %v4862 = vmax.f32 %v4204, 0.0
      %v4863 = vmax.f32 %v4206, 0.0
      %v4864 = vmax.f32 %v4208, 0.0
      %v4865 = vmax.f32 %v4212, 0.0
      %v4866 = vmax.f32 %v4214, 0.0
      %v4867 = vmax.f32 %v4216, 0.0
      %v4868 = vmax.f32 %v4218, 0.0
      %v4869 = vmax.f32 %v4222, 0.0
      %v4870 = vmax.f32 %v4224, 0.0
      %v4871 = vmax.f32 %v4226, 0.0
      %v4872 = vmax.f32 %v4228, 0.0
      %v4873 = vmax.f32 %v4232, 0.0
      %v4874 = vmax.f32 %v4234, 0.0
      %v4875 = vmax.f32 %v4236, 0.0
      %v4876 = vmax.f32 %v4238, 0.0
      %v4877 = vmax.f32 %v4242, 0.0
      %v4878 = vmax.f32 %v4244, 0.0
      %v4879 = vmax.f32 %v4246, 0.0
      %v4880 = vmax.f32 %v4248, 0.0
      %v4881 = vmax.f32 %v4252, 0.0
      %v4882 = vmax.f32 %v4254, 0.0
      %v4883 = vmax.f32 %v4256, 0.0
      %v4884 = vmax.f32 %v4258, 0.0
      %v4885 = vmax.f32 %v4262, 0.0
      %v4886 = vmax.f32 %v4264, 0.0
      %v4887 = vmax.f32 %v4266, 0.0
      %v4888 = vmax.f32 %v4268, 0.0
      %v4889 = vmax.f32 %v4272, 0.0
      %v4890 = vmax.f32 %v4274, 0.0
      %v4891 = vmax.f32 %v4276, 0.0
      %v4892 = vmax.f32 %v4278, 0.0
      %v4893 = vmax.f32 %v4282, 0.0
      %v4894 = vmax.f32 %v4284, 0.0
      %v4895 = vmax.f32 %v4286, 0.0
      %v4896 = vmax.f32 %v4288, 0.0
      %v4897 = vmax.f32 %v4292, 0.0
      %v4898 = vmax.f32 %v4294, 0.0
      %v4899 = vmax.f32 %v4296, 0.0
      %v4900 = vmax.f32 %v4298, 0.0
      %v4901 = vmax.f32 %v4302, 0.0
      %v4902 = vmax.f32 %v4304, 0.0
      %v4903 = vmax.f32 %v4306, 0.0
      %v4904 = vmax.f32 %v4308, 0.0
      %v4905 = vmax.f32 %v4312, 0.0
      %v4906 = vmax.f32 %v4314, 0.0
      %v4907 = vmax.f32 %v4316, 0.0
      %v4908 = vmax.f32 %v4318, 0.0
      %v4909 = vmax.f32 %v4322, 0.0
      %v4910 = vmax.f32 %v4324, 0.0
      %v4911 = vmax.f32 %v4326, 0.0
      %v4912 = vmax.f32 %v4328, 0.0
      %v4913 = vmax.f32 %v4332, 0.0
      %v4914 = vmax.f32 %v4334, 0.0
      %v4915 = vmax.f32 %v4336, 0.0
      %v4916 = vmax.f32 %v4338, 0.0
      %v4917 = vmax.f32 %v4342, 0.0
      %v4918 = vmax.f32 %v4344, 0.0
      %v4919 = vmax.f32 %v4346, 0.0
      %v4920 = vmax.f32 %v4348, 0.0
      %v4921 = vmax.f32 %v4352, 0.0
      %v4922 = vmax.f32 %v4354, 0.0
      %v4923 = vmax.f32 %v4356, 0.0
      %v4924 = vmax.f32 %v4358, 0.0
      %v4925 = vmax.f32 %v4362, 0.0
      %v4926 = vmax.f32 %v4364, 0.0
      %v4927 = vmax.f32 %v4366, 0.0
      %v4928 = vmax.f32 %v4368, 0.0
      %v4929 = vmax.f32 %v4372, 0.0
      %v4930 = vmax.f32 %v4374, 0.0
      %v4931 = vmax.f32 %v4376, 0.0
      %v4932 = vmax.f32 %v4378, 0.0
      %v4933 = vmax.f32 %v4382, 0.0
      %v4934 = vmax.f32 %v4384, 0.0
      %v4935 = vmax.f32 %v4386, 0.0
      %v4936 = vmax.f32 %v4388, 0.0
      %v4937 = vmax.f32 %v4392, 0.0
      %v4938 = vmax.f32 %v4394, 0.0
      %v4939 = vmax.f32 %v4396, 0.0
      %v4940 = vmax.f32 %v4398, 0.0
      %v4941 = vmax.f32 %v4402, 0.0
      %v4942 = vmax.f32 %v4404, 0.0
      %v4943 = vmax.f32 %v4406, 0.0
      %v4944 = vmax.f32 %v4408, 0.0
      %v4945 = vmax.f32 %v4412, 0.0
      %v4946 = vmax.f32 %v4414, 0.0
      %v4947 = vmax.f32 %v4416, 0.0
      %v4948 = vmax.f32 %v4418, 0.0
      %v4949 = vmax.f32 %v4422, 0.0
      %v4950 = vmax.f32 %v4424, 0.0
      %v4951 = vmax.f32 %v4426, 0.0
      %v4952 = vmax.f32 %v4428, 0.0
      %v4953 = vmax.f32 %v4432, 0.0
      %v4954 = vmax.f32 %v4434, 0.0
      %v4955 = vmax.f32 %v4436, 0.0
      %v4956 = vmax.f32 %v4438, 0.0
      %v4957 = vmax.f32 %v4442, 0.0
      %v4958 = vmax.f32 %v4444, 0.0
      %v4959 = vmax.f32 %v4446, 0.0
      %v4960 = vmax.f32 %v4448, 0.0
      %v4961 = vmax.f32 %v4452, 0.0
      %v4962 = vmax.f32 %v4454, 0.0
      %v4963 = vmax.f32 %v4456, 0.0
      %v4964 = vmax.f32 %v4458, 0.0
      %v4965 = vmax.f32 %v4462, 0.0
      %v4966 = vmax.f32 %v4464, 0.0
      %v4967 = vmax.f32 %v4466, 0.0
      %v4968 = vmax.f32 %v4468, 0.0
      %v4969 = vmax.f32 %v4472, 0.0
      %v4970 = vmax.f32 %v4474, 0.0
      %v4971 = vmax.f32 %v4476, 0.0
      %v4972 = vmax.f32 %v4478, 0.0
      %v4973 = vmax.f32 %v4482, 0.0
      %v4974 = vmax.f32 %v4484, 0.0
      %v4975 = vmax.f32 %v4486, 0.0
      %v4976 = vmax.f32 %v4488, 0.0
      %v4977 = vmax.f32 %v4492, 0.0
      %v4978 = vmax.f32 %v4494, 0.0
      %v4979 = vmax.f32 %v4496, 0.0
      %v4980 = vmax.f32 %v4498, 0.0
      %v4981 = vpack.c.bf16 %v4855, %v4853
      %v4982 = vpack.c.bf16 %v4856, %v4854
      %v4983 = vpack.c.bf16 %v4859, %v4857
      %v4984 = vpack.c.bf16 %v4860, %v4858
      %v4985 = vpack.c.bf16 %v4863, %v4861
      %v4986 = vpack.c.bf16 %v4864, %v4862
      %v4987 = vpack.c.bf16 %v4867, %v4865
      %v4988 = vpack.c.bf16 %v4868, %v4866
      %v4989 = vpack.c.bf16 %v4871, %v4869
      %v4990 = vpack.c.bf16 %v4872, %v4870
      %v4991 = vpack.c.bf16 %v4875, %v4873
      %v4992 = vpack.c.bf16 %v4876, %v4874
      %v4993 = vpack.c.bf16 %v4879, %v4877
      %v4994 = vpack.c.bf16 %v4880, %v4878
      %v4995 = vpack.c.bf16 %v4883, %v4881
      %v4996 = vpack.c.bf16 %v4884, %v4882
      %v4997 = vpack.c.bf16 %v4887, %v4885
      %v4998 = vpack.c.bf16 %v4888, %v4886
      %v4999 = vpack.c.bf16 %v4891, %v4889
      %v5000 = vpack.c.bf16 %v4892, %v4890
      %v5001 = vpack.c.bf16 %v4895, %v4893
      %v5002 = vpack.c.bf16 %v4896, %v4894
      %v5003 = vpack.c.bf16 %v4899, %v4897
      %v5004 = vpack.c.bf16 %v4900, %v4898
      %v5005 = vpack.c.bf16 %v4903, %v4901
      %v5006 = vpack.c.bf16 %v4904, %v4902
      %v5007 = vpack.c.bf16 %v4907, %v4905
      %v5008 = vpack.c.bf16 %v4908, %v4906
      %v5009 = vpack.c.bf16 %v4911, %v4909
      %v5010 = vpack.c.bf16 %v4912, %v4910
      %v5011 = vpack.c.bf16 %v4915, %v4913
      %v5012 = vpack.c.bf16 %v4916, %v4914
      %v5013 = vpack.c.bf16 %v4919, %v4917
      %v5014 = vpack.c.bf16 %v4920, %v4918
      %v5015 = vpack.c.bf16 %v4923, %v4921
      %v5016 = vpack.c.bf16 %v4924, %v4922
      %v5017 = vpack.c.bf16 %v4927, %v4925
      %v5018 = vpack.c.bf16 %v4928, %v4926
      %v5019 = vpack.c.bf16 %v4931, %v4929
      %v5020 = vpack.c.bf16 %v4932, %v4930
      %v5021 = vpack.c.bf16 %v4935, %v4933
      %v5022 = vpack.c.bf16 %v4936, %v4934
      %v5023 = vpack.c.bf16 %v4939, %v4937
      %v5024 = vpack.c.bf16 %v4940, %v4938
      %v5025 = vpack.c.bf16 %v4943, %v4941
      %v5026 = vpack.c.bf16 %v4944, %v4942
      %v5027 = vpack.c.bf16 %v4947, %v4945
      %v5028 = vpack.c.bf16 %v4948, %v4946
      %v5029 = vpack.c.bf16 %v4951, %v4949
      %v5030 = vpack.c.bf16 %v4952, %v4950
      %v5031 = vpack.c.bf16 %v4955, %v4953
      %v5032 = vpack.c.bf16 %v4956, %v4954
      %v5033 = vpack.c.bf16 %v4959, %v4957
      %v5034 = vpack.c.bf16 %v4960, %v4958
      %v5035 = vpack.c.bf16 %v4963, %v4961
      %v5036 = vpack.c.bf16 %v4964, %v4962
      %v5037 = vpack.c.bf16 %v4967, %v4965
      %v5038 = vpack.c.bf16 %v4968, %v4966
      %v5039 = vpack.c.bf16 %v4971, %v4969
      %v5040 = vpack.c.bf16 %v4972, %v4970
      %v5041 = vpack.c.bf16 %v4975, %v4973
      %v5042 = vpack.c.bf16 %v4976, %v4974
      %v5043 = vpack.c.bf16 %v4979, %v4977
      %v5044 = vpack.c.bf16 %v4980, %v4978
      %v5045 = vmax.f32 %v4535, 0.0
      %v5046 = vmax.f32 %v4537, 0.0
      %v5047 = vmax.f32 %v4539, 0.0
      %v5048 = vmax.f32 %v4541, 0.0
      %v5049 = vmax.f32 %v4545, 0.0
      %v5050 = vmax.f32 %v4547, 0.0
      %v5051 = vmax.f32 %v4549, 0.0
      %v5052 = vmax.f32 %v4551, 0.0
      %v5053 = vmax.f32 %v4555, 0.0
      %v5054 = vmax.f32 %v4557, 0.0
      %v5055 = vmax.f32 %v4559, 0.0
      %v5056 = vmax.f32 %v4561, 0.0
      %v5057 = vmax.f32 %v4565, 0.0
      %v5058 = vmax.f32 %v4567, 0.0
      %v5059 = vmax.f32 %v4569, 0.0
      %v5060 = vmax.f32 %v4571, 0.0
      %v5061 = vmax.f32 %v4575, 0.0
      %v5062 = vmax.f32 %v4577, 0.0
      %v5063 = vmax.f32 %v4579, 0.0
      %v5064 = vmax.f32 %v4581, 0.0
      %v5065 = vmax.f32 %v4585, 0.0
      %v5066 = vmax.f32 %v4587, 0.0
      %v5067 = vmax.f32 %v4589, 0.0
      %v5068 = vmax.f32 %v4591, 0.0
      %v5069 = vmax.f32 %v4595, 0.0
      %v5070 = vmax.f32 %v4597, 0.0
      %v5071 = vmax.f32 %v4599, 0.0
      %v5072 = vmax.f32 %v4601, 0.0
      %v5073 = vmax.f32 %v4605, 0.0
      %v5074 = vmax.f32 %v4607, 0.0
      %v5075 = vmax.f32 %v4609, 0.0
      %v5076 = vmax.f32 %v4611, 0.0
      %v5077 = vmax.f32 %v4615, 0.0
      %v5078 = vmax.f32 %v4617, 0.0
      %v5079 = vmax.f32 %v4619, 0.0
      %v5080 = vmax.f32 %v4621, 0.0
      %v5081 = vmax.f32 %v4625, 0.0
      %v5082 = vmax.f32 %v4627, 0.0
      %v5083 = vmax.f32 %v4629, 0.0
      %v5084 = vmax.f32 %v4631, 0.0
      %v5085 = vmax.f32 %v4635, 0.0
      %v5086 = vmax.f32 %v4637, 0.0
      %v5087 = vmax.f32 %v4639, 0.0
      %v5088 = vmax.f32 %v4641, 0.0
      %v5089 = vmax.f32 %v4645, 0.0
      %v5090 = vmax.f32 %v4647, 0.0
      %v5091 = vmax.f32 %v4649, 0.0
      %v5092 = vmax.f32 %v4651, 0.0
      %v5093 = vmax.f32 %v4655, 0.0
      %v5094 = vmax.f32 %v4657, 0.0
      %v5095 = vmax.f32 %v4659, 0.0
      %v5096 = vmax.f32 %v4661, 0.0
      %v5097 = vmax.f32 %v4665, 0.0
      %v5098 = vmax.f32 %v4667, 0.0
      %v5099 = vmax.f32 %v4669, 0.0
      %v5100 = vmax.f32 %v4671, 0.0
      %v5101 = vmax.f32 %v4675, 0.0
      %v5102 = vmax.f32 %v4677, 0.0
      %v5103 = vmax.f32 %v4679, 0.0
      %v5104 = vmax.f32 %v4681, 0.0
      %v5105 = vmax.f32 %v4685, 0.0
      %v5106 = vmax.f32 %v4687, 0.0
      %v5107 = vmax.f32 %v4689, 0.0
      %v5108 = vmax.f32 %v4691, 0.0
      %v5109 = vmax.f32 %v4695, 0.0
      %v5110 = vmax.f32 %v4697, 0.0
      %v5111 = vmax.f32 %v4699, 0.0
      %v5112 = vmax.f32 %v4701, 0.0
      %v5113 = vmax.f32 %v4705, 0.0
      %v5114 = vmax.f32 %v4707, 0.0
      %v5115 = vmax.f32 %v4709, 0.0
      %v5116 = vmax.f32 %v4711, 0.0
      %v5117 = vmax.f32 %v4715, 0.0
      %v5118 = vmax.f32 %v4717, 0.0
      %v5119 = vmax.f32 %v4719, 0.0
      %v5120 = vmax.f32 %v4721, 0.0
      %v5121 = vmax.f32 %v4725, 0.0
      %v5122 = vmax.f32 %v4727, 0.0
      %v5123 = vmax.f32 %v4729, 0.0
      %v5124 = vmax.f32 %v4731, 0.0
      %v5125 = vmax.f32 %v4735, 0.0
      %v5126 = vmax.f32 %v4737, 0.0
      %v5127 = vmax.f32 %v4739, 0.0
      %v5128 = vmax.f32 %v4741, 0.0
      %v5129 = vmax.f32 %v4745, 0.0
      %v5130 = vmax.f32 %v4747, 0.0
      %v5131 = vmax.f32 %v4749, 0.0
      %v5132 = vmax.f32 %v4751, 0.0
      %v5133 = vmax.f32 %v4755, 0.0
      %v5134 = vmax.f32 %v4757, 0.0
      %v5135 = vmax.f32 %v4759, 0.0
      %v5136 = vmax.f32 %v4761, 0.0
      %v5137 = vmax.f32 %v4765, 0.0
      %v5138 = vmax.f32 %v4767, 0.0
      %v5139 = vmax.f32 %v4769, 0.0
      %v5140 = vmax.f32 %v4771, 0.0
      %v5141 = vmax.f32 %v4775, 0.0
      %v5142 = vmax.f32 %v4777, 0.0
      %v5143 = vmax.f32 %v4779, 0.0
      %v5144 = vmax.f32 %v4781, 0.0
      %v5145 = vmax.f32 %v4785, 0.0
      %v5146 = vmax.f32 %v4787, 0.0
      %v5147 = vmax.f32 %v4789, 0.0
      %v5148 = vmax.f32 %v4791, 0.0
      %v5149 = vmax.f32 %v4795, 0.0
      %v5150 = vmax.f32 %v4797, 0.0
      %v5151 = vmax.f32 %v4799, 0.0
      %v5152 = vmax.f32 %v4801, 0.0
      %v5153 = vmax.f32 %v4805, 0.0
      %v5154 = vmax.f32 %v4807, 0.0
      %v5155 = vmax.f32 %v4809, 0.0
      %v5156 = vmax.f32 %v4811, 0.0
      %v5157 = vmax.f32 %v4815, 0.0
      %v5158 = vmax.f32 %v4817, 0.0
      %v5159 = vmax.f32 %v4819, 0.0
      %v5160 = vmax.f32 %v4821, 0.0
      %v5161 = vmax.f32 %v4825, 0.0
      %v5162 = vmax.f32 %v4827, 0.0
      %v5163 = vmax.f32 %v4829, 0.0
      %v5164 = vmax.f32 %v4831, 0.0
      %v5165 = vmax.f32 %v4835, 0.0
      %v5166 = vmax.f32 %v4837, 0.0
      %v5167 = vmax.f32 %v4839, 0.0
      %v5168 = vmax.f32 %v4841, 0.0
      %v5169 = vmax.f32 %v4845, 0.0
      %v5170 = vmax.f32 %v4847, 0.0
      %v5171 = vmax.f32 %v4849, 0.0
      %v5172 = vmax.f32 %v4851, 0.0
      %v5173 = vpack.c.bf16 %v5047, %v5045
      %v5174 = vpack.c.bf16 %v5048, %v5046
      %v5175 = vpack.c.bf16 %v5051, %v5049
      %v5176 = vpack.c.bf16 %v5052, %v5050
      %v5177 = vpack.c.bf16 %v5055, %v5053
      %v5178 = vpack.c.bf16 %v5056, %v5054
      %v5179 = vpack.c.bf16 %v5059, %v5057
      %v5180 = vpack.c.bf16 %v5060, %v5058
      %v5181 = vpack.c.bf16 %v5063, %v5061
      %v5182 = vpack.c.bf16 %v5064, %v5062
      %v5183 = vpack.c.bf16 %v5067, %v5065
      %v5184 = vpack.c.bf16 %v5068, %v5066
      %v5185 = vpack.c.bf16 %v5071, %v5069
      %v5186 = vpack.c.bf16 %v5072, %v5070
      %v5187 = vpack.c.bf16 %v5075, %v5073
      %v5188 = vpack.c.bf16 %v5076, %v5074
      %v5189 = vpack.c.bf16 %v5079, %v5077
      %v5190 = vpack.c.bf16 %v5080, %v5078
      %v5191 = vpack.c.bf16 %v5083, %v5081
      %v5192 = vpack.c.bf16 %v5084, %v5082
      %v5193 = vpack.c.bf16 %v5087, %v5085
      %v5194 = vpack.c.bf16 %v5088, %v5086
      %v5195 = vpack.c.bf16 %v5091, %v5089
      %v5196 = vpack.c.bf16 %v5092, %v5090
      %v5197 = vpack.c.bf16 %v5095, %v5093
      %v5198 = vpack.c.bf16 %v5096, %v5094
      %v5199 = vpack.c.bf16 %v5099, %v5097
      %v5200 = vpack.c.bf16 %v5100, %v5098
      %v5201 = vpack.c.bf16 %v5103, %v5101
      %v5202 = vpack.c.bf16 %v5104, %v5102
      %v5203 = vpack.c.bf16 %v5107, %v5105
      %v5204 = vpack.c.bf16 %v5108, %v5106
      %v5205 = vpack.c.bf16 %v5111, %v5109
      %v5206 = vpack.c.bf16 %v5112, %v5110
      %v5207 = vpack.c.bf16 %v5115, %v5113
      %v5208 = vpack.c.bf16 %v5116, %v5114
      %v5209 = vpack.c.bf16 %v5119, %v5117
      %v5210 = vpack.c.bf16 %v5120, %v5118
      %v5211 = vpack.c.bf16 %v5123, %v5121
      %v5212 = vpack.c.bf16 %v5124, %v5122
      %v5213 = vpack.c.bf16 %v5127, %v5125
      %v5214 = vpack.c.bf16 %v5128, %v5126
      %v5215 = vpack.c.bf16 %v5131, %v5129
      %v5216 = vpack.c.bf16 %v5132, %v5130
      %v5217 = vpack.c.bf16 %v5135, %v5133
      %v5218 = vpack.c.bf16 %v5136, %v5134
      %v5219 = vpack.c.bf16 %v5139, %v5137
      %v5220 = vpack.c.bf16 %v5140, %v5138
      %v5221 = vpack.c.bf16 %v5143, %v5141
      %v5222 = vpack.c.bf16 %v5144, %v5142
      %v5223 = vpack.c.bf16 %v5147, %v5145
      %v5224 = vpack.c.bf16 %v5148, %v5146
      %v5225 = vpack.c.bf16 %v5151, %v5149
      %v5226 = vpack.c.bf16 %v5152, %v5150
      %v5227 = vpack.c.bf16 %v5155, %v5153
      %v5228 = vpack.c.bf16 %v5156, %v5154
      %v5229 = vpack.c.bf16 %v5159, %v5157
      %v5230 = vpack.c.bf16 %v5160, %v5158
      %v5231 = vpack.c.bf16 %v5163, %v5161
      %v5232 = vpack.c.bf16 %v5164, %v5162
      %v5233 = vpack.c.bf16 %v5167, %v5165
      %v5234 = vpack.c.bf16 %v5168, %v5166
      %v5235 = vpack.c.bf16 %v5171, %v5169
      %v5236 = vpack.c.bf16 %v5172, %v5170
      %s5237 = scalar_lea.vmem %s2, 512
      %v5238 = vld [vmem:[%s5237] sm:$0xff]
      %v5239 = vld [vmem:[%s5237 + $0x8] sm:$0xff]
      %v5240 = vld [vmem:[%s5237 + $0x10] sm:$0xff]
      %v5241 = vld [vmem:[%s5237 + $0x18] sm:$0xff]
      %v5242 = vld [vmem:[%s5237 + $0x20] sm:$0xff]
      %v5243 = vld [vmem:[%s5237 + $0x28] sm:$0xff]
      %v5244 = vld [vmem:[%s5237 + $0x30] sm:$0xff]
      %v5245 = vld [vmem:[%s5237 + $0x38] sm:$0xff]
      %v5246 = vld [vmem:[%s5237 + $0x40] sm:$0xff]
      %v5247 = vld [vmem:[%s5237 + $0x48] sm:$0xff]
      %v5248 = vld [vmem:[%s5237 + $0x50] sm:$0xff]
      %v5249 = vld [vmem:[%s5237 + $0x58] sm:$0xff]
      %v5250 = vld [vmem:[%s5237 + $0x60] sm:$0xff]
      %v5251 = vld [vmem:[%s5237 + $0x68] sm:$0xff]
      %v5252 = vld [vmem:[%s5237 + $0x70] sm:$0xff]
      %v5253 = vld [vmem:[%s5237 + $0x78] sm:$0xff]
      %v5254 = vld [vmem:[%s5237 + $0x80] sm:$0xff]
      %v5255 = vld [vmem:[%s5237 + $0x88] sm:$0xff]
      %v5256 = vld [vmem:[%s5237 + $0x90] sm:$0xff]
      %v5257 = vld [vmem:[%s5237 + $0x98] sm:$0xff]
      %v5258 = vld [vmem:[%s5237 + $0xa0] sm:$0xff]
      %v5259 = vld [vmem:[%s5237 + $0xa8] sm:$0xff]
      %v5260 = vld [vmem:[%s5237 + $0xb0] sm:$0xff]
      %v5261 = vld [vmem:[%s5237 + $0xb8] sm:$0xff]
      %v5262 = vld [vmem:[%s5237 + $0xc0] sm:$0xff]
      %v5263 = vld [vmem:[%s5237 + $0xc8] sm:$0xff]
      %v5264 = vld [vmem:[%s5237 + $0xd0] sm:$0xff]
      %v5265 = vld [vmem:[%s5237 + $0xd8] sm:$0xff]
      %v5266 = vld [vmem:[%s5237 + $0xe0] sm:$0xff]
      %v5267 = vld [vmem:[%s5237 + $0xe8] sm:$0xff]
      %v5268 = vld [vmem:[%s5237 + $0xf0] sm:$0xff]
      %v5269 = vld [vmem:[%s5237 + $0xf8] sm:$0xff]
      %v5302 = vunpack.c.l.b16 %v5238
      %v5303 = vunpack.c.h.b16 %v5238
      %v5304 = vunpack.c.l.b16 %v5239
      %v5305 = vunpack.c.h.b16 %v5239
      %v5306 = vunpack.c.l.b16 %v5240
      %v5307 = vunpack.c.h.b16 %v5240
      %v5308 = vunpack.c.l.b16 %v5241
      %v5309 = vunpack.c.h.b16 %v5241
      %v5310 = vunpack.c.l.b16 %v5242
      %v5311 = vunpack.c.h.b16 %v5242
      %v5312 = vunpack.c.l.b16 %v5243
      %v5313 = vunpack.c.h.b16 %v5243
      %v5314 = vunpack.c.l.b16 %v5244
      %v5315 = vunpack.c.h.b16 %v5244
      %v5316 = vunpack.c.l.b16 %v5245
      %v5317 = vunpack.c.h.b16 %v5245
      %v5318 = vunpack.c.l.b16 %v5246
      %v5319 = vunpack.c.h.b16 %v5246
      %v5320 = vunpack.c.l.b16 %v5247
      %v5321 = vunpack.c.h.b16 %v5247
      %v5322 = vunpack.c.l.b16 %v5248
      %v5323 = vunpack.c.h.b16 %v5248
      %v5324 = vunpack.c.l.b16 %v5249
      %v5325 = vunpack.c.h.b16 %v5249
      %v5326 = vunpack.c.l.b16 %v5250
      %v5327 = vunpack.c.h.b16 %v5250
      %v5328 = vunpack.c.l.b16 %v5251
      %v5329 = vunpack.c.h.b16 %v5251
      %v5330 = vunpack.c.l.b16 %v5252
      %v5331 = vunpack.c.h.b16 %v5252
      %v5332 = vunpack.c.l.b16 %v5253
      %v5333 = vunpack.c.h.b16 %v5253
      %v5334 = vunpack.c.l.b16 %v5254
      %v5335 = vunpack.c.h.b16 %v5254
      %v5336 = vunpack.c.l.b16 %v5255
      %v5337 = vunpack.c.h.b16 %v5255
      %v5338 = vunpack.c.l.b16 %v5256
      %v5339 = vunpack.c.h.b16 %v5256
      %v5340 = vunpack.c.l.b16 %v5257
      %v5341 = vunpack.c.h.b16 %v5257
      %v5342 = vunpack.c.l.b16 %v5258
      %v5343 = vunpack.c.h.b16 %v5258
      %v5344 = vunpack.c.l.b16 %v5259
      %v5345 = vunpack.c.h.b16 %v5259
      %v5346 = vunpack.c.l.b16 %v5260
      %v5347 = vunpack.c.h.b16 %v5260
      %v5348 = vunpack.c.l.b16 %v5261
      %v5349 = vunpack.c.h.b16 %v5261
      %v5350 = vunpack.c.l.b16 %v5262
      %v5351 = vunpack.c.h.b16 %v5262
      %v5352 = vunpack.c.l.b16 %v5263
      %v5353 = vunpack.c.h.b16 %v5263
      %v5354 = vunpack.c.l.b16 %v5264
      %v5355 = vunpack.c.h.b16 %v5264
      %v5356 = vunpack.c.l.b16 %v5265
      %v5357 = vunpack.c.h.b16 %v5265
      %v5358 = vunpack.c.l.b16 %v5266
      %v5359 = vunpack.c.h.b16 %v5266
      %v5360 = vunpack.c.l.b16 %v5267
      %v5361 = vunpack.c.h.b16 %v5267
      %v5362 = vunpack.c.l.b16 %v5268
      %v5363 = vunpack.c.h.b16 %v5268
      %v5364 = vunpack.c.l.b16 %v5269
      %v5365 = vunpack.c.h.b16 %v5269
      %v5366 = vpack.c.b16 %v5304, %v5302
      %v5367 = vpack.c.b16 %v5305, %v5303
      %v5368 = vpack.c.b16 %v5308, %v5306
      %v5369 = vpack.c.b16 %v5309, %v5307
      %v5370 = vpack.c.b16 %v5312, %v5310
      %v5371 = vpack.c.b16 %v5313, %v5311
      %v5372 = vpack.c.b16 %v5316, %v5314
      %v5373 = vpack.c.b16 %v5317, %v5315
      %v5374 = vpack.c.b16 %v5320, %v5318
      %v5375 = vpack.c.b16 %v5321, %v5319
      %v5376 = vpack.c.b16 %v5324, %v5322
      %v5377 = vpack.c.b16 %v5325, %v5323
      %v5378 = vpack.c.b16 %v5328, %v5326
      %v5379 = vpack.c.b16 %v5329, %v5327
      %v5380 = vpack.c.b16 %v5332, %v5330
      %v5381 = vpack.c.b16 %v5333, %v5331
      %v5382 = vpack.c.b16 %v5336, %v5334
      %v5383 = vpack.c.b16 %v5337, %v5335
      %v5384 = vpack.c.b16 %v5340, %v5338
      %v5385 = vpack.c.b16 %v5341, %v5339
      %v5386 = vpack.c.b16 %v5344, %v5342
      %v5387 = vpack.c.b16 %v5345, %v5343
      %v5388 = vpack.c.b16 %v5348, %v5346
      %v5389 = vpack.c.b16 %v5349, %v5347
      %v5390 = vpack.c.b16 %v5352, %v5350
      %v5391 = vpack.c.b16 %v5353, %v5351
      %v5392 = vpack.c.b16 %v5356, %v5354
      %v5393 = vpack.c.b16 %v5357, %v5355
      %v5394 = vpack.c.b16 %v5360, %v5358
      %v5395 = vpack.c.b16 %v5361, %v5359
      %v5396 = vpack.c.b16 %v5364, %v5362
      %v5397 = vpack.c.b16 %v5365, %v5363
      %5430 = vmatprep.subr.bf16.mxu0 %v5381
      %5431 = vmatpush1.bf16.msra.mxu0 %v5380
      %5432 = vmatprep.subr.bf16.mxu0 %v5379
      %5433 = vmatpush1.bf16.msra.mxu0 %v5378
      %5434 = vmatprep.subr.bf16.mxu0 %v5377
      %5435 = vmatpush1.bf16.msra.mxu0 %v5376
      %5436 = vmatprep.subr.bf16.mxu0 %v5375
      %5437 = vmatpush1.bf16.msra.mxu0 %v5374
      %5438 = vmatprep.subr.bf16.mxu0 %v5373
      %5439 = vmatpush1.bf16.msra.mxu0 %v5372
      %5440 = vmatprep.subr.bf16.mxu0 %v5371
      %5441 = vmatpush1.bf16.msra.mxu0 %v5370
      %5442 = vmatprep.subr.bf16.mxu0 %v5369
      %5443 = vmatpush1.bf16.msra.mxu0 %v5368
      %5444 = vmatprep.subr.bf16.mxu0 %v5367
      %5445 = vmatpush1.bf16.msra.mxu0 %v5366
      %5446 = vmatprep.subr.bf16.mxu0 %v5397
      %5447 = vmatpush2.bf16.msra.mxu0 %v5396
      %5448 = vmatprep.subr.bf16.mxu0 %v5395
      %5449 = vmatpush2.bf16.msra.mxu0 %v5394
      %5450 = vmatprep.subr.bf16.mxu0 %v5393
      %5451 = vmatpush2.bf16.msra.mxu0 %v5392
      %5452 = vmatprep.subr.bf16.mxu0 %v5391
      %5453 = vmatpush2.bf16.msra.mxu0 %v5390
      %5454 = vmatprep.subr.bf16.mxu0 %v5389
      %5455 = vmatpush2.bf16.msra.mxu0 %v5388
      %5456 = vmatprep.subr.bf16.mxu0 %v5387
      %5457 = vmatpush2.bf16.msra.mxu0 %v5386
      %5458 = vmatprep.subr.bf16.mxu0 %v5385
      %5459 = vmatpush2.bf16.msra.mxu0 %v5384
      %5460 = vmatprep.subr.bf16.mxu0 %v5383
      %5461 = vmatpush2.bf16.msra.mxu0 %v5382
      %5462 = vmatprep.mubr.bf16.mxu0 %v4982
      %5463 = vmatmul.mubr.bf16.gmra.mxu0 %v4981
      %v5464 = vpop.f32.mrf.mxu0
      %v5465 = vadd.f32 0.0, %v5464
      %v5466 = vpop.f32.mrf.mxu0
      %v5467 = vadd.f32 0.0, %v5466
      %v5468 = vpop.f32.mrf.mxu0
      %v5469 = vadd.f32 0.0, %v5468
      %v5470 = vpop.f32.mrf.mxu0
      %v5471 = vadd.f32 0.0, %v5470
      %5472 = vmatprep.mubr.bf16.mxu0 %v4984
      %5473 = vmatmul.mubr.bf16.gmra.mxu0 %v4983
      %v5474 = vpop.f32.mrf.mxu0
      %v5475 = vadd.f32 0.0, %v5474
      %v5476 = vpop.f32.mrf.mxu0
      %v5477 = vadd.f32 0.0, %v5476
      %v5478 = vpop.f32.mrf.mxu0
      %v5479 = vadd.f32 0.0, %v5478
      %v5480 = vpop.f32.mrf.mxu0
      %v5481 = vadd.f32 0.0, %v5480
      %5482 = vmatprep.mubr.bf16.mxu0 %v4986
      %5483 = vmatmul.mubr.bf16.gmra.mxu0 %v4985
      %v5484 = vpop.f32.mrf.mxu0
      %v5485 = vadd.f32 0.0, %v5484
      %v5486 = vpop.f32.mrf.mxu0
      %v5487 = vadd.f32 0.0, %v5486
      %v5488 = vpop.f32.mrf.mxu0
      %v5489 = vadd.f32 0.0, %v5488
      %v5490 = vpop.f32.mrf.mxu0
      %v5491 = vadd.f32 0.0, %v5490
      %5492 = vmatprep.mubr.bf16.mxu0 %v4988
      %5493 = vmatmul.mubr.bf16.gmra.mxu0 %v4987
      %v5494 = vpop.f32.mrf.mxu0
      %v5495 = vadd.f32 0.0, %v5494
      %v5496 = vpop.f32.mrf.mxu0
      %v5497 = vadd.f32 0.0, %v5496
      %v5498 = vpop.f32.mrf.mxu0
      %v5499 = vadd.f32 0.0, %v5498
      %v5500 = vpop.f32.mrf.mxu0
      %v5501 = vadd.f32 0.0, %v5500
      %5502 = vmatprep.mubr.bf16.mxu0 %v4990
      %5503 = vmatmul.mubr.bf16.gmra.mxu0 %v4989
      %v5504 = vpop.f32.mrf.mxu0
      %v5505 = vadd.f32 0.0, %v5504
      %v5506 = vpop.f32.mrf.mxu0
      %v5507 = vadd.f32 0.0, %v5506
      %v5508 = vpop.f32.mrf.mxu0
      %v5509 = vadd.f32 0.0, %v5508
      %v5510 = vpop.f32.mrf.mxu0
      %v5511 = vadd.f32 0.0, %v5510
      %5512 = vmatprep.mubr.bf16.mxu0 %v4992
      %5513 = vmatmul.mubr.bf16.gmra.mxu0 %v4991
      %v5514 = vpop.f32.mrf.mxu0
      %v5515 = vadd.f32 0.0, %v5514
      %v5516 = vpop.f32.mrf.mxu0
      %v5517 = vadd.f32 0.0, %v5516
      %v5518 = vpop.f32.mrf.mxu0
      %v5519 = vadd.f32 0.0, %v5518
      %v5520 = vpop.f32.mrf.mxu0
      %v5521 = vadd.f32 0.0, %v5520
      %5522 = vmatprep.mubr.bf16.mxu0 %v4994
      %5523 = vmatmul.mubr.bf16.gmra.mxu0 %v4993
      %v5524 = vpop.f32.mrf.mxu0
      %v5525 = vadd.f32 0.0, %v5524
      %v5526 = vpop.f32.mrf.mxu0
      %v5527 = vadd.f32 0.0, %v5526
      %v5528 = vpop.f32.mrf.mxu0
      %v5529 = vadd.f32 0.0, %v5528
      %v5530 = vpop.f32.mrf.mxu0
      %v5531 = vadd.f32 0.0, %v5530
      %5532 = vmatprep.mubr.bf16.mxu0 %v4996
      %5533 = vmatmul.mubr.bf16.gmra.mxu0 %v4995
      %v5534 = vpop.f32.mrf.mxu0
      %v5535 = vadd.f32 0.0, %v5534
      %v5536 = vpop.f32.mrf.mxu0
      %v5537 = vadd.f32 0.0, %v5536
      %v5538 = vpop.f32.mrf.mxu0
      %v5539 = vadd.f32 0.0, %v5538
      %v5540 = vpop.f32.mrf.mxu0
      %v5541 = vadd.f32 0.0, %v5540
      %5542 = vmatprep.mubr.bf16.mxu0 %v4998
      %5543 = vmatmul.mubr.bf16.gmra.mxu0 %v4997
      %v5544 = vpop.f32.mrf.mxu0
      %v5545 = vadd.f32 0.0, %v5544
      %v5546 = vpop.f32.mrf.mxu0
      %v5547 = vadd.f32 0.0, %v5546
      %v5548 = vpop.f32.mrf.mxu0
      %v5549 = vadd.f32 0.0, %v5548
      %v5550 = vpop.f32.mrf.mxu0
      %v5551 = vadd.f32 0.0, %v5550
      %5552 = vmatprep.mubr.bf16.mxu0 %v5000
      %5553 = vmatmul.mubr.bf16.gmra.mxu0 %v4999
      %v5554 = vpop.f32.mrf.mxu0
      %v5555 = vadd.f32 0.0, %v5554
      %v5556 = vpop.f32.mrf.mxu0
      %v5557 = vadd.f32 0.0, %v5556
      %v5558 = vpop.f32.mrf.mxu0
      %v5559 = vadd.f32 0.0, %v5558
      %v5560 = vpop.f32.mrf.mxu0
      %v5561 = vadd.f32 0.0, %v5560
      %5562 = vmatprep.mubr.bf16.mxu0 %v5002
      %5563 = vmatmul.mubr.bf16.gmra.mxu0 %v5001
      %v5564 = vpop.f32.mrf.mxu0
      %v5565 = vadd.f32 0.0, %v5564
      %v5566 = vpop.f32.mrf.mxu0
      %v5567 = vadd.f32 0.0, %v5566
      %v5568 = vpop.f32.mrf.mxu0
      %v5569 = vadd.f32 0.0, %v5568
      %v5570 = vpop.f32.mrf.mxu0
      %v5571 = vadd.f32 0.0, %v5570
      %5572 = vmatprep.mubr.bf16.mxu0 %v5004
      %5573 = vmatmul.mubr.bf16.gmra.mxu0 %v5003
      %v5574 = vpop.f32.mrf.mxu0
      %v5575 = vadd.f32 0.0, %v5574
      %v5576 = vpop.f32.mrf.mxu0
      %v5577 = vadd.f32 0.0, %v5576
      %v5578 = vpop.f32.mrf.mxu0
      %v5579 = vadd.f32 0.0, %v5578
      %v5580 = vpop.f32.mrf.mxu0
      %v5581 = vadd.f32 0.0, %v5580
      %5582 = vmatprep.mubr.bf16.mxu0 %v5006
      %5583 = vmatmul.mubr.bf16.gmra.mxu0 %v5005
      %v5584 = vpop.f32.mrf.mxu0
      %v5585 = vadd.f32 0.0, %v5584
      %v5586 = vpop.f32.mrf.mxu0
      %v5587 = vadd.f32 0.0, %v5586
      %v5588 = vpop.f32.mrf.mxu0
      %v5589 = vadd.f32 0.0, %v5588
      %v5590 = vpop.f32.mrf.mxu0
      %v5591 = vadd.f32 0.0, %v5590
      %5592 = vmatprep.mubr.bf16.mxu0 %v5008
      %5593 = vmatmul.mubr.bf16.gmra.mxu0 %v5007
      %v5594 = vpop.f32.mrf.mxu0
      %v5595 = vadd.f32 0.0, %v5594
      %v5596 = vpop.f32.mrf.mxu0
      %v5597 = vadd.f32 0.0, %v5596
      %v5598 = vpop.f32.mrf.mxu0
      %v5599 = vadd.f32 0.0, %v5598
      %v5600 = vpop.f32.mrf.mxu0
      %v5601 = vadd.f32 0.0, %v5600
      %5602 = vmatprep.mubr.bf16.mxu0 %v5010
      %5603 = vmatmul.mubr.bf16.gmra.mxu0 %v5009
      %v5604 = vpop.f32.mrf.mxu0
      %v5605 = vadd.f32 0.0, %v5604
      %v5606 = vpop.f32.mrf.mxu0
      %v5607 = vadd.f32 0.0, %v5606
      %v5608 = vpop.f32.mrf.mxu0
      %v5609 = vadd.f32 0.0, %v5608
      %v5610 = vpop.f32.mrf.mxu0
      %v5611 = vadd.f32 0.0, %v5610
      %5612 = vmatprep.mubr.bf16.mxu0 %v5012
      %5613 = vmatmul.mubr.bf16.gmra.mxu0 %v5011
      %v5614 = vpop.f32.mrf.mxu0
      %v5615 = vadd.f32 0.0, %v5614
      %v5616 = vpop.f32.mrf.mxu0
      %v5617 = vadd.f32 0.0, %v5616
      %v5618 = vpop.f32.mrf.mxu0
      %v5619 = vadd.f32 0.0, %v5618
      %v5620 = vpop.f32.mrf.mxu0
      %v5621 = vadd.f32 0.0, %v5620
      %5622 = vmatprep.mubr.bf16.mxu0 %v5014
      %5623 = vmatmul.mubr.bf16.gmra.mxu0 %v5013
      %v5624 = vpop.f32.mrf.mxu0
      %v5625 = vadd.f32 0.0, %v5624
      %v5626 = vpop.f32.mrf.mxu0
      %v5627 = vadd.f32 0.0, %v5626
      %v5628 = vpop.f32.mrf.mxu0
      %v5629 = vadd.f32 0.0, %v5628
      %v5630 = vpop.f32.mrf.mxu0
      %v5631 = vadd.f32 0.0, %v5630
      %5632 = vmatprep.mubr.bf16.mxu0 %v5016
      %5633 = vmatmul.mubr.bf16.gmra.mxu0 %v5015
      %v5634 = vpop.f32.mrf.mxu0
      %v5635 = vadd.f32 0.0, %v5634
      %v5636 = vpop.f32.mrf.mxu0
      %v5637 = vadd.f32 0.0, %v5636
      %v5638 = vpop.f32.mrf.mxu0
      %v5639 = vadd.f32 0.0, %v5638
      %v5640 = vpop.f32.mrf.mxu0
      %v5641 = vadd.f32 0.0, %v5640
      %5642 = vmatprep.mubr.bf16.mxu0 %v5018
      %5643 = vmatmul.mubr.bf16.gmra.mxu0 %v5017
      %v5644 = vpop.f32.mrf.mxu0
      %v5645 = vadd.f32 0.0, %v5644
      %v5646 = vpop.f32.mrf.mxu0
      %v5647 = vadd.f32 0.0, %v5646
      %v5648 = vpop.f32.mrf.mxu0
      %v5649 = vadd.f32 0.0, %v5648
      %v5650 = vpop.f32.mrf.mxu0
      %v5651 = vadd.f32 0.0, %v5650
      %5652 = vmatprep.mubr.bf16.mxu0 %v5020
      %5653 = vmatmul.mubr.bf16.gmra.mxu0 %v5019
      %v5654 = vpop.f32.mrf.mxu0
      %v5655 = vadd.f32 0.0, %v5654
      %v5656 = vpop.f32.mrf.mxu0
      %v5657 = vadd.f32 0.0, %v5656
      %v5658 = vpop.f32.mrf.mxu0
      %v5659 = vadd.f32 0.0, %v5658
      %v5660 = vpop.f32.mrf.mxu0
      %v5661 = vadd.f32 0.0, %v5660
      %5662 = vmatprep.mubr.bf16.mxu0 %v5022
      %5663 = vmatmul.mubr.bf16.gmra.mxu0 %v5021
      %v5664 = vpop.f32.mrf.mxu0
      %v5665 = vadd.f32 0.0, %v5664
      %v5666 = vpop.f32.mrf.mxu0
      %v5667 = vadd.f32 0.0, %v5666
      %v5668 = vpop.f32.mrf.mxu0
      %v5669 = vadd.f32 0.0, %v5668
      %v5670 = vpop.f32.mrf.mxu0
      %v5671 = vadd.f32 0.0, %v5670
      %5672 = vmatprep.mubr.bf16.mxu0 %v5024
      %5673 = vmatmul.mubr.bf16.gmra.mxu0 %v5023
      %v5674 = vpop.f32.mrf.mxu0
      %v5675 = vadd.f32 0.0, %v5674
      %v5676 = vpop.f32.mrf.mxu0
      %v5677 = vadd.f32 0.0, %v5676
      %v5678 = vpop.f32.mrf.mxu0
      %v5679 = vadd.f32 0.0, %v5678
      %v5680 = vpop.f32.mrf.mxu0
      %v5681 = vadd.f32 0.0, %v5680
      %5682 = vmatprep.mubr.bf16.mxu0 %v5026
      %5683 = vmatmul.mubr.bf16.gmra.mxu0 %v5025
      %v5684 = vpop.f32.mrf.mxu0
      %v5685 = vadd.f32 0.0, %v5684
      %v5686 = vpop.f32.mrf.mxu0
      %v5687 = vadd.f32 0.0, %v5686
      %v5688 = vpop.f32.mrf.mxu0
      %v5689 = vadd.f32 0.0, %v5688
      %v5690 = vpop.f32.mrf.mxu0
      %v5691 = vadd.f32 0.0, %v5690
      %5692 = vmatprep.mubr.bf16.mxu0 %v5028
      %5693 = vmatmul.mubr.bf16.gmra.mxu0 %v5027
      %v5694 = vpop.f32.mrf.mxu0
      %v5695 = vadd.f32 0.0, %v5694
      %v5696 = vpop.f32.mrf.mxu0
      %v5697 = vadd.f32 0.0, %v5696
      %v5698 = vpop.f32.mrf.mxu0
      %v5699 = vadd.f32 0.0, %v5698
      %v5700 = vpop.f32.mrf.mxu0
      %v5701 = vadd.f32 0.0, %v5700
      %5702 = vmatprep.mubr.bf16.mxu0 %v5030
      %5703 = vmatmul.mubr.bf16.gmra.mxu0 %v5029
      %v5704 = vpop.f32.mrf.mxu0
      %v5705 = vadd.f32 0.0, %v5704
      %v5706 = vpop.f32.mrf.mxu0
      %v5707 = vadd.f32 0.0, %v5706
      %v5708 = vpop.f32.mrf.mxu0
      %v5709 = vadd.f32 0.0, %v5708
      %v5710 = vpop.f32.mrf.mxu0
      %v5711 = vadd.f32 0.0, %v5710
      %5712 = vmatprep.mubr.bf16.mxu0 %v5032
      %5713 = vmatmul.mubr.bf16.gmra.mxu0 %v5031
      %v5714 = vpop.f32.mrf.mxu0
      %v5715 = vadd.f32 0.0, %v5714
      %v5716 = vpop.f32.mrf.mxu0
      %v5717 = vadd.f32 0.0, %v5716
      %v5718 = vpop.f32.mrf.mxu0
      %v5719 = vadd.f32 0.0, %v5718
      %v5720 = vpop.f32.mrf.mxu0
      %v5721 = vadd.f32 0.0, %v5720
      %5722 = vmatprep.mubr.bf16.mxu0 %v5034
      %5723 = vmatmul.mubr.bf16.gmra.mxu0 %v5033
      %v5724 = vpop.f32.mrf.mxu0
      %v5725 = vadd.f32 0.0, %v5724
      %v5726 = vpop.f32.mrf.mxu0
      %v5727 = vadd.f32 0.0, %v5726
      %v5728 = vpop.f32.mrf.mxu0
      %v5729 = vadd.f32 0.0, %v5728
      %v5730 = vpop.f32.mrf.mxu0
      %v5731 = vadd.f32 0.0, %v5730
      %5732 = vmatprep.mubr.bf16.mxu0 %v5036
      %5733 = vmatmul.mubr.bf16.gmra.mxu0 %v5035
      %v5734 = vpop.f32.mrf.mxu0
      %v5735 = vadd.f32 0.0, %v5734
      %v5736 = vpop.f32.mrf.mxu0
      %v5737 = vadd.f32 0.0, %v5736
      %v5738 = vpop.f32.mrf.mxu0
      %v5739 = vadd.f32 0.0, %v5738
      %v5740 = vpop.f32.mrf.mxu0
      %v5741 = vadd.f32 0.0, %v5740
      %5742 = vmatprep.mubr.bf16.mxu0 %v5038
      %5743 = vmatmul.mubr.bf16.gmra.mxu0 %v5037
      %v5744 = vpop.f32.mrf.mxu0
      %v5745 = vadd.f32 0.0, %v5744
      %v5746 = vpop.f32.mrf.mxu0
      %v5747 = vadd.f32 0.0, %v5746
      %v5748 = vpop.f32.mrf.mxu0
      %v5749 = vadd.f32 0.0, %v5748
      %v5750 = vpop.f32.mrf.mxu0
      %v5751 = vadd.f32 0.0, %v5750
      %5752 = vmatprep.mubr.bf16.mxu0 %v5040
      %5753 = vmatmul.mubr.bf16.gmra.mxu0 %v5039
      %v5754 = vpop.f32.mrf.mxu0
      %v5755 = vadd.f32 0.0, %v5754
      %v5756 = vpop.f32.mrf.mxu0
      %v5757 = vadd.f32 0.0, %v5756
      %v5758 = vpop.f32.mrf.mxu0
      %v5759 = vadd.f32 0.0, %v5758
      %v5760 = vpop.f32.mrf.mxu0
      %v5761 = vadd.f32 0.0, %v5760
      %5762 = vmatprep.mubr.bf16.mxu0 %v5042
      %5763 = vmatmul.mubr.bf16.gmra.mxu0 %v5041
      %v5764 = vpop.f32.mrf.mxu0
      %v5765 = vadd.f32 0.0, %v5764
      %v5766 = vpop.f32.mrf.mxu0
      %v5767 = vadd.f32 0.0, %v5766
      %v5768 = vpop.f32.mrf.mxu0
      %v5769 = vadd.f32 0.0, %v5768
      %v5770 = vpop.f32.mrf.mxu0
      %v5771 = vadd.f32 0.0, %v5770
      %5772 = vmatprep.mubr.bf16.mxu0 %v5044
      %5773 = vmatmul.mubr.bf16.gmra.mxu0 %v5043
      %v5774 = vpop.f32.mrf.mxu0
      %v5775 = vadd.f32 0.0, %v5774
      %v5776 = vpop.f32.mrf.mxu0
      %v5777 = vadd.f32 0.0, %v5776
      %v5778 = vpop.f32.mrf.mxu0
      %v5779 = vadd.f32 0.0, %v5778
      %v5780 = vpop.f32.mrf.mxu0
      %v5781 = vadd.f32 0.0, %v5780
      %5782 = vdwg.mxu0
      %5783 = vmatprep.subr.bf16.mxu0 %v5381
      %5784 = vmatpush1.bf16.msra.mxu0 %v5380
      %5785 = vmatprep.subr.bf16.mxu0 %v5379
      %5786 = vmatpush1.bf16.msra.mxu0 %v5378
      %5787 = vmatprep.subr.bf16.mxu0 %v5377
      %5788 = vmatpush1.bf16.msra.mxu0 %v5376
      %5789 = vmatprep.subr.bf16.mxu0 %v5375
      %5790 = vmatpush1.bf16.msra.mxu0 %v5374
      %5791 = vmatprep.subr.bf16.mxu0 %v5373
      %5792 = vmatpush1.bf16.msra.mxu0 %v5372
      %5793 = vmatprep.subr.bf16.mxu0 %v5371
      %5794 = vmatpush1.bf16.msra.mxu0 %v5370
      %5795 = vmatprep.subr.bf16.mxu0 %v5369
      %5796 = vmatpush1.bf16.msra.mxu0 %v5368
      %5797 = vmatprep.subr.bf16.mxu0 %v5367
      %5798 = vmatpush1.bf16.msra.mxu0 %v5366
      %5799 = vmatprep.subr.bf16.mxu0 %v5397
      %5800 = vmatpush2.bf16.msra.mxu0 %v5396
      %5801 = vmatprep.subr.bf16.mxu0 %v5395
      %5802 = vmatpush2.bf16.msra.mxu0 %v5394
      %5803 = vmatprep.subr.bf16.mxu0 %v5393
      %5804 = vmatpush2.bf16.msra.mxu0 %v5392
      %5805 = vmatprep.subr.bf16.mxu0 %v5391
      %5806 = vmatpush2.bf16.msra.mxu0 %v5390
      %5807 = vmatprep.subr.bf16.mxu0 %v5389
      %5808 = vmatpush2.bf16.msra.mxu0 %v5388
      %5809 = vmatprep.subr.bf16.mxu0 %v5387
      %5810 = vmatpush2.bf16.msra.mxu0 %v5386
      %5811 = vmatprep.subr.bf16.mxu0 %v5385
      %5812 = vmatpush2.bf16.msra.mxu0 %v5384
      %5813 = vmatprep.subr.bf16.mxu0 %v5383
      %5814 = vmatpush2.bf16.msra.mxu0 %v5382
      %5815 = vmatprep.mubr.bf16.mxu0 %v5174
      %5816 = vmatmul.mubr.bf16.gmra.mxu0 %v5173
      %v5817 = vpop.f32.mrf.mxu0
      %v5818 = vadd.f32 0.0, %v5817
      %v5819 = vpop.f32.mrf.mxu0
      %v5820 = vadd.f32 0.0, %v5819
      %v5821 = vpop.f32.mrf.mxu0
      %v5822 = vadd.f32 0.0, %v5821
      %v5823 = vpop.f32.mrf.mxu0
      %v5824 = vadd.f32 0.0, %v5823
      %5825 = vmatprep.mubr.bf16.mxu0 %v5176
      %5826 = vmatmul.mubr.bf16.gmra.mxu0 %v5175
      %v5827 = vpop.f32.mrf.mxu0
      %v5828 = vadd.f32 0.0, %v5827
      %v5829 = vpop.f32.mrf.mxu0
      %v5830 = vadd.f32 0.0, %v5829
      %v5831 = vpop.f32.mrf.mxu0
      %v5832 = vadd.f32 0.0, %v5831
      %v5833 = vpop.f32.mrf.mxu0
      %v5834 = vadd.f32 0.0, %v5833
      %5835 = vmatprep.mubr.bf16.mxu0 %v5178
      %5836 = vmatmul.mubr.bf16.gmra.mxu0 %v5177
      %v5837 = vpop.f32.mrf.mxu0
      %v5838 = vadd.f32 0.0, %v5837
      %v5839 = vpop.f32.mrf.mxu0
      %v5840 = vadd.f32 0.0, %v5839
      %v5841 = vpop.f32.mrf.mxu0
      %v5842 = vadd.f32 0.0, %v5841
      %v5843 = vpop.f32.mrf.mxu0
      %v5844 = vadd.f32 0.0, %v5843
      %5845 = vmatprep.mubr.bf16.mxu0 %v5180
      %5846 = vmatmul.mubr.bf16.gmra.mxu0 %v5179
      %v5847 = vpop.f32.mrf.mxu0
      %v5848 = vadd.f32 0.0, %v5847
      %v5849 = vpop.f32.mrf.mxu0
      %v5850 = vadd.f32 0.0, %v5849
      %v5851 = vpop.f32.mrf.mxu0
      %v5852 = vadd.f32 0.0, %v5851
      %v5853 = vpop.f32.mrf.mxu0
      %v5854 = vadd.f32 0.0, %v5853
      %5855 = vmatprep.mubr.bf16.mxu0 %v5182
      %5856 = vmatmul.mubr.bf16.gmra.mxu0 %v5181
      %v5857 = vpop.f32.mrf.mxu0
      %v5858 = vadd.f32 0.0, %v5857
      %v5859 = vpop.f32.mrf.mxu0
      %v5860 = vadd.f32 0.0, %v5859
      %v5861 = vpop.f32.mrf.mxu0
      %v5862 = vadd.f32 0.0, %v5861
      %v5863 = vpop.f32.mrf.mxu0
      %v5864 = vadd.f32 0.0, %v5863
      %5865 = vmatprep.mubr.bf16.mxu0 %v5184
      %5866 = vmatmul.mubr.bf16.gmra.mxu0 %v5183
      %v5867 = vpop.f32.mrf.mxu0
      %v5868 = vadd.f32 0.0, %v5867
      %v5869 = vpop.f32.mrf.mxu0
      %v5870 = vadd.f32 0.0, %v5869
      %v5871 = vpop.f32.mrf.mxu0
      %v5872 = vadd.f32 0.0, %v5871
      %v5873 = vpop.f32.mrf.mxu0
      %v5874 = vadd.f32 0.0, %v5873
      %5875 = vmatprep.mubr.bf16.mxu0 %v5186
      %5876 = vmatmul.mubr.bf16.gmra.mxu0 %v5185
      %v5877 = vpop.f32.mrf.mxu0
      %v5878 = vadd.f32 0.0, %v5877
      %v5879 = vpop.f32.mrf.mxu0
      %v5880 = vadd.f32 0.0, %v5879
      %v5881 = vpop.f32.mrf.mxu0
      %v5882 = vadd.f32 0.0, %v5881
      %v5883 = vpop.f32.mrf.mxu0
      %v5884 = vadd.f32 0.0, %v5883
      %5885 = vmatprep.mubr.bf16.mxu0 %v5188
      %5886 = vmatmul.mubr.bf16.gmra.mxu0 %v5187
      %v5887 = vpop.f32.mrf.mxu0
      %v5888 = vadd.f32 0.0, %v5887
      %v5889 = vpop.f32.mrf.mxu0
      %v5890 = vadd.f32 0.0, %v5889
      %v5891 = vpop.f32.mrf.mxu0
      %v5892 = vadd.f32 0.0, %v5891
      %v5893 = vpop.f32.mrf.mxu0
      %v5894 = vadd.f32 0.0, %v5893
      %5895 = vmatprep.mubr.bf16.mxu0 %v5190
      %5896 = vmatmul.mubr.bf16.gmra.mxu0 %v5189
      %v5897 = vpop.f32.mrf.mxu0
      %v5898 = vadd.f32 0.0, %v5897
      %v5899 = vpop.f32.mrf.mxu0
      %v5900 = vadd.f32 0.0, %v5899
      %v5901 = vpop.f32.mrf.mxu0
      %v5902 = vadd.f32 0.0, %v5901
      %v5903 = vpop.f32.mrf.mxu0
      %v5904 = vadd.f32 0.0, %v5903
      %5905 = vmatprep.mubr.bf16.mxu0 %v5192
      %5906 = vmatmul.mubr.bf16.gmra.mxu0 %v5191
      %v5907 = vpop.f32.mrf.mxu0
      %v5908 = vadd.f32 0.0, %v5907
      %v5909 = vpop.f32.mrf.mxu0
      %v5910 = vadd.f32 0.0, %v5909
      %v5911 = vpop.f32.mrf.mxu0
      %v5912 = vadd.f32 0.0, %v5911
      %v5913 = vpop.f32.mrf.mxu0
      %v5914 = vadd.f32 0.0, %v5913
      %5915 = vmatprep.mubr.bf16.mxu0 %v5194
      %5916 = vmatmul.mubr.bf16.gmra.mxu0 %v5193
      %v5917 = vpop.f32.mrf.mxu0
      %v5918 = vadd.f32 0.0, %v5917
      %v5919 = vpop.f32.mrf.mxu0
      %v5920 = vadd.f32 0.0, %v5919
      %v5921 = vpop.f32.mrf.mxu0
      %v5922 = vadd.f32 0.0, %v5921
      %v5923 = vpop.f32.mrf.mxu0
      %v5924 = vadd.f32 0.0, %v5923
      %5925 = vmatprep.mubr.bf16.mxu0 %v5196
      %5926 = vmatmul.mubr.bf16.gmra.mxu0 %v5195
      %v5927 = vpop.f32.mrf.mxu0
      %v5928 = vadd.f32 0.0, %v5927
      %v5929 = vpop.f32.mrf.mxu0
      %v5930 = vadd.f32 0.0, %v5929
      %v5931 = vpop.f32.mrf.mxu0
      %v5932 = vadd.f32 0.0, %v5931
      %v5933 = vpop.f32.mrf.mxu0
      %v5934 = vadd.f32 0.0, %v5933
      %5935 = vmatprep.mubr.bf16.mxu0 %v5198
      %5936 = vmatmul.mubr.bf16.gmra.mxu0 %v5197
      %v5937 = vpop.f32.mrf.mxu0
      %v5938 = vadd.f32 0.0, %v5937
      %v5939 = vpop.f32.mrf.mxu0
      %v5940 = vadd.f32 0.0, %v5939
      %v5941 = vpop.f32.mrf.mxu0
      %v5942 = vadd.f32 0.0, %v5941
      %v5943 = vpop.f32.mrf.mxu0
      %v5944 = vadd.f32 0.0, %v5943
      %5945 = vmatprep.mubr.bf16.mxu0 %v5200
      %5946 = vmatmul.mubr.bf16.gmra.mxu0 %v5199
      %v5947 = vpop.f32.mrf.mxu0
      %v5948 = vadd.f32 0.0, %v5947
      %v5949 = vpop.f32.mrf.mxu0
      %v5950 = vadd.f32 0.0, %v5949
      %v5951 = vpop.f32.mrf.mxu0
      %v5952 = vadd.f32 0.0, %v5951
      %v5953 = vpop.f32.mrf.mxu0
      %v5954 = vadd.f32 0.0, %v5953
      %5955 = vmatprep.mubr.bf16.mxu0 %v5202
      %5956 = vmatmul.mubr.bf16.gmra.mxu0 %v5201
      %v5957 = vpop.f32.mrf.mxu0
      %v5958 = vadd.f32 0.0, %v5957
      %v5959 = vpop.f32.mrf.mxu0
      %v5960 = vadd.f32 0.0, %v5959
      %v5961 = vpop.f32.mrf.mxu0
      %v5962 = vadd.f32 0.0, %v5961
      %v5963 = vpop.f32.mrf.mxu0
      %v5964 = vadd.f32 0.0, %v5963
      %5965 = vmatprep.mubr.bf16.mxu0 %v5204
      %5966 = vmatmul.mubr.bf16.gmra.mxu0 %v5203
      %v5967 = vpop.f32.mrf.mxu0
      %v5968 = vadd.f32 0.0, %v5967
      %v5969 = vpop.f32.mrf.mxu0
      %v5970 = vadd.f32 0.0, %v5969
      %v5971 = vpop.f32.mrf.mxu0
      %v5972 = vadd.f32 0.0, %v5971
      %v5973 = vpop.f32.mrf.mxu0
      %v5974 = vadd.f32 0.0, %v5973
      %5975 = vmatprep.mubr.bf16.mxu0 %v5206
      %5976 = vmatmul.mubr.bf16.gmra.mxu0 %v5205
      %v5977 = vpop.f32.mrf.mxu0
      %v5978 = vadd.f32 0.0, %v5977
      %v5979 = vpop.f32.mrf.mxu0
      %v5980 = vadd.f32 0.0, %v5979
      %v5981 = vpop.f32.mrf.mxu0
      %v5982 = vadd.f32 0.0, %v5981
      %v5983 = vpop.f32.mrf.mxu0
      %v5984 = vadd.f32 0.0, %v5983
      %5985 = vmatprep.mubr.bf16.mxu0 %v5208
      %5986 = vmatmul.mubr.bf16.gmra.mxu0 %v5207
      %v5987 = vpop.f32.mrf.mxu0
      %v5988 = vadd.f32 0.0, %v5987
      %v5989 = vpop.f32.mrf.mxu0
      %v5990 = vadd.f32 0.0, %v5989
      %v5991 = vpop.f32.mrf.mxu0
      %v5992 = vadd.f32 0.0, %v5991
      %v5993 = vpop.f32.mrf.mxu0
      %v5994 = vadd.f32 0.0, %v5993
      %5995 = vmatprep.mubr.bf16.mxu0 %v5210
      %5996 = vmatmul.mubr.bf16.gmra.mxu0 %v5209
      %v5997 = vpop.f32.mrf.mxu0
      %v5998 = vadd.f32 0.0, %v5997
      %v5999 = vpop.f32.mrf.mxu0
      %v6000 = vadd.f32 0.0, %v5999
      %v6001 = vpop.f32.mrf.mxu0
      %v6002 = vadd.f32 0.0, %v6001
      %v6003 = vpop.f32.mrf.mxu0
      %v6004 = vadd.f32 0.0, %v6003
      %6005 = vmatprep.mubr.bf16.mxu0 %v5212
      %6006 = vmatmul.mubr.bf16.gmra.mxu0 %v5211
      %v6007 = vpop.f32.mrf.mxu0
      %v6008 = vadd.f32 0.0, %v6007
      %v6009 = vpop.f32.mrf.mxu0
      %v6010 = vadd.f32 0.0, %v6009
      %v6011 = vpop.f32.mrf.mxu0
      %v6012 = vadd.f32 0.0, %v6011
      %v6013 = vpop.f32.mrf.mxu0
      %v6014 = vadd.f32 0.0, %v6013
      %6015 = vmatprep.mubr.bf16.mxu0 %v5214
      %6016 = vmatmul.mubr.bf16.gmra.mxu0 %v5213
      %v6017 = vpop.f32.mrf.mxu0
      %v6018 = vadd.f32 0.0, %v6017
      %v6019 = vpop.f32.mrf.mxu0
      %v6020 = vadd.f32 0.0, %v6019
      %v6021 = vpop.f32.mrf.mxu0
      %v6022 = vadd.f32 0.0, %v6021
      %v6023 = vpop.f32.mrf.mxu0
      %v6024 = vadd.f32 0.0, %v6023
      %6025 = vmatprep.mubr.bf16.mxu0 %v5216
      %6026 = vmatmul.mubr.bf16.gmra.mxu0 %v5215
      %v6027 = vpop.f32.mrf.mxu0
      %v6028 = vadd.f32 0.0, %v6027
      %v6029 = vpop.f32.mrf.mxu0
      %v6030 = vadd.f32 0.0, %v6029
      %v6031 = vpop.f32.mrf.mxu0
      %v6032 = vadd.f32 0.0, %v6031
      %v6033 = vpop.f32.mrf.mxu0
      %v6034 = vadd.f32 0.0, %v6033
      %6035 = vmatprep.mubr.bf16.mxu0 %v5218
      %6036 = vmatmul.mubr.bf16.gmra.mxu0 %v5217
      %v6037 = vpop.f32.mrf.mxu0
      %v6038 = vadd.f32 0.0, %v6037
      %v6039 = vpop.f32.mrf.mxu0
      %v6040 = vadd.f32 0.0, %v6039
      %v6041 = vpop.f32.mrf.mxu0
      %v6042 = vadd.f32 0.0, %v6041
      %v6043 = vpop.f32.mrf.mxu0
      %v6044 = vadd.f32 0.0, %v6043
      %6045 = vmatprep.mubr.bf16.mxu0 %v5220
      %6046 = vmatmul.mubr.bf16.gmra.mxu0 %v5219
      %v6047 = vpop.f32.mrf.mxu0
      %v6048 = vadd.f32 0.0, %v6047
      %v6049 = vpop.f32.mrf.mxu0
      %v6050 = vadd.f32 0.0, %v6049
      %v6051 = vpop.f32.mrf.mxu0
      %v6052 = vadd.f32 0.0, %v6051
      %v6053 = vpop.f32.mrf.mxu0
      %v6054 = vadd.f32 0.0, %v6053
      %6055 = vmatprep.mubr.bf16.mxu0 %v5222
      %6056 = vmatmul.mubr.bf16.gmra.mxu0 %v5221
      %v6057 = vpop.f32.mrf.mxu0
      %v6058 = vadd.f32 0.0, %v6057
      %v6059 = vpop.f32.mrf.mxu0
      %v6060 = vadd.f32 0.0, %v6059
      %v6061 = vpop.f32.mrf.mxu0
      %v6062 = vadd.f32 0.0, %v6061
      %v6063 = vpop.f32.mrf.mxu0
      %v6064 = vadd.f32 0.0, %v6063
      %6065 = vmatprep.mubr.bf16.mxu0 %v5224
      %6066 = vmatmul.mubr.bf16.gmra.mxu0 %v5223
      %v6067 = vpop.f32.mrf.mxu0
      %v6068 = vadd.f32 0.0, %v6067
      %v6069 = vpop.f32.mrf.mxu0
      %v6070 = vadd.f32 0.0, %v6069
      %v6071 = vpop.f32.mrf.mxu0
      %v6072 = vadd.f32 0.0, %v6071
      %v6073 = vpop.f32.mrf.mxu0
      %v6074 = vadd.f32 0.0, %v6073
      %6075 = vmatprep.mubr.bf16.mxu0 %v5226
      %6076 = vmatmul.mubr.bf16.gmra.mxu0 %v5225
      %v6077 = vpop.f32.mrf.mxu0
      %v6078 = vadd.f32 0.0, %v6077
      %v6079 = vpop.f32.mrf.mxu0
      %v6080 = vadd.f32 0.0, %v6079
      %v6081 = vpop.f32.mrf.mxu0
      %v6082 = vadd.f32 0.0, %v6081
      %v6083 = vpop.f32.mrf.mxu0
      %v6084 = vadd.f32 0.0, %v6083
      %6085 = vmatprep.mubr.bf16.mxu0 %v5228
      %6086 = vmatmul.mubr.bf16.gmra.mxu0 %v5227
      %v6087 = vpop.f32.mrf.mxu0
      %v6088 = vadd.f32 0.0, %v6087
      %v6089 = vpop.f32.mrf.mxu0
      %v6090 = vadd.f32 0.0, %v6089
      %v6091 = vpop.f32.mrf.mxu0
      %v6092 = vadd.f32 0.0, %v6091
      %v6093 = vpop.f32.mrf.mxu0
      %v6094 = vadd.f32 0.0, %v6093
      %6095 = vmatprep.mubr.bf16.mxu0 %v5230
      %6096 = vmatmul.mubr.bf16.gmra.mxu0 %v5229
      %v6097 = vpop.f32.mrf.mxu0
      %v6098 = vadd.f32 0.0, %v6097
      %v6099 = vpop.f32.mrf.mxu0
      %v6100 = vadd.f32 0.0, %v6099
      %v6101 = vpop.f32.mrf.mxu0
      %v6102 = vadd.f32 0.0, %v6101
      %v6103 = vpop.f32.mrf.mxu0
      %v6104 = vadd.f32 0.0, %v6103
      %6105 = vmatprep.mubr.bf16.mxu0 %v5232
      %6106 = vmatmul.mubr.bf16.gmra.mxu0 %v5231
      %v6107 = vpop.f32.mrf.mxu0
      %v6108 = vadd.f32 0.0, %v6107
      %v6109 = vpop.f32.mrf.mxu0
      %v6110 = vadd.f32 0.0, %v6109
      %v6111 = vpop.f32.mrf.mxu0
      %v6112 = vadd.f32 0.0, %v6111
      %v6113 = vpop.f32.mrf.mxu0
      %v6114 = vadd.f32 0.0, %v6113
      %6115 = vmatprep.mubr.bf16.mxu0 %v5234
      %6116 = vmatmul.mubr.bf16.gmra.mxu0 %v5233
      %v6117 = vpop.f32.mrf.mxu0
      %v6118 = vadd.f32 0.0, %v6117
      %v6119 = vpop.f32.mrf.mxu0
      %v6120 = vadd.f32 0.0, %v6119
      %v6121 = vpop.f32.mrf.mxu0
      %v6122 = vadd.f32 0.0, %v6121
      %v6123 = vpop.f32.mrf.mxu0
      %v6124 = vadd.f32 0.0, %v6123
      %6125 = vmatprep.mubr.bf16.mxu0 %v5236
      %6126 = vmatmul.mubr.bf16.gmra.mxu0 %v5235
      %v6127 = vpop.f32.mrf.mxu0
      %v6128 = vadd.f32 0.0, %v6127
      %v6129 = vpop.f32.mrf.mxu0
      %v6130 = vadd.f32 0.0, %v6129
      %v6131 = vpop.f32.mrf.mxu0
      %v6132 = vadd.f32 0.0, %v6131
      %v6133 = vpop.f32.mrf.mxu0
      %v6134 = vadd.f32 0.0, %v6133
      %6135 = vdwg.mxu0
      %v6136 = vmax.f32 %v5465, 0.0
      %v6137 = vmax.f32 %v5467, 0.0
      %v6138 = vmax.f32 %v5469, 0.0
      %v6139 = vmax.f32 %v5471, 0.0
      %v6140 = vmax.f32 %v5475, 0.0
      %v6141 = vmax.f32 %v5477, 0.0
      %v6142 = vmax.f32 %v5479, 0.0
      %v6143 = vmax.f32 %v5481, 0.0
      %v6144 = vmax.f32 %v5485, 0.0
      %v6145 = vmax.f32 %v5487, 0.0
      %v6146 = vmax.f32 %v5489, 0.0
      %v6147 = vmax.f32 %v5491, 0.0
      %v6148 = vmax.f32 %v5495, 0.0
      %v6149 = vmax.f32 %v5497, 0.0
      %v6150 = vmax.f32 %v5499, 0.0
      %v6151 = vmax.f32 %v5501, 0.0
      %v6152 = vmax.f32 %v5505, 0.0
      %v6153 = vmax.f32 %v5507, 0.0
      %v6154 = vmax.f32 %v5509, 0.0
      %v6155 = vmax.f32 %v5511, 0.0
      %v6156 = vmax.f32 %v5515, 0.0
      %v6157 = vmax.f32 %v5517, 0.0
      %v6158 = vmax.f32 %v5519, 0.0
      %v6159 = vmax.f32 %v5521, 0.0
      %v6160 = vmax.f32 %v5525, 0.0
      %v6161 = vmax.f32 %v5527, 0.0
      %v6162 = vmax.f32 %v5529, 0.0
      %v6163 = vmax.f32 %v5531, 0.0
      %v6164 = vmax.f32 %v5535, 0.0
      %v6165 = vmax.f32 %v5537, 0.0
      %v6166 = vmax.f32 %v5539, 0.0
      %v6167 = vmax.f32 %v5541, 0.0
      %v6168 = vmax.f32 %v5545, 0.0
      %v6169 = vmax.f32 %v5547, 0.0
      %v6170 = vmax.f32 %v5549, 0.0
      %v6171 = vmax.f32 %v5551, 0.0
      %v6172 = vmax.f32 %v5555, 0.0
      %v6173 = vmax.f32 %v5557, 0.0
      %v6174 = vmax.f32 %v5559, 0.0
      %v6175 = vmax.f32 %v5561, 0.0
      %v6176 = vmax.f32 %v5565, 0.0
      %v6177 = vmax.f32 %v5567, 0.0
      %v6178 = vmax.f32 %v5569, 0.0
      %v6179 = vmax.f32 %v5571, 0.0
      %v6180 = vmax.f32 %v5575, 0.0
      %v6181 = vmax.f32 %v5577, 0.0
      %v6182 = vmax.f32 %v5579, 0.0
      %v6183 = vmax.f32 %v5581, 0.0
      %v6184 = vmax.f32 %v5585, 0.0
      %v6185 = vmax.f32 %v5587, 0.0
      %v6186 = vmax.f32 %v5589, 0.0
      %v6187 = vmax.f32 %v5591, 0.0
      %v6188 = vmax.f32 %v5595, 0.0
      %v6189 = vmax.f32 %v5597, 0.0
      %v6190 = vmax.f32 %v5599, 0.0
      %v6191 = vmax.f32 %v5601, 0.0
      %v6192 = vmax.f32 %v5605, 0.0
      %v6193 = vmax.f32 %v5607, 0.0
      %v6194 = vmax.f32 %v5609, 0.0
      %v6195 = vmax.f32 %v5611, 0.0
      %v6196 = vmax.f32 %v5615, 0.0
      %v6197 = vmax.f32 %v5617, 0.0
      %v6198 = vmax.f32 %v5619, 0.0
      %v6199 = vmax.f32 %v5621, 0.0
      %v6200 = vmax.f32 %v5625, 0.0
      %v6201 = vmax.f32 %v5627, 0.0
      %v6202 = vmax.f32 %v5629, 0.0
      %v6203 = vmax.f32 %v5631, 0.0
      %v6204 = vmax.f32 %v5635, 0.0
      %v6205 = vmax.f32 %v5637, 0.0
      %v6206 = vmax.f32 %v5639, 0.0
      %v6207 = vmax.f32 %v5641, 0.0
      %v6208 = vmax.f32 %v5645, 0.0
      %v6209 = vmax.f32 %v5647, 0.0
      %v6210 = vmax.f32 %v5649, 0.0
      %v6211 = vmax.f32 %v5651, 0.0
      %v6212 = vmax.f32 %v5655, 0.0
      %v6213 = vmax.f32 %v5657, 0.0
      %v6214 = vmax.f32 %v5659, 0.0
      %v6215 = vmax.f32 %v5661, 0.0
      %v6216 = vmax.f32 %v5665, 0.0
      %v6217 = vmax.f32 %v5667, 0.0
      %v6218 = vmax.f32 %v5669, 0.0
      %v6219 = vmax.f32 %v5671, 0.0
      %v6220 = vmax.f32 %v5675, 0.0
      %v6221 = vmax.f32 %v5677, 0.0
      %v6222 = vmax.f32 %v5679, 0.0
      %v6223 = vmax.f32 %v5681, 0.0
      %v6224 = vmax.f32 %v5685, 0.0
      %v6225 = vmax.f32 %v5687, 0.0
      %v6226 = vmax.f32 %v5689, 0.0
      %v6227 = vmax.f32 %v5691, 0.0
      %v6228 = vmax.f32 %v5695, 0.0
      %v6229 = vmax.f32 %v5697, 0.0
      %v6230 = vmax.f32 %v5699, 0.0
      %v6231 = vmax.f32 %v5701, 0.0
      %v6232 = vmax.f32 %v5705, 0.0
      %v6233 = vmax.f32 %v5707, 0.0
      %v6234 = vmax.f32 %v5709, 0.0
      %v6235 = vmax.f32 %v5711, 0.0
      %v6236 = vmax.f32 %v5715, 0.0
      %v6237 = vmax.f32 %v5717, 0.0
      %v6238 = vmax.f32 %v5719, 0.0
      %v6239 = vmax.f32 %v5721, 0.0
      %v6240 = vmax.f32 %v5725, 0.0
      %v6241 = vmax.f32 %v5727, 0.0
      %v6242 = vmax.f32 %v5729, 0.0
      %v6243 = vmax.f32 %v5731, 0.0
      %v6244 = vmax.f32 %v5735, 0.0
      %v6245 = vmax.f32 %v5737, 0.0
      %v6246 = vmax.f32 %v5739, 0.0
      %v6247 = vmax.f32 %v5741, 0.0
      %v6248 = vmax.f32 %v5745, 0.0
      %v6249 = vmax.f32 %v5747, 0.0
      %v6250 = vmax.f32 %v5749, 0.0
      %v6251 = vmax.f32 %v5751, 0.0
      %v6252 = vmax.f32 %v5755, 0.0
      %v6253 = vmax.f32 %v5757, 0.0
      %v6254 = vmax.f32 %v5759, 0.0
      %v6255 = vmax.f32 %v5761, 0.0
      %v6256 = vmax.f32 %v5765, 0.0
      %v6257 = vmax.f32 %v5767, 0.0
      %v6258 = vmax.f32 %v5769, 0.0
      %v6259 = vmax.f32 %v5771, 0.0
      %v6260 = vmax.f32 %v5775, 0.0
      %v6261 = vmax.f32 %v5777, 0.0
      %v6262 = vmax.f32 %v5779, 0.0
      %v6263 = vmax.f32 %v5781, 0.0
      %v6264 = vpack.c.bf16 %v6138, %v6136
      %v6265 = vpack.c.bf16 %v6139, %v6137
      %v6266 = vpack.c.bf16 %v6142, %v6140
      %v6267 = vpack.c.bf16 %v6143, %v6141
      %v6268 = vpack.c.bf16 %v6146, %v6144
      %v6269 = vpack.c.bf16 %v6147, %v6145
      %v6270 = vpack.c.bf16 %v6150, %v6148
      %v6271 = vpack.c.bf16 %v6151, %v6149
      %v6272 = vpack.c.bf16 %v6154, %v6152
      %v6273 = vpack.c.bf16 %v6155, %v6153
      %v6274 = vpack.c.bf16 %v6158, %v6156
      %v6275 = vpack.c.bf16 %v6159, %v6157
      %v6276 = vpack.c.bf16 %v6162, %v6160
      %v6277 = vpack.c.bf16 %v6163, %v6161
      %v6278 = vpack.c.bf16 %v6166, %v6164
      %v6279 = vpack.c.bf16 %v6167, %v6165
      %v6280 = vpack.c.bf16 %v6170, %v6168
      %v6281 = vpack.c.bf16 %v6171, %v6169
      %v6282 = vpack.c.bf16 %v6174, %v6172
      %v6283 = vpack.c.bf16 %v6175, %v6173
      %v6284 = vpack.c.bf16 %v6178, %v6176
      %v6285 = vpack.c.bf16 %v6179, %v6177
      %v6286 = vpack.c.bf16 %v6182, %v6180
      %v6287 = vpack.c.bf16 %v6183, %v6181
      %v6288 = vpack.c.bf16 %v6186, %v6184
      %v6289 = vpack.c.bf16 %v6187, %v6185
      %v6290 = vpack.c.bf16 %v6190, %v6188
      %v6291 = vpack.c.bf16 %v6191, %v6189
      %v6292 = vpack.c.bf16 %v6194, %v6192
      %v6293 = vpack.c.bf16 %v6195, %v6193
      %v6294 = vpack.c.bf16 %v6198, %v6196
      %v6295 = vpack.c.bf16 %v6199, %v6197
      %v6296 = vpack.c.bf16 %v6202, %v6200
      %v6297 = vpack.c.bf16 %v6203, %v6201
      %v6298 = vpack.c.bf16 %v6206, %v6204
      %v6299 = vpack.c.bf16 %v6207, %v6205
      %v6300 = vpack.c.bf16 %v6210, %v6208
      %v6301 = vpack.c.bf16 %v6211, %v6209
      %v6302 = vpack.c.bf16 %v6214, %v6212
      %v6303 = vpack.c.bf16 %v6215, %v6213
      %v6304 = vpack.c.bf16 %v6218, %v6216
      %v6305 = vpack.c.bf16 %v6219, %v6217
      %v6306 = vpack.c.bf16 %v6222, %v6220
      %v6307 = vpack.c.bf16 %v6223, %v6221
      %v6308 = vpack.c.bf16 %v6226, %v6224
      %v6309 = vpack.c.bf16 %v6227, %v6225
      %v6310 = vpack.c.bf16 %v6230, %v6228
      %v6311 = vpack.c.bf16 %v6231, %v6229
      %v6312 = vpack.c.bf16 %v6234, %v6232
      %v6313 = vpack.c.bf16 %v6235, %v6233
      %v6314 = vpack.c.bf16 %v6238, %v6236
      %v6315 = vpack.c.bf16 %v6239, %v6237
      %v6316 = vpack.c.bf16 %v6242, %v6240
      %v6317 = vpack.c.bf16 %v6243, %v6241
      %v6318 = vpack.c.bf16 %v6246, %v6244
      %v6319 = vpack.c.bf16 %v6247, %v6245
      %v6320 = vpack.c.bf16 %v6250, %v6248
      %v6321 = vpack.c.bf16 %v6251, %v6249
      %v6322 = vpack.c.bf16 %v6254, %v6252
      %v6323 = vpack.c.bf16 %v6255, %v6253
      %v6324 = vpack.c.bf16 %v6258, %v6256
      %v6325 = vpack.c.bf16 %v6259, %v6257
      %v6326 = vpack.c.bf16 %v6262, %v6260
      %v6327 = vpack.c.bf16 %v6263, %v6261
      %v6328 = vmax.f32 %v5818, 0.0
      %v6329 = vmax.f32 %v5820, 0.0
      %v6330 = vmax.f32 %v5822, 0.0
      %v6331 = vmax.f32 %v5824, 0.0
      %v6332 = vmax.f32 %v5828, 0.0
      %v6333 = vmax.f32 %v5830, 0.0
      %v6334 = vmax.f32 %v5832, 0.0
      %v6335 = vmax.f32 %v5834, 0.0
      %v6336 = vmax.f32 %v5838, 0.0
      %v6337 = vmax.f32 %v5840, 0.0
      %v6338 = vmax.f32 %v5842, 0.0
      %v6339 = vmax.f32 %v5844, 0.0
      %v6340 = vmax.f32 %v5848, 0.0
      %v6341 = vmax.f32 %v5850, 0.0
      %v6342 = vmax.f32 %v5852, 0.0
      %v6343 = vmax.f32 %v5854, 0.0
      %v6344 = vmax.f32 %v5858, 0.0
      %v6345 = vmax.f32 %v5860, 0.0
      %v6346 = vmax.f32 %v5862, 0.0
      %v6347 = vmax.f32 %v5864, 0.0
      %v6348 = vmax.f32 %v5868, 0.0
      %v6349 = vmax.f32 %v5870, 0.0
      %v6350 = vmax.f32 %v5872, 0.0
      %v6351 = vmax.f32 %v5874, 0.0
      %v6352 = vmax.f32 %v5878, 0.0
      %v6353 = vmax.f32 %v5880, 0.0
      %v6354 = vmax.f32 %v5882, 0.0
      %v6355 = vmax.f32 %v5884, 0.0
      %v6356 = vmax.f32 %v5888, 0.0
      %v6357 = vmax.f32 %v5890, 0.0
      %v6358 = vmax.f32 %v5892, 0.0
      %v6359 = vmax.f32 %v5894, 0.0
      %v6360 = vmax.f32 %v5898, 0.0
      %v6361 = vmax.f32 %v5900, 0.0
      %v6362 = vmax.f32 %v5902, 0.0
      %v6363 = vmax.f32 %v5904, 0.0
      %v6364 = vmax.f32 %v5908, 0.0
      %v6365 = vmax.f32 %v5910, 0.0
      %v6366 = vmax.f32 %v5912, 0.0
      %v6367 = vmax.f32 %v5914, 0.0
      %v6368 = vmax.f32 %v5918, 0.0
      %v6369 = vmax.f32 %v5920, 0.0
      %v6370 = vmax.f32 %v5922, 0.0
      %v6371 = vmax.f32 %v5924, 0.0
      %v6372 = vmax.f32 %v5928, 0.0
      %v6373 = vmax.f32 %v5930, 0.0
      %v6374 = vmax.f32 %v5932, 0.0
      %v6375 = vmax.f32 %v5934, 0.0
      %v6376 = vmax.f32 %v5938, 0.0
      %v6377 = vmax.f32 %v5940, 0.0
      %v6378 = vmax.f32 %v5942, 0.0
      %v6379 = vmax.f32 %v5944, 0.0
      %v6380 = vmax.f32 %v5948, 0.0
      %v6381 = vmax.f32 %v5950, 0.0
      %v6382 = vmax.f32 %v5952, 0.0
      %v6383 = vmax.f32 %v5954, 0.0
      %v6384 = vmax.f32 %v5958, 0.0
      %v6385 = vmax.f32 %v5960, 0.0
      %v6386 = vmax.f32 %v5962, 0.0
      %v6387 = vmax.f32 %v5964, 0.0
      %v6388 = vmax.f32 %v5968, 0.0
      %v6389 = vmax.f32 %v5970, 0.0
      %v6390 = vmax.f32 %v5972, 0.0
      %v6391 = vmax.f32 %v5974, 0.0
      %v6392 = vmax.f32 %v5978, 0.0
      %v6393 = vmax.f32 %v5980, 0.0
      %v6394 = vmax.f32 %v5982, 0.0
      %v6395 = vmax.f32 %v5984, 0.0
      %v6396 = vmax.f32 %v5988, 0.0
      %v6397 = vmax.f32 %v5990, 0.0
      %v6398 = vmax.f32 %v5992, 0.0
      %v6399 = vmax.f32 %v5994, 0.0
      %v6400 = vmax.f32 %v5998, 0.0
      %v6401 = vmax.f32 %v6000, 0.0
      %v6402 = vmax.f32 %v6002, 0.0
      %v6403 = vmax.f32 %v6004, 0.0
      %v6404 = vmax.f32 %v6008, 0.0
      %v6405 = vmax.f32 %v6010, 0.0
      %v6406 = vmax.f32 %v6012, 0.0
      %v6407 = vmax.f32 %v6014, 0.0
      %v6408 = vmax.f32 %v6018, 0.0
      %v6409 = vmax.f32 %v6020, 0.0
      %v6410 = vmax.f32 %v6022, 0.0
      %v6411 = vmax.f32 %v6024, 0.0
      %v6412 = vmax.f32 %v6028, 0.0
      %v6413 = vmax.f32 %v6030, 0.0
      %v6414 = vmax.f32 %v6032, 0.0
      %v6415 = vmax.f32 %v6034, 0.0
      %v6416 = vmax.f32 %v6038, 0.0
      %v6417 = vmax.f32 %v6040, 0.0
      %v6418 = vmax.f32 %v6042, 0.0
      %v6419 = vmax.f32 %v6044, 0.0
      %v6420 = vmax.f32 %v6048, 0.0
      %v6421 = vmax.f32 %v6050, 0.0
      %v6422 = vmax.f32 %v6052, 0.0
      %v6423 = vmax.f32 %v6054, 0.0
      %v6424 = vmax.f32 %v6058, 0.0
      %v6425 = vmax.f32 %v6060, 0.0
      %v6426 = vmax.f32 %v6062, 0.0
      %v6427 = vmax.f32 %v6064, 0.0
      %v6428 = vmax.f32 %v6068, 0.0
      %v6429 = vmax.f32 %v6070, 0.0
      %v6430 = vmax.f32 %v6072, 0.0
      %v6431 = vmax.f32 %v6074, 0.0
      %v6432 = vmax.f32 %v6078, 0.0
      %v6433 = vmax.f32 %v6080, 0.0
      %v6434 = vmax.f32 %v6082, 0.0
      %v6435 = vmax.f32 %v6084, 0.0
      %v6436 = vmax.f32 %v6088, 0.0
      %v6437 = vmax.f32 %v6090, 0.0
      %v6438 = vmax.f32 %v6092, 0.0
      %v6439 = vmax.f32 %v6094, 0.0
      %v6440 = vmax.f32 %v6098, 0.0
      %v6441 = vmax.f32 %v6100, 0.0
      %v6442 = vmax.f32 %v6102, 0.0
      %v6443 = vmax.f32 %v6104, 0.0
      %v6444 = vmax.f32 %v6108, 0.0
      %v6445 = vmax.f32 %v6110, 0.0
      %v6446 = vmax.f32 %v6112, 0.0
      %v6447 = vmax.f32 %v6114, 0.0
      %v6448 = vmax.f32 %v6118, 0.0
      %v6449 = vmax.f32 %v6120, 0.0
      %v6450 = vmax.f32 %v6122, 0.0
      %v6451 = vmax.f32 %v6124, 0.0
      %v6452 = vmax.f32 %v6128, 0.0
      %v6453 = vmax.f32 %v6130, 0.0
      %v6454 = vmax.f32 %v6132, 0.0
      %v6455 = vmax.f32 %v6134, 0.0
      %v6456 = vpack.c.bf16 %v6330, %v6328
      %v6457 = vpack.c.bf16 %v6331, %v6329
      %v6458 = vpack.c.bf16 %v6334, %v6332
      %v6459 = vpack.c.bf16 %v6335, %v6333
      %v6460 = vpack.c.bf16 %v6338, %v6336
      %v6461 = vpack.c.bf16 %v6339, %v6337
      %v6462 = vpack.c.bf16 %v6342, %v6340
      %v6463 = vpack.c.bf16 %v6343, %v6341
      %v6464 = vpack.c.bf16 %v6346, %v6344
      %v6465 = vpack.c.bf16 %v6347, %v6345
      %v6466 = vpack.c.bf16 %v6350, %v6348
      %v6467 = vpack.c.bf16 %v6351, %v6349
      %v6468 = vpack.c.bf16 %v6354, %v6352
      %v6469 = vpack.c.bf16 %v6355, %v6353
      %v6470 = vpack.c.bf16 %v6358, %v6356
      %v6471 = vpack.c.bf16 %v6359, %v6357
      %v6472 = vpack.c.bf16 %v6362, %v6360
      %v6473 = vpack.c.bf16 %v6363, %v6361
      %v6474 = vpack.c.bf16 %v6366, %v6364
      %v6475 = vpack.c.bf16 %v6367, %v6365
      %v6476 = vpack.c.bf16 %v6370, %v6368
      %v6477 = vpack.c.bf16 %v6371, %v6369
      %v6478 = vpack.c.bf16 %v6374, %v6372
      %v6479 = vpack.c.bf16 %v6375, %v6373
      %v6480 = vpack.c.bf16 %v6378, %v6376
      %v6481 = vpack.c.bf16 %v6379, %v6377
      %v6482 = vpack.c.bf16 %v6382, %v6380
      %v6483 = vpack.c.bf16 %v6383, %v6381
      %v6484 = vpack.c.bf16 %v6386, %v6384
      %v6485 = vpack.c.bf16 %v6387, %v6385
      %v6486 = vpack.c.bf16 %v6390, %v6388
      %v6487 = vpack.c.bf16 %v6391, %v6389
      %v6488 = vpack.c.bf16 %v6394, %v6392
      %v6489 = vpack.c.bf16 %v6395, %v6393
      %v6490 = vpack.c.bf16 %v6398, %v6396
      %v6491 = vpack.c.bf16 %v6399, %v6397
      %v6492 = vpack.c.bf16 %v6402, %v6400
      %v6493 = vpack.c.bf16 %v6403, %v6401
      %v6494 = vpack.c.bf16 %v6406, %v6404
      %v6495 = vpack.c.bf16 %v6407, %v6405
      %v6496 = vpack.c.bf16 %v6410, %v6408
      %v6497 = vpack.c.bf16 %v6411, %v6409
      %v6498 = vpack.c.bf16 %v6414, %v6412
      %v6499 = vpack.c.bf16 %v6415, %v6413
      %v6500 = vpack.c.bf16 %v6418, %v6416
      %v6501 = vpack.c.bf16 %v6419, %v6417
      %v6502 = vpack.c.bf16 %v6422, %v6420
      %v6503 = vpack.c.bf16 %v6423, %v6421
      %v6504 = vpack.c.bf16 %v6426, %v6424
      %v6505 = vpack.c.bf16 %v6427, %v6425
      %v6506 = vpack.c.bf16 %v6430, %v6428
      %v6507 = vpack.c.bf16 %v6431, %v6429
      %v6508 = vpack.c.bf16 %v6434, %v6432
      %v6509 = vpack.c.bf16 %v6435, %v6433
      %v6510 = vpack.c.bf16 %v6438, %v6436
      %v6511 = vpack.c.bf16 %v6439, %v6437
      %v6512 = vpack.c.bf16 %v6442, %v6440
      %v6513 = vpack.c.bf16 %v6443, %v6441
      %v6514 = vpack.c.bf16 %v6446, %v6444
      %v6515 = vpack.c.bf16 %v6447, %v6445
      %v6516 = vpack.c.bf16 %v6450, %v6448
      %v6517 = vpack.c.bf16 %v6451, %v6449
      %v6518 = vpack.c.bf16 %v6454, %v6452
      %v6519 = vpack.c.bf16 %v6455, %v6453
      %s6520 = scalar_lea.vmem %s2, 768
      %v6521 = vld [vmem:[%s6520] sm:$0xff]
      %v6522 = vld [vmem:[%s6520 + $0x8] sm:$0xff]
      %v6523 = vld [vmem:[%s6520 + $0x10] sm:$0xff]
      %v6524 = vld [vmem:[%s6520 + $0x18] sm:$0xff]
      %v6525 = vld [vmem:[%s6520 + $0x20] sm:$0xff]
      %v6526 = vld [vmem:[%s6520 + $0x28] sm:$0xff]
      %v6527 = vld [vmem:[%s6520 + $0x30] sm:$0xff]
      %v6528 = vld [vmem:[%s6520 + $0x38] sm:$0xff]
      %v6529 = vld [vmem:[%s6520 + $0x40] sm:$0xff]
      %v6530 = vld [vmem:[%s6520 + $0x48] sm:$0xff]
      %v6531 = vld [vmem:[%s6520 + $0x50] sm:$0xff]
      %v6532 = vld [vmem:[%s6520 + $0x58] sm:$0xff]
      %v6533 = vld [vmem:[%s6520 + $0x60] sm:$0xff]
      %v6534 = vld [vmem:[%s6520 + $0x68] sm:$0xff]
      %v6535 = vld [vmem:[%s6520 + $0x70] sm:$0xff]
      %v6536 = vld [vmem:[%s6520 + $0x78] sm:$0xff]
      %v6537 = vld [vmem:[%s6520 + $0x80] sm:$0xff]
      %v6538 = vld [vmem:[%s6520 + $0x88] sm:$0xff]
      %v6539 = vld [vmem:[%s6520 + $0x90] sm:$0xff]
      %v6540 = vld [vmem:[%s6520 + $0x98] sm:$0xff]
      %v6541 = vld [vmem:[%s6520 + $0xa0] sm:$0xff]
      %v6542 = vld [vmem:[%s6520 + $0xa8] sm:$0xff]
      %v6543 = vld [vmem:[%s6520 + $0xb0] sm:$0xff]
      %v6544 = vld [vmem:[%s6520 + $0xb8] sm:$0xff]
      %v6545 = vld [vmem:[%s6520 + $0xc0] sm:$0xff]
      %v6546 = vld [vmem:[%s6520 + $0xc8] sm:$0xff]
      %v6547 = vld [vmem:[%s6520 + $0xd0] sm:$0xff]
      %v6548 = vld [vmem:[%s6520 + $0xd8] sm:$0xff]
      %v6549 = vld [vmem:[%s6520 + $0xe0] sm:$0xff]
      %v6550 = vld [vmem:[%s6520 + $0xe8] sm:$0xff]
      %v6551 = vld [vmem:[%s6520 + $0xf0] sm:$0xff]
      %v6552 = vld [vmem:[%s6520 + $0xf8] sm:$0xff]
      %v6585 = vunpack.c.l.b16 %v6521
      %v6586 = vunpack.c.h.b16 %v6521
      %v6587 = vunpack.c.l.b16 %v6522
      %v6588 = vunpack.c.h.b16 %v6522
      %v6589 = vunpack.c.l.b16 %v6523
      %v6590 = vunpack.c.h.b16 %v6523
      %v6591 = vunpack.c.l.b16 %v6524
      %v6592 = vunpack.c.h.b16 %v6524
      %v6593 = vunpack.c.l.b16 %v6525
      %v6594 = vunpack.c.h.b16 %v6525
      %v6595 = vunpack.c.l.b16 %v6526
      %v6596 = vunpack.c.h.b16 %v6526
      %v6597 = vunpack.c.l.b16 %v6527
      %v6598 = vunpack.c.h.b16 %v6527
      %v6599 = vunpack.c.l.b16 %v6528
      %v6600 = vunpack.c.h.b16 %v6528
      %v6601 = vunpack.c.l.b16 %v6529
      %v6602 = vunpack.c.h.b16 %v6529
      %v6603 = vunpack.c.l.b16 %v6530
      %v6604 = vunpack.c.h.b16 %v6530
      %v6605 = vunpack.c.l.b16 %v6531
      %v6606 = vunpack.c.h.b16 %v6531
      %v6607 = vunpack.c.l.b16 %v6532
      %v6608 = vunpack.c.h.b16 %v6532
      %v6609 = vunpack.c.l.b16 %v6533
      %v6610 = vunpack.c.h.b16 %v6533
      %v6611 = vunpack.c.l.b16 %v6534
      %v6612 = vunpack.c.h.b16 %v6534
      %v6613 = vunpack.c.l.b16 %v6535
      %v6614 = vunpack.c.h.b16 %v6535
      %v6615 = vunpack.c.l.b16 %v6536
      %v6616 = vunpack.c.h.b16 %v6536
      %v6617 = vunpack.c.l.b16 %v6537
      %v6618 = vunpack.c.h.b16 %v6537
      %v6619 = vunpack.c.l.b16 %v6538
      %v6620 = vunpack.c.h.b16 %v6538
      %v6621 = vunpack.c.l.b16 %v6539
      %v6622 = vunpack.c.h.b16 %v6539
      %v6623 = vunpack.c.l.b16 %v6540
      %v6624 = vunpack.c.h.b16 %v6540
      %v6625 = vunpack.c.l.b16 %v6541
      %v6626 = vunpack.c.h.b16 %v6541
      %v6627 = vunpack.c.l.b16 %v6542
      %v6628 = vunpack.c.h.b16 %v6542
      %v6629 = vunpack.c.l.b16 %v6543
      %v6630 = vunpack.c.h.b16 %v6543
      %v6631 = vunpack.c.l.b16 %v6544
      %v6632 = vunpack.c.h.b16 %v6544
      %v6633 = vunpack.c.l.b16 %v6545
      %v6634 = vunpack.c.h.b16 %v6545
      %v6635 = vunpack.c.l.b16 %v6546
      %v6636 = vunpack.c.h.b16 %v6546
      %v6637 = vunpack.c.l.b16 %v6547
      %v6638 = vunpack.c.h.b16 %v6547
      %v6639 = vunpack.c.l.b16 %v6548
      %v6640 = vunpack.c.h.b16 %v6548
      %v6641 = vunpack.c.l.b16 %v6549
      %v6642 = vunpack.c.h.b16 %v6549
      %v6643 = vunpack.c.l.b16 %v6550
      %v6644 = vunpack.c.h.b16 %v6550
      %v6645 = vunpack.c.l.b16 %v6551
      %v6646 = vunpack.c.h.b16 %v6551
      %v6647 = vunpack.c.l.b16 %v6552
      %v6648 = vunpack.c.h.b16 %v6552
      %v6649 = vpack.c.b16 %v6587, %v6585
      %v6650 = vpack.c.b16 %v6588, %v6586
      %v6651 = vpack.c.b16 %v6591, %v6589
      %v6652 = vpack.c.b16 %v6592, %v6590
      %v6653 = vpack.c.b16 %v6595, %v6593
      %v6654 = vpack.c.b16 %v6596, %v6594
      %v6655 = vpack.c.b16 %v6599, %v6597
      %v6656 = vpack.c.b16 %v6600, %v6598
      %v6657 = vpack.c.b16 %v6603, %v6601
      %v6658 = vpack.c.b16 %v6604, %v6602
      %v6659 = vpack.c.b16 %v6607, %v6605
      %v6660 = vpack.c.b16 %v6608, %v6606
      %v6661 = vpack.c.b16 %v6611, %v6609
      %v6662 = vpack.c.b16 %v6612, %v6610
      %v6663 = vpack.c.b16 %v6615, %v6613
      %v6664 = vpack.c.b16 %v6616, %v6614
      %v6665 = vpack.c.b16 %v6619, %v6617
      %v6666 = vpack.c.b16 %v6620, %v6618
      %v6667 = vpack.c.b16 %v6623, %v6621
      %v6668 = vpack.c.b16 %v6624, %v6622
      %v6669 = vpack.c.b16 %v6627, %v6625
      %v6670 = vpack.c.b16 %v6628, %v6626
      %v6671 = vpack.c.b16 %v6631, %v6629
      %v6672 = vpack.c.b16 %v6632, %v6630
      %v6673 = vpack.c.b16 %v6635, %v6633
      %v6674 = vpack.c.b16 %v6636, %v6634
      %v6675 = vpack.c.b16 %v6639, %v6637
      %v6676 = vpack.c.b16 %v6640, %v6638
      %v6677 = vpack.c.b16 %v6643, %v6641
      %v6678 = vpack.c.b16 %v6644, %v6642
      %v6679 = vpack.c.b16 %v6647, %v6645
      %v6680 = vpack.c.b16 %v6648, %v6646
      %6713 = vmatprep.subr.bf16.mxu0 %v6664
      %6714 = vmatpush1.bf16.msra.mxu0 %v6663
      %6715 = vmatprep.subr.bf16.mxu0 %v6662
      %6716 = vmatpush1.bf16.msra.mxu0 %v6661
      %6717 = vmatprep.subr.bf16.mxu0 %v6660
      %6718 = vmatpush1.bf16.msra.mxu0 %v6659
      %6719 = vmatprep.subr.bf16.mxu0 %v6658
      %6720 = vmatpush1.bf16.msra.mxu0 %v6657
      %6721 = vmatprep.subr.bf16.mxu0 %v6656
      %6722 = vmatpush1.bf16.msra.mxu0 %v6655
      %6723 = vmatprep.subr.bf16.mxu0 %v6654
      %6724 = vmatpush1.bf16.msra.mxu0 %v6653
      %6725 = vmatprep.subr.bf16.mxu0 %v6652
      %6726 = vmatpush1.bf16.msra.mxu0 %v6651
      %6727 = vmatprep.subr.bf16.mxu0 %v6650
      %6728 = vmatpush1.bf16.msra.mxu0 %v6649
      %6729 = vmatprep.subr.bf16.mxu0 %v6680
      %6730 = vmatpush2.bf16.msra.mxu0 %v6679
      %6731 = vmatprep.subr.bf16.mxu0 %v6678
      %6732 = vmatpush2.bf16.msra.mxu0 %v6677
      %6733 = vmatprep.subr.bf16.mxu0 %v6676
      %6734 = vmatpush2.bf16.msra.mxu0 %v6675
      %6735 = vmatprep.subr.bf16.mxu0 %v6674
      %6736 = vmatpush2.bf16.msra.mxu0 %v6673
      %6737 = vmatprep.subr.bf16.mxu0 %v6672
      %6738 = vmatpush2.bf16.msra.mxu0 %v6671
      %6739 = vmatprep.subr.bf16.mxu0 %v6670
      %6740 = vmatpush2.bf16.msra.mxu0 %v6669
      %6741 = vmatprep.subr.bf16.mxu0 %v6668
      %6742 = vmatpush2.bf16.msra.mxu0 %v6667
      %6743 = vmatprep.subr.bf16.mxu0 %v6666
      %6744 = vmatpush2.bf16.msra.mxu0 %v6665
      %6745 = vmatprep.mubr.bf16.mxu0 %v6265
      %6746 = vmatmul.mubr.bf16.gmra.mxu0 %v6264
      %v6747 = vpop.f32.mrf.mxu0
      %v6748 = vadd.f32 0.0, %v6747
      %v6749 = vpop.f32.mrf.mxu0
      %v6750 = vadd.f32 0.0, %v6749
      %v6751 = vpop.f32.mrf.mxu0
      %v6752 = vadd.f32 0.0, %v6751
      %v6753 = vpop.f32.mrf.mxu0
      %v6754 = vadd.f32 0.0, %v6753
      %6755 = vmatprep.mubr.bf16.mxu0 %v6267
      %6756 = vmatmul.mubr.bf16.gmra.mxu0 %v6266
      %v6757 = vpop.f32.mrf.mxu0
      %v6758 = vadd.f32 0.0, %v6757
      %v6759 = vpop.f32.mrf.mxu0
      %v6760 = vadd.f32 0.0, %v6759
      %v6761 = vpop.f32.mrf.mxu0
      %v6762 = vadd.f32 0.0, %v6761
      %v6763 = vpop.f32.mrf.mxu0
      %v6764 = vadd.f32 0.0, %v6763
      %6765 = vmatprep.mubr.bf16.mxu0 %v6269
      %6766 = vmatmul.mubr.bf16.gmra.mxu0 %v6268
      %v6767 = vpop.f32.mrf.mxu0
      %v6768 = vadd.f32 0.0, %v6767
      %v6769 = vpop.f32.mrf.mxu0
      %v6770 = vadd.f32 0.0, %v6769
      %v6771 = vpop.f32.mrf.mxu0
      %v6772 = vadd.f32 0.0, %v6771
      %v6773 = vpop.f32.mrf.mxu0
      %v6774 = vadd.f32 0.0, %v6773
      %6775 = vmatprep.mubr.bf16.mxu0 %v6271
      %6776 = vmatmul.mubr.bf16.gmra.mxu0 %v6270
      %v6777 = vpop.f32.mrf.mxu0
      %v6778 = vadd.f32 0.0, %v6777
      %v6779 = vpop.f32.mrf.mxu0
      %v6780 = vadd.f32 0.0, %v6779
      %v6781 = vpop.f32.mrf.mxu0
      %v6782 = vadd.f32 0.0, %v6781
      %v6783 = vpop.f32.mrf.mxu0
      %v6784 = vadd.f32 0.0, %v6783
      %6785 = vmatprep.mubr.bf16.mxu0 %v6273
      %6786 = vmatmul.mubr.bf16.gmra.mxu0 %v6272
      %v6787 = vpop.f32.mrf.mxu0
      %v6788 = vadd.f32 0.0, %v6787
      %v6789 = vpop.f32.mrf.mxu0
      %v6790 = vadd.f32 0.0, %v6789
      %v6791 = vpop.f32.mrf.mxu0
      %v6792 = vadd.f32 0.0, %v6791
      %v6793 = vpop.f32.mrf.mxu0
      %v6794 = vadd.f32 0.0, %v6793
      %6795 = vmatprep.mubr.bf16.mxu0 %v6275
      %6796 = vmatmul.mubr.bf16.gmra.mxu0 %v6274
      %v6797 = vpop.f32.mrf.mxu0
      %v6798 = vadd.f32 0.0, %v6797
      %v6799 = vpop.f32.mrf.mxu0
      %v6800 = vadd.f32 0.0, %v6799
      %v6801 = vpop.f32.mrf.mxu0
      %v6802 = vadd.f32 0.0, %v6801
      %v6803 = vpop.f32.mrf.mxu0
      %v6804 = vadd.f32 0.0, %v6803
      %6805 = vmatprep.mubr.bf16.mxu0 %v6277
      %6806 = vmatmul.mubr.bf16.gmra.mxu0 %v6276
      %v6807 = vpop.f32.mrf.mxu0
      %v6808 = vadd.f32 0.0, %v6807
      %v6809 = vpop.f32.mrf.mxu0
      %v6810 = vadd.f32 0.0, %v6809
      %v6811 = vpop.f32.mrf.mxu0
      %v6812 = vadd.f32 0.0, %v6811
      %v6813 = vpop.f32.mrf.mxu0
      %v6814 = vadd.f32 0.0, %v6813
      %6815 = vmatprep.mubr.bf16.mxu0 %v6279
      %6816 = vmatmul.mubr.bf16.gmra.mxu0 %v6278
      %v6817 = vpop.f32.mrf.mxu0
      %v6818 = vadd.f32 0.0, %v6817
      %v6819 = vpop.f32.mrf.mxu0
      %v6820 = vadd.f32 0.0, %v6819
      %v6821 = vpop.f32.mrf.mxu0
      %v6822 = vadd.f32 0.0, %v6821
      %v6823 = vpop.f32.mrf.mxu0
      %v6824 = vadd.f32 0.0, %v6823
      %6825 = vmatprep.mubr.bf16.mxu0 %v6281
      %6826 = vmatmul.mubr.bf16.gmra.mxu0 %v6280
      %v6827 = vpop.f32.mrf.mxu0
      %v6828 = vadd.f32 0.0, %v6827
      %v6829 = vpop.f32.mrf.mxu0
      %v6830 = vadd.f32 0.0, %v6829
      %v6831 = vpop.f32.mrf.mxu0
      %v6832 = vadd.f32 0.0, %v6831
      %v6833 = vpop.f32.mrf.mxu0
      %v6834 = vadd.f32 0.0, %v6833
      %6835 = vmatprep.mubr.bf16.mxu0 %v6283
      %6836 = vmatmul.mubr.bf16.gmra.mxu0 %v6282
      %v6837 = vpop.f32.mrf.mxu0
      %v6838 = vadd.f32 0.0, %v6837
      %v6839 = vpop.f32.mrf.mxu0
      %v6840 = vadd.f32 0.0, %v6839
      %v6841 = vpop.f32.mrf.mxu0
      %v6842 = vadd.f32 0.0, %v6841
      %v6843 = vpop.f32.mrf.mxu0
      %v6844 = vadd.f32 0.0, %v6843
      %6845 = vmatprep.mubr.bf16.mxu0 %v6285
      %6846 = vmatmul.mubr.bf16.gmra.mxu0 %v6284
      %v6847 = vpop.f32.mrf.mxu0
      %v6848 = vadd.f32 0.0, %v6847
      %v6849 = vpop.f32.mrf.mxu0
      %v6850 = vadd.f32 0.0, %v6849
      %v6851 = vpop.f32.mrf.mxu0
      %v6852 = vadd.f32 0.0, %v6851
      %v6853 = vpop.f32.mrf.mxu0
      %v6854 = vadd.f32 0.0, %v6853
      %6855 = vmatprep.mubr.bf16.mxu0 %v6287
      %6856 = vmatmul.mubr.bf16.gmra.mxu0 %v6286
      %v6857 = vpop.f32.mrf.mxu0
      %v6858 = vadd.f32 0.0, %v6857
      %v6859 = vpop.f32.mrf.mxu0
      %v6860 = vadd.f32 0.0, %v6859
      %v6861 = vpop.f32.mrf.mxu0
      %v6862 = vadd.f32 0.0, %v6861
      %v6863 = vpop.f32.mrf.mxu0
      %v6864 = vadd.f32 0.0, %v6863
      %6865 = vmatprep.mubr.bf16.mxu0 %v6289
      %6866 = vmatmul.mubr.bf16.gmra.mxu0 %v6288
      %v6867 = vpop.f32.mrf.mxu0
      %v6868 = vadd.f32 0.0, %v6867
      %v6869 = vpop.f32.mrf.mxu0
      %v6870 = vadd.f32 0.0, %v6869
      %v6871 = vpop.f32.mrf.mxu0
      %v6872 = vadd.f32 0.0, %v6871
      %v6873 = vpop.f32.mrf.mxu0
      %v6874 = vadd.f32 0.0, %v6873
      %6875 = vmatprep.mubr.bf16.mxu0 %v6291
      %6876 = vmatmul.mubr.bf16.gmra.mxu0 %v6290
      %v6877 = vpop.f32.mrf.mxu0
      %v6878 = vadd.f32 0.0, %v6877
      %v6879 = vpop.f32.mrf.mxu0
      %v6880 = vadd.f32 0.0, %v6879
      %v6881 = vpop.f32.mrf.mxu0
      %v6882 = vadd.f32 0.0, %v6881
      %v6883 = vpop.f32.mrf.mxu0
      %v6884 = vadd.f32 0.0, %v6883
      %6885 = vmatprep.mubr.bf16.mxu0 %v6293
      %6886 = vmatmul.mubr.bf16.gmra.mxu0 %v6292
      %v6887 = vpop.f32.mrf.mxu0
      %v6888 = vadd.f32 0.0, %v6887
      %v6889 = vpop.f32.mrf.mxu0
      %v6890 = vadd.f32 0.0, %v6889
      %v6891 = vpop.f32.mrf.mxu0
      %v6892 = vadd.f32 0.0, %v6891
      %v6893 = vpop.f32.mrf.mxu0
      %v6894 = vadd.f32 0.0, %v6893
      %6895 = vmatprep.mubr.bf16.mxu0 %v6295
      %6896 = vmatmul.mubr.bf16.gmra.mxu0 %v6294
      %v6897 = vpop.f32.mrf.mxu0
      %v6898 = vadd.f32 0.0, %v6897
      %v6899 = vpop.f32.mrf.mxu0
      %v6900 = vadd.f32 0.0, %v6899
      %v6901 = vpop.f32.mrf.mxu0
      %v6902 = vadd.f32 0.0, %v6901
      %v6903 = vpop.f32.mrf.mxu0
      %v6904 = vadd.f32 0.0, %v6903
      %6905 = vmatprep.mubr.bf16.mxu0 %v6297
      %6906 = vmatmul.mubr.bf16.gmra.mxu0 %v6296
      %v6907 = vpop.f32.mrf.mxu0
      %v6908 = vadd.f32 0.0, %v6907
      %v6909 = vpop.f32.mrf.mxu0
      %v6910 = vadd.f32 0.0, %v6909
      %v6911 = vpop.f32.mrf.mxu0
      %v6912 = vadd.f32 0.0, %v6911
      %v6913 = vpop.f32.mrf.mxu0
      %v6914 = vadd.f32 0.0, %v6913
      %6915 = vmatprep.mubr.bf16.mxu0 %v6299
      %6916 = vmatmul.mubr.bf16.gmra.mxu0 %v6298
      %v6917 = vpop.f32.mrf.mxu0
      %v6918 = vadd.f32 0.0, %v6917
      %v6919 = vpop.f32.mrf.mxu0
      %v6920 = vadd.f32 0.0, %v6919
      %v6921 = vpop.f32.mrf.mxu0
      %v6922 = vadd.f32 0.0, %v6921
      %v6923 = vpop.f32.mrf.mxu0
      %v6924 = vadd.f32 0.0, %v6923
      %6925 = vmatprep.mubr.bf16.mxu0 %v6301
      %6926 = vmatmul.mubr.bf16.gmra.mxu0 %v6300
      %v6927 = vpop.f32.mrf.mxu0
      %v6928 = vadd.f32 0.0, %v6927
      %v6929 = vpop.f32.mrf.mxu0
      %v6930 = vadd.f32 0.0, %v6929
      %v6931 = vpop.f32.mrf.mxu0
      %v6932 = vadd.f32 0.0, %v6931
      %v6933 = vpop.f32.mrf.mxu0
      %v6934 = vadd.f32 0.0, %v6933
      %6935 = vmatprep.mubr.bf16.mxu0 %v6303
      %6936 = vmatmul.mubr.bf16.gmra.mxu0 %v6302
      %v6937 = vpop.f32.mrf.mxu0
      %v6938 = vadd.f32 0.0, %v6937
      %v6939 = vpop.f32.mrf.mxu0
      %v6940 = vadd.f32 0.0, %v6939
      %v6941 = vpop.f32.mrf.mxu0
      %v6942 = vadd.f32 0.0, %v6941
      %v6943 = vpop.f32.mrf.mxu0
      %v6944 = vadd.f32 0.0, %v6943
      %6945 = vmatprep.mubr.bf16.mxu0 %v6305
      %6946 = vmatmul.mubr.bf16.gmra.mxu0 %v6304
      %v6947 = vpop.f32.mrf.mxu0
      %v6948 = vadd.f32 0.0, %v6947
      %v6949 = vpop.f32.mrf.mxu0
      %v6950 = vadd.f32 0.0, %v6949
      %v6951 = vpop.f32.mrf.mxu0
      %v6952 = vadd.f32 0.0, %v6951
      %v6953 = vpop.f32.mrf.mxu0
      %v6954 = vadd.f32 0.0, %v6953
      %6955 = vmatprep.mubr.bf16.mxu0 %v6307
      %6956 = vmatmul.mubr.bf16.gmra.mxu0 %v6306
      %v6957 = vpop.f32.mrf.mxu0
      %v6958 = vadd.f32 0.0, %v6957
      %v6959 = vpop.f32.mrf.mxu0
      %v6960 = vadd.f32 0.0, %v6959
      %v6961 = vpop.f32.mrf.mxu0
      %v6962 = vadd.f32 0.0, %v6961
      %v6963 = vpop.f32.mrf.mxu0
      %v6964 = vadd.f32 0.0, %v6963
      %6965 = vmatprep.mubr.bf16.mxu0 %v6309
      %6966 = vmatmul.mubr.bf16.gmra.mxu0 %v6308
      %v6967 = vpop.f32.mrf.mxu0
      %v6968 = vadd.f32 0.0, %v6967
      %v6969 = vpop.f32.mrf.mxu0
      %v6970 = vadd.f32 0.0, %v6969
      %v6971 = vpop.f32.mrf.mxu0
      %v6972 = vadd.f32 0.0, %v6971
      %v6973 = vpop.f32.mrf.mxu0
      %v6974 = vadd.f32 0.0, %v6973
      %6975 = vmatprep.mubr.bf16.mxu0 %v6311
      %6976 = vmatmul.mubr.bf16.gmra.mxu0 %v6310
      %v6977 = vpop.f32.mrf.mxu0
      %v6978 = vadd.f32 0.0, %v6977
      %v6979 = vpop.f32.mrf.mxu0
      %v6980 = vadd.f32 0.0, %v6979
      %v6981 = vpop.f32.mrf.mxu0
      %v6982 = vadd.f32 0.0, %v6981
      %v6983 = vpop.f32.mrf.mxu0
      %v6984 = vadd.f32 0.0, %v6983
      %6985 = vmatprep.mubr.bf16.mxu0 %v6313
      %6986 = vmatmul.mubr.bf16.gmra.mxu0 %v6312
      %v6987 = vpop.f32.mrf.mxu0
      %v6988 = vadd.f32 0.0, %v6987
      %v6989 = vpop.f32.mrf.mxu0
      %v6990 = vadd.f32 0.0, %v6989
      %v6991 = vpop.f32.mrf.mxu0
      %v6992 = vadd.f32 0.0, %v6991
      %v6993 = vpop.f32.mrf.mxu0
      %v6994 = vadd.f32 0.0, %v6993
      %6995 = vmatprep.mubr.bf16.mxu0 %v6315
      %6996 = vmatmul.mubr.bf16.gmra.mxu0 %v6314
      %v6997 = vpop.f32.mrf.mxu0
      %v6998 = vadd.f32 0.0, %v6997
      %v6999 = vpop.f32.mrf.mxu0
      %v7000 = vadd.f32 0.0, %v6999
      %v7001 = vpop.f32.mrf.mxu0
      %v7002 = vadd.f32 0.0, %v7001
      %v7003 = vpop.f32.mrf.mxu0
      %v7004 = vadd.f32 0.0, %v7003
      %7005 = vmatprep.mubr.bf16.mxu0 %v6317
      %7006 = vmatmul.mubr.bf16.gmra.mxu0 %v6316
      %v7007 = vpop.f32.mrf.mxu0
      %v7008 = vadd.f32 0.0, %v7007
      %v7009 = vpop.f32.mrf.mxu0
      %v7010 = vadd.f32 0.0, %v7009
      %v7011 = vpop.f32.mrf.mxu0
      %v7012 = vadd.f32 0.0, %v7011
      %v7013 = vpop.f32.mrf.mxu0
      %v7014 = vadd.f32 0.0, %v7013
      %7015 = vmatprep.mubr.bf16.mxu0 %v6319
      %7016 = vmatmul.mubr.bf16.gmra.mxu0 %v6318
      %v7017 = vpop.f32.mrf.mxu0
      %v7018 = vadd.f32 0.0, %v7017
      %v7019 = vpop.f32.mrf.mxu0
      %v7020 = vadd.f32 0.0, %v7019
      %v7021 = vpop.f32.mrf.mxu0
      %v7022 = vadd.f32 0.0, %v7021
      %v7023 = vpop.f32.mrf.mxu0
      %v7024 = vadd.f32 0.0, %v7023
      %7025 = vmatprep.mubr.bf16.mxu0 %v6321
      %7026 = vmatmul.mubr.bf16.gmra.mxu0 %v6320
      %v7027 = vpop.f32.mrf.mxu0
      %v7028 = vadd.f32 0.0, %v7027
      %v7029 = vpop.f32.mrf.mxu0
      %v7030 = vadd.f32 0.0, %v7029
      %v7031 = vpop.f32.mrf.mxu0
      %v7032 = vadd.f32 0.0, %v7031
      %v7033 = vpop.f32.mrf.mxu0
      %v7034 = vadd.f32 0.0, %v7033
      %7035 = vmatprep.mubr.bf16.mxu0 %v6323
      %7036 = vmatmul.mubr.bf16.gmra.mxu0 %v6322
      %v7037 = vpop.f32.mrf.mxu0
      %v7038 = vadd.f32 0.0, %v7037
      %v7039 = vpop.f32.mrf.mxu0
      %v7040 = vadd.f32 0.0, %v7039
      %v7041 = vpop.f32.mrf.mxu0
      %v7042 = vadd.f32 0.0, %v7041
      %v7043 = vpop.f32.mrf.mxu0
      %v7044 = vadd.f32 0.0, %v7043
      %7045 = vmatprep.mubr.bf16.mxu0 %v6325
      %7046 = vmatmul.mubr.bf16.gmra.mxu0 %v6324
      %v7047 = vpop.f32.mrf.mxu0
      %v7048 = vadd.f32 0.0, %v7047
      %v7049 = vpop.f32.mrf.mxu0
      %v7050 = vadd.f32 0.0, %v7049
      %v7051 = vpop.f32.mrf.mxu0
      %v7052 = vadd.f32 0.0, %v7051
      %v7053 = vpop.f32.mrf.mxu0
      %v7054 = vadd.f32 0.0, %v7053
      %7055 = vmatprep.mubr.bf16.mxu0 %v6327
      %7056 = vmatmul.mubr.bf16.gmra.mxu0 %v6326
      %v7057 = vpop.f32.mrf.mxu0
      %v7058 = vadd.f32 0.0, %v7057
      %v7059 = vpop.f32.mrf.mxu0
      %v7060 = vadd.f32 0.0, %v7059
      %v7061 = vpop.f32.mrf.mxu0
      %v7062 = vadd.f32 0.0, %v7061
      %v7063 = vpop.f32.mrf.mxu0
      %v7064 = vadd.f32 0.0, %v7063
      %7065 = vdwg.mxu0
      %7066 = vmatprep.subr.bf16.mxu0 %v6664
      %7067 = vmatpush1.bf16.msra.mxu0 %v6663
      %7068 = vmatprep.subr.bf16.mxu0 %v6662
      %7069 = vmatpush1.bf16.msra.mxu0 %v6661
      %7070 = vmatprep.subr.bf16.mxu0 %v6660
      %7071 = vmatpush1.bf16.msra.mxu0 %v6659
      %7072 = vmatprep.subr.bf16.mxu0 %v6658
      %7073 = vmatpush1.bf16.msra.mxu0 %v6657
      %7074 = vmatprep.subr.bf16.mxu0 %v6656
      %7075 = vmatpush1.bf16.msra.mxu0 %v6655
      %7076 = vmatprep.subr.bf16.mxu0 %v6654
      %7077 = vmatpush1.bf16.msra.mxu0 %v6653
      %7078 = vmatprep.subr.bf16.mxu0 %v6652
      %7079 = vmatpush1.bf16.msra.mxu0 %v6651
      %7080 = vmatprep.subr.bf16.mxu0 %v6650
      %7081 = vmatpush1.bf16.msra.mxu0 %v6649
      %7082 = vmatprep.subr.bf16.mxu0 %v6680
      %7083 = vmatpush2.bf16.msra.mxu0 %v6679
      %7084 = vmatprep.subr.bf16.mxu0 %v6678
      %7085 = vmatpush2.bf16.msra.mxu0 %v6677
      %7086 = vmatprep.subr.bf16.mxu0 %v6676
      %7087 = vmatpush2.bf16.msra.mxu0 %v6675
      %7088 = vmatprep.subr.bf16.mxu0 %v6674
      %7089 = vmatpush2.bf16.msra.mxu0 %v6673
      %7090 = vmatprep.subr.bf16.mxu0 %v6672
      %7091 = vmatpush2.bf16.msra.mxu0 %v6671
      %7092 = vmatprep.subr.bf16.mxu0 %v6670
      %7093 = vmatpush2.bf16.msra.mxu0 %v6669
      %7094 = vmatprep.subr.bf16.mxu0 %v6668
      %7095 = vmatpush2.bf16.msra.mxu0 %v6667
      %7096 = vmatprep.subr.bf16.mxu0 %v6666
      %7097 = vmatpush2.bf16.msra.mxu0 %v6665
      %7098 = vmatprep.mubr.bf16.mxu0 %v6457
      %7099 = vmatmul.mubr.bf16.gmra.mxu0 %v6456
      %v7100 = vpop.f32.mrf.mxu0
      %v7101 = vadd.f32 0.0, %v7100
      %v7102 = vpop.f32.mrf.mxu0
      %v7103 = vadd.f32 0.0, %v7102
      %v7104 = vpop.f32.mrf.mxu0
      %v7105 = vadd.f32 0.0, %v7104
      %v7106 = vpop.f32.mrf.mxu0
      %v7107 = vadd.f32 0.0, %v7106
      %7108 = vmatprep.mubr.bf16.mxu0 %v6459
      %7109 = vmatmul.mubr.bf16.gmra.mxu0 %v6458
      %v7110 = vpop.f32.mrf.mxu0
      %v7111 = vadd.f32 0.0, %v7110
      %v7112 = vpop.f32.mrf.mxu0
      %v7113 = vadd.f32 0.0, %v7112
      %v7114 = vpop.f32.mrf.mxu0
      %v7115 = vadd.f32 0.0, %v7114
      %v7116 = vpop.f32.mrf.mxu0
      %v7117 = vadd.f32 0.0, %v7116
      %7118 = vmatprep.mubr.bf16.mxu0 %v6461
      %7119 = vmatmul.mubr.bf16.gmra.mxu0 %v6460
      %v7120 = vpop.f32.mrf.mxu0
      %v7121 = vadd.f32 0.0, %v7120
      %v7122 = vpop.f32.mrf.mxu0
      %v7123 = vadd.f32 0.0, %v7122
      %v7124 = vpop.f32.mrf.mxu0
      %v7125 = vadd.f32 0.0, %v7124
      %v7126 = vpop.f32.mrf.mxu0
      %v7127 = vadd.f32 0.0, %v7126
      %7128 = vmatprep.mubr.bf16.mxu0 %v6463
      %7129 = vmatmul.mubr.bf16.gmra.mxu0 %v6462
      %v7130 = vpop.f32.mrf.mxu0
      %v7131 = vadd.f32 0.0, %v7130
      %v7132 = vpop.f32.mrf.mxu0
      %v7133 = vadd.f32 0.0, %v7132
      %v7134 = vpop.f32.mrf.mxu0
      %v7135 = vadd.f32 0.0, %v7134
      %v7136 = vpop.f32.mrf.mxu0
      %v7137 = vadd.f32 0.0, %v7136
      %7138 = vmatprep.mubr.bf16.mxu0 %v6465
      %7139 = vmatmul.mubr.bf16.gmra.mxu0 %v6464
      %v7140 = vpop.f32.mrf.mxu0
      %v7141 = vadd.f32 0.0, %v7140
      %v7142 = vpop.f32.mrf.mxu0
      %v7143 = vadd.f32 0.0, %v7142
      %v7144 = vpop.f32.mrf.mxu0
      %v7145 = vadd.f32 0.0, %v7144
      %v7146 = vpop.f32.mrf.mxu0
      %v7147 = vadd.f32 0.0, %v7146
      %7148 = vmatprep.mubr.bf16.mxu0 %v6467
      %7149 = vmatmul.mubr.bf16.gmra.mxu0 %v6466
      %v7150 = vpop.f32.mrf.mxu0
      %v7151 = vadd.f32 0.0, %v7150
      %v7152 = vpop.f32.mrf.mxu0
      %v7153 = vadd.f32 0.0, %v7152
      %v7154 = vpop.f32.mrf.mxu0
      %v7155 = vadd.f32 0.0, %v7154
      %v7156 = vpop.f32.mrf.mxu0
      %v7157 = vadd.f32 0.0, %v7156
      %7158 = vmatprep.mubr.bf16.mxu0 %v6469
      %7159 = vmatmul.mubr.bf16.gmra.mxu0 %v6468
      %v7160 = vpop.f32.mrf.mxu0
      %v7161 = vadd.f32 0.0, %v7160
      %v7162 = vpop.f32.mrf.mxu0
      %v7163 = vadd.f32 0.0, %v7162
      %v7164 = vpop.f32.mrf.mxu0
      %v7165 = vadd.f32 0.0, %v7164
      %v7166 = vpop.f32.mrf.mxu0
      %v7167 = vadd.f32 0.0, %v7166
      %7168 = vmatprep.mubr.bf16.mxu0 %v6471
      %7169 = vmatmul.mubr.bf16.gmra.mxu0 %v6470
      %v7170 = vpop.f32.mrf.mxu0
      %v7171 = vadd.f32 0.0, %v7170
      %v7172 = vpop.f32.mrf.mxu0
      %v7173 = vadd.f32 0.0, %v7172
      %v7174 = vpop.f32.mrf.mxu0
      %v7175 = vadd.f32 0.0, %v7174
      %v7176 = vpop.f32.mrf.mxu0
      %v7177 = vadd.f32 0.0, %v7176
      %7178 = vmatprep.mubr.bf16.mxu0 %v6473
      %7179 = vmatmul.mubr.bf16.gmra.mxu0 %v6472
      %v7180 = vpop.f32.mrf.mxu0
      %v7181 = vadd.f32 0.0, %v7180
      %v7182 = vpop.f32.mrf.mxu0
      %v7183 = vadd.f32 0.0, %v7182
      %v7184 = vpop.f32.mrf.mxu0
      %v7185 = vadd.f32 0.0, %v7184
      %v7186 = vpop.f32.mrf.mxu0
      %v7187 = vadd.f32 0.0, %v7186
      %7188 = vmatprep.mubr.bf16.mxu0 %v6475
      %7189 = vmatmul.mubr.bf16.gmra.mxu0 %v6474
      %v7190 = vpop.f32.mrf.mxu0
      %v7191 = vadd.f32 0.0, %v7190
      %v7192 = vpop.f32.mrf.mxu0
      %v7193 = vadd.f32 0.0, %v7192
      %v7194 = vpop.f32.mrf.mxu0
      %v7195 = vadd.f32 0.0, %v7194
      %v7196 = vpop.f32.mrf.mxu0
      %v7197 = vadd.f32 0.0, %v7196
      %7198 = vmatprep.mubr.bf16.mxu0 %v6477
      %7199 = vmatmul.mubr.bf16.gmra.mxu0 %v6476
      %v7200 = vpop.f32.mrf.mxu0
      %v7201 = vadd.f32 0.0, %v7200
      %v7202 = vpop.f32.mrf.mxu0
      %v7203 = vadd.f32 0.0, %v7202
      %v7204 = vpop.f32.mrf.mxu0
      %v7205 = vadd.f32 0.0, %v7204
      %v7206 = vpop.f32.mrf.mxu0
      %v7207 = vadd.f32 0.0, %v7206
      %7208 = vmatprep.mubr.bf16.mxu0 %v6479
      %7209 = vmatmul.mubr.bf16.gmra.mxu0 %v6478
      %v7210 = vpop.f32.mrf.mxu0
      %v7211 = vadd.f32 0.0, %v7210
      %v7212 = vpop.f32.mrf.mxu0
      %v7213 = vadd.f32 0.0, %v7212
      %v7214 = vpop.f32.mrf.mxu0
      %v7215 = vadd.f32 0.0, %v7214
      %v7216 = vpop.f32.mrf.mxu0
      %v7217 = vadd.f32 0.0, %v7216
      %7218 = vmatprep.mubr.bf16.mxu0 %v6481
      %7219 = vmatmul.mubr.bf16.gmra.mxu0 %v6480
      %v7220 = vpop.f32.mrf.mxu0
      %v7221 = vadd.f32 0.0, %v7220
      %v7222 = vpop.f32.mrf.mxu0
      %v7223 = vadd.f32 0.0, %v7222
      %v7224 = vpop.f32.mrf.mxu0
      %v7225 = vadd.f32 0.0, %v7224
      %v7226 = vpop.f32.mrf.mxu0
      %v7227 = vadd.f32 0.0, %v7226
      %7228 = vmatprep.mubr.bf16.mxu0 %v6483
      %7229 = vmatmul.mubr.bf16.gmra.mxu0 %v6482
      %v7230 = vpop.f32.mrf.mxu0
      %v7231 = vadd.f32 0.0, %v7230
      %v7232 = vpop.f32.mrf.mxu0
      %v7233 = vadd.f32 0.0, %v7232
      %v7234 = vpop.f32.mrf.mxu0
      %v7235 = vadd.f32 0.0, %v7234
      %v7236 = vpop.f32.mrf.mxu0
      %v7237 = vadd.f32 0.0, %v7236
      %7238 = vmatprep.mubr.bf16.mxu0 %v6485
      %7239 = vmatmul.mubr.bf16.gmra.mxu0 %v6484
      %v7240 = vpop.f32.mrf.mxu0
      %v7241 = vadd.f32 0.0, %v7240
      %v7242 = vpop.f32.mrf.mxu0
      %v7243 = vadd.f32 0.0, %v7242
      %v7244 = vpop.f32.mrf.mxu0
      %v7245 = vadd.f32 0.0, %v7244
      %v7246 = vpop.f32.mrf.mxu0
      %v7247 = vadd.f32 0.0, %v7246
      %7248 = vmatprep.mubr.bf16.mxu0 %v6487
      %7249 = vmatmul.mubr.bf16.gmra.mxu0 %v6486
      %v7250 = vpop.f32.mrf.mxu0
      %v7251 = vadd.f32 0.0, %v7250
      %v7252 = vpop.f32.mrf.mxu0
      %v7253 = vadd.f32 0.0, %v7252
      %v7254 = vpop.f32.mrf.mxu0
      %v7255 = vadd.f32 0.0, %v7254
      %v7256 = vpop.f32.mrf.mxu0
      %v7257 = vadd.f32 0.0, %v7256
      %7258 = vmatprep.mubr.bf16.mxu0 %v6489
      %7259 = vmatmul.mubr.bf16.gmra.mxu0 %v6488
      %v7260 = vpop.f32.mrf.mxu0
      %v7261 = vadd.f32 0.0, %v7260
      %v7262 = vpop.f32.mrf.mxu0
      %v7263 = vadd.f32 0.0, %v7262
      %v7264 = vpop.f32.mrf.mxu0
      %v7265 = vadd.f32 0.0, %v7264
      %v7266 = vpop.f32.mrf.mxu0
      %v7267 = vadd.f32 0.0, %v7266
      %7268 = vmatprep.mubr.bf16.mxu0 %v6491
      %7269 = vmatmul.mubr.bf16.gmra.mxu0 %v6490
      %v7270 = vpop.f32.mrf.mxu0
      %v7271 = vadd.f32 0.0, %v7270
      %v7272 = vpop.f32.mrf.mxu0
      %v7273 = vadd.f32 0.0, %v7272
      %v7274 = vpop.f32.mrf.mxu0
      %v7275 = vadd.f32 0.0, %v7274
      %v7276 = vpop.f32.mrf.mxu0
      %v7277 = vadd.f32 0.0, %v7276
      %7278 = vmatprep.mubr.bf16.mxu0 %v6493
      %7279 = vmatmul.mubr.bf16.gmra.mxu0 %v6492
      %v7280 = vpop.f32.mrf.mxu0
      %v7281 = vadd.f32 0.0, %v7280
      %v7282 = vpop.f32.mrf.mxu0
      %v7283 = vadd.f32 0.0, %v7282
      %v7284 = vpop.f32.mrf.mxu0
      %v7285 = vadd.f32 0.0, %v7284
      %v7286 = vpop.f32.mrf.mxu0
      %v7287 = vadd.f32 0.0, %v7286
      %7288 = vmatprep.mubr.bf16.mxu0 %v6495
      %7289 = vmatmul.mubr.bf16.gmra.mxu0 %v6494
      %v7290 = vpop.f32.mrf.mxu0
      %v7291 = vadd.f32 0.0, %v7290
      %v7292 = vpop.f32.mrf.mxu0
      %v7293 = vadd.f32 0.0, %v7292
      %v7294 = vpop.f32.mrf.mxu0
      %v7295 = vadd.f32 0.0, %v7294
      %v7296 = vpop.f32.mrf.mxu0
      %v7297 = vadd.f32 0.0, %v7296
      %7298 = vmatprep.mubr.bf16.mxu0 %v6497
      %7299 = vmatmul.mubr.bf16.gmra.mxu0 %v6496
      %v7300 = vpop.f32.mrf.mxu0
      %v7301 = vadd.f32 0.0, %v7300
      %v7302 = vpop.f32.mrf.mxu0
      %v7303 = vadd.f32 0.0, %v7302
      %v7304 = vpop.f32.mrf.mxu0
      %v7305 = vadd.f32 0.0, %v7304
      %v7306 = vpop.f32.mrf.mxu0
      %v7307 = vadd.f32 0.0, %v7306
      %7308 = vmatprep.mubr.bf16.mxu0 %v6499
      %7309 = vmatmul.mubr.bf16.gmra.mxu0 %v6498
      %v7310 = vpop.f32.mrf.mxu0
      %v7311 = vadd.f32 0.0, %v7310
      %v7312 = vpop.f32.mrf.mxu0
      %v7313 = vadd.f32 0.0, %v7312
      %v7314 = vpop.f32.mrf.mxu0
      %v7315 = vadd.f32 0.0, %v7314
      %v7316 = vpop.f32.mrf.mxu0
      %v7317 = vadd.f32 0.0, %v7316
      %7318 = vmatprep.mubr.bf16.mxu0 %v6501
      %7319 = vmatmul.mubr.bf16.gmra.mxu0 %v6500
      %v7320 = vpop.f32.mrf.mxu0
      %v7321 = vadd.f32 0.0, %v7320
      %v7322 = vpop.f32.mrf.mxu0
      %v7323 = vadd.f32 0.0, %v7322
      %v7324 = vpop.f32.mrf.mxu0
      %v7325 = vadd.f32 0.0, %v7324
      %v7326 = vpop.f32.mrf.mxu0
      %v7327 = vadd.f32 0.0, %v7326
      %7328 = vmatprep.mubr.bf16.mxu0 %v6503
      %7329 = vmatmul.mubr.bf16.gmra.mxu0 %v6502
      %v7330 = vpop.f32.mrf.mxu0
      %v7331 = vadd.f32 0.0, %v7330
      %v7332 = vpop.f32.mrf.mxu0
      %v7333 = vadd.f32 0.0, %v7332
      %v7334 = vpop.f32.mrf.mxu0
      %v7335 = vadd.f32 0.0, %v7334
      %v7336 = vpop.f32.mrf.mxu0
      %v7337 = vadd.f32 0.0, %v7336
      %7338 = vmatprep.mubr.bf16.mxu0 %v6505
      %7339 = vmatmul.mubr.bf16.gmra.mxu0 %v6504
      %v7340 = vpop.f32.mrf.mxu0
      %v7341 = vadd.f32 0.0, %v7340
      %v7342 = vpop.f32.mrf.mxu0
      %v7343 = vadd.f32 0.0, %v7342
      %v7344 = vpop.f32.mrf.mxu0
      %v7345 = vadd.f32 0.0, %v7344
      %v7346 = vpop.f32.mrf.mxu0
      %v7347 = vadd.f32 0.0, %v7346
      %7348 = vmatprep.mubr.bf16.mxu0 %v6507
      %7349 = vmatmul.mubr.bf16.gmra.mxu0 %v6506
      %v7350 = vpop.f32.mrf.mxu0
      %v7351 = vadd.f32 0.0, %v7350
      %v7352 = vpop.f32.mrf.mxu0
      %v7353 = vadd.f32 0.0, %v7352
      %v7354 = vpop.f32.mrf.mxu0
      %v7355 = vadd.f32 0.0, %v7354
      %v7356 = vpop.f32.mrf.mxu0
      %v7357 = vadd.f32 0.0, %v7356
      %7358 = vmatprep.mubr.bf16.mxu0 %v6509
      %7359 = vmatmul.mubr.bf16.gmra.mxu0 %v6508
      %v7360 = vpop.f32.mrf.mxu0
      %v7361 = vadd.f32 0.0, %v7360
      %v7362 = vpop.f32.mrf.mxu0
      %v7363 = vadd.f32 0.0, %v7362
      %v7364 = vpop.f32.mrf.mxu0
      %v7365 = vadd.f32 0.0, %v7364
      %v7366 = vpop.f32.mrf.mxu0
      %v7367 = vadd.f32 0.0, %v7366
      %7368 = vmatprep.mubr.bf16.mxu0 %v6511
      %7369 = vmatmul.mubr.bf16.gmra.mxu0 %v6510
      %v7370 = vpop.f32.mrf.mxu0
      %v7371 = vadd.f32 0.0, %v7370
      %v7372 = vpop.f32.mrf.mxu0
      %v7373 = vadd.f32 0.0, %v7372
      %v7374 = vpop.f32.mrf.mxu0
      %v7375 = vadd.f32 0.0, %v7374
      %v7376 = vpop.f32.mrf.mxu0
      %v7377 = vadd.f32 0.0, %v7376
      %7378 = vmatprep.mubr.bf16.mxu0 %v6513
      %7379 = vmatmul.mubr.bf16.gmra.mxu0 %v6512
      %v7380 = vpop.f32.mrf.mxu0
      %v7381 = vadd.f32 0.0, %v7380
      %v7382 = vpop.f32.mrf.mxu0
      %v7383 = vadd.f32 0.0, %v7382
      %v7384 = vpop.f32.mrf.mxu0
      %v7385 = vadd.f32 0.0, %v7384
      %v7386 = vpop.f32.mrf.mxu0
      %v7387 = vadd.f32 0.0, %v7386
      %7388 = vmatprep.mubr.bf16.mxu0 %v6515
      %7389 = vmatmul.mubr.bf16.gmra.mxu0 %v6514
      %v7390 = vpop.f32.mrf.mxu0
      %v7391 = vadd.f32 0.0, %v7390
      %v7392 = vpop.f32.mrf.mxu0
      %v7393 = vadd.f32 0.0, %v7392
      %v7394 = vpop.f32.mrf.mxu0
      %v7395 = vadd.f32 0.0, %v7394
      %v7396 = vpop.f32.mrf.mxu0
      %v7397 = vadd.f32 0.0, %v7396
      %7398 = vmatprep.mubr.bf16.mxu0 %v6517
      %7399 = vmatmul.mubr.bf16.gmra.mxu0 %v6516
      %v7400 = vpop.f32.mrf.mxu0
      %v7401 = vadd.f32 0.0, %v7400
      %v7402 = vpop.f32.mrf.mxu0
      %v7403 = vadd.f32 0.0, %v7402
      %v7404 = vpop.f32.mrf.mxu0
      %v7405 = vadd.f32 0.0, %v7404
      %v7406 = vpop.f32.mrf.mxu0
      %v7407 = vadd.f32 0.0, %v7406
      %7408 = vmatprep.mubr.bf16.mxu0 %v6519
      %7409 = vmatmul.mubr.bf16.gmra.mxu0 %v6518
      %v7410 = vpop.f32.mrf.mxu0
      %v7411 = vadd.f32 0.0, %v7410
      %v7412 = vpop.f32.mrf.mxu0
      %v7413 = vadd.f32 0.0, %v7412
      %v7414 = vpop.f32.mrf.mxu0
      %v7415 = vadd.f32 0.0, %v7414
      %v7416 = vpop.f32.mrf.mxu0
      %v7417 = vadd.f32 0.0, %v7416
      %7418 = vdwg.mxu0
      %v7419 = vmax.f32 %v6748, 0.0
      %v7420 = vmax.f32 %v6750, 0.0
      %v7421 = vmax.f32 %v6752, 0.0
      %v7422 = vmax.f32 %v6754, 0.0
      %v7423 = vmax.f32 %v6758, 0.0
      %v7424 = vmax.f32 %v6760, 0.0
      %v7425 = vmax.f32 %v6762, 0.0
      %v7426 = vmax.f32 %v6764, 0.0
      %v7427 = vmax.f32 %v6768, 0.0
      %v7428 = vmax.f32 %v6770, 0.0
      %v7429 = vmax.f32 %v6772, 0.0
      %v7430 = vmax.f32 %v6774, 0.0
      %v7431 = vmax.f32 %v6778, 0.0
      %v7432 = vmax.f32 %v6780, 0.0
      %v7433 = vmax.f32 %v6782, 0.0
      %v7434 = vmax.f32 %v6784, 0.0
      %v7435 = vmax.f32 %v6788, 0.0
      %v7436 = vmax.f32 %v6790, 0.0
      %v7437 = vmax.f32 %v6792, 0.0
      %v7438 = vmax.f32 %v6794, 0.0
      %v7439 = vmax.f32 %v6798, 0.0
      %v7440 = vmax.f32 %v6800, 0.0
      %v7441 = vmax.f32 %v6802, 0.0
      %v7442 = vmax.f32 %v6804, 0.0
      %v7443 = vmax.f32 %v6808, 0.0
      %v7444 = vmax.f32 %v6810, 0.0
      %v7445 = vmax.f32 %v6812, 0.0
      %v7446 = vmax.f32 %v6814, 0.0
      %v7447 = vmax.f32 %v6818, 0.0
      %v7448 = vmax.f32 %v6820, 0.0
      %v7449 = vmax.f32 %v6822, 0.0
      %v7450 = vmax.f32 %v6824, 0.0
      %v7451 = vmax.f32 %v6828, 0.0
      %v7452 = vmax.f32 %v6830, 0.0
      %v7453 = vmax.f32 %v6832, 0.0
      %v7454 = vmax.f32 %v6834, 0.0
      %v7455 = vmax.f32 %v6838, 0.0
      %v7456 = vmax.f32 %v6840, 0.0
      %v7457 = vmax.f32 %v6842, 0.0
      %v7458 = vmax.f32 %v6844, 0.0
      %v7459 = vmax.f32 %v6848, 0.0
      %v7460 = vmax.f32 %v6850, 0.0
      %v7461 = vmax.f32 %v6852, 0.0
      %v7462 = vmax.f32 %v6854, 0.0
      %v7463 = vmax.f32 %v6858, 0.0
      %v7464 = vmax.f32 %v6860, 0.0
      %v7465 = vmax.f32 %v6862, 0.0
      %v7466 = vmax.f32 %v6864, 0.0
      %v7467 = vmax.f32 %v6868, 0.0
      %v7468 = vmax.f32 %v6870, 0.0
      %v7469 = vmax.f32 %v6872, 0.0
      %v7470 = vmax.f32 %v6874, 0.0
      %v7471 = vmax.f32 %v6878, 0.0
      %v7472 = vmax.f32 %v6880, 0.0
      %v7473 = vmax.f32 %v6882, 0.0
      %v7474 = vmax.f32 %v6884, 0.0
      %v7475 = vmax.f32 %v6888, 0.0
      %v7476 = vmax.f32 %v6890, 0.0
      %v7477 = vmax.f32 %v6892, 0.0
      %v7478 = vmax.f32 %v6894, 0.0
      %v7479 = vmax.f32 %v6898, 0.0
      %v7480 = vmax.f32 %v6900, 0.0
      %v7481 = vmax.f32 %v6902, 0.0
      %v7482 = vmax.f32 %v6904, 0.0
      %v7483 = vmax.f32 %v6908, 0.0
      %v7484 = vmax.f32 %v6910, 0.0
      %v7485 = vmax.f32 %v6912, 0.0
      %v7486 = vmax.f32 %v6914, 0.0
      %v7487 = vmax.f32 %v6918, 0.0
      %v7488 = vmax.f32 %v6920, 0.0
      %v7489 = vmax.f32 %v6922, 0.0
      %v7490 = vmax.f32 %v6924, 0.0
      %v7491 = vmax.f32 %v6928, 0.0
      %v7492 = vmax.f32 %v6930, 0.0
      %v7493 = vmax.f32 %v6932, 0.0
      %v7494 = vmax.f32 %v6934, 0.0
      %v7495 = vmax.f32 %v6938, 0.0
      %v7496 = vmax.f32 %v6940, 0.0
      %v7497 = vmax.f32 %v6942, 0.0
      %v7498 = vmax.f32 %v6944, 0.0
      %v7499 = vmax.f32 %v6948, 0.0
      %v7500 = vmax.f32 %v6950, 0.0
      %v7501 = vmax.f32 %v6952, 0.0
      %v7502 = vmax.f32 %v6954, 0.0
      %v7503 = vmax.f32 %v6958, 0.0
      %v7504 = vmax.f32 %v6960, 0.0
      %v7505 = vmax.f32 %v6962, 0.0
      %v7506 = vmax.f32 %v6964, 0.0
      %v7507 = vmax.f32 %v6968, 0.0
      %v7508 = vmax.f32 %v6970, 0.0
      %v7509 = vmax.f32 %v6972, 0.0
      %v7510 = vmax.f32 %v6974, 0.0
      %v7511 = vmax.f32 %v6978, 0.0
      %v7512 = vmax.f32 %v6980, 0.0
      %v7513 = vmax.f32 %v6982, 0.0
      %v7514 = vmax.f32 %v6984, 0.0
      %v7515 = vmax.f32 %v6988, 0.0
      %v7516 = vmax.f32 %v6990, 0.0
      %v7517 = vmax.f32 %v6992, 0.0
      %v7518 = vmax.f32 %v6994, 0.0
      %v7519 = vmax.f32 %v6998, 0.0
      %v7520 = vmax.f32 %v7000, 0.0
      %v7521 = vmax.f32 %v7002, 0.0
      %v7522 = vmax.f32 %v7004, 0.0
      %v7523 = vmax.f32 %v7008, 0.0
      %v7524 = vmax.f32 %v7010, 0.0
      %v7525 = vmax.f32 %v7012, 0.0
      %v7526 = vmax.f32 %v7014, 0.0
      %v7527 = vmax.f32 %v7018, 0.0
      %v7528 = vmax.f32 %v7020, 0.0
      %v7529 = vmax.f32 %v7022, 0.0
      %v7530 = vmax.f32 %v7024, 0.0
      %v7531 = vmax.f32 %v7028, 0.0
      %v7532 = vmax.f32 %v7030, 0.0
      %v7533 = vmax.f32 %v7032, 0.0
      %v7534 = vmax.f32 %v7034, 0.0
      %v7535 = vmax.f32 %v7038, 0.0
      %v7536 = vmax.f32 %v7040, 0.0
      %v7537 = vmax.f32 %v7042, 0.0
      %v7538 = vmax.f32 %v7044, 0.0
      %v7539 = vmax.f32 %v7048, 0.0
      %v7540 = vmax.f32 %v7050, 0.0
      %v7541 = vmax.f32 %v7052, 0.0
      %v7542 = vmax.f32 %v7054, 0.0
      %v7543 = vmax.f32 %v7058, 0.0
      %v7544 = vmax.f32 %v7060, 0.0
      %v7545 = vmax.f32 %v7062, 0.0
      %v7546 = vmax.f32 %v7064, 0.0
      %v7547 = vpack.c.bf16 %v7421, %v7419
      %v7548 = vpack.c.bf16 %v7422, %v7420
      %v7549 = vpack.c.bf16 %v7425, %v7423
      %v7550 = vpack.c.bf16 %v7426, %v7424
      %v7551 = vpack.c.bf16 %v7429, %v7427
      %v7552 = vpack.c.bf16 %v7430, %v7428
      %v7553 = vpack.c.bf16 %v7433, %v7431
      %v7554 = vpack.c.bf16 %v7434, %v7432
      %v7555 = vpack.c.bf16 %v7437, %v7435
      %v7556 = vpack.c.bf16 %v7438, %v7436
      %v7557 = vpack.c.bf16 %v7441, %v7439
      %v7558 = vpack.c.bf16 %v7442, %v7440
      %v7559 = vpack.c.bf16 %v7445, %v7443
      %v7560 = vpack.c.bf16 %v7446, %v7444
      %v7561 = vpack.c.bf16 %v7449, %v7447
      %v7562 = vpack.c.bf16 %v7450, %v7448
      %v7563 = vpack.c.bf16 %v7453, %v7451
      %v7564 = vpack.c.bf16 %v7454, %v7452
      %v7565 = vpack.c.bf16 %v7457, %v7455
      %v7566 = vpack.c.bf16 %v7458, %v7456
      %v7567 = vpack.c.bf16 %v7461, %v7459
      %v7568 = vpack.c.bf16 %v7462, %v7460
      %v7569 = vpack.c.bf16 %v7465, %v7463
      %v7570 = vpack.c.bf16 %v7466, %v7464
      %v7571 = vpack.c.bf16 %v7469, %v7467
      %v7572 = vpack.c.bf16 %v7470, %v7468
      %v7573 = vpack.c.bf16 %v7473, %v7471
      %v7574 = vpack.c.bf16 %v7474, %v7472
      %v7575 = vpack.c.bf16 %v7477, %v7475
      %v7576 = vpack.c.bf16 %v7478, %v7476
      %v7577 = vpack.c.bf16 %v7481, %v7479
      %v7578 = vpack.c.bf16 %v7482, %v7480
      %v7579 = vpack.c.bf16 %v7485, %v7483
      %v7580 = vpack.c.bf16 %v7486, %v7484
      %v7581 = vpack.c.bf16 %v7489, %v7487
      %v7582 = vpack.c.bf16 %v7490, %v7488
      %v7583 = vpack.c.bf16 %v7493, %v7491
      %v7584 = vpack.c.bf16 %v7494, %v7492
      %v7585 = vpack.c.bf16 %v7497, %v7495
      %v7586 = vpack.c.bf16 %v7498, %v7496
      %v7587 = vpack.c.bf16 %v7501, %v7499
      %v7588 = vpack.c.bf16 %v7502, %v7500
      %v7589 = vpack.c.bf16 %v7505, %v7503
      %v7590 = vpack.c.bf16 %v7506, %v7504
      %v7591 = vpack.c.bf16 %v7509, %v7507
      %v7592 = vpack.c.bf16 %v7510, %v7508
      %v7593 = vpack.c.bf16 %v7513, %v7511
      %v7594 = vpack.c.bf16 %v7514, %v7512
      %v7595 = vpack.c.bf16 %v7517, %v7515
      %v7596 = vpack.c.bf16 %v7518, %v7516
      %v7597 = vpack.c.bf16 %v7521, %v7519
      %v7598 = vpack.c.bf16 %v7522, %v7520
      %v7599 = vpack.c.bf16 %v7525, %v7523
      %v7600 = vpack.c.bf16 %v7526, %v7524
      %v7601 = vpack.c.bf16 %v7529, %v7527
      %v7602 = vpack.c.bf16 %v7530, %v7528
      %v7603 = vpack.c.bf16 %v7533, %v7531
      %v7604 = vpack.c.bf16 %v7534, %v7532
      %v7605 = vpack.c.bf16 %v7537, %v7535
      %v7606 = vpack.c.bf16 %v7538, %v7536
      %v7607 = vpack.c.bf16 %v7541, %v7539
      %v7608 = vpack.c.bf16 %v7542, %v7540
      %v7609 = vpack.c.bf16 %v7545, %v7543
      %v7610 = vpack.c.bf16 %v7546, %v7544
      %v7611 = vmax.f32 %v7101, 0.0
      %v7612 = vmax.f32 %v7103, 0.0
      %v7613 = vmax.f32 %v7105, 0.0
      %v7614 = vmax.f32 %v7107, 0.0
      %v7615 = vmax.f32 %v7111, 0.0
      %v7616 = vmax.f32 %v7113, 0.0
      %v7617 = vmax.f32 %v7115, 0.0
      %v7618 = vmax.f32 %v7117, 0.0
      %v7619 = vmax.f32 %v7121, 0.0
      %v7620 = vmax.f32 %v7123, 0.0
      %v7621 = vmax.f32 %v7125, 0.0
      %v7622 = vmax.f32 %v7127, 0.0
      %v7623 = vmax.f32 %v7131, 0.0
      %v7624 = vmax.f32 %v7133, 0.0
      %v7625 = vmax.f32 %v7135, 0.0
      %v7626 = vmax.f32 %v7137, 0.0
      %v7627 = vmax.f32 %v7141, 0.0
      %v7628 = vmax.f32 %v7143, 0.0
      %v7629 = vmax.f32 %v7145, 0.0
      %v7630 = vmax.f32 %v7147, 0.0
      %v7631 = vmax.f32 %v7151, 0.0
      %v7632 = vmax.f32 %v7153, 0.0
      %v7633 = vmax.f32 %v7155, 0.0
      %v7634 = vmax.f32 %v7157, 0.0
      %v7635 = vmax.f32 %v7161, 0.0
      %v7636 = vmax.f32 %v7163, 0.0
      %v7637 = vmax.f32 %v7165, 0.0
      %v7638 = vmax.f32 %v7167, 0.0
      %v7639 = vmax.f32 %v7171, 0.0
      %v7640 = vmax.f32 %v7173, 0.0
      %v7641 = vmax.f32 %v7175, 0.0
      %v7642 = vmax.f32 %v7177, 0.0
      %v7643 = vmax.f32 %v7181, 0.0
      %v7644 = vmax.f32 %v7183, 0.0
      %v7645 = vmax.f32 %v7185, 0.0
      %v7646 = vmax.f32 %v7187, 0.0
      %v7647 = vmax.f32 %v7191, 0.0
      %v7648 = vmax.f32 %v7193, 0.0
      %v7649 = vmax.f32 %v7195, 0.0
      %v7650 = vmax.f32 %v7197, 0.0
      %v7651 = vmax.f32 %v7201, 0.0
      %v7652 = vmax.f32 %v7203, 0.0
      %v7653 = vmax.f32 %v7205, 0.0
      %v7654 = vmax.f32 %v7207, 0.0
      %v7655 = vmax.f32 %v7211, 0.0
      %v7656 = vmax.f32 %v7213, 0.0
      %v7657 = vmax.f32 %v7215, 0.0
      %v7658 = vmax.f32 %v7217, 0.0
      %v7659 = vmax.f32 %v7221, 0.0
      %v7660 = vmax.f32 %v7223, 0.0
      %v7661 = vmax.f32 %v7225, 0.0
      %v7662 = vmax.f32 %v7227, 0.0
      %v7663 = vmax.f32 %v7231, 0.0
      %v7664 = vmax.f32 %v7233, 0.0
      %v7665 = vmax.f32 %v7235, 0.0
      %v7666 = vmax.f32 %v7237, 0.0
      %v7667 = vmax.f32 %v7241, 0.0
      %v7668 = vmax.f32 %v7243, 0.0
      %v7669 = vmax.f32 %v7245, 0.0
      %v7670 = vmax.f32 %v7247, 0.0
      %v7671 = vmax.f32 %v7251, 0.0
      %v7672 = vmax.f32 %v7253, 0.0
      %v7673 = vmax.f32 %v7255, 0.0
      %v7674 = vmax.f32 %v7257, 0.0
      %v7675 = vmax.f32 %v7261, 0.0
      %v7676 = vmax.f32 %v7263, 0.0
      %v7677 = vmax.f32 %v7265, 0.0
      %v7678 = vmax.f32 %v7267, 0.0
      %v7679 = vmax.f32 %v7271, 0.0
      %v7680 = vmax.f32 %v7273, 0.0
      %v7681 = vmax.f32 %v7275, 0.0
      %v7682 = vmax.f32 %v7277, 0.0
      %v7683 = vmax.f32 %v7281, 0.0
      %v7684 = vmax.f32 %v7283, 0.0
      %v7685 = vmax.f32 %v7285, 0.0
      %v7686 = vmax.f32 %v7287, 0.0
      %v7687 = vmax.f32 %v7291, 0.0
      %v7688 = vmax.f32 %v7293, 0.0
      %v7689 = vmax.f32 %v7295, 0.0
      %v7690 = vmax.f32 %v7297, 0.0
      %v7691 = vmax.f32 %v7301, 0.0
      %v7692 = vmax.f32 %v7303, 0.0
      %v7693 = vmax.f32 %v7305, 0.0
      %v7694 = vmax.f32 %v7307, 0.0
      %v7695 = vmax.f32 %v7311, 0.0
      %v7696 = vmax.f32 %v7313, 0.0
      %v7697 = vmax.f32 %v7315, 0.0
      %v7698 = vmax.f32 %v7317, 0.0
      %v7699 = vmax.f32 %v7321, 0.0
      %v7700 = vmax.f32 %v7323, 0.0
      %v7701 = vmax.f32 %v7325, 0.0
      %v7702 = vmax.f32 %v7327, 0.0
      %v7703 = vmax.f32 %v7331, 0.0
      %v7704 = vmax.f32 %v7333, 0.0
      %v7705 = vmax.f32 %v7335, 0.0
      %v7706 = vmax.f32 %v7337, 0.0
      %v7707 = vmax.f32 %v7341, 0.0
      %v7708 = vmax.f32 %v7343, 0.0
      %v7709 = vmax.f32 %v7345, 0.0
      %v7710 = vmax.f32 %v7347, 0.0
      %v7711 = vmax.f32 %v7351, 0.0
      %v7712 = vmax.f32 %v7353, 0.0
      %v7713 = vmax.f32 %v7355, 0.0
      %v7714 = vmax.f32 %v7357, 0.0
      %v7715 = vmax.f32 %v7361, 0.0
      %v7716 = vmax.f32 %v7363, 0.0
      %v7717 = vmax.f32 %v7365, 0.0
      %v7718 = vmax.f32 %v7367, 0.0
      %v7719 = vmax.f32 %v7371, 0.0
      %v7720 = vmax.f32 %v7373, 0.0
      %v7721 = vmax.f32 %v7375, 0.0
      %v7722 = vmax.f32 %v7377, 0.0
      %v7723 = vmax.f32 %v7381, 0.0
      %v7724 = vmax.f32 %v7383, 0.0
      %v7725 = vmax.f32 %v7385, 0.0
      %v7726 = vmax.f32 %v7387, 0.0
      %v7727 = vmax.f32 %v7391, 0.0
      %v7728 = vmax.f32 %v7393, 0.0
      %v7729 = vmax.f32 %v7395, 0.0
      %v7730 = vmax.f32 %v7397, 0.0
      %v7731 = vmax.f32 %v7401, 0.0
      %v7732 = vmax.f32 %v7403, 0.0
      %v7733 = vmax.f32 %v7405, 0.0
      %v7734 = vmax.f32 %v7407, 0.0
      %v7735 = vmax.f32 %v7411, 0.0
      %v7736 = vmax.f32 %v7413, 0.0
      %v7737 = vmax.f32 %v7415, 0.0
      %v7738 = vmax.f32 %v7417, 0.0
      %v7739 = vpack.c.bf16 %v7613, %v7611
      %v7740 = vpack.c.bf16 %v7614, %v7612
      %v7741 = vpack.c.bf16 %v7617, %v7615
      %v7742 = vpack.c.bf16 %v7618, %v7616
      %v7743 = vpack.c.bf16 %v7621, %v7619
      %v7744 = vpack.c.bf16 %v7622, %v7620
      %v7745 = vpack.c.bf16 %v7625, %v7623
      %v7746 = vpack.c.bf16 %v7626, %v7624
      %v7747 = vpack.c.bf16 %v7629, %v7627
      %v7748 = vpack.c.bf16 %v7630, %v7628
      %v7749 = vpack.c.bf16 %v7633, %v7631
      %v7750 = vpack.c.bf16 %v7634, %v7632
      %v7751 = vpack.c.bf16 %v7637, %v7635
      %v7752 = vpack.c.bf16 %v7638, %v7636
      %v7753 = vpack.c.bf16 %v7641, %v7639
      %v7754 = vpack.c.bf16 %v7642, %v7640
      %v7755 = vpack.c.bf16 %v7645, %v7643
      %v7756 = vpack.c.bf16 %v7646, %v7644
      %v7757 = vpack.c.bf16 %v7649, %v7647
      %v7758 = vpack.c.bf16 %v7650, %v7648
      %v7759 = vpack.c.bf16 %v7653, %v7651
      %v7760 = vpack.c.bf16 %v7654, %v7652
      %v7761 = vpack.c.bf16 %v7657, %v7655
      %v7762 = vpack.c.bf16 %v7658, %v7656
      %v7763 = vpack.c.bf16 %v7661, %v7659
      %v7764 = vpack.c.bf16 %v7662, %v7660
      %v7765 = vpack.c.bf16 %v7665, %v7663
      %v7766 = vpack.c.bf16 %v7666, %v7664
      %v7767 = vpack.c.bf16 %v7669, %v7667
      %v7768 = vpack.c.bf16 %v7670, %v7668
      %v7769 = vpack.c.bf16 %v7673, %v7671
      %v7770 = vpack.c.bf16 %v7674, %v7672
      %v7771 = vpack.c.bf16 %v7677, %v7675
      %v7772 = vpack.c.bf16 %v7678, %v7676
      %v7773 = vpack.c.bf16 %v7681, %v7679
      %v7774 = vpack.c.bf16 %v7682, %v7680
      %v7775 = vpack.c.bf16 %v7685, %v7683
      %v7776 = vpack.c.bf16 %v7686, %v7684
      %v7777 = vpack.c.bf16 %v7689, %v7687
      %v7778 = vpack.c.bf16 %v7690, %v7688
      %v7779 = vpack.c.bf16 %v7693, %v7691
      %v7780 = vpack.c.bf16 %v7694, %v7692
      %v7781 = vpack.c.bf16 %v7697, %v7695
      %v7782 = vpack.c.bf16 %v7698, %v7696
      %v7783 = vpack.c.bf16 %v7701, %v7699
      %v7784 = vpack.c.bf16 %v7702, %v7700
      %v7785 = vpack.c.bf16 %v7705, %v7703
      %v7786 = vpack.c.bf16 %v7706, %v7704
      %v7787 = vpack.c.bf16 %v7709, %v7707
      %v7788 = vpack.c.bf16 %v7710, %v7708
      %v7789 = vpack.c.bf16 %v7713, %v7711
      %v7790 = vpack.c.bf16 %v7714, %v7712
      %v7791 = vpack.c.bf16 %v7717, %v7715
      %v7792 = vpack.c.bf16 %v7718, %v7716
      %v7793 = vpack.c.bf16 %v7721, %v7719
      %v7794 = vpack.c.bf16 %v7722, %v7720
      %v7795 = vpack.c.bf16 %v7725, %v7723
      %v7796 = vpack.c.bf16 %v7726, %v7724
      %v7797 = vpack.c.bf16 %v7729, %v7727
      %v7798 = vpack.c.bf16 %v7730, %v7728
      %v7799 = vpack.c.bf16 %v7733, %v7731
      %v7800 = vpack.c.bf16 %v7734, %v7732
      %v7801 = vpack.c.bf16 %v7737, %v7735
      %v7802 = vpack.c.bf16 %v7738, %v7736
      %s7803 = scalar_lea.vmem %s2, 1024
      %v7804 = vld [vmem:[%s7803] sm:$0xff]
      %v7805 = vld [vmem:[%s7803 + $0x8] sm:$0xff]
      %v7806 = vld [vmem:[%s7803 + $0x10] sm:$0xff]
      %v7807 = vld [vmem:[%s7803 + $0x18] sm:$0xff]
      %v7808 = vld [vmem:[%s7803 + $0x20] sm:$0xff]
      %v7809 = vld [vmem:[%s7803 + $0x28] sm:$0xff]
      %v7810 = vld [vmem:[%s7803 + $0x30] sm:$0xff]
      %v7811 = vld [vmem:[%s7803 + $0x38] sm:$0xff]
      %v7812 = vld [vmem:[%s7803 + $0x40] sm:$0xff]
      %v7813 = vld [vmem:[%s7803 + $0x48] sm:$0xff]
      %v7814 = vld [vmem:[%s7803 + $0x50] sm:$0xff]
      %v7815 = vld [vmem:[%s7803 + $0x58] sm:$0xff]
      %v7816 = vld [vmem:[%s7803 + $0x60] sm:$0xff]
      %v7817 = vld [vmem:[%s7803 + $0x68] sm:$0xff]
      %v7818 = vld [vmem:[%s7803 + $0x70] sm:$0xff]
      %v7819 = vld [vmem:[%s7803 + $0x78] sm:$0xff]
      %v7820 = vld [vmem:[%s7803 + $0x80] sm:$0xff]
      %v7821 = vld [vmem:[%s7803 + $0x88] sm:$0xff]
      %v7822 = vld [vmem:[%s7803 + $0x90] sm:$0xff]
      %v7823 = vld [vmem:[%s7803 + $0x98] sm:$0xff]
      %v7824 = vld [vmem:[%s7803 + $0xa0] sm:$0xff]
      %v7825 = vld [vmem:[%s7803 + $0xa8] sm:$0xff]
      %v7826 = vld [vmem:[%s7803 + $0xb0] sm:$0xff]
      %v7827 = vld [vmem:[%s7803 + $0xb8] sm:$0xff]
      %v7828 = vld [vmem:[%s7803 + $0xc0] sm:$0xff]
      %v7829 = vld [vmem:[%s7803 + $0xc8] sm:$0xff]
      %v7830 = vld [vmem:[%s7803 + $0xd0] sm:$0xff]
      %v7831 = vld [vmem:[%s7803 + $0xd8] sm:$0xff]
      %v7832 = vld [vmem:[%s7803 + $0xe0] sm:$0xff]
      %v7833 = vld [vmem:[%s7803 + $0xe8] sm:$0xff]
      %v7834 = vld [vmem:[%s7803 + $0xf0] sm:$0xff]
      %v7835 = vld [vmem:[%s7803 + $0xf8] sm:$0xff]
      %v7868 = vunpack.c.l.b16 %v7804
      %v7869 = vunpack.c.h.b16 %v7804
      %v7870 = vunpack.c.l.b16 %v7805
      %v7871 = vunpack.c.h.b16 %v7805
      %v7872 = vunpack.c.l.b16 %v7806
      %v7873 = vunpack.c.h.b16 %v7806
      %v7874 = vunpack.c.l.b16 %v7807
      %v7875 = vunpack.c.h.b16 %v7807
      %v7876 = vunpack.c.l.b16 %v7808
      %v7877 = vunpack.c.h.b16 %v7808
      %v7878 = vunpack.c.l.b16 %v7809
      %v7879 = vunpack.c.h.b16 %v7809
      %v7880 = vunpack.c.l.b16 %v7810
      %v7881 = vunpack.c.h.b16 %v7810
      %v7882 = vunpack.c.l.b16 %v7811
      %v7883 = vunpack.c.h.b16 %v7811
      %v7884 = vunpack.c.l.b16 %v7812
      %v7885 = vunpack.c.h.b16 %v7812
      %v7886 = vunpack.c.l.b16 %v7813
      %v7887 = vunpack.c.h.b16 %v7813
      %v7888 = vunpack.c.l.b16 %v7814
      %v7889 = vunpack.c.h.b16 %v7814
      %v7890 = vunpack.c.l.b16 %v7815
      %v7891 = vunpack.c.h.b16 %v7815
      %v7892 = vunpack.c.l.b16 %v7816
      %v7893 = vunpack.c.h.b16 %v7816
      %v7894 = vunpack.c.l.b16 %v7817
      %v7895 = vunpack.c.h.b16 %v7817
      %v7896 = vunpack.c.l.b16 %v7818
      %v7897 = vunpack.c.h.b16 %v7818
      %v7898 = vunpack.c.l.b16 %v7819
      %v7899 = vunpack.c.h.b16 %v7819
      %v7900 = vunpack.c.l.b16 %v7820
      %v7901 = vunpack.c.h.b16 %v7820
      %v7902 = vunpack.c.l.b16 %v7821
      %v7903 = vunpack.c.h.b16 %v7821
      %v7904 = vunpack.c.l.b16 %v7822
      %v7905 = vunpack.c.h.b16 %v7822
      %v7906 = vunpack.c.l.b16 %v7823
      %v7907 = vunpack.c.h.b16 %v7823
      %v7908 = vunpack.c.l.b16 %v7824
      %v7909 = vunpack.c.h.b16 %v7824
      %v7910 = vunpack.c.l.b16 %v7825
      %v7911 = vunpack.c.h.b16 %v7825
      %v7912 = vunpack.c.l.b16 %v7826
      %v7913 = vunpack.c.h.b16 %v7826
      %v7914 = vunpack.c.l.b16 %v7827
      %v7915 = vunpack.c.h.b16 %v7827
      %v7916 = vunpack.c.l.b16 %v7828
      %v7917 = vunpack.c.h.b16 %v7828
      %v7918 = vunpack.c.l.b16 %v7829
      %v7919 = vunpack.c.h.b16 %v7829
      %v7920 = vunpack.c.l.b16 %v7830
      %v7921 = vunpack.c.h.b16 %v7830
      %v7922 = vunpack.c.l.b16 %v7831
      %v7923 = vunpack.c.h.b16 %v7831
      %v7924 = vunpack.c.l.b16 %v7832
      %v7925 = vunpack.c.h.b16 %v7832
      %v7926 = vunpack.c.l.b16 %v7833
      %v7927 = vunpack.c.h.b16 %v7833
      %v7928 = vunpack.c.l.b16 %v7834
      %v7929 = vunpack.c.h.b16 %v7834
      %v7930 = vunpack.c.l.b16 %v7835
      %v7931 = vunpack.c.h.b16 %v7835
      %v7932 = vpack.c.b16 %v7870, %v7868
      %v7933 = vpack.c.b16 %v7871, %v7869
      %v7934 = vpack.c.b16 %v7874, %v7872
      %v7935 = vpack.c.b16 %v7875, %v7873
      %v7936 = vpack.c.b16 %v7878, %v7876
      %v7937 = vpack.c.b16 %v7879, %v7877
      %v7938 = vpack.c.b16 %v7882, %v7880
      %v7939 = vpack.c.b16 %v7883, %v7881
      %v7940 = vpack.c.b16 %v7886, %v7884
      %v7941 = vpack.c.b16 %v7887, %v7885
      %v7942 = vpack.c.b16 %v7890, %v7888
      %v7943 = vpack.c.b16 %v7891, %v7889
      %v7944 = vpack.c.b16 %v7894, %v7892
      %v7945 = vpack.c.b16 %v7895, %v7893
      %v7946 = vpack.c.b16 %v7898, %v7896
      %v7947 = vpack.c.b16 %v7899, %v7897
      %v7948 = vpack.c.b16 %v7902, %v7900
      %v7949 = vpack.c.b16 %v7903, %v7901
      %v7950 = vpack.c.b16 %v7906, %v7904
      %v7951 = vpack.c.b16 %v7907, %v7905
      %v7952 = vpack.c.b16 %v7910, %v7908
      %v7953 = vpack.c.b16 %v7911, %v7909
      %v7954 = vpack.c.b16 %v7914, %v7912
      %v7955 = vpack.c.b16 %v7915, %v7913
      %v7956 = vpack.c.b16 %v7918, %v7916
      %v7957 = vpack.c.b16 %v7919, %v7917
      %v7958 = vpack.c.b16 %v7922, %v7920
      %v7959 = vpack.c.b16 %v7923, %v7921
      %v7960 = vpack.c.b16 %v7926, %v7924
      %v7961 = vpack.c.b16 %v7927, %v7925
      %v7962 = vpack.c.b16 %v7930, %v7928
      %v7963 = vpack.c.b16 %v7931, %v7929
      %7996 = vmatprep.subr.bf16.mxu0 %v7947
      %7997 = vmatpush1.bf16.msra.mxu0 %v7946
      %7998 = vmatprep.subr.bf16.mxu0 %v7945
      %7999 = vmatpush1.bf16.msra.mxu0 %v7944
      %8000 = vmatprep.subr.bf16.mxu0 %v7943
      %8001 = vmatpush1.bf16.msra.mxu0 %v7942
      %8002 = vmatprep.subr.bf16.mxu0 %v7941
      %8003 = vmatpush1.bf16.msra.mxu0 %v7940
      %8004 = vmatprep.subr.bf16.mxu0 %v7939
      %8005 = vmatpush1.bf16.msra.mxu0 %v7938
      %8006 = vmatprep.subr.bf16.mxu0 %v7937
      %8007 = vmatpush1.bf16.msra.mxu0 %v7936
      %8008 = vmatprep.subr.bf16.mxu0 %v7935
      %8009 = vmatpush1.bf16.msra.mxu0 %v7934
      %8010 = vmatprep.subr.bf16.mxu0 %v7933
      %8011 = vmatpush1.bf16.msra.mxu0 %v7932
      %8012 = vmatprep.subr.bf16.mxu0 %v7963
      %8013 = vmatpush2.bf16.msra.mxu0 %v7962
      %8014 = vmatprep.subr.bf16.mxu0 %v7961
      %8015 = vmatpush2.bf16.msra.mxu0 %v7960
      %8016 = vmatprep.subr.bf16.mxu0 %v7959
      %8017 = vmatpush2.bf16.msra.mxu0 %v7958
      %8018 = vmatprep.subr.bf16.mxu0 %v7957
      %8019 = vmatpush2.bf16.msra.mxu0 %v7956
      %8020 = vmatprep.subr.bf16.mxu0 %v7955
      %8021 = vmatpush2.bf16.msra.mxu0 %v7954
      %8022 = vmatprep.subr.bf16.mxu0 %v7953
      %8023 = vmatpush2.bf16.msra.mxu0 %v7952
      %8024 = vmatprep.subr.bf16.mxu0 %v7951
      %8025 = vmatpush2.bf16.msra.mxu0 %v7950
      %8026 = vmatprep.subr.bf16.mxu0 %v7949
      %8027 = vmatpush2.bf16.msra.mxu0 %v7948
      %8028 = vmatprep.mubr.bf16.mxu0 %v7548
      %8029 = vmatmul.mubr.bf16.gmra.mxu0 %v7547
      %v8030 = vpop.f32.mrf.mxu0
      %v8031 = vadd.f32 0.0, %v8030
      %v8032 = vpop.f32.mrf.mxu0
      %v8033 = vadd.f32 0.0, %v8032
      %v8034 = vpop.f32.mrf.mxu0
      %v8035 = vadd.f32 0.0, %v8034
      %v8036 = vpop.f32.mrf.mxu0
      %v8037 = vadd.f32 0.0, %v8036
      %8038 = vmatprep.mubr.bf16.mxu0 %v7550
      %8039 = vmatmul.mubr.bf16.gmra.mxu0 %v7549
      %v8040 = vpop.f32.mrf.mxu0
      %v8041 = vadd.f32 0.0, %v8040
      %v8042 = vpop.f32.mrf.mxu0
      %v8043 = vadd.f32 0.0, %v8042
      %v8044 = vpop.f32.mrf.mxu0
      %v8045 = vadd.f32 0.0, %v8044
      %v8046 = vpop.f32.mrf.mxu0
      %v8047 = vadd.f32 0.0, %v8046
      %8048 = vmatprep.mubr.bf16.mxu0 %v7552
      %8049 = vmatmul.mubr.bf16.gmra.mxu0 %v7551
      %v8050 = vpop.f32.mrf.mxu0
      %v8051 = vadd.f32 0.0, %v8050
      %v8052 = vpop.f32.mrf.mxu0
      %v8053 = vadd.f32 0.0, %v8052
      %v8054 = vpop.f32.mrf.mxu0
      %v8055 = vadd.f32 0.0, %v8054
      %v8056 = vpop.f32.mrf.mxu0
      %v8057 = vadd.f32 0.0, %v8056
      %8058 = vmatprep.mubr.bf16.mxu0 %v7554
      %8059 = vmatmul.mubr.bf16.gmra.mxu0 %v7553
      %v8060 = vpop.f32.mrf.mxu0
      %v8061 = vadd.f32 0.0, %v8060
      %v8062 = vpop.f32.mrf.mxu0
      %v8063 = vadd.f32 0.0, %v8062
      %v8064 = vpop.f32.mrf.mxu0
      %v8065 = vadd.f32 0.0, %v8064
      %v8066 = vpop.f32.mrf.mxu0
      %v8067 = vadd.f32 0.0, %v8066
      %8068 = vmatprep.mubr.bf16.mxu0 %v7556
      %8069 = vmatmul.mubr.bf16.gmra.mxu0 %v7555
      %v8070 = vpop.f32.mrf.mxu0
      %v8071 = vadd.f32 0.0, %v8070
      %v8072 = vpop.f32.mrf.mxu0
      %v8073 = vadd.f32 0.0, %v8072
      %v8074 = vpop.f32.mrf.mxu0
      %v8075 = vadd.f32 0.0, %v8074
      %v8076 = vpop.f32.mrf.mxu0
      %v8077 = vadd.f32 0.0, %v8076
      %8078 = vmatprep.mubr.bf16.mxu0 %v7558
      %8079 = vmatmul.mubr.bf16.gmra.mxu0 %v7557
      %v8080 = vpop.f32.mrf.mxu0
      %v8081 = vadd.f32 0.0, %v8080
      %v8082 = vpop.f32.mrf.mxu0
      %v8083 = vadd.f32 0.0, %v8082
      %v8084 = vpop.f32.mrf.mxu0
      %v8085 = vadd.f32 0.0, %v8084
      %v8086 = vpop.f32.mrf.mxu0
      %v8087 = vadd.f32 0.0, %v8086
      %8088 = vmatprep.mubr.bf16.mxu0 %v7560
      %8089 = vmatmul.mubr.bf16.gmra.mxu0 %v7559
      %v8090 = vpop.f32.mrf.mxu0
      %v8091 = vadd.f32 0.0, %v8090
      %v8092 = vpop.f32.mrf.mxu0
      %v8093 = vadd.f32 0.0, %v8092
      %v8094 = vpop.f32.mrf.mxu0
      %v8095 = vadd.f32 0.0, %v8094
      %v8096 = vpop.f32.mrf.mxu0
      %v8097 = vadd.f32 0.0, %v8096
      %8098 = vmatprep.mubr.bf16.mxu0 %v7562
      %8099 = vmatmul.mubr.bf16.gmra.mxu0 %v7561
      %v8100 = vpop.f32.mrf.mxu0
      %v8101 = vadd.f32 0.0, %v8100
      %v8102 = vpop.f32.mrf.mxu0
      %v8103 = vadd.f32 0.0, %v8102
      %v8104 = vpop.f32.mrf.mxu0
      %v8105 = vadd.f32 0.0, %v8104
      %v8106 = vpop.f32.mrf.mxu0
      %v8107 = vadd.f32 0.0, %v8106
      %8108 = vmatprep.mubr.bf16.mxu0 %v7564
      %8109 = vmatmul.mubr.bf16.gmra.mxu0 %v7563
      %v8110 = vpop.f32.mrf.mxu0
      %v8111 = vadd.f32 0.0, %v8110
      %v8112 = vpop.f32.mrf.mxu0
      %v8113 = vadd.f32 0.0, %v8112
      %v8114 = vpop.f32.mrf.mxu0
      %v8115 = vadd.f32 0.0, %v8114
      %v8116 = vpop.f32.mrf.mxu0
      %v8117 = vadd.f32 0.0, %v8116
      %8118 = vmatprep.mubr.bf16.mxu0 %v7566
      %8119 = vmatmul.mubr.bf16.gmra.mxu0 %v7565
      %v8120 = vpop.f32.mrf.mxu0
      %v8121 = vadd.f32 0.0, %v8120
      %v8122 = vpop.f32.mrf.mxu0
      %v8123 = vadd.f32 0.0, %v8122
      %v8124 = vpop.f32.mrf.mxu0
      %v8125 = vadd.f32 0.0, %v8124
      %v8126 = vpop.f32.mrf.mxu0
      %v8127 = vadd.f32 0.0, %v8126
      %8128 = vmatprep.mubr.bf16.mxu0 %v7568
      %8129 = vmatmul.mubr.bf16.gmra.mxu0 %v7567
      %v8130 = vpop.f32.mrf.mxu0
      %v8131 = vadd.f32 0.0, %v8130
      %v8132 = vpop.f32.mrf.mxu0
      %v8133 = vadd.f32 0.0, %v8132
      %v8134 = vpop.f32.mrf.mxu0
      %v8135 = vadd.f32 0.0, %v8134
      %v8136 = vpop.f32.mrf.mxu0
      %v8137 = vadd.f32 0.0, %v8136
      %8138 = vmatprep.mubr.bf16.mxu0 %v7570
      %8139 = vmatmul.mubr.bf16.gmra.mxu0 %v7569
      %v8140 = vpop.f32.mrf.mxu0
      %v8141 = vadd.f32 0.0, %v8140
      %v8142 = vpop.f32.mrf.mxu0
      %v8143 = vadd.f32 0.0, %v8142
      %v8144 = vpop.f32.mrf.mxu0
      %v8145 = vadd.f32 0.0, %v8144
      %v8146 = vpop.f32.mrf.mxu0
      %v8147 = vadd.f32 0.0, %v8146
      %8148 = vmatprep.mubr.bf16.mxu0 %v7572
      %8149 = vmatmul.mubr.bf16.gmra.mxu0 %v7571
      %v8150 = vpop.f32.mrf.mxu0
      %v8151 = vadd.f32 0.0, %v8150
      %v8152 = vpop.f32.mrf.mxu0
      %v8153 = vadd.f32 0.0, %v8152
      %v8154 = vpop.f32.mrf.mxu0
      %v8155 = vadd.f32 0.0, %v8154
      %v8156 = vpop.f32.mrf.mxu0
      %v8157 = vadd.f32 0.0, %v8156
      %8158 = vmatprep.mubr.bf16.mxu0 %v7574
      %8159 = vmatmul.mubr.bf16.gmra.mxu0 %v7573
      %v8160 = vpop.f32.mrf.mxu0
      %v8161 = vadd.f32 0.0, %v8160
      %v8162 = vpop.f32.mrf.mxu0
      %v8163 = vadd.f32 0.0, %v8162
      %v8164 = vpop.f32.mrf.mxu0
      %v8165 = vadd.f32 0.0, %v8164
      %v8166 = vpop.f32.mrf.mxu0
      %v8167 = vadd.f32 0.0, %v8166
      %8168 = vmatprep.mubr.bf16.mxu0 %v7576
      %8169 = vmatmul.mubr.bf16.gmra.mxu0 %v7575
      %v8170 = vpop.f32.mrf.mxu0
      %v8171 = vadd.f32 0.0, %v8170
      %v8172 = vpop.f32.mrf.mxu0
      %v8173 = vadd.f32 0.0, %v8172
      %v8174 = vpop.f32.mrf.mxu0
      %v8175 = vadd.f32 0.0, %v8174
      %v8176 = vpop.f32.mrf.mxu0
      %v8177 = vadd.f32 0.0, %v8176
      %8178 = vmatprep.mubr.bf16.mxu0 %v7578
      %8179 = vmatmul.mubr.bf16.gmra.mxu0 %v7577
      %v8180 = vpop.f32.mrf.mxu0
      %v8181 = vadd.f32 0.0, %v8180
      %v8182 = vpop.f32.mrf.mxu0
      %v8183 = vadd.f32 0.0, %v8182
      %v8184 = vpop.f32.mrf.mxu0
      %v8185 = vadd.f32 0.0, %v8184
      %v8186 = vpop.f32.mrf.mxu0
      %v8187 = vadd.f32 0.0, %v8186
      %8188 = vmatprep.mubr.bf16.mxu0 %v7580
      %8189 = vmatmul.mubr.bf16.gmra.mxu0 %v7579
      %v8190 = vpop.f32.mrf.mxu0
      %v8191 = vadd.f32 0.0, %v8190
      %v8192 = vpop.f32.mrf.mxu0
      %v8193 = vadd.f32 0.0, %v8192
      %v8194 = vpop.f32.mrf.mxu0
      %v8195 = vadd.f32 0.0, %v8194
      %v8196 = vpop.f32.mrf.mxu0
      %v8197 = vadd.f32 0.0, %v8196
      %8198 = vmatprep.mubr.bf16.mxu0 %v7582
      %8199 = vmatmul.mubr.bf16.gmra.mxu0 %v7581
      %v8200 = vpop.f32.mrf.mxu0
      %v8201 = vadd.f32 0.0, %v8200
      %v8202 = vpop.f32.mrf.mxu0
      %v8203 = vadd.f32 0.0, %v8202
      %v8204 = vpop.f32.mrf.mxu0
      %v8205 = vadd.f32 0.0, %v8204
      %v8206 = vpop.f32.mrf.mxu0
      %v8207 = vadd.f32 0.0, %v8206
      %8208 = vmatprep.mubr.bf16.mxu0 %v7584
      %8209 = vmatmul.mubr.bf16.gmra.mxu0 %v7583
      %v8210 = vpop.f32.mrf.mxu0
      %v8211 = vadd.f32 0.0, %v8210
      %v8212 = vpop.f32.mrf.mxu0
      %v8213 = vadd.f32 0.0, %v8212
      %v8214 = vpop.f32.mrf.mxu0
      %v8215 = vadd.f32 0.0, %v8214
      %v8216 = vpop.f32.mrf.mxu0
      %v8217 = vadd.f32 0.0, %v8216
      %8218 = vmatprep.mubr.bf16.mxu0 %v7586
      %8219 = vmatmul.mubr.bf16.gmra.mxu0 %v7585
      %v8220 = vpop.f32.mrf.mxu0
      %v8221 = vadd.f32 0.0, %v8220
      %v8222 = vpop.f32.mrf.mxu0
      %v8223 = vadd.f32 0.0, %v8222
      %v8224 = vpop.f32.mrf.mxu0
      %v8225 = vadd.f32 0.0, %v8224
      %v8226 = vpop.f32.mrf.mxu0
      %v8227 = vadd.f32 0.0, %v8226
      %8228 = vmatprep.mubr.bf16.mxu0 %v7588
      %8229 = vmatmul.mubr.bf16.gmra.mxu0 %v7587
      %v8230 = vpop.f32.mrf.mxu0
      %v8231 = vadd.f32 0.0, %v8230
      %v8232 = vpop.f32.mrf.mxu0
      %v8233 = vadd.f32 0.0, %v8232
      %v8234 = vpop.f32.mrf.mxu0
      %v8235 = vadd.f32 0.0, %v8234
      %v8236 = vpop.f32.mrf.mxu0
      %v8237 = vadd.f32 0.0, %v8236
      %8238 = vmatprep.mubr.bf16.mxu0 %v7590
      %8239 = vmatmul.mubr.bf16.gmra.mxu0 %v7589
      %v8240 = vpop.f32.mrf.mxu0
      %v8241 = vadd.f32 0.0, %v8240
      %v8242 = vpop.f32.mrf.mxu0
      %v8243 = vadd.f32 0.0, %v8242
      %v8244 = vpop.f32.mrf.mxu0
      %v8245 = vadd.f32 0.0, %v8244
      %v8246 = vpop.f32.mrf.mxu0
      %v8247 = vadd.f32 0.0, %v8246
      %8248 = vmatprep.mubr.bf16.mxu0 %v7592
      %8249 = vmatmul.mubr.bf16.gmra.mxu0 %v7591
      %v8250 = vpop.f32.mrf.mxu0
      %v8251 = vadd.f32 0.0, %v8250
      %v8252 = vpop.f32.mrf.mxu0
      %v8253 = vadd.f32 0.0, %v8252
      %v8254 = vpop.f32.mrf.mxu0
      %v8255 = vadd.f32 0.0, %v8254
      %v8256 = vpop.f32.mrf.mxu0
      %v8257 = vadd.f32 0.0, %v8256
      %8258 = vmatprep.mubr.bf16.mxu0 %v7594
      %8259 = vmatmul.mubr.bf16.gmra.mxu0 %v7593
      %v8260 = vpop.f32.mrf.mxu0
      %v8261 = vadd.f32 0.0, %v8260
      %v8262 = vpop.f32.mrf.mxu0
      %v8263 = vadd.f32 0.0, %v8262
      %v8264 = vpop.f32.mrf.mxu0
      %v8265 = vadd.f32 0.0, %v8264
      %v8266 = vpop.f32.mrf.mxu0
      %v8267 = vadd.f32 0.0, %v8266
      %8268 = vmatprep.mubr.bf16.mxu0 %v7596
      %8269 = vmatmul.mubr.bf16.gmra.mxu0 %v7595
      %v8270 = vpop.f32.mrf.mxu0
      %v8271 = vadd.f32 0.0, %v8270
      %v8272 = vpop.f32.mrf.mxu0
      %v8273 = vadd.f32 0.0, %v8272
      %v8274 = vpop.f32.mrf.mxu0
      %v8275 = vadd.f32 0.0, %v8274
      %v8276 = vpop.f32.mrf.mxu0
      %v8277 = vadd.f32 0.0, %v8276
      %8278 = vmatprep.mubr.bf16.mxu0 %v7598
      %8279 = vmatmul.mubr.bf16.gmra.mxu0 %v7597
      %v8280 = vpop.f32.mrf.mxu0
      %v8281 = vadd.f32 0.0, %v8280
      %v8282 = vpop.f32.mrf.mxu0
      %v8283 = vadd.f32 0.0, %v8282
      %v8284 = vpop.f32.mrf.mxu0
      %v8285 = vadd.f32 0.0, %v8284
      %v8286 = vpop.f32.mrf.mxu0
      %v8287 = vadd.f32 0.0, %v8286
      %8288 = vmatprep.mubr.bf16.mxu0 %v7600
      %8289 = vmatmul.mubr.bf16.gmra.mxu0 %v7599
      %v8290 = vpop.f32.mrf.mxu0
      %v8291 = vadd.f32 0.0, %v8290
      %v8292 = vpop.f32.mrf.mxu0
      %v8293 = vadd.f32 0.0, %v8292
      %v8294 = vpop.f32.mrf.mxu0
      %v8295 = vadd.f32 0.0, %v8294
      %v8296 = vpop.f32.mrf.mxu0
      %v8297 = vadd.f32 0.0, %v8296
      %8298 = vmatprep.mubr.bf16.mxu0 %v7602
      %8299 = vmatmul.mubr.bf16.gmra.mxu0 %v7601
      %v8300 = vpop.f32.mrf.mxu0
      %v8301 = vadd.f32 0.0, %v8300
      %v8302 = vpop.f32.mrf.mxu0
      %v8303 = vadd.f32 0.0, %v8302
      %v8304 = vpop.f32.mrf.mxu0
      %v8305 = vadd.f32 0.0, %v8304
      %v8306 = vpop.f32.mrf.mxu0
      %v8307 = vadd.f32 0.0, %v8306
      %8308 = vmatprep.mubr.bf16.mxu0 %v7604
      %8309 = vmatmul.mubr.bf16.gmra.mxu0 %v7603
      %v8310 = vpop.f32.mrf.mxu0
      %v8311 = vadd.f32 0.0, %v8310
      %v8312 = vpop.f32.mrf.mxu0
      %v8313 = vadd.f32 0.0, %v8312
      %v8314 = vpop.f32.mrf.mxu0
      %v8315 = vadd.f32 0.0, %v8314
      %v8316 = vpop.f32.mrf.mxu0
      %v8317 = vadd.f32 0.0, %v8316
      %8318 = vmatprep.mubr.bf16.mxu0 %v7606
      %8319 = vmatmul.mubr.bf16.gmra.mxu0 %v7605
      %v8320 = vpop.f32.mrf.mxu0
      %v8321 = vadd.f32 0.0, %v8320
      %v8322 = vpop.f32.mrf.mxu0
      %v8323 = vadd.f32 0.0, %v8322
      %v8324 = vpop.f32.mrf.mxu0
      %v8325 = vadd.f32 0.0, %v8324
      %v8326 = vpop.f32.mrf.mxu0
      %v8327 = vadd.f32 0.0, %v8326
      %8328 = vmatprep.mubr.bf16.mxu0 %v7608
      %8329 = vmatmul.mubr.bf16.gmra.mxu0 %v7607
      %v8330 = vpop.f32.mrf.mxu0
      %v8331 = vadd.f32 0.0, %v8330
      %v8332 = vpop.f32.mrf.mxu0
      %v8333 = vadd.f32 0.0, %v8332
      %v8334 = vpop.f32.mrf.mxu0
      %v8335 = vadd.f32 0.0, %v8334
      %v8336 = vpop.f32.mrf.mxu0
      %v8337 = vadd.f32 0.0, %v8336
      %8338 = vmatprep.mubr.bf16.mxu0 %v7610
      %8339 = vmatmul.mubr.bf16.gmra.mxu0 %v7609
      %v8340 = vpop.f32.mrf.mxu0
      %v8341 = vadd.f32 0.0, %v8340
      %v8342 = vpop.f32.mrf.mxu0
      %v8343 = vadd.f32 0.0, %v8342
      %v8344 = vpop.f32.mrf.mxu0
      %v8345 = vadd.f32 0.0, %v8344
      %v8346 = vpop.f32.mrf.mxu0
      %v8347 = vadd.f32 0.0, %v8346
      %8348 = vdwg.mxu0
      %8349 = vmatprep.subr.bf16.mxu0 %v7947
      %8350 = vmatpush1.bf16.msra.mxu0 %v7946
      %8351 = vmatprep.subr.bf16.mxu0 %v7945
      %8352 = vmatpush1.bf16.msra.mxu0 %v7944
      %8353 = vmatprep.subr.bf16.mxu0 %v7943
      %8354 = vmatpush1.bf16.msra.mxu0 %v7942
      %8355 = vmatprep.subr.bf16.mxu0 %v7941
      %8356 = vmatpush1.bf16.msra.mxu0 %v7940
      %8357 = vmatprep.subr.bf16.mxu0 %v7939
      %8358 = vmatpush1.bf16.msra.mxu0 %v7938
      %8359 = vmatprep.subr.bf16.mxu0 %v7937
      %8360 = vmatpush1.bf16.msra.mxu0 %v7936
      %8361 = vmatprep.subr.bf16.mxu0 %v7935
      %8362 = vmatpush1.bf16.msra.mxu0 %v7934
      %8363 = vmatprep.subr.bf16.mxu0 %v7933
      %8364 = vmatpush1.bf16.msra.mxu0 %v7932
      %8365 = vmatprep.subr.bf16.mxu0 %v7963
      %8366 = vmatpush2.bf16.msra.mxu0 %v7962
      %8367 = vmatprep.subr.bf16.mxu0 %v7961
      %8368 = vmatpush2.bf16.msra.mxu0 %v7960
      %8369 = vmatprep.subr.bf16.mxu0 %v7959
      %8370 = vmatpush2.bf16.msra.mxu0 %v7958
      %8371 = vmatprep.subr.bf16.mxu0 %v7957
      %8372 = vmatpush2.bf16.msra.mxu0 %v7956
      %8373 = vmatprep.subr.bf16.mxu0 %v7955
      %8374 = vmatpush2.bf16.msra.mxu0 %v7954
      %8375 = vmatprep.subr.bf16.mxu0 %v7953
      %8376 = vmatpush2.bf16.msra.mxu0 %v7952
      %8377 = vmatprep.subr.bf16.mxu0 %v7951
      %8378 = vmatpush2.bf16.msra.mxu0 %v7950
      %8379 = vmatprep.subr.bf16.mxu0 %v7949
      %8380 = vmatpush2.bf16.msra.mxu0 %v7948
      %8381 = vmatprep.mubr.bf16.mxu0 %v7740
      %8382 = vmatmul.mubr.bf16.gmra.mxu0 %v7739
      %v8383 = vpop.f32.mrf.mxu0
      %v8384 = vadd.f32 0.0, %v8383
      %v8385 = vpop.f32.mrf.mxu0
      %v8386 = vadd.f32 0.0, %v8385
      %v8387 = vpop.f32.mrf.mxu0
      %v8388 = vadd.f32 0.0, %v8387
      %v8389 = vpop.f32.mrf.mxu0
      %v8390 = vadd.f32 0.0, %v8389
      %8391 = vmatprep.mubr.bf16.mxu0 %v7742
      %8392 = vmatmul.mubr.bf16.gmra.mxu0 %v7741
      %v8393 = vpop.f32.mrf.mxu0
      %v8394 = vadd.f32 0.0, %v8393
      %v8395 = vpop.f32.mrf.mxu0
      %v8396 = vadd.f32 0.0, %v8395
      %v8397 = vpop.f32.mrf.mxu0
      %v8398 = vadd.f32 0.0, %v8397
      %v8399 = vpop.f32.mrf.mxu0
      %v8400 = vadd.f32 0.0, %v8399
      %8401 = vmatprep.mubr.bf16.mxu0 %v7744
      %8402 = vmatmul.mubr.bf16.gmra.mxu0 %v7743
      %v8403 = vpop.f32.mrf.mxu0
      %v8404 = vadd.f32 0.0, %v8403
      %v8405 = vpop.f32.mrf.mxu0
      %v8406 = vadd.f32 0.0, %v8405
      %v8407 = vpop.f32.mrf.mxu0
      %v8408 = vadd.f32 0.0, %v8407
      %v8409 = vpop.f32.mrf.mxu0
      %v8410 = vadd.f32 0.0, %v8409
      %8411 = vmatprep.mubr.bf16.mxu0 %v7746
      %8412 = vmatmul.mubr.bf16.gmra.mxu0 %v7745
      %v8413 = vpop.f32.mrf.mxu0
      %v8414 = vadd.f32 0.0, %v8413
      %v8415 = vpop.f32.mrf.mxu0
      %v8416 = vadd.f32 0.0, %v8415
      %v8417 = vpop.f32.mrf.mxu0
      %v8418 = vadd.f32 0.0, %v8417
      %v8419 = vpop.f32.mrf.mxu0
      %v8420 = vadd.f32 0.0, %v8419
      %8421 = vmatprep.mubr.bf16.mxu0 %v7748
      %8422 = vmatmul.mubr.bf16.gmra.mxu0 %v7747
      %v8423 = vpop.f32.mrf.mxu0
      %v8424 = vadd.f32 0.0, %v8423
      %v8425 = vpop.f32.mrf.mxu0
      %v8426 = vadd.f32 0.0, %v8425
      %v8427 = vpop.f32.mrf.mxu0
      %v8428 = vadd.f32 0.0, %v8427
      %v8429 = vpop.f32.mrf.mxu0
      %v8430 = vadd.f32 0.0, %v8429
      %8431 = vmatprep.mubr.bf16.mxu0 %v7750
      %8432 = vmatmul.mubr.bf16.gmra.mxu0 %v7749
      %v8433 = vpop.f32.mrf.mxu0
      %v8434 = vadd.f32 0.0, %v8433
      %v8435 = vpop.f32.mrf.mxu0
      %v8436 = vadd.f32 0.0, %v8435
      %v8437 = vpop.f32.mrf.mxu0
      %v8438 = vadd.f32 0.0, %v8437
      %v8439 = vpop.f32.mrf.mxu0
      %v8440 = vadd.f32 0.0, %v8439
      %8441 = vmatprep.mubr.bf16.mxu0 %v7752
      %8442 = vmatmul.mubr.bf16.gmra.mxu0 %v7751
      %v8443 = vpop.f32.mrf.mxu0
      %v8444 = vadd.f32 0.0, %v8443
      %v8445 = vpop.f32.mrf.mxu0
      %v8446 = vadd.f32 0.0, %v8445
      %v8447 = vpop.f32.mrf.mxu0
      %v8448 = vadd.f32 0.0, %v8447
      %v8449 = vpop.f32.mrf.mxu0
      %v8450 = vadd.f32 0.0, %v8449
      %8451 = vmatprep.mubr.bf16.mxu0 %v7754
      %8452 = vmatmul.mubr.bf16.gmra.mxu0 %v7753
      %v8453 = vpop.f32.mrf.mxu0
      %v8454 = vadd.f32 0.0, %v8453
      %v8455 = vpop.f32.mrf.mxu0
      %v8456 = vadd.f32 0.0, %v8455
      %v8457 = vpop.f32.mrf.mxu0
      %v8458 = vadd.f32 0.0, %v8457
      %v8459 = vpop.f32.mrf.mxu0
      %v8460 = vadd.f32 0.0, %v8459
      %8461 = vmatprep.mubr.bf16.mxu0 %v7756
      %8462 = vmatmul.mubr.bf16.gmra.mxu0 %v7755
      %v8463 = vpop.f32.mrf.mxu0
      %v8464 = vadd.f32 0.0, %v8463
      %v8465 = vpop.f32.mrf.mxu0
      %v8466 = vadd.f32 0.0, %v8465
      %v8467 = vpop.f32.mrf.mxu0
      %v8468 = vadd.f32 0.0, %v8467
      %v8469 = vpop.f32.mrf.mxu0
      %v8470 = vadd.f32 0.0, %v8469
      %8471 = vmatprep.mubr.bf16.mxu0 %v7758
      %8472 = vmatmul.mubr.bf16.gmra.mxu0 %v7757
      %v8473 = vpop.f32.mrf.mxu0
      %v8474 = vadd.f32 0.0, %v8473
      %v8475 = vpop.f32.mrf.mxu0
      %v8476 = vadd.f32 0.0, %v8475
      %v8477 = vpop.f32.mrf.mxu0
      %v8478 = vadd.f32 0.0, %v8477
      %v8479 = vpop.f32.mrf.mxu0
      %v8480 = vadd.f32 0.0, %v8479
      %8481 = vmatprep.mubr.bf16.mxu0 %v7760
      %8482 = vmatmul.mubr.bf16.gmra.mxu0 %v7759
      %v8483 = vpop.f32.mrf.mxu0
      %v8484 = vadd.f32 0.0, %v8483
      %v8485 = vpop.f32.mrf.mxu0
      %v8486 = vadd.f32 0.0, %v8485
      %v8487 = vpop.f32.mrf.mxu0
      %v8488 = vadd.f32 0.0, %v8487
      %v8489 = vpop.f32.mrf.mxu0
      %v8490 = vadd.f32 0.0, %v8489
      %8491 = vmatprep.mubr.bf16.mxu0 %v7762
      %8492 = vmatmul.mubr.bf16.gmra.mxu0 %v7761
      %v8493 = vpop.f32.mrf.mxu0
      %v8494 = vadd.f32 0.0, %v8493
      %v8495 = vpop.f32.mrf.mxu0
      %v8496 = vadd.f32 0.0, %v8495
      %v8497 = vpop.f32.mrf.mxu0
      %v8498 = vadd.f32 0.0, %v8497
      %v8499 = vpop.f32.mrf.mxu0
      %v8500 = vadd.f32 0.0, %v8499
      %8501 = vmatprep.mubr.bf16.mxu0 %v7764
      %8502 = vmatmul.mubr.bf16.gmra.mxu0 %v7763
      %v8503 = vpop.f32.mrf.mxu0
      %v8504 = vadd.f32 0.0, %v8503
      %v8505 = vpop.f32.mrf.mxu0
      %v8506 = vadd.f32 0.0, %v8505
      %v8507 = vpop.f32.mrf.mxu0
      %v8508 = vadd.f32 0.0, %v8507
      %v8509 = vpop.f32.mrf.mxu0
      %v8510 = vadd.f32 0.0, %v8509
      %8511 = vmatprep.mubr.bf16.mxu0 %v7766
      %8512 = vmatmul.mubr.bf16.gmra.mxu0 %v7765
      %v8513 = vpop.f32.mrf.mxu0
      %v8514 = vadd.f32 0.0, %v8513
      %v8515 = vpop.f32.mrf.mxu0
      %v8516 = vadd.f32 0.0, %v8515
      %v8517 = vpop.f32.mrf.mxu0
      %v8518 = vadd.f32 0.0, %v8517
      %v8519 = vpop.f32.mrf.mxu0
      %v8520 = vadd.f32 0.0, %v8519
      %8521 = vmatprep.mubr.bf16.mxu0 %v7768
      %8522 = vmatmul.mubr.bf16.gmra.mxu0 %v7767
      %v8523 = vpop.f32.mrf.mxu0
      %v8524 = vadd.f32 0.0, %v8523
      %v8525 = vpop.f32.mrf.mxu0
      %v8526 = vadd.f32 0.0, %v8525
      %v8527 = vpop.f32.mrf.mxu0
      %v8528 = vadd.f32 0.0, %v8527
      %v8529 = vpop.f32.mrf.mxu0
      %v8530 = vadd.f32 0.0, %v8529
      %8531 = vmatprep.mubr.bf16.mxu0 %v7770
      %8532 = vmatmul.mubr.bf16.gmra.mxu0 %v7769
      %v8533 = vpop.f32.mrf.mxu0
      %v8534 = vadd.f32 0.0, %v8533
      %v8535 = vpop.f32.mrf.mxu0
      %v8536 = vadd.f32 0.0, %v8535
      %v8537 = vpop.f32.mrf.mxu0
      %v8538 = vadd.f32 0.0, %v8537
      %v8539 = vpop.f32.mrf.mxu0
      %v8540 = vadd.f32 0.0, %v8539
      %8541 = vmatprep.mubr.bf16.mxu0 %v7772
      %8542 = vmatmul.mubr.bf16.gmra.mxu0 %v7771
      %v8543 = vpop.f32.mrf.mxu0
      %v8544 = vadd.f32 0.0, %v8543
      %v8545 = vpop.f32.mrf.mxu0
      %v8546 = vadd.f32 0.0, %v8545
      %v8547 = vpop.f32.mrf.mxu0
      %v8548 = vadd.f32 0.0, %v8547
      %v8549 = vpop.f32.mrf.mxu0
      %v8550 = vadd.f32 0.0, %v8549
      %8551 = vmatprep.mubr.bf16.mxu0 %v7774
      %8552 = vmatmul.mubr.bf16.gmra.mxu0 %v7773
      %v8553 = vpop.f32.mrf.mxu0
      %v8554 = vadd.f32 0.0, %v8553
      %v8555 = vpop.f32.mrf.mxu0
      %v8556 = vadd.f32 0.0, %v8555
      %v8557 = vpop.f32.mrf.mxu0
      %v8558 = vadd.f32 0.0, %v8557
      %v8559 = vpop.f32.mrf.mxu0
      %v8560 = vadd.f32 0.0, %v8559
      %8561 = vmatprep.mubr.bf16.mxu0 %v7776
      %8562 = vmatmul.mubr.bf16.gmra.mxu0 %v7775
      %v8563 = vpop.f32.mrf.mxu0
      %v8564 = vadd.f32 0.0, %v8563
      %v8565 = vpop.f32.mrf.mxu0
      %v8566 = vadd.f32 0.0, %v8565
      %v8567 = vpop.f32.mrf.mxu0
      %v8568 = vadd.f32 0.0, %v8567
      %v8569 = vpop.f32.mrf.mxu0
      %v8570 = vadd.f32 0.0, %v8569
      %8571 = vmatprep.mubr.bf16.mxu0 %v7778
      %8572 = vmatmul.mubr.bf16.gmra.mxu0 %v7777
      %v8573 = vpop.f32.mrf.mxu0
      %v8574 = vadd.f32 0.0, %v8573
      %v8575 = vpop.f32.mrf.mxu0
      %v8576 = vadd.f32 0.0, %v8575
      %v8577 = vpop.f32.mrf.mxu0
      %v8578 = vadd.f32 0.0, %v8577
      %v8579 = vpop.f32.mrf.mxu0
      %v8580 = vadd.f32 0.0, %v8579
      %8581 = vmatprep.mubr.bf16.mxu0 %v7780
      %8582 = vmatmul.mubr.bf16.gmra.mxu0 %v7779
      %v8583 = vpop.f32.mrf.mxu0
      %v8584 = vadd.f32 0.0, %v8583
      %v8585 = vpop.f32.mrf.mxu0
      %v8586 = vadd.f32 0.0, %v8585
      %v8587 = vpop.f32.mrf.mxu0
      %v8588 = vadd.f32 0.0, %v8587
      %v8589 = vpop.f32.mrf.mxu0
      %v8590 = vadd.f32 0.0, %v8589
      %8591 = vmatprep.mubr.bf16.mxu0 %v7782
      %8592 = vmatmul.mubr.bf16.gmra.mxu0 %v7781
      %v8593 = vpop.f32.mrf.mxu0
      %v8594 = vadd.f32 0.0, %v8593
      %v8595 = vpop.f32.mrf.mxu0
      %v8596 = vadd.f32 0.0, %v8595
      %v8597 = vpop.f32.mrf.mxu0
      %v8598 = vadd.f32 0.0, %v8597
      %v8599 = vpop.f32.mrf.mxu0
      %v8600 = vadd.f32 0.0, %v8599
      %8601 = vmatprep.mubr.bf16.mxu0 %v7784
      %8602 = vmatmul.mubr.bf16.gmra.mxu0 %v7783
      %v8603 = vpop.f32.mrf.mxu0
      %v8604 = vadd.f32 0.0, %v8603
      %v8605 = vpop.f32.mrf.mxu0
      %v8606 = vadd.f32 0.0, %v8605
      %v8607 = vpop.f32.mrf.mxu0
      %v8608 = vadd.f32 0.0, %v8607
      %v8609 = vpop.f32.mrf.mxu0
      %v8610 = vadd.f32 0.0, %v8609
      %8611 = vmatprep.mubr.bf16.mxu0 %v7786
      %8612 = vmatmul.mubr.bf16.gmra.mxu0 %v7785
      %v8613 = vpop.f32.mrf.mxu0
      %v8614 = vadd.f32 0.0, %v8613
      %v8615 = vpop.f32.mrf.mxu0
      %v8616 = vadd.f32 0.0, %v8615
      %v8617 = vpop.f32.mrf.mxu0
      %v8618 = vadd.f32 0.0, %v8617
      %v8619 = vpop.f32.mrf.mxu0
      %v8620 = vadd.f32 0.0, %v8619
      %8621 = vmatprep.mubr.bf16.mxu0 %v7788
      %8622 = vmatmul.mubr.bf16.gmra.mxu0 %v7787
      %v8623 = vpop.f32.mrf.mxu0
      %v8624 = vadd.f32 0.0, %v8623
      %v8625 = vpop.f32.mrf.mxu0
      %v8626 = vadd.f32 0.0, %v8625
      %v8627 = vpop.f32.mrf.mxu0
      %v8628 = vadd.f32 0.0, %v8627
      %v8629 = vpop.f32.mrf.mxu0
      %v8630 = vadd.f32 0.0, %v8629
      %8631 = vmatprep.mubr.bf16.mxu0 %v7790
      %8632 = vmatmul.mubr.bf16.gmra.mxu0 %v7789
      %v8633 = vpop.f32.mrf.mxu0
      %v8634 = vadd.f32 0.0, %v8633
      %v8635 = vpop.f32.mrf.mxu0
      %v8636 = vadd.f32 0.0, %v8635
      %v8637 = vpop.f32.mrf.mxu0
      %v8638 = vadd.f32 0.0, %v8637
      %v8639 = vpop.f32.mrf.mxu0
      %v8640 = vadd.f32 0.0, %v8639
      %8641 = vmatprep.mubr.bf16.mxu0 %v7792
      %8642 = vmatmul.mubr.bf16.gmra.mxu0 %v7791
      %v8643 = vpop.f32.mrf.mxu0
      %v8644 = vadd.f32 0.0, %v8643
      %v8645 = vpop.f32.mrf.mxu0
      %v8646 = vadd.f32 0.0, %v8645
      %v8647 = vpop.f32.mrf.mxu0
      %v8648 = vadd.f32 0.0, %v8647
      %v8649 = vpop.f32.mrf.mxu0
      %v8650 = vadd.f32 0.0, %v8649
      %8651 = vmatprep.mubr.bf16.mxu0 %v7794
      %8652 = vmatmul.mubr.bf16.gmra.mxu0 %v7793
      %v8653 = vpop.f32.mrf.mxu0
      %v8654 = vadd.f32 0.0, %v8653
      %v8655 = vpop.f32.mrf.mxu0
      %v8656 = vadd.f32 0.0, %v8655
      %v8657 = vpop.f32.mrf.mxu0
      %v8658 = vadd.f32 0.0, %v8657
      %v8659 = vpop.f32.mrf.mxu0
      %v8660 = vadd.f32 0.0, %v8659
      %8661 = vmatprep.mubr.bf16.mxu0 %v7796
      %8662 = vmatmul.mubr.bf16.gmra.mxu0 %v7795
      %v8663 = vpop.f32.mrf.mxu0
      %v8664 = vadd.f32 0.0, %v8663
      %v8665 = vpop.f32.mrf.mxu0
      %v8666 = vadd.f32 0.0, %v8665
      %v8667 = vpop.f32.mrf.mxu0
      %v8668 = vadd.f32 0.0, %v8667
      %v8669 = vpop.f32.mrf.mxu0
      %v8670 = vadd.f32 0.0, %v8669
      %8671 = vmatprep.mubr.bf16.mxu0 %v7798
      %8672 = vmatmul.mubr.bf16.gmra.mxu0 %v7797
      %v8673 = vpop.f32.mrf.mxu0
      %v8674 = vadd.f32 0.0, %v8673
      %v8675 = vpop.f32.mrf.mxu0
      %v8676 = vadd.f32 0.0, %v8675
      %v8677 = vpop.f32.mrf.mxu0
      %v8678 = vadd.f32 0.0, %v8677
      %v8679 = vpop.f32.mrf.mxu0
      %v8680 = vadd.f32 0.0, %v8679
      %8681 = vmatprep.mubr.bf16.mxu0 %v7800
      %8682 = vmatmul.mubr.bf16.gmra.mxu0 %v7799
      %v8683 = vpop.f32.mrf.mxu0
      %v8684 = vadd.f32 0.0, %v8683
      %v8685 = vpop.f32.mrf.mxu0
      %v8686 = vadd.f32 0.0, %v8685
      %v8687 = vpop.f32.mrf.mxu0
      %v8688 = vadd.f32 0.0, %v8687
      %v8689 = vpop.f32.mrf.mxu0
      %v8690 = vadd.f32 0.0, %v8689
      %8691 = vmatprep.mubr.bf16.mxu0 %v7802
      %8692 = vmatmul.mubr.bf16.gmra.mxu0 %v7801
      %v8693 = vpop.f32.mrf.mxu0
      %v8694 = vadd.f32 0.0, %v8693
      %v8695 = vpop.f32.mrf.mxu0
      %v8696 = vadd.f32 0.0, %v8695
      %v8697 = vpop.f32.mrf.mxu0
      %v8698 = vadd.f32 0.0, %v8697
      %v8699 = vpop.f32.mrf.mxu0
      %v8700 = vadd.f32 0.0, %v8699
      %8701 = vdwg.mxu0
      %v8702 = vmax.f32 %v8031, 0.0
      %v8703 = vmax.f32 %v8033, 0.0
      %v8704 = vmax.f32 %v8035, 0.0
      %v8705 = vmax.f32 %v8037, 0.0
      %v8706 = vmax.f32 %v8041, 0.0
      %v8707 = vmax.f32 %v8043, 0.0
      %v8708 = vmax.f32 %v8045, 0.0
      %v8709 = vmax.f32 %v8047, 0.0
      %v8710 = vmax.f32 %v8051, 0.0
      %v8711 = vmax.f32 %v8053, 0.0
      %v8712 = vmax.f32 %v8055, 0.0
      %v8713 = vmax.f32 %v8057, 0.0
      %v8714 = vmax.f32 %v8061, 0.0
      %v8715 = vmax.f32 %v8063, 0.0
      %v8716 = vmax.f32 %v8065, 0.0
      %v8717 = vmax.f32 %v8067, 0.0
      %v8718 = vmax.f32 %v8071, 0.0
      %v8719 = vmax.f32 %v8073, 0.0
      %v8720 = vmax.f32 %v8075, 0.0
      %v8721 = vmax.f32 %v8077, 0.0
      %v8722 = vmax.f32 %v8081, 0.0
      %v8723 = vmax.f32 %v8083, 0.0
      %v8724 = vmax.f32 %v8085, 0.0
      %v8725 = vmax.f32 %v8087, 0.0
      %v8726 = vmax.f32 %v8091, 0.0
      %v8727 = vmax.f32 %v8093, 0.0
      %v8728 = vmax.f32 %v8095, 0.0
      %v8729 = vmax.f32 %v8097, 0.0
      %v8730 = vmax.f32 %v8101, 0.0
      %v8731 = vmax.f32 %v8103, 0.0
      %v8732 = vmax.f32 %v8105, 0.0
      %v8733 = vmax.f32 %v8107, 0.0
      %v8734 = vmax.f32 %v8111, 0.0
      %v8735 = vmax.f32 %v8113, 0.0
      %v8736 = vmax.f32 %v8115, 0.0
      %v8737 = vmax.f32 %v8117, 0.0
      %v8738 = vmax.f32 %v8121, 0.0
      %v8739 = vmax.f32 %v8123, 0.0
      %v8740 = vmax.f32 %v8125, 0.0
      %v8741 = vmax.f32 %v8127, 0.0
      %v8742 = vmax.f32 %v8131, 0.0
      %v8743 = vmax.f32 %v8133, 0.0
      %v8744 = vmax.f32 %v8135, 0.0
      %v8745 = vmax.f32 %v8137, 0.0
      %v8746 = vmax.f32 %v8141, 0.0
      %v8747 = vmax.f32 %v8143, 0.0
      %v8748 = vmax.f32 %v8145, 0.0
      %v8749 = vmax.f32 %v8147, 0.0
      %v8750 = vmax.f32 %v8151, 0.0
      %v8751 = vmax.f32 %v8153, 0.0
      %v8752 = vmax.f32 %v8155, 0.0
      %v8753 = vmax.f32 %v8157, 0.0
      %v8754 = vmax.f32 %v8161, 0.0
      %v8755 = vmax.f32 %v8163, 0.0
      %v8756 = vmax.f32 %v8165, 0.0
      %v8757 = vmax.f32 %v8167, 0.0
      %v8758 = vmax.f32 %v8171, 0.0
      %v8759 = vmax.f32 %v8173, 0.0
      %v8760 = vmax.f32 %v8175, 0.0
      %v8761 = vmax.f32 %v8177, 0.0
      %v8762 = vmax.f32 %v8181, 0.0
      %v8763 = vmax.f32 %v8183, 0.0
      %v8764 = vmax.f32 %v8185, 0.0
      %v8765 = vmax.f32 %v8187, 0.0
      %v8766 = vmax.f32 %v8191, 0.0
      %v8767 = vmax.f32 %v8193, 0.0
      %v8768 = vmax.f32 %v8195, 0.0
      %v8769 = vmax.f32 %v8197, 0.0
      %v8770 = vmax.f32 %v8201, 0.0
      %v8771 = vmax.f32 %v8203, 0.0
      %v8772 = vmax.f32 %v8205, 0.0
      %v8773 = vmax.f32 %v8207, 0.0
      %v8774 = vmax.f32 %v8211, 0.0
      %v8775 = vmax.f32 %v8213, 0.0
      %v8776 = vmax.f32 %v8215, 0.0
      %v8777 = vmax.f32 %v8217, 0.0
      %v8778 = vmax.f32 %v8221, 0.0
      %v8779 = vmax.f32 %v8223, 0.0
      %v8780 = vmax.f32 %v8225, 0.0
      %v8781 = vmax.f32 %v8227, 0.0
      %v8782 = vmax.f32 %v8231, 0.0
      %v8783 = vmax.f32 %v8233, 0.0
      %v8784 = vmax.f32 %v8235, 0.0
      %v8785 = vmax.f32 %v8237, 0.0
      %v8786 = vmax.f32 %v8241, 0.0
      %v8787 = vmax.f32 %v8243, 0.0
      %v8788 = vmax.f32 %v8245, 0.0
      %v8789 = vmax.f32 %v8247, 0.0
      %v8790 = vmax.f32 %v8251, 0.0
      %v8791 = vmax.f32 %v8253, 0.0
      %v8792 = vmax.f32 %v8255, 0.0
      %v8793 = vmax.f32 %v8257, 0.0
      %v8794 = vmax.f32 %v8261, 0.0
      %v8795 = vmax.f32 %v8263, 0.0
      %v8796 = vmax.f32 %v8265, 0.0
      %v8797 = vmax.f32 %v8267, 0.0
      %v8798 = vmax.f32 %v8271, 0.0
      %v8799 = vmax.f32 %v8273, 0.0
      %v8800 = vmax.f32 %v8275, 0.0
      %v8801 = vmax.f32 %v8277, 0.0
      %v8802 = vmax.f32 %v8281, 0.0
      %v8803 = vmax.f32 %v8283, 0.0
      %v8804 = vmax.f32 %v8285, 0.0
      %v8805 = vmax.f32 %v8287, 0.0
      %v8806 = vmax.f32 %v8291, 0.0
      %v8807 = vmax.f32 %v8293, 0.0
      %v8808 = vmax.f32 %v8295, 0.0
      %v8809 = vmax.f32 %v8297, 0.0
      %v8810 = vmax.f32 %v8301, 0.0
      %v8811 = vmax.f32 %v8303, 0.0
      %v8812 = vmax.f32 %v8305, 0.0
      %v8813 = vmax.f32 %v8307, 0.0
      %v8814 = vmax.f32 %v8311, 0.0
      %v8815 = vmax.f32 %v8313, 0.0
      %v8816 = vmax.f32 %v8315, 0.0
      %v8817 = vmax.f32 %v8317, 0.0
      %v8818 = vmax.f32 %v8321, 0.0
      %v8819 = vmax.f32 %v8323, 0.0
      %v8820 = vmax.f32 %v8325, 0.0
      %v8821 = vmax.f32 %v8327, 0.0
      %v8822 = vmax.f32 %v8331, 0.0
      %v8823 = vmax.f32 %v8333, 0.0
      %v8824 = vmax.f32 %v8335, 0.0
      %v8825 = vmax.f32 %v8337, 0.0
      %v8826 = vmax.f32 %v8341, 0.0
      %v8827 = vmax.f32 %v8343, 0.0
      %v8828 = vmax.f32 %v8345, 0.0
      %v8829 = vmax.f32 %v8347, 0.0
      %v8830 = vpack.c.bf16 %v8704, %v8702
      %v8831 = vpack.c.bf16 %v8705, %v8703
      %v8832 = vpack.c.bf16 %v8708, %v8706
      %v8833 = vpack.c.bf16 %v8709, %v8707
      %v8834 = vpack.c.bf16 %v8712, %v8710
      %v8835 = vpack.c.bf16 %v8713, %v8711
      %v8836 = vpack.c.bf16 %v8716, %v8714
      %v8837 = vpack.c.bf16 %v8717, %v8715
      %v8838 = vpack.c.bf16 %v8720, %v8718
      %v8839 = vpack.c.bf16 %v8721, %v8719
      %v8840 = vpack.c.bf16 %v8724, %v8722
      %v8841 = vpack.c.bf16 %v8725, %v8723
      %v8842 = vpack.c.bf16 %v8728, %v8726
      %v8843 = vpack.c.bf16 %v8729, %v8727
      %v8844 = vpack.c.bf16 %v8732, %v8730
      %v8845 = vpack.c.bf16 %v8733, %v8731
      %v8846 = vpack.c.bf16 %v8736, %v8734
      %v8847 = vpack.c.bf16 %v8737, %v8735
      %v8848 = vpack.c.bf16 %v8740, %v8738
      %v8849 = vpack.c.bf16 %v8741, %v8739
      %v8850 = vpack.c.bf16 %v8744, %v8742
      %v8851 = vpack.c.bf16 %v8745, %v8743
      %v8852 = vpack.c.bf16 %v8748, %v8746
      %v8853 = vpack.c.bf16 %v8749, %v8747
      %v8854 = vpack.c.bf16 %v8752, %v8750
      %v8855 = vpack.c.bf16 %v8753, %v8751
      %v8856 = vpack.c.bf16 %v8756, %v8754
      %v8857 = vpack.c.bf16 %v8757, %v8755
      %v8858 = vpack.c.bf16 %v8760, %v8758
      %v8859 = vpack.c.bf16 %v8761, %v8759
      %v8860 = vpack.c.bf16 %v8764, %v8762
      %v8861 = vpack.c.bf16 %v8765, %v8763
      %v8862 = vpack.c.bf16 %v8768, %v8766
      %v8863 = vpack.c.bf16 %v8769, %v8767
      %v8864 = vpack.c.bf16 %v8772, %v8770
      %v8865 = vpack.c.bf16 %v8773, %v8771
      %v8866 = vpack.c.bf16 %v8776, %v8774
      %v8867 = vpack.c.bf16 %v8777, %v8775
      %v8868 = vpack.c.bf16 %v8780, %v8778
      %v8869 = vpack.c.bf16 %v8781, %v8779
      %v8870 = vpack.c.bf16 %v8784, %v8782
      %v8871 = vpack.c.bf16 %v8785, %v8783
      %v8872 = vpack.c.bf16 %v8788, %v8786
      %v8873 = vpack.c.bf16 %v8789, %v8787
      %v8874 = vpack.c.bf16 %v8792, %v8790
      %v8875 = vpack.c.bf16 %v8793, %v8791
      %v8876 = vpack.c.bf16 %v8796, %v8794
      %v8877 = vpack.c.bf16 %v8797, %v8795
      %v8878 = vpack.c.bf16 %v8800, %v8798
      %v8879 = vpack.c.bf16 %v8801, %v8799
      %v8880 = vpack.c.bf16 %v8804, %v8802
      %v8881 = vpack.c.bf16 %v8805, %v8803
      %v8882 = vpack.c.bf16 %v8808, %v8806
      %v8883 = vpack.c.bf16 %v8809, %v8807
      %v8884 = vpack.c.bf16 %v8812, %v8810
      %v8885 = vpack.c.bf16 %v8813, %v8811
      %v8886 = vpack.c.bf16 %v8816, %v8814
      %v8887 = vpack.c.bf16 %v8817, %v8815
      %v8888 = vpack.c.bf16 %v8820, %v8818
      %v8889 = vpack.c.bf16 %v8821, %v8819
      %v8890 = vpack.c.bf16 %v8824, %v8822
      %v8891 = vpack.c.bf16 %v8825, %v8823
      %v8892 = vpack.c.bf16 %v8828, %v8826
      %v8893 = vpack.c.bf16 %v8829, %v8827
      %v8894 = vmax.f32 %v8384, 0.0
      %v8895 = vmax.f32 %v8386, 0.0
      %v8896 = vmax.f32 %v8388, 0.0
      %v8897 = vmax.f32 %v8390, 0.0
      %v8898 = vmax.f32 %v8394, 0.0
      %v8899 = vmax.f32 %v8396, 0.0
      %v8900 = vmax.f32 %v8398, 0.0
      %v8901 = vmax.f32 %v8400, 0.0
      %v8902 = vmax.f32 %v8404, 0.0
      %v8903 = vmax.f32 %v8406, 0.0
      %v8904 = vmax.f32 %v8408, 0.0
      %v8905 = vmax.f32 %v8410, 0.0
      %v8906 = vmax.f32 %v8414, 0.0
      %v8907 = vmax.f32 %v8416, 0.0
      %v8908 = vmax.f32 %v8418, 0.0
      %v8909 = vmax.f32 %v8420, 0.0
      %v8910 = vmax.f32 %v8424, 0.0
      %v8911 = vmax.f32 %v8426, 0.0
      %v8912 = vmax.f32 %v8428, 0.0
      %v8913 = vmax.f32 %v8430, 0.0
      %v8914 = vmax.f32 %v8434, 0.0
      %v8915 = vmax.f32 %v8436, 0.0
      %v8916 = vmax.f32 %v8438, 0.0
      %v8917 = vmax.f32 %v8440, 0.0
      %v8918 = vmax.f32 %v8444, 0.0
      %v8919 = vmax.f32 %v8446, 0.0
      %v8920 = vmax.f32 %v8448, 0.0
      %v8921 = vmax.f32 %v8450, 0.0
      %v8922 = vmax.f32 %v8454, 0.0
      %v8923 = vmax.f32 %v8456, 0.0
      %v8924 = vmax.f32 %v8458, 0.0
      %v8925 = vmax.f32 %v8460, 0.0
      %v8926 = vmax.f32 %v8464, 0.0
      %v8927 = vmax.f32 %v8466, 0.0
      %v8928 = vmax.f32 %v8468, 0.0
      %v8929 = vmax.f32 %v8470, 0.0
      %v8930 = vmax.f32 %v8474, 0.0
      %v8931 = vmax.f32 %v8476, 0.0
      %v8932 = vmax.f32 %v8478, 0.0
      %v8933 = vmax.f32 %v8480, 0.0
      %v8934 = vmax.f32 %v8484, 0.0
      %v8935 = vmax.f32 %v8486, 0.0
      %v8936 = vmax.f32 %v8488, 0.0
      %v8937 = vmax.f32 %v8490, 0.0
      %v8938 = vmax.f32 %v8494, 0.0
      %v8939 = vmax.f32 %v8496, 0.0
      %v8940 = vmax.f32 %v8498, 0.0
      %v8941 = vmax.f32 %v8500, 0.0
      %v8942 = vmax.f32 %v8504, 0.0
      %v8943 = vmax.f32 %v8506, 0.0
      %v8944 = vmax.f32 %v8508, 0.0
      %v8945 = vmax.f32 %v8510, 0.0
      %v8946 = vmax.f32 %v8514, 0.0
      %v8947 = vmax.f32 %v8516, 0.0
      %v8948 = vmax.f32 %v8518, 0.0
      %v8949 = vmax.f32 %v8520, 0.0
      %v8950 = vmax.f32 %v8524, 0.0
      %v8951 = vmax.f32 %v8526, 0.0
      %v8952 = vmax.f32 %v8528, 0.0
      %v8953 = vmax.f32 %v8530, 0.0
      %v8954 = vmax.f32 %v8534, 0.0
      %v8955 = vmax.f32 %v8536, 0.0
      %v8956 = vmax.f32 %v8538, 0.0
      %v8957 = vmax.f32 %v8540, 0.0
      %v8958 = vmax.f32 %v8544, 0.0
      %v8959 = vmax.f32 %v8546, 0.0
      %v8960 = vmax.f32 %v8548, 0.0
      %v8961 = vmax.f32 %v8550, 0.0
      %v8962 = vmax.f32 %v8554, 0.0
      %v8963 = vmax.f32 %v8556, 0.0
      %v8964 = vmax.f32 %v8558, 0.0
      %v8965 = vmax.f32 %v8560, 0.0
      %v8966 = vmax.f32 %v8564, 0.0
      %v8967 = vmax.f32 %v8566, 0.0
      %v8968 = vmax.f32 %v8568, 0.0
      %v8969 = vmax.f32 %v8570, 0.0
      %v8970 = vmax.f32 %v8574, 0.0
      %v8971 = vmax.f32 %v8576, 0.0
      %v8972 = vmax.f32 %v8578, 0.0
      %v8973 = vmax.f32 %v8580, 0.0
      %v8974 = vmax.f32 %v8584, 0.0
      %v8975 = vmax.f32 %v8586, 0.0
      %v8976 = vmax.f32 %v8588, 0.0
      %v8977 = vmax.f32 %v8590, 0.0
      %v8978 = vmax.f32 %v8594, 0.0
      %v8979 = vmax.f32 %v8596, 0.0
      %v8980 = vmax.f32 %v8598, 0.0
      %v8981 = vmax.f32 %v8600, 0.0
      %v8982 = vmax.f32 %v8604, 0.0
      %v8983 = vmax.f32 %v8606, 0.0
      %v8984 = vmax.f32 %v8608, 0.0
      %v8985 = vmax.f32 %v8610, 0.0
      %v8986 = vmax.f32 %v8614, 0.0
      %v8987 = vmax.f32 %v8616, 0.0
      %v8988 = vmax.f32 %v8618, 0.0
      %v8989 = vmax.f32 %v8620, 0.0
      %v8990 = vmax.f32 %v8624, 0.0
      %v8991 = vmax.f32 %v8626, 0.0
      %v8992 = vmax.f32 %v8628, 0.0
      %v8993 = vmax.f32 %v8630, 0.0
      %v8994 = vmax.f32 %v8634, 0.0
      %v8995 = vmax.f32 %v8636, 0.0
      %v8996 = vmax.f32 %v8638, 0.0
      %v8997 = vmax.f32 %v8640, 0.0
      %v8998 = vmax.f32 %v8644, 0.0
      %v8999 = vmax.f32 %v8646, 0.0
      %v9000 = vmax.f32 %v8648, 0.0
      %v9001 = vmax.f32 %v8650, 0.0
      %v9002 = vmax.f32 %v8654, 0.0
      %v9003 = vmax.f32 %v8656, 0.0
      %v9004 = vmax.f32 %v8658, 0.0
      %v9005 = vmax.f32 %v8660, 0.0
      %v9006 = vmax.f32 %v8664, 0.0
      %v9007 = vmax.f32 %v8666, 0.0
      %v9008 = vmax.f32 %v8668, 0.0
      %v9009 = vmax.f32 %v8670, 0.0
      %v9010 = vmax.f32 %v8674, 0.0
      %v9011 = vmax.f32 %v8676, 0.0
      %v9012 = vmax.f32 %v8678, 0.0
      %v9013 = vmax.f32 %v8680, 0.0
      %v9014 = vmax.f32 %v8684, 0.0
      %v9015 = vmax.f32 %v8686, 0.0
      %v9016 = vmax.f32 %v8688, 0.0
      %v9017 = vmax.f32 %v8690, 0.0
      %v9018 = vmax.f32 %v8694, 0.0
      %v9019 = vmax.f32 %v8696, 0.0
      %v9020 = vmax.f32 %v8698, 0.0
      %v9021 = vmax.f32 %v8700, 0.0
      %v9022 = vpack.c.bf16 %v8896, %v8894
      %v9023 = vpack.c.bf16 %v8897, %v8895
      %v9024 = vpack.c.bf16 %v8900, %v8898
      %v9025 = vpack.c.bf16 %v8901, %v8899
      %v9026 = vpack.c.bf16 %v8904, %v8902
      %v9027 = vpack.c.bf16 %v8905, %v8903
      %v9028 = vpack.c.bf16 %v8908, %v8906
      %v9029 = vpack.c.bf16 %v8909, %v8907
      %v9030 = vpack.c.bf16 %v8912, %v8910
      %v9031 = vpack.c.bf16 %v8913, %v8911
      %v9032 = vpack.c.bf16 %v8916, %v8914
      %v9033 = vpack.c.bf16 %v8917, %v8915
      %v9034 = vpack.c.bf16 %v8920, %v8918
      %v9035 = vpack.c.bf16 %v8921, %v8919
      %v9036 = vpack.c.bf16 %v8924, %v8922
      %v9037 = vpack.c.bf16 %v8925, %v8923
      %v9038 = vpack.c.bf16 %v8928, %v8926
      %v9039 = vpack.c.bf16 %v8929, %v8927
      %v9040 = vpack.c.bf16 %v8932, %v8930
      %v9041 = vpack.c.bf16 %v8933, %v8931
      %v9042 = vpack.c.bf16 %v8936, %v8934
      %v9043 = vpack.c.bf16 %v8937, %v8935
      %v9044 = vpack.c.bf16 %v8940, %v8938
      %v9045 = vpack.c.bf16 %v8941, %v8939
      %v9046 = vpack.c.bf16 %v8944, %v8942
      %v9047 = vpack.c.bf16 %v8945, %v8943
      %v9048 = vpack.c.bf16 %v8948, %v8946
      %v9049 = vpack.c.bf16 %v8949, %v8947
      %v9050 = vpack.c.bf16 %v8952, %v8950
      %v9051 = vpack.c.bf16 %v8953, %v8951
      %v9052 = vpack.c.bf16 %v8956, %v8954
      %v9053 = vpack.c.bf16 %v8957, %v8955
      %v9054 = vpack.c.bf16 %v8960, %v8958
      %v9055 = vpack.c.bf16 %v8961, %v8959
      %v9056 = vpack.c.bf16 %v8964, %v8962
      %v9057 = vpack.c.bf16 %v8965, %v8963
      %v9058 = vpack.c.bf16 %v8968, %v8966
      %v9059 = vpack.c.bf16 %v8969, %v8967
      %v9060 = vpack.c.bf16 %v8972, %v8970
      %v9061 = vpack.c.bf16 %v8973, %v8971
      %v9062 = vpack.c.bf16 %v8976, %v8974
      %v9063 = vpack.c.bf16 %v8977, %v8975
      %v9064 = vpack.c.bf16 %v8980, %v8978
      %v9065 = vpack.c.bf16 %v8981, %v8979
      %v9066 = vpack.c.bf16 %v8984, %v8982
      %v9067 = vpack.c.bf16 %v8985, %v8983
      %v9068 = vpack.c.bf16 %v8988, %v8986
      %v9069 = vpack.c.bf16 %v8989, %v8987
      %v9070 = vpack.c.bf16 %v8992, %v8990
      %v9071 = vpack.c.bf16 %v8993, %v8991
      %v9072 = vpack.c.bf16 %v8996, %v8994
      %v9073 = vpack.c.bf16 %v8997, %v8995
      %v9074 = vpack.c.bf16 %v9000, %v8998
      %v9075 = vpack.c.bf16 %v9001, %v8999
      %v9076 = vpack.c.bf16 %v9004, %v9002
      %v9077 = vpack.c.bf16 %v9005, %v9003
      %v9078 = vpack.c.bf16 %v9008, %v9006
      %v9079 = vpack.c.bf16 %v9009, %v9007
      %v9080 = vpack.c.bf16 %v9012, %v9010
      %v9081 = vpack.c.bf16 %v9013, %v9011
      %v9082 = vpack.c.bf16 %v9016, %v9014
      %v9083 = vpack.c.bf16 %v9017, %v9015
      %v9084 = vpack.c.bf16 %v9020, %v9018
      %v9085 = vpack.c.bf16 %v9021, %v9019
      %s9086 = scalar_lea.vmem %s2, 1280
      %v9087 = vld [vmem:[%s9086] sm:$0xff]
      %v9088 = vld [vmem:[%s9086 + $0x8] sm:$0xff]
      %v9089 = vld [vmem:[%s9086 + $0x10] sm:$0xff]
      %v9090 = vld [vmem:[%s9086 + $0x18] sm:$0xff]
      %v9091 = vld [vmem:[%s9086 + $0x20] sm:$0xff]
      %v9092 = vld [vmem:[%s9086 + $0x28] sm:$0xff]
      %v9093 = vld [vmem:[%s9086 + $0x30] sm:$0xff]
      %v9094 = vld [vmem:[%s9086 + $0x38] sm:$0xff]
      %v9095 = vld [vmem:[%s9086 + $0x40] sm:$0xff]
      %v9096 = vld [vmem:[%s9086 + $0x48] sm:$0xff]
      %v9097 = vld [vmem:[%s9086 + $0x50] sm:$0xff]
      %v9098 = vld [vmem:[%s9086 + $0x58] sm:$0xff]
      %v9099 = vld [vmem:[%s9086 + $0x60] sm:$0xff]
      %v9100 = vld [vmem:[%s9086 + $0x68] sm:$0xff]
      %v9101 = vld [vmem:[%s9086 + $0x70] sm:$0xff]
      %v9102 = vld [vmem:[%s9086 + $0x78] sm:$0xff]
      %v9103 = vld [vmem:[%s9086 + $0x80] sm:$0xff]
      %v9104 = vld [vmem:[%s9086 + $0x88] sm:$0xff]
      %v9105 = vld [vmem:[%s9086 + $0x90] sm:$0xff]
      %v9106 = vld [vmem:[%s9086 + $0x98] sm:$0xff]
      %v9107 = vld [vmem:[%s9086 + $0xa0] sm:$0xff]
      %v9108 = vld [vmem:[%s9086 + $0xa8] sm:$0xff]
      %v9109 = vld [vmem:[%s9086 + $0xb0] sm:$0xff]
      %v9110 = vld [vmem:[%s9086 + $0xb8] sm:$0xff]
      %v9111 = vld [vmem:[%s9086 + $0xc0] sm:$0xff]
      %v9112 = vld [vmem:[%s9086 + $0xc8] sm:$0xff]
      %v9113 = vld [vmem:[%s9086 + $0xd0] sm:$0xff]
      %v9114 = vld [vmem:[%s9086 + $0xd8] sm:$0xff]
      %v9115 = vld [vmem:[%s9086 + $0xe0] sm:$0xff]
      %v9116 = vld [vmem:[%s9086 + $0xe8] sm:$0xff]
      %v9117 = vld [vmem:[%s9086 + $0xf0] sm:$0xff]
      %v9118 = vld [vmem:[%s9086 + $0xf8] sm:$0xff]
      %v9151 = vunpack.c.l.b16 %v9087
      %v9152 = vunpack.c.h.b16 %v9087
      %v9153 = vunpack.c.l.b16 %v9088
      %v9154 = vunpack.c.h.b16 %v9088
      %v9155 = vunpack.c.l.b16 %v9089
      %v9156 = vunpack.c.h.b16 %v9089
      %v9157 = vunpack.c.l.b16 %v9090
      %v9158 = vunpack.c.h.b16 %v9090
      %v9159 = vunpack.c.l.b16 %v9091
      %v9160 = vunpack.c.h.b16 %v9091
      %v9161 = vunpack.c.l.b16 %v9092
      %v9162 = vunpack.c.h.b16 %v9092
      %v9163 = vunpack.c.l.b16 %v9093
      %v9164 = vunpack.c.h.b16 %v9093
      %v9165 = vunpack.c.l.b16 %v9094
      %v9166 = vunpack.c.h.b16 %v9094
      %v9167 = vunpack.c.l.b16 %v9095
      %v9168 = vunpack.c.h.b16 %v9095
      %v9169 = vunpack.c.l.b16 %v9096
      %v9170 = vunpack.c.h.b16 %v9096
      %v9171 = vunpack.c.l.b16 %v9097
      %v9172 = vunpack.c.h.b16 %v9097
      %v9173 = vunpack.c.l.b16 %v9098
      %v9174 = vunpack.c.h.b16 %v9098
      %v9175 = vunpack.c.l.b16 %v9099
      %v9176 = vunpack.c.h.b16 %v9099
      %v9177 = vunpack.c.l.b16 %v9100
      %v9178 = vunpack.c.h.b16 %v9100
      %v9179 = vunpack.c.l.b16 %v9101
      %v9180 = vunpack.c.h.b16 %v9101
      %v9181 = vunpack.c.l.b16 %v9102
      %v9182 = vunpack.c.h.b16 %v9102
      %v9183 = vunpack.c.l.b16 %v9103
      %v9184 = vunpack.c.h.b16 %v9103
      %v9185 = vunpack.c.l.b16 %v9104
      %v9186 = vunpack.c.h.b16 %v9104
      %v9187 = vunpack.c.l.b16 %v9105
      %v9188 = vunpack.c.h.b16 %v9105
      %v9189 = vunpack.c.l.b16 %v9106
      %v9190 = vunpack.c.h.b16 %v9106
      %v9191 = vunpack.c.l.b16 %v9107
      %v9192 = vunpack.c.h.b16 %v9107
      %v9193 = vunpack.c.l.b16 %v9108
      %v9194 = vunpack.c.h.b16 %v9108
      %v9195 = vunpack.c.l.b16 %v9109
      %v9196 = vunpack.c.h.b16 %v9109
      %v9197 = vunpack.c.l.b16 %v9110
      %v9198 = vunpack.c.h.b16 %v9110
      %v9199 = vunpack.c.l.b16 %v9111
      %v9200 = vunpack.c.h.b16 %v9111
      %v9201 = vunpack.c.l.b16 %v9112
      %v9202 = vunpack.c.h.b16 %v9112
      %v9203 = vunpack.c.l.b16 %v9113
      %v9204 = vunpack.c.h.b16 %v9113
      %v9205 = vunpack.c.l.b16 %v9114
      %v9206 = vunpack.c.h.b16 %v9114
      %v9207 = vunpack.c.l.b16 %v9115
      %v9208 = vunpack.c.h.b16 %v9115
      %v9209 = vunpack.c.l.b16 %v9116
      %v9210 = vunpack.c.h.b16 %v9116
      %v9211 = vunpack.c.l.b16 %v9117
      %v9212 = vunpack.c.h.b16 %v9117
      %v9213 = vunpack.c.l.b16 %v9118
      %v9214 = vunpack.c.h.b16 %v9118
      %v9215 = vpack.c.b16 %v9153, %v9151
      %v9216 = vpack.c.b16 %v9154, %v9152
      %v9217 = vpack.c.b16 %v9157, %v9155
      %v9218 = vpack.c.b16 %v9158, %v9156
      %v9219 = vpack.c.b16 %v9161, %v9159
      %v9220 = vpack.c.b16 %v9162, %v9160
      %v9221 = vpack.c.b16 %v9165, %v9163
      %v9222 = vpack.c.b16 %v9166, %v9164
      %v9223 = vpack.c.b16 %v9169, %v9167
      %v9224 = vpack.c.b16 %v9170, %v9168
      %v9225 = vpack.c.b16 %v9173, %v9171
      %v9226 = vpack.c.b16 %v9174, %v9172
      %v9227 = vpack.c.b16 %v9177, %v9175
      %v9228 = vpack.c.b16 %v9178, %v9176
      %v9229 = vpack.c.b16 %v9181, %v9179
      %v9230 = vpack.c.b16 %v9182, %v9180
      %v9231 = vpack.c.b16 %v9185, %v9183
      %v9232 = vpack.c.b16 %v9186, %v9184
      %v9233 = vpack.c.b16 %v9189, %v9187
      %v9234 = vpack.c.b16 %v9190, %v9188
      %v9235 = vpack.c.b16 %v9193, %v9191
      %v9236 = vpack.c.b16 %v9194, %v9192
      %v9237 = vpack.c.b16 %v9197, %v9195
      %v9238 = vpack.c.b16 %v9198, %v9196
      %v9239 = vpack.c.b16 %v9201, %v9199
      %v9240 = vpack.c.b16 %v9202, %v9200
      %v9241 = vpack.c.b16 %v9205, %v9203
      %v9242 = vpack.c.b16 %v9206, %v9204
      %v9243 = vpack.c.b16 %v9209, %v9207
      %v9244 = vpack.c.b16 %v9210, %v9208
      %v9245 = vpack.c.b16 %v9213, %v9211
      %v9246 = vpack.c.b16 %v9214, %v9212
      %9279 = vmatprep.subr.bf16.mxu0 %v9230
      %9280 = vmatpush1.bf16.msra.mxu0 %v9229
      %9281 = vmatprep.subr.bf16.mxu0 %v9228
      %9282 = vmatpush1.bf16.msra.mxu0 %v9227
      %9283 = vmatprep.subr.bf16.mxu0 %v9226
      %9284 = vmatpush1.bf16.msra.mxu0 %v9225
      %9285 = vmatprep.subr.bf16.mxu0 %v9224
      %9286 = vmatpush1.bf16.msra.mxu0 %v9223
      %9287 = vmatprep.subr.bf16.mxu0 %v9222
      %9288 = vmatpush1.bf16.msra.mxu0 %v9221
      %9289 = vmatprep.subr.bf16.mxu0 %v9220
      %9290 = vmatpush1.bf16.msra.mxu0 %v9219
      %9291 = vmatprep.subr.bf16.mxu0 %v9218
      %9292 = vmatpush1.bf16.msra.mxu0 %v9217
      %9293 = vmatprep.subr.bf16.mxu0 %v9216
      %9294 = vmatpush1.bf16.msra.mxu0 %v9215
      %9295 = vmatprep.subr.bf16.mxu0 %v9246
      %9296 = vmatpush2.bf16.msra.mxu0 %v9245
      %9297 = vmatprep.subr.bf16.mxu0 %v9244
      %9298 = vmatpush2.bf16.msra.mxu0 %v9243
      %9299 = vmatprep.subr.bf16.mxu0 %v9242
      %9300 = vmatpush2.bf16.msra.mxu0 %v9241
      %9301 = vmatprep.subr.bf16.mxu0 %v9240
      %9302 = vmatpush2.bf16.msra.mxu0 %v9239
      %9303 = vmatprep.subr.bf16.mxu0 %v9238
      %9304 = vmatpush2.bf16.msra.mxu0 %v9237
      %9305 = vmatprep.subr.bf16.mxu0 %v9236
      %9306 = vmatpush2.bf16.msra.mxu0 %v9235
      %9307 = vmatprep.subr.bf16.mxu0 %v9234
      %9308 = vmatpush2.bf16.msra.mxu0 %v9233
      %9309 = vmatprep.subr.bf16.mxu0 %v9232
      %9310 = vmatpush2.bf16.msra.mxu0 %v9231
      %9311 = vmatprep.mubr.bf16.mxu0 %v8831
      %9312 = vmatmul.mubr.bf16.gmra.mxu0 %v8830
      %v9313 = vpop.f32.mrf.mxu0
      %v9314 = vadd.f32 0.0, %v9313
      %v9315 = vpop.f32.mrf.mxu0
      %v9316 = vadd.f32 0.0, %v9315
      %v9317 = vpop.f32.mrf.mxu0
      %v9318 = vadd.f32 0.0, %v9317
      %v9319 = vpop.f32.mrf.mxu0
      %v9320 = vadd.f32 0.0, %v9319
      %9321 = vmatprep.mubr.bf16.mxu0 %v8833
      %9322 = vmatmul.mubr.bf16.gmra.mxu0 %v8832
      %v9323 = vpop.f32.mrf.mxu0
      %v9324 = vadd.f32 0.0, %v9323
      %v9325 = vpop.f32.mrf.mxu0
      %v9326 = vadd.f32 0.0, %v9325
      %v9327 = vpop.f32.mrf.mxu0
      %v9328 = vadd.f32 0.0, %v9327
      %v9329 = vpop.f32.mrf.mxu0
      %v9330 = vadd.f32 0.0, %v9329
      %9331 = vmatprep.mubr.bf16.mxu0 %v8835
      %9332 = vmatmul.mubr.bf16.gmra.mxu0 %v8834
      %v9333 = vpop.f32.mrf.mxu0
      %v9334 = vadd.f32 0.0, %v9333
      %v9335 = vpop.f32.mrf.mxu0
      %v9336 = vadd.f32 0.0, %v9335
      %v9337 = vpop.f32.mrf.mxu0
      %v9338 = vadd.f32 0.0, %v9337
      %v9339 = vpop.f32.mrf.mxu0
      %v9340 = vadd.f32 0.0, %v9339
      %9341 = vmatprep.mubr.bf16.mxu0 %v8837
      %9342 = vmatmul.mubr.bf16.gmra.mxu0 %v8836
      %v9343 = vpop.f32.mrf.mxu0
      %v9344 = vadd.f32 0.0, %v9343
      %v9345 = vpop.f32.mrf.mxu0
      %v9346 = vadd.f32 0.0, %v9345
      %v9347 = vpop.f32.mrf.mxu0
      %v9348 = vadd.f32 0.0, %v9347
      %v9349 = vpop.f32.mrf.mxu0
      %v9350 = vadd.f32 0.0, %v9349
      %9351 = vmatprep.mubr.bf16.mxu0 %v8839
      %9352 = vmatmul.mubr.bf16.gmra.mxu0 %v8838
      %v9353 = vpop.f32.mrf.mxu0
      %v9354 = vadd.f32 0.0, %v9353
      %v9355 = vpop.f32.mrf.mxu0
      %v9356 = vadd.f32 0.0, %v9355
      %v9357 = vpop.f32.mrf.mxu0
      %v9358 = vadd.f32 0.0, %v9357
      %v9359 = vpop.f32.mrf.mxu0
      %v9360 = vadd.f32 0.0, %v9359
      %9361 = vmatprep.mubr.bf16.mxu0 %v8841
      %9362 = vmatmul.mubr.bf16.gmra.mxu0 %v8840
      %v9363 = vpop.f32.mrf.mxu0
      %v9364 = vadd.f32 0.0, %v9363
      %v9365 = vpop.f32.mrf.mxu0
      %v9366 = vadd.f32 0.0, %v9365
      %v9367 = vpop.f32.mrf.mxu0
      %v9368 = vadd.f32 0.0, %v9367
      %v9369 = vpop.f32.mrf.mxu0
      %v9370 = vadd.f32 0.0, %v9369
      %9371 = vmatprep.mubr.bf16.mxu0 %v8843
      %9372 = vmatmul.mubr.bf16.gmra.mxu0 %v8842
      %v9373 = vpop.f32.mrf.mxu0
      %v9374 = vadd.f32 0.0, %v9373
      %v9375 = vpop.f32.mrf.mxu0
      %v9376 = vadd.f32 0.0, %v9375
      %v9377 = vpop.f32.mrf.mxu0
      %v9378 = vadd.f32 0.0, %v9377
      %v9379 = vpop.f32.mrf.mxu0
      %v9380 = vadd.f32 0.0, %v9379
      %9381 = vmatprep.mubr.bf16.mxu0 %v8845
      %9382 = vmatmul.mubr.bf16.gmra.mxu0 %v8844
      %v9383 = vpop.f32.mrf.mxu0
      %v9384 = vadd.f32 0.0, %v9383
      %v9385 = vpop.f32.mrf.mxu0
      %v9386 = vadd.f32 0.0, %v9385
      %v9387 = vpop.f32.mrf.mxu0
      %v9388 = vadd.f32 0.0, %v9387
      %v9389 = vpop.f32.mrf.mxu0
      %v9390 = vadd.f32 0.0, %v9389
      %9391 = vmatprep.mubr.bf16.mxu0 %v8847
      %9392 = vmatmul.mubr.bf16.gmra.mxu0 %v8846
      %v9393 = vpop.f32.mrf.mxu0
      %v9394 = vadd.f32 0.0, %v9393
      %v9395 = vpop.f32.mrf.mxu0
      %v9396 = vadd.f32 0.0, %v9395
      %v9397 = vpop.f32.mrf.mxu0
      %v9398 = vadd.f32 0.0, %v9397
      %v9399 = vpop.f32.mrf.mxu0
      %v9400 = vadd.f32 0.0, %v9399
      %9401 = vmatprep.mubr.bf16.mxu0 %v8849
      %9402 = vmatmul.mubr.bf16.gmra.mxu0 %v8848
      %v9403 = vpop.f32.mrf.mxu0
      %v9404 = vadd.f32 0.0, %v9403
      %v9405 = vpop.f32.mrf.mxu0
      %v9406 = vadd.f32 0.0, %v9405
      %v9407 = vpop.f32.mrf.mxu0
      %v9408 = vadd.f32 0.0, %v9407
      %v9409 = vpop.f32.mrf.mxu0
      %v9410 = vadd.f32 0.0, %v9409
      %9411 = vmatprep.mubr.bf16.mxu0 %v8851
      %9412 = vmatmul.mubr.bf16.gmra.mxu0 %v8850
      %v9413 = vpop.f32.mrf.mxu0
      %v9414 = vadd.f32 0.0, %v9413
      %v9415 = vpop.f32.mrf.mxu0
      %v9416 = vadd.f32 0.0, %v9415
      %v9417 = vpop.f32.mrf.mxu0
      %v9418 = vadd.f32 0.0, %v9417
      %v9419 = vpop.f32.mrf.mxu0
      %v9420 = vadd.f32 0.0, %v9419
      %9421 = vmatprep.mubr.bf16.mxu0 %v8853
      %9422 = vmatmul.mubr.bf16.gmra.mxu0 %v8852
      %v9423 = vpop.f32.mrf.mxu0
      %v9424 = vadd.f32 0.0, %v9423
      %v9425 = vpop.f32.mrf.mxu0
      %v9426 = vadd.f32 0.0, %v9425
      %v9427 = vpop.f32.mrf.mxu0
      %v9428 = vadd.f32 0.0, %v9427
      %v9429 = vpop.f32.mrf.mxu0
      %v9430 = vadd.f32 0.0, %v9429
      %9431 = vmatprep.mubr.bf16.mxu0 %v8855
      %9432 = vmatmul.mubr.bf16.gmra.mxu0 %v8854
      %v9433 = vpop.f32.mrf.mxu0
      %v9434 = vadd.f32 0.0, %v9433
      %v9435 = vpop.f32.mrf.mxu0
      %v9436 = vadd.f32 0.0, %v9435
      %v9437 = vpop.f32.mrf.mxu0
      %v9438 = vadd.f32 0.0, %v9437
      %v9439 = vpop.f32.mrf.mxu0
      %v9440 = vadd.f32 0.0, %v9439
      %9441 = vmatprep.mubr.bf16.mxu0 %v8857
      %9442 = vmatmul.mubr.bf16.gmra.mxu0 %v8856
      %v9443 = vpop.f32.mrf.mxu0
      %v9444 = vadd.f32 0.0, %v9443
      %v9445 = vpop.f32.mrf.mxu0
      %v9446 = vadd.f32 0.0, %v9445
      %v9447 = vpop.f32.mrf.mxu0
      %v9448 = vadd.f32 0.0, %v9447
      %v9449 = vpop.f32.mrf.mxu0
      %v9450 = vadd.f32 0.0, %v9449
      %9451 = vmatprep.mubr.bf16.mxu0 %v8859
      %9452 = vmatmul.mubr.bf16.gmra.mxu0 %v8858
      %v9453 = vpop.f32.mrf.mxu0
      %v9454 = vadd.f32 0.0, %v9453
      %v9455 = vpop.f32.mrf.mxu0
      %v9456 = vadd.f32 0.0, %v9455
      %v9457 = vpop.f32.mrf.mxu0
      %v9458 = vadd.f32 0.0, %v9457
      %v9459 = vpop.f32.mrf.mxu0
      %v9460 = vadd.f32 0.0, %v9459
      %9461 = vmatprep.mubr.bf16.mxu0 %v8861
      %9462 = vmatmul.mubr.bf16.gmra.mxu0 %v8860
      %v9463 = vpop.f32.mrf.mxu0
      %v9464 = vadd.f32 0.0, %v9463
      %v9465 = vpop.f32.mrf.mxu0
      %v9466 = vadd.f32 0.0, %v9465
      %v9467 = vpop.f32.mrf.mxu0
      %v9468 = vadd.f32 0.0, %v9467
      %v9469 = vpop.f32.mrf.mxu0
      %v9470 = vadd.f32 0.0, %v9469
      %9471 = vmatprep.mubr.bf16.mxu0 %v8863
      %9472 = vmatmul.mubr.bf16.gmra.mxu0 %v8862
      %v9473 = vpop.f32.mrf.mxu0
      %v9474 = vadd.f32 0.0, %v9473
      %v9475 = vpop.f32.mrf.mxu0
      %v9476 = vadd.f32 0.0, %v9475
      %v9477 = vpop.f32.mrf.mxu0
      %v9478 = vadd.f32 0.0, %v9477
      %v9479 = vpop.f32.mrf.mxu0
      %v9480 = vadd.f32 0.0, %v9479
      %9481 = vmatprep.mubr.bf16.mxu0 %v8865
      %9482 = vmatmul.mubr.bf16.gmra.mxu0 %v8864
      %v9483 = vpop.f32.mrf.mxu0
      %v9484 = vadd.f32 0.0, %v9483
      %v9485 = vpop.f32.mrf.mxu0
      %v9486 = vadd.f32 0.0, %v9485
      %v9487 = vpop.f32.mrf.mxu0
      %v9488 = vadd.f32 0.0, %v9487
      %v9489 = vpop.f32.mrf.mxu0
      %v9490 = vadd.f32 0.0, %v9489
      %9491 = vmatprep.mubr.bf16.mxu0 %v8867
      %9492 = vmatmul.mubr.bf16.gmra.mxu0 %v8866
      %v9493 = vpop.f32.mrf.mxu0
      %v9494 = vadd.f32 0.0, %v9493
      %v9495 = vpop.f32.mrf.mxu0
      %v9496 = vadd.f32 0.0, %v9495
      %v9497 = vpop.f32.mrf.mxu0
      %v9498 = vadd.f32 0.0, %v9497
      %v9499 = vpop.f32.mrf.mxu0
      %v9500 = vadd.f32 0.0, %v9499
      %9501 = vmatprep.mubr.bf16.mxu0 %v8869
      %9502 = vmatmul.mubr.bf16.gmra.mxu0 %v8868
      %v9503 = vpop.f32.mrf.mxu0
      %v9504 = vadd.f32 0.0, %v9503
      %v9505 = vpop.f32.mrf.mxu0
      %v9506 = vadd.f32 0.0, %v9505
      %v9507 = vpop.f32.mrf.mxu0
      %v9508 = vadd.f32 0.0, %v9507
      %v9509 = vpop.f32.mrf.mxu0
      %v9510 = vadd.f32 0.0, %v9509
      %9511 = vmatprep.mubr.bf16.mxu0 %v8871
      %9512 = vmatmul.mubr.bf16.gmra.mxu0 %v8870
      %v9513 = vpop.f32.mrf.mxu0
      %v9514 = vadd.f32 0.0, %v9513
      %v9515 = vpop.f32.mrf.mxu0
      %v9516 = vadd.f32 0.0, %v9515
      %v9517 = vpop.f32.mrf.mxu0
      %v9518 = vadd.f32 0.0, %v9517
      %v9519 = vpop.f32.mrf.mxu0
      %v9520 = vadd.f32 0.0, %v9519
      %9521 = vmatprep.mubr.bf16.mxu0 %v8873
      %9522 = vmatmul.mubr.bf16.gmra.mxu0 %v8872
      %v9523 = vpop.f32.mrf.mxu0
      %v9524 = vadd.f32 0.0, %v9523
      %v9525 = vpop.f32.mrf.mxu0
      %v9526 = vadd.f32 0.0, %v9525
      %v9527 = vpop.f32.mrf.mxu0
      %v9528 = vadd.f32 0.0, %v9527
      %v9529 = vpop.f32.mrf.mxu0
      %v9530 = vadd.f32 0.0, %v9529
      %9531 = vmatprep.mubr.bf16.mxu0 %v8875
      %9532 = vmatmul.mubr.bf16.gmra.mxu0 %v8874
      %v9533 = vpop.f32.mrf.mxu0
      %v9534 = vadd.f32 0.0, %v9533
      %v9535 = vpop.f32.mrf.mxu0
      %v9536 = vadd.f32 0.0, %v9535
      %v9537 = vpop.f32.mrf.mxu0
      %v9538 = vadd.f32 0.0, %v9537
      %v9539 = vpop.f32.mrf.mxu0
      %v9540 = vadd.f32 0.0, %v9539
      %9541 = vmatprep.mubr.bf16.mxu0 %v8877
      %9542 = vmatmul.mubr.bf16.gmra.mxu0 %v8876
      %v9543 = vpop.f32.mrf.mxu0
      %v9544 = vadd.f32 0.0, %v9543
      %v9545 = vpop.f32.mrf.mxu0
      %v9546 = vadd.f32 0.0, %v9545
      %v9547 = vpop.f32.mrf.mxu0
      %v9548 = vadd.f32 0.0, %v9547
      %v9549 = vpop.f32.mrf.mxu0
      %v9550 = vadd.f32 0.0, %v9549
      %9551 = vmatprep.mubr.bf16.mxu0 %v8879
      %9552 = vmatmul.mubr.bf16.gmra.mxu0 %v8878
      %v9553 = vpop.f32.mrf.mxu0
      %v9554 = vadd.f32 0.0, %v9553
      %v9555 = vpop.f32.mrf.mxu0
      %v9556 = vadd.f32 0.0, %v9555
      %v9557 = vpop.f32.mrf.mxu0
      %v9558 = vadd.f32 0.0, %v9557
      %v9559 = vpop.f32.mrf.mxu0
      %v9560 = vadd.f32 0.0, %v9559
      %9561 = vmatprep.mubr.bf16.mxu0 %v8881
      %9562 = vmatmul.mubr.bf16.gmra.mxu0 %v8880
      %v9563 = vpop.f32.mrf.mxu0
      %v9564 = vadd.f32 0.0, %v9563
      %v9565 = vpop.f32.mrf.mxu0
      %v9566 = vadd.f32 0.0, %v9565
      %v9567 = vpop.f32.mrf.mxu0
      %v9568 = vadd.f32 0.0, %v9567
      %v9569 = vpop.f32.mrf.mxu0
      %v9570 = vadd.f32 0.0, %v9569
      %9571 = vmatprep.mubr.bf16.mxu0 %v8883
      %9572 = vmatmul.mubr.bf16.gmra.mxu0 %v8882
      %v9573 = vpop.f32.mrf.mxu0
      %v9574 = vadd.f32 0.0, %v9573
      %v9575 = vpop.f32.mrf.mxu0
      %v9576 = vadd.f32 0.0, %v9575
      %v9577 = vpop.f32.mrf.mxu0
      %v9578 = vadd.f32 0.0, %v9577
      %v9579 = vpop.f32.mrf.mxu0
      %v9580 = vadd.f32 0.0, %v9579
      %9581 = vmatprep.mubr.bf16.mxu0 %v8885
      %9582 = vmatmul.mubr.bf16.gmra.mxu0 %v8884
      %v9583 = vpop.f32.mrf.mxu0
      %v9584 = vadd.f32 0.0, %v9583
      %v9585 = vpop.f32.mrf.mxu0
      %v9586 = vadd.f32 0.0, %v9585
      %v9587 = vpop.f32.mrf.mxu0
      %v9588 = vadd.f32 0.0, %v9587
      %v9589 = vpop.f32.mrf.mxu0
      %v9590 = vadd.f32 0.0, %v9589
      %9591 = vmatprep.mubr.bf16.mxu0 %v8887
      %9592 = vmatmul.mubr.bf16.gmra.mxu0 %v8886
      %v9593 = vpop.f32.mrf.mxu0
      %v9594 = vadd.f32 0.0, %v9593
      %v9595 = vpop.f32.mrf.mxu0
      %v9596 = vadd.f32 0.0, %v9595
      %v9597 = vpop.f32.mrf.mxu0
      %v9598 = vadd.f32 0.0, %v9597
      %v9599 = vpop.f32.mrf.mxu0
      %v9600 = vadd.f32 0.0, %v9599
      %9601 = vmatprep.mubr.bf16.mxu0 %v8889
      %9602 = vmatmul.mubr.bf16.gmra.mxu0 %v8888
      %v9603 = vpop.f32.mrf.mxu0
      %v9604 = vadd.f32 0.0, %v9603
      %v9605 = vpop.f32.mrf.mxu0
      %v9606 = vadd.f32 0.0, %v9605
      %v9607 = vpop.f32.mrf.mxu0
      %v9608 = vadd.f32 0.0, %v9607
      %v9609 = vpop.f32.mrf.mxu0
      %v9610 = vadd.f32 0.0, %v9609
      %9611 = vmatprep.mubr.bf16.mxu0 %v8891
      %9612 = vmatmul.mubr.bf16.gmra.mxu0 %v8890
      %v9613 = vpop.f32.mrf.mxu0
      %v9614 = vadd.f32 0.0, %v9613
      %v9615 = vpop.f32.mrf.mxu0
      %v9616 = vadd.f32 0.0, %v9615
      %v9617 = vpop.f32.mrf.mxu0
      %v9618 = vadd.f32 0.0, %v9617
      %v9619 = vpop.f32.mrf.mxu0
      %v9620 = vadd.f32 0.0, %v9619
      %9621 = vmatprep.mubr.bf16.mxu0 %v8893
      %9622 = vmatmul.mubr.bf16.gmra.mxu0 %v8892
      %v9623 = vpop.f32.mrf.mxu0
      %v9624 = vadd.f32 0.0, %v9623
      %v9625 = vpop.f32.mrf.mxu0
      %v9626 = vadd.f32 0.0, %v9625
      %v9627 = vpop.f32.mrf.mxu0
      %v9628 = vadd.f32 0.0, %v9627
      %v9629 = vpop.f32.mrf.mxu0
      %v9630 = vadd.f32 0.0, %v9629
      %9631 = vdwg.mxu0
      %9632 = vmatprep.subr.bf16.mxu0 %v9230
      %9633 = vmatpush1.bf16.msra.mxu0 %v9229
      %9634 = vmatprep.subr.bf16.mxu0 %v9228
      %9635 = vmatpush1.bf16.msra.mxu0 %v9227
      %9636 = vmatprep.subr.bf16.mxu0 %v9226
      %9637 = vmatpush1.bf16.msra.mxu0 %v9225
      %9638 = vmatprep.subr.bf16.mxu0 %v9224
      %9639 = vmatpush1.bf16.msra.mxu0 %v9223
      %9640 = vmatprep.subr.bf16.mxu0 %v9222
      %9641 = vmatpush1.bf16.msra.mxu0 %v9221
      %9642 = vmatprep.subr.bf16.mxu0 %v9220
      %9643 = vmatpush1.bf16.msra.mxu0 %v9219
      %9644 = vmatprep.subr.bf16.mxu0 %v9218
      %9645 = vmatpush1.bf16.msra.mxu0 %v9217
      %9646 = vmatprep.subr.bf16.mxu0 %v9216
      %9647 = vmatpush1.bf16.msra.mxu0 %v9215
      %9648 = vmatprep.subr.bf16.mxu0 %v9246
      %9649 = vmatpush2.bf16.msra.mxu0 %v9245
      %9650 = vmatprep.subr.bf16.mxu0 %v9244
      %9651 = vmatpush2.bf16.msra.mxu0 %v9243
      %9652 = vmatprep.subr.bf16.mxu0 %v9242
      %9653 = vmatpush2.bf16.msra.mxu0 %v9241
      %9654 = vmatprep.subr.bf16.mxu0 %v9240
      %9655 = vmatpush2.bf16.msra.mxu0 %v9239
      %9656 = vmatprep.subr.bf16.mxu0 %v9238
      %9657 = vmatpush2.bf16.msra.mxu0 %v9237
      %9658 = vmatprep.subr.bf16.mxu0 %v9236
      %9659 = vmatpush2.bf16.msra.mxu0 %v9235
      %9660 = vmatprep.subr.bf16.mxu0 %v9234
      %9661 = vmatpush2.bf16.msra.mxu0 %v9233
      %9662 = vmatprep.subr.bf16.mxu0 %v9232
      %9663 = vmatpush2.bf16.msra.mxu0 %v9231
      %9664 = vmatprep.mubr.bf16.mxu0 %v9023
      %9665 = vmatmul.mubr.bf16.gmra.mxu0 %v9022
      %v9666 = vpop.f32.mrf.mxu0
      %v9667 = vadd.f32 0.0, %v9666
      %v9668 = vpop.f32.mrf.mxu0
      %v9669 = vadd.f32 0.0, %v9668
      %v9670 = vpop.f32.mrf.mxu0
      %v9671 = vadd.f32 0.0, %v9670
      %v9672 = vpop.f32.mrf.mxu0
      %v9673 = vadd.f32 0.0, %v9672
      %9674 = vmatprep.mubr.bf16.mxu0 %v9025
      %9675 = vmatmul.mubr.bf16.gmra.mxu0 %v9024
      %v9676 = vpop.f32.mrf.mxu0
      %v9677 = vadd.f32 0.0, %v9676
      %v9678 = vpop.f32.mrf.mxu0
      %v9679 = vadd.f32 0.0, %v9678
      %v9680 = vpop.f32.mrf.mxu0
      %v9681 = vadd.f32 0.0, %v9680
      %v9682 = vpop.f32.mrf.mxu0
      %v9683 = vadd.f32 0.0, %v9682
      %9684 = vmatprep.mubr.bf16.mxu0 %v9027
      %9685 = vmatmul.mubr.bf16.gmra.mxu0 %v9026
      %v9686 = vpop.f32.mrf.mxu0
      %v9687 = vadd.f32 0.0, %v9686
      %v9688 = vpop.f32.mrf.mxu0
      %v9689 = vadd.f32 0.0, %v9688
      %v9690 = vpop.f32.mrf.mxu0
      %v9691 = vadd.f32 0.0, %v9690
      %v9692 = vpop.f32.mrf.mxu0
      %v9693 = vadd.f32 0.0, %v9692
      %9694 = vmatprep.mubr.bf16.mxu0 %v9029
      %9695 = vmatmul.mubr.bf16.gmra.mxu0 %v9028
      %v9696 = vpop.f32.mrf.mxu0
      %v9697 = vadd.f32 0.0, %v9696
      %v9698 = vpop.f32.mrf.mxu0
      %v9699 = vadd.f32 0.0, %v9698
      %v9700 = vpop.f32.mrf.mxu0
      %v9701 = vadd.f32 0.0, %v9700
      %v9702 = vpop.f32.mrf.mxu0
      %v9703 = vadd.f32 0.0, %v9702
      %9704 = vmatprep.mubr.bf16.mxu0 %v9031
      %9705 = vmatmul.mubr.bf16.gmra.mxu0 %v9030
      %v9706 = vpop.f32.mrf.mxu0
      %v9707 = vadd.f32 0.0, %v9706
      %v9708 = vpop.f32.mrf.mxu0
      %v9709 = vadd.f32 0.0, %v9708
      %v9710 = vpop.f32.mrf.mxu0
      %v9711 = vadd.f32 0.0, %v9710
      %v9712 = vpop.f32.mrf.mxu0
      %v9713 = vadd.f32 0.0, %v9712
      %9714 = vmatprep.mubr.bf16.mxu0 %v9033
      %9715 = vmatmul.mubr.bf16.gmra.mxu0 %v9032
      %v9716 = vpop.f32.mrf.mxu0
      %v9717 = vadd.f32 0.0, %v9716
      %v9718 = vpop.f32.mrf.mxu0
      %v9719 = vadd.f32 0.0, %v9718
      %v9720 = vpop.f32.mrf.mxu0
      %v9721 = vadd.f32 0.0, %v9720
      %v9722 = vpop.f32.mrf.mxu0
      %v9723 = vadd.f32 0.0, %v9722
      %9724 = vmatprep.mubr.bf16.mxu0 %v9035
      %9725 = vmatmul.mubr.bf16.gmra.mxu0 %v9034
      %v9726 = vpop.f32.mrf.mxu0
      %v9727 = vadd.f32 0.0, %v9726
      %v9728 = vpop.f32.mrf.mxu0
      %v9729 = vadd.f32 0.0, %v9728
      %v9730 = vpop.f32.mrf.mxu0
      %v9731 = vadd.f32 0.0, %v9730
      %v9732 = vpop.f32.mrf.mxu0
      %v9733 = vadd.f32 0.0, %v9732
      %9734 = vmatprep.mubr.bf16.mxu0 %v9037
      %9735 = vmatmul.mubr.bf16.gmra.mxu0 %v9036
      %v9736 = vpop.f32.mrf.mxu0
      %v9737 = vadd.f32 0.0, %v9736
      %v9738 = vpop.f32.mrf.mxu0
      %v9739 = vadd.f32 0.0, %v9738
      %v9740 = vpop.f32.mrf.mxu0
      %v9741 = vadd.f32 0.0, %v9740
      %v9742 = vpop.f32.mrf.mxu0
      %v9743 = vadd.f32 0.0, %v9742
      %9744 = vmatprep.mubr.bf16.mxu0 %v9039
      %9745 = vmatmul.mubr.bf16.gmra.mxu0 %v9038
      %v9746 = vpop.f32.mrf.mxu0
      %v9747 = vadd.f32 0.0, %v9746
      %v9748 = vpop.f32.mrf.mxu0
      %v9749 = vadd.f32 0.0, %v9748
      %v9750 = vpop.f32.mrf.mxu0
      %v9751 = vadd.f32 0.0, %v9750
      %v9752 = vpop.f32.mrf.mxu0
      %v9753 = vadd.f32 0.0, %v9752
      %9754 = vmatprep.mubr.bf16.mxu0 %v9041
      %9755 = vmatmul.mubr.bf16.gmra.mxu0 %v9040
      %v9756 = vpop.f32.mrf.mxu0
      %v9757 = vadd.f32 0.0, %v9756
      %v9758 = vpop.f32.mrf.mxu0
      %v9759 = vadd.f32 0.0, %v9758
      %v9760 = vpop.f32.mrf.mxu0
      %v9761 = vadd.f32 0.0, %v9760
      %v9762 = vpop.f32.mrf.mxu0
      %v9763 = vadd.f32 0.0, %v9762
      %9764 = vmatprep.mubr.bf16.mxu0 %v9043
      %9765 = vmatmul.mubr.bf16.gmra.mxu0 %v9042
      %v9766 = vpop.f32.mrf.mxu0
      %v9767 = vadd.f32 0.0, %v9766
      %v9768 = vpop.f32.mrf.mxu0
      %v9769 = vadd.f32 0.0, %v9768
      %v9770 = vpop.f32.mrf.mxu0
      %v9771 = vadd.f32 0.0, %v9770
      %v9772 = vpop.f32.mrf.mxu0
      %v9773 = vadd.f32 0.0, %v9772
      %9774 = vmatprep.mubr.bf16.mxu0 %v9045
      %9775 = vmatmul.mubr.bf16.gmra.mxu0 %v9044
      %v9776 = vpop.f32.mrf.mxu0
      %v9777 = vadd.f32 0.0, %v9776
      %v9778 = vpop.f32.mrf.mxu0
      %v9779 = vadd.f32 0.0, %v9778
      %v9780 = vpop.f32.mrf.mxu0
      %v9781 = vadd.f32 0.0, %v9780
      %v9782 = vpop.f32.mrf.mxu0
      %v9783 = vadd.f32 0.0, %v9782
      %9784 = vmatprep.mubr.bf16.mxu0 %v9047
      %9785 = vmatmul.mubr.bf16.gmra.mxu0 %v9046
      %v9786 = vpop.f32.mrf.mxu0
      %v9787 = vadd.f32 0.0, %v9786
      %v9788 = vpop.f32.mrf.mxu0
      %v9789 = vadd.f32 0.0, %v9788
      %v9790 = vpop.f32.mrf.mxu0
      %v9791 = vadd.f32 0.0, %v9790
      %v9792 = vpop.f32.mrf.mxu0
      %v9793 = vadd.f32 0.0, %v9792
      %9794 = vmatprep.mubr.bf16.mxu0 %v9049
      %9795 = vmatmul.mubr.bf16.gmra.mxu0 %v9048
      %v9796 = vpop.f32.mrf.mxu0
      %v9797 = vadd.f32 0.0, %v9796
      %v9798 = vpop.f32.mrf.mxu0
      %v9799 = vadd.f32 0.0, %v9798
      %v9800 = vpop.f32.mrf.mxu0
      %v9801 = vadd.f32 0.0, %v9800
      %v9802 = vpop.f32.mrf.mxu0
      %v9803 = vadd.f32 0.0, %v9802
      %9804 = vmatprep.mubr.bf16.mxu0 %v9051
      %9805 = vmatmul.mubr.bf16.gmra.mxu0 %v9050
      %v9806 = vpop.f32.mrf.mxu0
      %v9807 = vadd.f32 0.0, %v9806
      %v9808 = vpop.f32.mrf.mxu0
      %v9809 = vadd.f32 0.0, %v9808
      %v9810 = vpop.f32.mrf.mxu0
      %v9811 = vadd.f32 0.0, %v9810
      %v9812 = vpop.f32.mrf.mxu0
      %v9813 = vadd.f32 0.0, %v9812
      %9814 = vmatprep.mubr.bf16.mxu0 %v9053
      %9815 = vmatmul.mubr.bf16.gmra.mxu0 %v9052
      %v9816 = vpop.f32.mrf.mxu0
      %v9817 = vadd.f32 0.0, %v9816
      %v9818 = vpop.f32.mrf.mxu0
      %v9819 = vadd.f32 0.0, %v9818
      %v9820 = vpop.f32.mrf.mxu0
      %v9821 = vadd.f32 0.0, %v9820
      %v9822 = vpop.f32.mrf.mxu0
      %v9823 = vadd.f32 0.0, %v9822
      %9824 = vmatprep.mubr.bf16.mxu0 %v9055
      %9825 = vmatmul.mubr.bf16.gmra.mxu0 %v9054
      %v9826 = vpop.f32.mrf.mxu0
      %v9827 = vadd.f32 0.0, %v9826
      %v9828 = vpop.f32.mrf.mxu0
      %v9829 = vadd.f32 0.0, %v9828
      %v9830 = vpop.f32.mrf.mxu0
      %v9831 = vadd.f32 0.0, %v9830
      %v9832 = vpop.f32.mrf.mxu0
      %v9833 = vadd.f32 0.0, %v9832
      %9834 = vmatprep.mubr.bf16.mxu0 %v9057
      %9835 = vmatmul.mubr.bf16.gmra.mxu0 %v9056
      %v9836 = vpop.f32.mrf.mxu0
      %v9837 = vadd.f32 0.0, %v9836
      %v9838 = vpop.f32.mrf.mxu0
      %v9839 = vadd.f32 0.0, %v9838
      %v9840 = vpop.f32.mrf.mxu0
      %v9841 = vadd.f32 0.0, %v9840
      %v9842 = vpop.f32.mrf.mxu0
      %v9843 = vadd.f32 0.0, %v9842
      %9844 = vmatprep.mubr.bf16.mxu0 %v9059
      %9845 = vmatmul.mubr.bf16.gmra.mxu0 %v9058
      %v9846 = vpop.f32.mrf.mxu0
      %v9847 = vadd.f32 0.0, %v9846
      %v9848 = vpop.f32.mrf.mxu0
      %v9849 = vadd.f32 0.0, %v9848
      %v9850 = vpop.f32.mrf.mxu0
      %v9851 = vadd.f32 0.0, %v9850
      %v9852 = vpop.f32.mrf.mxu0
      %v9853 = vadd.f32 0.0, %v9852
      %9854 = vmatprep.mubr.bf16.mxu0 %v9061
      %9855 = vmatmul.mubr.bf16.gmra.mxu0 %v9060
      %v9856 = vpop.f32.mrf.mxu0
      %v9857 = vadd.f32 0.0, %v9856
      %v9858 = vpop.f32.mrf.mxu0
      %v9859 = vadd.f32 0.0, %v9858
      %v9860 = vpop.f32.mrf.mxu0
      %v9861 = vadd.f32 0.0, %v9860
      %v9862 = vpop.f32.mrf.mxu0
      %v9863 = vadd.f32 0.0, %v9862
      %9864 = vmatprep.mubr.bf16.mxu0 %v9063
      %9865 = vmatmul.mubr.bf16.gmra.mxu0 %v9062
      %v9866 = vpop.f32.mrf.mxu0
      %v9867 = vadd.f32 0.0, %v9866
      %v9868 = vpop.f32.mrf.mxu0
      %v9869 = vadd.f32 0.0, %v9868
      %v9870 = vpop.f32.mrf.mxu0
      %v9871 = vadd.f32 0.0, %v9870
      %v9872 = vpop.f32.mrf.mxu0
      %v9873 = vadd.f32 0.0, %v9872
      %9874 = vmatprep.mubr.bf16.mxu0 %v9065
      %9875 = vmatmul.mubr.bf16.gmra.mxu0 %v9064
      %v9876 = vpop.f32.mrf.mxu0
      %v9877 = vadd.f32 0.0, %v9876
      %v9878 = vpop.f32.mrf.mxu0
      %v9879 = vadd.f32 0.0, %v9878
      %v9880 = vpop.f32.mrf.mxu0
      %v9881 = vadd.f32 0.0, %v9880
      %v9882 = vpop.f32.mrf.mxu0
      %v9883 = vadd.f32 0.0, %v9882
      %9884 = vmatprep.mubr.bf16.mxu0 %v9067
      %9885 = vmatmul.mubr.bf16.gmra.mxu0 %v9066
      %v9886 = vpop.f32.mrf.mxu0
      %v9887 = vadd.f32 0.0, %v9886
      %v9888 = vpop.f32.mrf.mxu0
      %v9889 = vadd.f32 0.0, %v9888
      %v9890 = vpop.f32.mrf.mxu0
      %v9891 = vadd.f32 0.0, %v9890
      %v9892 = vpop.f32.mrf.mxu0
      %v9893 = vadd.f32 0.0, %v9892
      %9894 = vmatprep.mubr.bf16.mxu0 %v9069
      %9895 = vmatmul.mubr.bf16.gmra.mxu0 %v9068
      %v9896 = vpop.f32.mrf.mxu0
      %v9897 = vadd.f32 0.0, %v9896
      %v9898 = vpop.f32.mrf.mxu0
      %v9899 = vadd.f32 0.0, %v9898
      %v9900 = vpop.f32.mrf.mxu0
      %v9901 = vadd.f32 0.0, %v9900
      %v9902 = vpop.f32.mrf.mxu0
      %v9903 = vadd.f32 0.0, %v9902
      %9904 = vmatprep.mubr.bf16.mxu0 %v9071
      %9905 = vmatmul.mubr.bf16.gmra.mxu0 %v9070
      %v9906 = vpop.f32.mrf.mxu0
      %v9907 = vadd.f32 0.0, %v9906
      %v9908 = vpop.f32.mrf.mxu0
      %v9909 = vadd.f32 0.0, %v9908
      %v9910 = vpop.f32.mrf.mxu0
      %v9911 = vadd.f32 0.0, %v9910
      %v9912 = vpop.f32.mrf.mxu0
      %v9913 = vadd.f32 0.0, %v9912
      %9914 = vmatprep.mubr.bf16.mxu0 %v9073
      %9915 = vmatmul.mubr.bf16.gmra.mxu0 %v9072
      %v9916 = vpop.f32.mrf.mxu0
      %v9917 = vadd.f32 0.0, %v9916
      %v9918 = vpop.f32.mrf.mxu0
      %v9919 = vadd.f32 0.0, %v9918
      %v9920 = vpop.f32.mrf.mxu0
      %v9921 = vadd.f32 0.0, %v9920
      %v9922 = vpop.f32.mrf.mxu0
      %v9923 = vadd.f32 0.0, %v9922
      %9924 = vmatprep.mubr.bf16.mxu0 %v9075
      %9925 = vmatmul.mubr.bf16.gmra.mxu0 %v9074
      %v9926 = vpop.f32.mrf.mxu0
      %v9927 = vadd.f32 0.0, %v9926
      %v9928 = vpop.f32.mrf.mxu0
      %v9929 = vadd.f32 0.0, %v9928
      %v9930 = vpop.f32.mrf.mxu0
      %v9931 = vadd.f32 0.0, %v9930
      %v9932 = vpop.f32.mrf.mxu0
      %v9933 = vadd.f32 0.0, %v9932
      %9934 = vmatprep.mubr.bf16.mxu0 %v9077
      %9935 = vmatmul.mubr.bf16.gmra.mxu0 %v9076
      %v9936 = vpop.f32.mrf.mxu0
      %v9937 = vadd.f32 0.0, %v9936
      %v9938 = vpop.f32.mrf.mxu0
      %v9939 = vadd.f32 0.0, %v9938
      %v9940 = vpop.f32.mrf.mxu0
      %v9941 = vadd.f32 0.0, %v9940
      %v9942 = vpop.f32.mrf.mxu0
      %v9943 = vadd.f32 0.0, %v9942
      %9944 = vmatprep.mubr.bf16.mxu0 %v9079
      %9945 = vmatmul.mubr.bf16.gmra.mxu0 %v9078
      %v9946 = vpop.f32.mrf.mxu0
      %v9947 = vadd.f32 0.0, %v9946
      %v9948 = vpop.f32.mrf.mxu0
      %v9949 = vadd.f32 0.0, %v9948
      %v9950 = vpop.f32.mrf.mxu0
      %v9951 = vadd.f32 0.0, %v9950
      %v9952 = vpop.f32.mrf.mxu0
      %v9953 = vadd.f32 0.0, %v9952
      %9954 = vmatprep.mubr.bf16.mxu0 %v9081
      %9955 = vmatmul.mubr.bf16.gmra.mxu0 %v9080
      %v9956 = vpop.f32.mrf.mxu0
      %v9957 = vadd.f32 0.0, %v9956
      %v9958 = vpop.f32.mrf.mxu0
      %v9959 = vadd.f32 0.0, %v9958
      %v9960 = vpop.f32.mrf.mxu0
      %v9961 = vadd.f32 0.0, %v9960
      %v9962 = vpop.f32.mrf.mxu0
      %v9963 = vadd.f32 0.0, %v9962
      %9964 = vmatprep.mubr.bf16.mxu0 %v9083
      %9965 = vmatmul.mubr.bf16.gmra.mxu0 %v9082
      %v9966 = vpop.f32.mrf.mxu0
      %v9967 = vadd.f32 0.0, %v9966
      %v9968 = vpop.f32.mrf.mxu0
      %v9969 = vadd.f32 0.0, %v9968
      %v9970 = vpop.f32.mrf.mxu0
      %v9971 = vadd.f32 0.0, %v9970
      %v9972 = vpop.f32.mrf.mxu0
      %v9973 = vadd.f32 0.0, %v9972
      %9974 = vmatprep.mubr.bf16.mxu0 %v9085
      %9975 = vmatmul.mubr.bf16.gmra.mxu0 %v9084
      %v9976 = vpop.f32.mrf.mxu0
      %v9977 = vadd.f32 0.0, %v9976
      %v9978 = vpop.f32.mrf.mxu0
      %v9979 = vadd.f32 0.0, %v9978
      %v9980 = vpop.f32.mrf.mxu0
      %v9981 = vadd.f32 0.0, %v9980
      %v9982 = vpop.f32.mrf.mxu0
      %v9983 = vadd.f32 0.0, %v9982
      %9984 = vdwg.mxu0
      %v9985 = vmax.f32 %v9314, 0.0
      %v9986 = vmax.f32 %v9316, 0.0
      %v9987 = vmax.f32 %v9318, 0.0
      %v9988 = vmax.f32 %v9320, 0.0
      %v9989 = vmax.f32 %v9324, 0.0
      %v9990 = vmax.f32 %v9326, 0.0
      %v9991 = vmax.f32 %v9328, 0.0
      %v9992 = vmax.f32 %v9330, 0.0
      %v9993 = vmax.f32 %v9334, 0.0
      %v9994 = vmax.f32 %v9336, 0.0
      %v9995 = vmax.f32 %v9338, 0.0
      %v9996 = vmax.f32 %v9340, 0.0
      %v9997 = vmax.f32 %v9344, 0.0
      %v9998 = vmax.f32 %v9346, 0.0
      %v9999 = vmax.f32 %v9348, 0.0
      %v10000 = vmax.f32 %v9350, 0.0
      %v10001 = vmax.f32 %v9354, 0.0
      %v10002 = vmax.f32 %v9356, 0.0
      %v10003 = vmax.f32 %v9358, 0.0
      %v10004 = vmax.f32 %v9360, 0.0
      %v10005 = vmax.f32 %v9364, 0.0
      %v10006 = vmax.f32 %v9366, 0.0
      %v10007 = vmax.f32 %v9368, 0.0
      %v10008 = vmax.f32 %v9370, 0.0
      %v10009 = vmax.f32 %v9374, 0.0
      %v10010 = vmax.f32 %v9376, 0.0
      %v10011 = vmax.f32 %v9378, 0.0
      %v10012 = vmax.f32 %v9380, 0.0
      %v10013 = vmax.f32 %v9384, 0.0
      %v10014 = vmax.f32 %v9386, 0.0
      %v10015 = vmax.f32 %v9388, 0.0
      %v10016 = vmax.f32 %v9390, 0.0
      %v10017 = vmax.f32 %v9394, 0.0
      %v10018 = vmax.f32 %v9396, 0.0
      %v10019 = vmax.f32 %v9398, 0.0
      %v10020 = vmax.f32 %v9400, 0.0
      %v10021 = vmax.f32 %v9404, 0.0
      %v10022 = vmax.f32 %v9406, 0.0
      %v10023 = vmax.f32 %v9408, 0.0
      %v10024 = vmax.f32 %v9410, 0.0
      %v10025 = vmax.f32 %v9414, 0.0
      %v10026 = vmax.f32 %v9416, 0.0
      %v10027 = vmax.f32 %v9418, 0.0
      %v10028 = vmax.f32 %v9420, 0.0
      %v10029 = vmax.f32 %v9424, 0.0
      %v10030 = vmax.f32 %v9426, 0.0
      %v10031 = vmax.f32 %v9428, 0.0
      %v10032 = vmax.f32 %v9430, 0.0
      %v10033 = vmax.f32 %v9434, 0.0
      %v10034 = vmax.f32 %v9436, 0.0
      %v10035 = vmax.f32 %v9438, 0.0
      %v10036 = vmax.f32 %v9440, 0.0
      %v10037 = vmax.f32 %v9444, 0.0
      %v10038 = vmax.f32 %v9446, 0.0
      %v10039 = vmax.f32 %v9448, 0.0
      %v10040 = vmax.f32 %v9450, 0.0
      %v10041 = vmax.f32 %v9454, 0.0
      %v10042 = vmax.f32 %v9456, 0.0
      %v10043 = vmax.f32 %v9458, 0.0
      %v10044 = vmax.f32 %v9460, 0.0
      %v10045 = vmax.f32 %v9464, 0.0
      %v10046 = vmax.f32 %v9466, 0.0
      %v10047 = vmax.f32 %v9468, 0.0
      %v10048 = vmax.f32 %v9470, 0.0
      %v10049 = vmax.f32 %v9474, 0.0
      %v10050 = vmax.f32 %v9476, 0.0
      %v10051 = vmax.f32 %v9478, 0.0
      %v10052 = vmax.f32 %v9480, 0.0
      %v10053 = vmax.f32 %v9484, 0.0
      %v10054 = vmax.f32 %v9486, 0.0
      %v10055 = vmax.f32 %v9488, 0.0
      %v10056 = vmax.f32 %v9490, 0.0
      %v10057 = vmax.f32 %v9494, 0.0
      %v10058 = vmax.f32 %v9496, 0.0
      %v10059 = vmax.f32 %v9498, 0.0
      %v10060 = vmax.f32 %v9500, 0.0
      %v10061 = vmax.f32 %v9504, 0.0
      %v10062 = vmax.f32 %v9506, 0.0
      %v10063 = vmax.f32 %v9508, 0.0
      %v10064 = vmax.f32 %v9510, 0.0
      %v10065 = vmax.f32 %v9514, 0.0
      %v10066 = vmax.f32 %v9516, 0.0
      %v10067 = vmax.f32 %v9518, 0.0
      %v10068 = vmax.f32 %v9520, 0.0
      %v10069 = vmax.f32 %v9524, 0.0
      %v10070 = vmax.f32 %v9526, 0.0
      %v10071 = vmax.f32 %v9528, 0.0
      %v10072 = vmax.f32 %v9530, 0.0
      %v10073 = vmax.f32 %v9534, 0.0
      %v10074 = vmax.f32 %v9536, 0.0
      %v10075 = vmax.f32 %v9538, 0.0
      %v10076 = vmax.f32 %v9540, 0.0
      %v10077 = vmax.f32 %v9544, 0.0
      %v10078 = vmax.f32 %v9546, 0.0
      %v10079 = vmax.f32 %v9548, 0.0
      %v10080 = vmax.f32 %v9550, 0.0
      %v10081 = vmax.f32 %v9554, 0.0
      %v10082 = vmax.f32 %v9556, 0.0
      %v10083 = vmax.f32 %v9558, 0.0
      %v10084 = vmax.f32 %v9560, 0.0
      %v10085 = vmax.f32 %v9564, 0.0
      %v10086 = vmax.f32 %v9566, 0.0
      %v10087 = vmax.f32 %v9568, 0.0
      %v10088 = vmax.f32 %v9570, 0.0
      %v10089 = vmax.f32 %v9574, 0.0
      %v10090 = vmax.f32 %v9576, 0.0
      %v10091 = vmax.f32 %v9578, 0.0
      %v10092 = vmax.f32 %v9580, 0.0
      %v10093 = vmax.f32 %v9584, 0.0
      %v10094 = vmax.f32 %v9586, 0.0
      %v10095 = vmax.f32 %v9588, 0.0
      %v10096 = vmax.f32 %v9590, 0.0
      %v10097 = vmax.f32 %v9594, 0.0
      %v10098 = vmax.f32 %v9596, 0.0
      %v10099 = vmax.f32 %v9598, 0.0
      %v10100 = vmax.f32 %v9600, 0.0
      %v10101 = vmax.f32 %v9604, 0.0
      %v10102 = vmax.f32 %v9606, 0.0
      %v10103 = vmax.f32 %v9608, 0.0
      %v10104 = vmax.f32 %v9610, 0.0
      %v10105 = vmax.f32 %v9614, 0.0
      %v10106 = vmax.f32 %v9616, 0.0
      %v10107 = vmax.f32 %v9618, 0.0
      %v10108 = vmax.f32 %v9620, 0.0
      %v10109 = vmax.f32 %v9624, 0.0
      %v10110 = vmax.f32 %v9626, 0.0
      %v10111 = vmax.f32 %v9628, 0.0
      %v10112 = vmax.f32 %v9630, 0.0
      %v10113 = vpack.c.bf16 %v9987, %v9985
      %v10114 = vpack.c.bf16 %v9988, %v9986
      %v10115 = vpack.c.bf16 %v9991, %v9989
      %v10116 = vpack.c.bf16 %v9992, %v9990
      %v10117 = vpack.c.bf16 %v9995, %v9993
      %v10118 = vpack.c.bf16 %v9996, %v9994
      %v10119 = vpack.c.bf16 %v9999, %v9997
      %v10120 = vpack.c.bf16 %v10000, %v9998
      %v10121 = vpack.c.bf16 %v10003, %v10001
      %v10122 = vpack.c.bf16 %v10004, %v10002
      %v10123 = vpack.c.bf16 %v10007, %v10005
      %v10124 = vpack.c.bf16 %v10008, %v10006
      %v10125 = vpack.c.bf16 %v10011, %v10009
      %v10126 = vpack.c.bf16 %v10012, %v10010
      %v10127 = vpack.c.bf16 %v10015, %v10013
      %v10128 = vpack.c.bf16 %v10016, %v10014
      %v10129 = vpack.c.bf16 %v10019, %v10017
      %v10130 = vpack.c.bf16 %v10020, %v10018
      %v10131 = vpack.c.bf16 %v10023, %v10021
      %v10132 = vpack.c.bf16 %v10024, %v10022
      %v10133 = vpack.c.bf16 %v10027, %v10025
      %v10134 = vpack.c.bf16 %v10028, %v10026
      %v10135 = vpack.c.bf16 %v10031, %v10029
      %v10136 = vpack.c.bf16 %v10032, %v10030
      %v10137 = vpack.c.bf16 %v10035, %v10033
      %v10138 = vpack.c.bf16 %v10036, %v10034
      %v10139 = vpack.c.bf16 %v10039, %v10037
      %v10140 = vpack.c.bf16 %v10040, %v10038
      %v10141 = vpack.c.bf16 %v10043, %v10041
      %v10142 = vpack.c.bf16 %v10044, %v10042
      %v10143 = vpack.c.bf16 %v10047, %v10045
      %v10144 = vpack.c.bf16 %v10048, %v10046
      %v10145 = vpack.c.bf16 %v10051, %v10049
      %v10146 = vpack.c.bf16 %v10052, %v10050
      %v10147 = vpack.c.bf16 %v10055, %v10053
      %v10148 = vpack.c.bf16 %v10056, %v10054
      %v10149 = vpack.c.bf16 %v10059, %v10057
      %v10150 = vpack.c.bf16 %v10060, %v10058
      %v10151 = vpack.c.bf16 %v10063, %v10061
      %v10152 = vpack.c.bf16 %v10064, %v10062
      %v10153 = vpack.c.bf16 %v10067, %v10065
      %v10154 = vpack.c.bf16 %v10068, %v10066
      %v10155 = vpack.c.bf16 %v10071, %v10069
      %v10156 = vpack.c.bf16 %v10072, %v10070
      %v10157 = vpack.c.bf16 %v10075, %v10073
      %v10158 = vpack.c.bf16 %v10076, %v10074
      %v10159 = vpack.c.bf16 %v10079, %v10077
      %v10160 = vpack.c.bf16 %v10080, %v10078
      %v10161 = vpack.c.bf16 %v10083, %v10081
      %v10162 = vpack.c.bf16 %v10084, %v10082
      %v10163 = vpack.c.bf16 %v10087, %v10085
      %v10164 = vpack.c.bf16 %v10088, %v10086
      %v10165 = vpack.c.bf16 %v10091, %v10089
      %v10166 = vpack.c.bf16 %v10092, %v10090
      %v10167 = vpack.c.bf16 %v10095, %v10093
      %v10168 = vpack.c.bf16 %v10096, %v10094
      %v10169 = vpack.c.bf16 %v10099, %v10097
      %v10170 = vpack.c.bf16 %v10100, %v10098
      %v10171 = vpack.c.bf16 %v10103, %v10101
      %v10172 = vpack.c.bf16 %v10104, %v10102
      %v10173 = vpack.c.bf16 %v10107, %v10105
      %v10174 = vpack.c.bf16 %v10108, %v10106
      %v10175 = vpack.c.bf16 %v10111, %v10109
      %v10176 = vpack.c.bf16 %v10112, %v10110
      %v10177 = vmax.f32 %v9667, 0.0
      %v10178 = vmax.f32 %v9669, 0.0
      %v10179 = vmax.f32 %v9671, 0.0
      %v10180 = vmax.f32 %v9673, 0.0
      %v10181 = vmax.f32 %v9677, 0.0
      %v10182 = vmax.f32 %v9679, 0.0
      %v10183 = vmax.f32 %v9681, 0.0
      %v10184 = vmax.f32 %v9683, 0.0
      %v10185 = vmax.f32 %v9687, 0.0
      %v10186 = vmax.f32 %v9689, 0.0
      %v10187 = vmax.f32 %v9691, 0.0
      %v10188 = vmax.f32 %v9693, 0.0
      %v10189 = vmax.f32 %v9697, 0.0
      %v10190 = vmax.f32 %v9699, 0.0
      %v10191 = vmax.f32 %v9701, 0.0
      %v10192 = vmax.f32 %v9703, 0.0
      %v10193 = vmax.f32 %v9707, 0.0
      %v10194 = vmax.f32 %v9709, 0.0
      %v10195 = vmax.f32 %v9711, 0.0
      %v10196 = vmax.f32 %v9713, 0.0
      %v10197 = vmax.f32 %v9717, 0.0
      %v10198 = vmax.f32 %v9719, 0.0
      %v10199 = vmax.f32 %v9721, 0.0
      %v10200 = vmax.f32 %v9723, 0.0
      %v10201 = vmax.f32 %v9727, 0.0
      %v10202 = vmax.f32 %v9729, 0.0
      %v10203 = vmax.f32 %v9731, 0.0
      %v10204 = vmax.f32 %v9733, 0.0
      %v10205 = vmax.f32 %v9737, 0.0
      %v10206 = vmax.f32 %v9739, 0.0
      %v10207 = vmax.f32 %v9741, 0.0
      %v10208 = vmax.f32 %v9743, 0.0
      %v10209 = vmax.f32 %v9747, 0.0
      %v10210 = vmax.f32 %v9749, 0.0
      %v10211 = vmax.f32 %v9751, 0.0
      %v10212 = vmax.f32 %v9753, 0.0
      %v10213 = vmax.f32 %v9757, 0.0
      %v10214 = vmax.f32 %v9759, 0.0
      %v10215 = vmax.f32 %v9761, 0.0
      %v10216 = vmax.f32 %v9763, 0.0
      %v10217 = vmax.f32 %v9767, 0.0
      %v10218 = vmax.f32 %v9769, 0.0
      %v10219 = vmax.f32 %v9771, 0.0
      %v10220 = vmax.f32 %v9773, 0.0
      %v10221 = vmax.f32 %v9777, 0.0
      %v10222 = vmax.f32 %v9779, 0.0
      %v10223 = vmax.f32 %v9781, 0.0
      %v10224 = vmax.f32 %v9783, 0.0
      %v10225 = vmax.f32 %v9787, 0.0
      %v10226 = vmax.f32 %v9789, 0.0
      %v10227 = vmax.f32 %v9791, 0.0
      %v10228 = vmax.f32 %v9793, 0.0
      %v10229 = vmax.f32 %v9797, 0.0
      %v10230 = vmax.f32 %v9799, 0.0
      %v10231 = vmax.f32 %v9801, 0.0
      %v10232 = vmax.f32 %v9803, 0.0
      %v10233 = vmax.f32 %v9807, 0.0
      %v10234 = vmax.f32 %v9809, 0.0
      %v10235 = vmax.f32 %v9811, 0.0
      %v10236 = vmax.f32 %v9813, 0.0
      %v10237 = vmax.f32 %v9817, 0.0
      %v10238 = vmax.f32 %v9819, 0.0
      %v10239 = vmax.f32 %v9821, 0.0
      %v10240 = vmax.f32 %v9823, 0.0
      %v10241 = vmax.f32 %v9827, 0.0
      %v10242 = vmax.f32 %v9829, 0.0
      %v10243 = vmax.f32 %v9831, 0.0
      %v10244 = vmax.f32 %v9833, 0.0
      %v10245 = vmax.f32 %v9837, 0.0
      %v10246 = vmax.f32 %v9839, 0.0
      %v10247 = vmax.f32 %v9841, 0.0
      %v10248 = vmax.f32 %v9843, 0.0
      %v10249 = vmax.f32 %v9847, 0.0
      %v10250 = vmax.f32 %v9849, 0.0
      %v10251 = vmax.f32 %v9851, 0.0
      %v10252 = vmax.f32 %v9853, 0.0
      %v10253 = vmax.f32 %v9857, 0.0
      %v10254 = vmax.f32 %v9859, 0.0
      %v10255 = vmax.f32 %v9861, 0.0
      %v10256 = vmax.f32 %v9863, 0.0
      %v10257 = vmax.f32 %v9867, 0.0
      %v10258 = vmax.f32 %v9869, 0.0
      %v10259 = vmax.f32 %v9871, 0.0
      %v10260 = vmax.f32 %v9873, 0.0
      %v10261 = vmax.f32 %v9877, 0.0
      %v10262 = vmax.f32 %v9879, 0.0
      %v10263 = vmax.f32 %v9881, 0.0
      %v10264 = vmax.f32 %v9883, 0.0
      %v10265 = vmax.f32 %v9887, 0.0
      %v10266 = vmax.f32 %v9889, 0.0
      %v10267 = vmax.f32 %v9891, 0.0
      %v10268 = vmax.f32 %v9893, 0.0
      %v10269 = vmax.f32 %v9897, 0.0
      %v10270 = vmax.f32 %v9899, 0.0
      %v10271 = vmax.f32 %v9901, 0.0
      %v10272 = vmax.f32 %v9903, 0.0
      %v10273 = vmax.f32 %v9907, 0.0
      %v10274 = vmax.f32 %v9909, 0.0
      %v10275 = vmax.f32 %v9911, 0.0
      %v10276 = vmax.f32 %v9913, 0.0
      %v10277 = vmax.f32 %v9917, 0.0
      %v10278 = vmax.f32 %v9919, 0.0
      %v10279 = vmax.f32 %v9921, 0.0
      %v10280 = vmax.f32 %v9923, 0.0
      %v10281 = vmax.f32 %v9927, 0.0
      %v10282 = vmax.f32 %v9929, 0.0
      %v10283 = vmax.f32 %v9931, 0.0
      %v10284 = vmax.f32 %v9933, 0.0
      %v10285 = vmax.f32 %v9937, 0.0
      %v10286 = vmax.f32 %v9939, 0.0
      %v10287 = vmax.f32 %v9941, 0.0
      %v10288 = vmax.f32 %v9943, 0.0
      %v10289 = vmax.f32 %v9947, 0.0
      %v10290 = vmax.f32 %v9949, 0.0
      %v10291 = vmax.f32 %v9951, 0.0
      %v10292 = vmax.f32 %v9953, 0.0
      %v10293 = vmax.f32 %v9957, 0.0
      %v10294 = vmax.f32 %v9959, 0.0
      %v10295 = vmax.f32 %v9961, 0.0
      %v10296 = vmax.f32 %v9963, 0.0
      %v10297 = vmax.f32 %v9967, 0.0
      %v10298 = vmax.f32 %v9969, 0.0
      %v10299 = vmax.f32 %v9971, 0.0
      %v10300 = vmax.f32 %v9973, 0.0
      %v10301 = vmax.f32 %v9977, 0.0
      %v10302 = vmax.f32 %v9979, 0.0
      %v10303 = vmax.f32 %v9981, 0.0
      %v10304 = vmax.f32 %v9983, 0.0
      %v10305 = vpack.c.bf16 %v10179, %v10177
      %v10306 = vpack.c.bf16 %v10180, %v10178
      %v10307 = vpack.c.bf16 %v10183, %v10181
      %v10308 = vpack.c.bf16 %v10184, %v10182
      %v10309 = vpack.c.bf16 %v10187, %v10185
      %v10310 = vpack.c.bf16 %v10188, %v10186
      %v10311 = vpack.c.bf16 %v10191, %v10189
      %v10312 = vpack.c.bf16 %v10192, %v10190
      %v10313 = vpack.c.bf16 %v10195, %v10193
      %v10314 = vpack.c.bf16 %v10196, %v10194
      %v10315 = vpack.c.bf16 %v10199, %v10197
      %v10316 = vpack.c.bf16 %v10200, %v10198
      %v10317 = vpack.c.bf16 %v10203, %v10201
      %v10318 = vpack.c.bf16 %v10204, %v10202
      %v10319 = vpack.c.bf16 %v10207, %v10205
      %v10320 = vpack.c.bf16 %v10208, %v10206
      %v10321 = vpack.c.bf16 %v10211, %v10209
      %v10322 = vpack.c.bf16 %v10212, %v10210
      %v10323 = vpack.c.bf16 %v10215, %v10213
      %v10324 = vpack.c.bf16 %v10216, %v10214
      %v10325 = vpack.c.bf16 %v10219, %v10217
      %v10326 = vpack.c.bf16 %v10220, %v10218
      %v10327 = vpack.c.bf16 %v10223, %v10221
      %v10328 = vpack.c.bf16 %v10224, %v10222
      %v10329 = vpack.c.bf16 %v10227, %v10225
      %v10330 = vpack.c.bf16 %v10228, %v10226
      %v10331 = vpack.c.bf16 %v10231, %v10229
      %v10332 = vpack.c.bf16 %v10232, %v10230
      %v10333 = vpack.c.bf16 %v10235, %v10233
      %v10334 = vpack.c.bf16 %v10236, %v10234
      %v10335 = vpack.c.bf16 %v10239, %v10237
      %v10336 = vpack.c.bf16 %v10240, %v10238
      %v10337 = vpack.c.bf16 %v10243, %v10241
      %v10338 = vpack.c.bf16 %v10244, %v10242
      %v10339 = vpack.c.bf16 %v10247, %v10245
      %v10340 = vpack.c.bf16 %v10248, %v10246
      %v10341 = vpack.c.bf16 %v10251, %v10249
      %v10342 = vpack.c.bf16 %v10252, %v10250
      %v10343 = vpack.c.bf16 %v10255, %v10253
      %v10344 = vpack.c.bf16 %v10256, %v10254
      %v10345 = vpack.c.bf16 %v10259, %v10257
      %v10346 = vpack.c.bf16 %v10260, %v10258
      %v10347 = vpack.c.bf16 %v10263, %v10261
      %v10348 = vpack.c.bf16 %v10264, %v10262
      %v10349 = vpack.c.bf16 %v10267, %v10265
      %v10350 = vpack.c.bf16 %v10268, %v10266
      %v10351 = vpack.c.bf16 %v10271, %v10269
      %v10352 = vpack.c.bf16 %v10272, %v10270
      %v10353 = vpack.c.bf16 %v10275, %v10273
      %v10354 = vpack.c.bf16 %v10276, %v10274
      %v10355 = vpack.c.bf16 %v10279, %v10277
      %v10356 = vpack.c.bf16 %v10280, %v10278
      %v10357 = vpack.c.bf16 %v10283, %v10281
      %v10358 = vpack.c.bf16 %v10284, %v10282
      %v10359 = vpack.c.bf16 %v10287, %v10285
      %v10360 = vpack.c.bf16 %v10288, %v10286
      %v10361 = vpack.c.bf16 %v10291, %v10289
      %v10362 = vpack.c.bf16 %v10292, %v10290
      %v10363 = vpack.c.bf16 %v10295, %v10293
      %v10364 = vpack.c.bf16 %v10296, %v10294
      %v10365 = vpack.c.bf16 %v10299, %v10297
      %v10366 = vpack.c.bf16 %v10300, %v10298
      %v10367 = vpack.c.bf16 %v10303, %v10301
      %v10368 = vpack.c.bf16 %v10304, %v10302
      %v10369 = vld [vmem:[%s3] sm:$0xf]
      %v10370 = vld [vmem:[%s3 + $0x4] sm:$0xf]
      %v10371 = vld [vmem:[%s3 + $0x8] sm:$0xf]
      %v10372 = vld [vmem:[%s3 + $0xc] sm:$0xf]
      %v10373 = vld [vmem:[%s3 + $0x10] sm:$0xf]
      %v10374 = vld [vmem:[%s3 + $0x14] sm:$0xf]
      %v10375 = vld [vmem:[%s3 + $0x18] sm:$0xf]
      %v10376 = vld [vmem:[%s3 + $0x1c] sm:$0xf]
      %v10377 = vld [vmem:[%s3 + $0x20] sm:$0xf]
      %v10378 = vld [vmem:[%s3 + $0x24] sm:$0xf]
      %v10379 = vld [vmem:[%s3 + $0x28] sm:$0xf]
      %v10380 = vld [vmem:[%s3 + $0x2c] sm:$0xf]
      %v10381 = vld [vmem:[%s3 + $0x30] sm:$0xf]
      %v10382 = vld [vmem:[%s3 + $0x34] sm:$0xf]
      %v10383 = vld [vmem:[%s3 + $0x38] sm:$0xf]
      %v10384 = vld [vmem:[%s3 + $0x3c] sm:$0xf]
      %v10385 = vld [vmem:[%s3 + $0x40] sm:$0xf]
      %v10386 = vld [vmem:[%s3 + $0x44] sm:$0xf]
      %v10387 = vld [vmem:[%s3 + $0x48] sm:$0xf]
      %v10388 = vld [vmem:[%s3 + $0x4c] sm:$0xf]
      %v10389 = vld [vmem:[%s3 + $0x50] sm:$0xf]
      %v10390 = vld [vmem:[%s3 + $0x54] sm:$0xf]
      %v10391 = vld [vmem:[%s3 + $0x58] sm:$0xf]
      %v10392 = vld [vmem:[%s3 + $0x5c] sm:$0xf]
      %v10393 = vld [vmem:[%s3 + $0x60] sm:$0xf]
      %v10394 = vld [vmem:[%s3 + $0x64] sm:$0xf]
      %v10395 = vld [vmem:[%s3 + $0x68] sm:$0xf]
      %v10396 = vld [vmem:[%s3 + $0x6c] sm:$0xf]
      %v10397 = vld [vmem:[%s3 + $0x70] sm:$0xf]
      %v10398 = vld [vmem:[%s3 + $0x74] sm:$0xf]
      %v10399 = vld [vmem:[%s3 + $0x78] sm:$0xf]
      %v10400 = vld [vmem:[%s3 + $0x7c] sm:$0xf]
      %v10433 = vunpack.c.l.b16 %v10369
      %v10434 = vunpack.c.l.b16 %v10370
      %v10435 = vunpack.c.l.b16 %v10371
      %v10436 = vunpack.c.l.b16 %v10372
      %v10437 = vunpack.c.l.b16 %v10373
      %v10438 = vunpack.c.l.b16 %v10374
      %v10439 = vunpack.c.l.b16 %v10375
      %v10440 = vunpack.c.l.b16 %v10376
      %v10441 = vunpack.c.l.b16 %v10377
      %v10442 = vunpack.c.l.b16 %v10378
      %v10443 = vunpack.c.l.b16 %v10379
      %v10444 = vunpack.c.l.b16 %v10380
      %v10445 = vunpack.c.l.b16 %v10381
      %v10446 = vunpack.c.l.b16 %v10382
      %v10447 = vunpack.c.l.b16 %v10383
      %v10448 = vunpack.c.l.b16 %v10384
      %v10449 = vunpack.c.l.b16 %v10385
      %v10450 = vunpack.c.l.b16 %v10386
      %v10451 = vunpack.c.l.b16 %v10387
      %v10452 = vunpack.c.l.b16 %v10388
      %v10453 = vunpack.c.l.b16 %v10389
      %v10454 = vunpack.c.l.b16 %v10390
      %v10455 = vunpack.c.l.b16 %v10391
      %v10456 = vunpack.c.l.b16 %v10392
      %v10457 = vunpack.c.l.b16 %v10393
      %v10458 = vunpack.c.l.b16 %v10394
      %v10459 = vunpack.c.l.b16 %v10395
      %v10460 = vunpack.c.l.b16 %v10396
      %v10461 = vunpack.c.l.b16 %v10397
      %v10462 = vunpack.c.l.b16 %v10398
      %v10463 = vunpack.c.l.b16 %v10399
      %v10464 = vunpack.c.l.b16 %v10400
      %v10465 = vpack.c.b16 %v10434, %v10433
      %v10466 = vpack.c.b16 %v10436, %v10435
      %v10467 = vpack.c.b16 %v10438, %v10437
      %v10468 = vpack.c.b16 %v10440, %v10439
      %v10469 = vpack.c.b16 %v10442, %v10441
      %v10470 = vpack.c.b16 %v10444, %v10443
      %v10471 = vpack.c.b16 %v10446, %v10445
      %v10472 = vpack.c.b16 %v10448, %v10447
      %v10473 = vpack.c.b16 %v10450, %v10449
      %v10474 = vpack.c.b16 %v10452, %v10451
      %v10475 = vpack.c.b16 %v10454, %v10453
      %v10476 = vpack.c.b16 %v10456, %v10455
      %v10477 = vpack.c.b16 %v10458, %v10457
      %v10478 = vpack.c.b16 %v10460, %v10459
      %v10479 = vpack.c.b16 %v10462, %v10461
      %v10480 = vpack.c.b16 %v10464, %v10463
      %10497 = vmatprep.subr.bf16.mxu0 0
      %10498 = vmatpush1.bf16.msra.mxu0 %v10472
      %10499 = vmatprep.subr.bf16.mxu0 0
      %10500 = vmatpush1.bf16.msra.mxu0 %v10471
      %10501 = vmatprep.subr.bf16.mxu0 0
      %10502 = vmatpush1.bf16.msra.mxu0 %v10470
      %10503 = vmatprep.subr.bf16.mxu0 0
      %10504 = vmatpush1.bf16.msra.mxu0 %v10469
      %10505 = vmatprep.subr.bf16.mxu0 0
      %10506 = vmatpush1.bf16.msra.mxu0 %v10468
      %10507 = vmatprep.subr.bf16.mxu0 0
      %10508 = vmatpush1.bf16.msra.mxu0 %v10467
      %10509 = vmatprep.subr.bf16.mxu0 0
      %10510 = vmatpush1.bf16.msra.mxu0 %v10466
      %10511 = vmatprep.subr.bf16.mxu0 0
      %10512 = vmatpush1.bf16.msra.mxu0 %v10465
      %10513 = vmatprep.subr.bf16.mxu0 0
      %10514 = vmatpush2.bf16.msra.mxu0 %v10480
      %10515 = vmatprep.subr.bf16.mxu0 0
      %10516 = vmatpush2.bf16.msra.mxu0 %v10479
      %10517 = vmatprep.subr.bf16.mxu0 0
      %10518 = vmatpush2.bf16.msra.mxu0 %v10478
      %10519 = vmatprep.subr.bf16.mxu0 0
      %10520 = vmatpush2.bf16.msra.mxu0 %v10477
      %10521 = vmatprep.subr.bf16.mxu0 0
      %10522 = vmatpush2.bf16.msra.mxu0 %v10476
      %10523 = vmatprep.subr.bf16.mxu0 0
      %10524 = vmatpush2.bf16.msra.mxu0 %v10475
      %10525 = vmatprep.subr.bf16.mxu0 0
      %10526 = vmatpush2.bf16.msra.mxu0 %v10474
      %10527 = vmatprep.subr.bf16.mxu0 0
      %10528 = vmatpush2.bf16.msra.mxu0 %v10473
      %10529 = vmatprep.mubr.bf16.mxu0 %v10114
      %10530 = vmatmul.mubr.bf16.gmra.mxu0 %v10113
      %v10531 = vpop.f32.mrf.mxu0
      %v10532 = vadd.f32 0.0, %v10531
      %v10533 = vpop.f32.mrf.mxu0
      %v10534 = vpop.f32.mrf.mxu0
      %v10535 = vadd.f32 0.0, %v10534
      %v10536 = vpop.f32.mrf.mxu0
      %10537 = vmatprep.mubr.bf16.mxu0 %v10116
      %10538 = vmatmul.mubr.bf16.gmra.mxu0 %v10115
      %v10539 = vpop.f32.mrf.mxu0
      %v10540 = vadd.f32 0.0, %v10539
      %v10541 = vpop.f32.mrf.mxu0
      %v10542 = vpop.f32.mrf.mxu0
      %v10543 = vadd.f32 0.0, %v10542
      %v10544 = vpop.f32.mrf.mxu0
      %10545 = vmatprep.mubr.bf16.mxu0 %v10118
      %10546 = vmatmul.mubr.bf16.gmra.mxu0 %v10117
      %v10547 = vpop.f32.mrf.mxu0
      %v10548 = vadd.f32 0.0, %v10547
      %v10549 = vpop.f32.mrf.mxu0
      %v10550 = vpop.f32.mrf.mxu0
      %v10551 = vadd.f32 0.0, %v10550
      %v10552 = vpop.f32.mrf.mxu0
      %10553 = vmatprep.mubr.bf16.mxu0 %v10120
      %10554 = vmatmul.mubr.bf16.gmra.mxu0 %v10119
      %v10555 = vpop.f32.mrf.mxu0
      %v10556 = vadd.f32 0.0, %v10555
      %v10557 = vpop.f32.mrf.mxu0
      %v10558 = vpop.f32.mrf.mxu0
      %v10559 = vadd.f32 0.0, %v10558
      %v10560 = vpop.f32.mrf.mxu0
      %10561 = vmatprep.mubr.bf16.mxu0 %v10122
      %10562 = vmatmul.mubr.bf16.gmra.mxu0 %v10121
      %v10563 = vpop.f32.mrf.mxu0
      %v10564 = vadd.f32 0.0, %v10563
      %v10565 = vpop.f32.mrf.mxu0
      %v10566 = vpop.f32.mrf.mxu0
      %v10567 = vadd.f32 0.0, %v10566
      %v10568 = vpop.f32.mrf.mxu0
      %10569 = vmatprep.mubr.bf16.mxu0 %v10124
      %10570 = vmatmul.mubr.bf16.gmra.mxu0 %v10123
      %v10571 = vpop.f32.mrf.mxu0
      %v10572 = vadd.f32 0.0, %v10571
      %v10573 = vpop.f32.mrf.mxu0
      %v10574 = vpop.f32.mrf.mxu0
      %v10575 = vadd.f32 0.0, %v10574
      %v10576 = vpop.f32.mrf.mxu0
      %10577 = vmatprep.mubr.bf16.mxu0 %v10126
      %10578 = vmatmul.mubr.bf16.gmra.mxu0 %v10125
      %v10579 = vpop.f32.mrf.mxu0
      %v10580 = vadd.f32 0.0, %v10579
      %v10581 = vpop.f32.mrf.mxu0
      %v10582 = vpop.f32.mrf.mxu0
      %v10583 = vadd.f32 0.0, %v10582
      %v10584 = vpop.f32.mrf.mxu0
      %10585 = vmatprep.mubr.bf16.mxu0 %v10128
      %10586 = vmatmul.mubr.bf16.gmra.mxu0 %v10127
      %v10587 = vpop.f32.mrf.mxu0
      %v10588 = vadd.f32 0.0, %v10587
      %v10589 = vpop.f32.mrf.mxu0
      %v10590 = vpop.f32.mrf.mxu0
      %v10591 = vadd.f32 0.0, %v10590
      %v10592 = vpop.f32.mrf.mxu0
      %10593 = vmatprep.mubr.bf16.mxu0 %v10130
      %10594 = vmatmul.mubr.bf16.gmra.mxu0 %v10129
      %v10595 = vpop.f32.mrf.mxu0
      %v10596 = vadd.f32 0.0, %v10595
      %v10597 = vpop.f32.mrf.mxu0
      %v10598 = vpop.f32.mrf.mxu0
      %v10599 = vadd.f32 0.0, %v10598
      %v10600 = vpop.f32.mrf.mxu0
      %10601 = vmatprep.mubr.bf16.mxu0 %v10132
      %10602 = vmatmul.mubr.bf16.gmra.mxu0 %v10131
      %v10603 = vpop.f32.mrf.mxu0
      %v10604 = vadd.f32 0.0, %v10603
      %v10605 = vpop.f32.mrf.mxu0
      %v10606 = vpop.f32.mrf.mxu0
      %v10607 = vadd.f32 0.0, %v10606
      %v10608 = vpop.f32.mrf.mxu0
      %10609 = vmatprep.mubr.bf16.mxu0 %v10134
      %10610 = vmatmul.mubr.bf16.gmra.mxu0 %v10133
      %v10611 = vpop.f32.mrf.mxu0
      %v10612 = vadd.f32 0.0, %v10611
      %v10613 = vpop.f32.mrf.mxu0
      %v10614 = vpop.f32.mrf.mxu0
      %v10615 = vadd.f32 0.0, %v10614
      %v10616 = vpop.f32.mrf.mxu0
      %10617 = vmatprep.mubr.bf16.mxu0 %v10136
      %10618 = vmatmul.mubr.bf16.gmra.mxu0 %v10135
      %v10619 = vpop.f32.mrf.mxu0
      %v10620 = vadd.f32 0.0, %v10619
      %v10621 = vpop.f32.mrf.mxu0
      %v10622 = vpop.f32.mrf.mxu0
      %v10623 = vadd.f32 0.0, %v10622
      %v10624 = vpop.f32.mrf.mxu0
      %10625 = vmatprep.mubr.bf16.mxu0 %v10138
      %10626 = vmatmul.mubr.bf16.gmra.mxu0 %v10137
      %v10627 = vpop.f32.mrf.mxu0
      %v10628 = vadd.f32 0.0, %v10627
      %v10629 = vpop.f32.mrf.mxu0
      %v10630 = vpop.f32.mrf.mxu0
      %v10631 = vadd.f32 0.0, %v10630
      %v10632 = vpop.f32.mrf.mxu0
      %10633 = vmatprep.mubr.bf16.mxu0 %v10140
      %10634 = vmatmul.mubr.bf16.gmra.mxu0 %v10139
      %v10635 = vpop.f32.mrf.mxu0
      %v10636 = vadd.f32 0.0, %v10635
      %v10637 = vpop.f32.mrf.mxu0
      %v10638 = vpop.f32.mrf.mxu0
      %v10639 = vadd.f32 0.0, %v10638
      %v10640 = vpop.f32.mrf.mxu0
      %10641 = vmatprep.mubr.bf16.mxu0 %v10142
      %10642 = vmatmul.mubr.bf16.gmra.mxu0 %v10141
      %v10643 = vpop.f32.mrf.mxu0
      %v10644 = vadd.f32 0.0, %v10643
      %v10645 = vpop.f32.mrf.mxu0
      %v10646 = vpop.f32.mrf.mxu0
      %v10647 = vadd.f32 0.0, %v10646
      %v10648 = vpop.f32.mrf.mxu0
      %10649 = vmatprep.mubr.bf16.mxu0 %v10144
      %10650 = vmatmul.mubr.bf16.gmra.mxu0 %v10143
      %v10651 = vpop.f32.mrf.mxu0
      %v10652 = vadd.f32 0.0, %v10651
      %v10653 = vpop.f32.mrf.mxu0
      %v10654 = vpop.f32.mrf.mxu0
      %v10655 = vadd.f32 0.0, %v10654
      %v10656 = vpop.f32.mrf.mxu0
      %10657 = vmatprep.mubr.bf16.mxu0 %v10146
      %10658 = vmatmul.mubr.bf16.gmra.mxu0 %v10145
      %v10659 = vpop.f32.mrf.mxu0
      %v10660 = vadd.f32 0.0, %v10659
      %v10661 = vpop.f32.mrf.mxu0
      %v10662 = vpop.f32.mrf.mxu0
      %v10663 = vadd.f32 0.0, %v10662
      %v10664 = vpop.f32.mrf.mxu0
      %10665 = vmatprep.mubr.bf16.mxu0 %v10148
      %10666 = vmatmul.mubr.bf16.gmra.mxu0 %v10147
      %v10667 = vpop.f32.mrf.mxu0
      %v10668 = vadd.f32 0.0, %v10667
      %v10669 = vpop.f32.mrf.mxu0
      %v10670 = vpop.f32.mrf.mxu0
      %v10671 = vadd.f32 0.0, %v10670
      %v10672 = vpop.f32.mrf.mxu0
      %10673 = vmatprep.mubr.bf16.mxu0 %v10150
      %10674 = vmatmul.mubr.bf16.gmra.mxu0 %v10149
      %v10675 = vpop.f32.mrf.mxu0
      %v10676 = vadd.f32 0.0, %v10675
      %v10677 = vpop.f32.mrf.mxu0
      %v10678 = vpop.f32.mrf.mxu0
      %v10679 = vadd.f32 0.0, %v10678
      %v10680 = vpop.f32.mrf.mxu0
      %10681 = vmatprep.mubr.bf16.mxu0 %v10152
      %10682 = vmatmul.mubr.bf16.gmra.mxu0 %v10151
      %v10683 = vpop.f32.mrf.mxu0
      %v10684 = vadd.f32 0.0, %v10683
      %v10685 = vpop.f32.mrf.mxu0
      %v10686 = vpop.f32.mrf.mxu0
      %v10687 = vadd.f32 0.0, %v10686
      %v10688 = vpop.f32.mrf.mxu0
      %10689 = vmatprep.mubr.bf16.mxu0 %v10154
      %10690 = vmatmul.mubr.bf16.gmra.mxu0 %v10153
      %v10691 = vpop.f32.mrf.mxu0
      %v10692 = vadd.f32 0.0, %v10691
      %v10693 = vpop.f32.mrf.mxu0
      %v10694 = vpop.f32.mrf.mxu0
      %v10695 = vadd.f32 0.0, %v10694
      %v10696 = vpop.f32.mrf.mxu0
      %10697 = vmatprep.mubr.bf16.mxu0 %v10156
      %10698 = vmatmul.mubr.bf16.gmra.mxu0 %v10155
      %v10699 = vpop.f32.mrf.mxu0
      %v10700 = vadd.f32 0.0, %v10699
      %v10701 = vpop.f32.mrf.mxu0
      %v10702 = vpop.f32.mrf.mxu0
      %v10703 = vadd.f32 0.0, %v10702
      %v10704 = vpop.f32.mrf.mxu0
      %10705 = vmatprep.mubr.bf16.mxu0 %v10158
      %10706 = vmatmul.mubr.bf16.gmra.mxu0 %v10157
      %v10707 = vpop.f32.mrf.mxu0
      %v10708 = vadd.f32 0.0, %v10707
      %v10709 = vpop.f32.mrf.mxu0
      %v10710 = vpop.f32.mrf.mxu0
      %v10711 = vadd.f32 0.0, %v10710
      %v10712 = vpop.f32.mrf.mxu0
      %10713 = vmatprep.mubr.bf16.mxu0 %v10160
      %10714 = vmatmul.mubr.bf16.gmra.mxu0 %v10159
      %v10715 = vpop.f32.mrf.mxu0
      %v10716 = vadd.f32 0.0, %v10715
      %v10717 = vpop.f32.mrf.mxu0
      %v10718 = vpop.f32.mrf.mxu0
      %v10719 = vadd.f32 0.0, %v10718
      %v10720 = vpop.f32.mrf.mxu0
      %10721 = vmatprep.mubr.bf16.mxu0 %v10162
      %10722 = vmatmul.mubr.bf16.gmra.mxu0 %v10161
      %v10723 = vpop.f32.mrf.mxu0
      %v10724 = vadd.f32 0.0, %v10723
      %v10725 = vpop.f32.mrf.mxu0
      %v10726 = vpop.f32.mrf.mxu0
      %v10727 = vadd.f32 0.0, %v10726
      %v10728 = vpop.f32.mrf.mxu0
      %10729 = vmatprep.mubr.bf16.mxu0 %v10164
      %10730 = vmatmul.mubr.bf16.gmra.mxu0 %v10163
      %v10731 = vpop.f32.mrf.mxu0
      %v10732 = vadd.f32 0.0, %v10731
      %v10733 = vpop.f32.mrf.mxu0
      %v10734 = vpop.f32.mrf.mxu0
      %v10735 = vadd.f32 0.0, %v10734
      %v10736 = vpop.f32.mrf.mxu0
      %10737 = vmatprep.mubr.bf16.mxu0 %v10166
      %10738 = vmatmul.mubr.bf16.gmra.mxu0 %v10165
      %v10739 = vpop.f32.mrf.mxu0
      %v10740 = vadd.f32 0.0, %v10739
      %v10741 = vpop.f32.mrf.mxu0
      %v10742 = vpop.f32.mrf.mxu0
      %v10743 = vadd.f32 0.0, %v10742
      %v10744 = vpop.f32.mrf.mxu0
      %10745 = vmatprep.mubr.bf16.mxu0 %v10168
      %10746 = vmatmul.mubr.bf16.gmra.mxu0 %v10167
      %v10747 = vpop.f32.mrf.mxu0
      %v10748 = vadd.f32 0.0, %v10747
      %v10749 = vpop.f32.mrf.mxu0
      %v10750 = vpop.f32.mrf.mxu0
      %v10751 = vadd.f32 0.0, %v10750
      %v10752 = vpop.f32.mrf.mxu0
      %10753 = vmatprep.mubr.bf16.mxu0 %v10170
      %10754 = vmatmul.mubr.bf16.gmra.mxu0 %v10169
      %v10755 = vpop.f32.mrf.mxu0
      %v10756 = vadd.f32 0.0, %v10755
      %v10757 = vpop.f32.mrf.mxu0
      %v10758 = vpop.f32.mrf.mxu0
      %v10759 = vadd.f32 0.0, %v10758
      %v10760 = vpop.f32.mrf.mxu0
      %10761 = vmatprep.mubr.bf16.mxu0 %v10172
      %10762 = vmatmul.mubr.bf16.gmra.mxu0 %v10171
      %v10763 = vpop.f32.mrf.mxu0
      %v10764 = vadd.f32 0.0, %v10763
      %v10765 = vpop.f32.mrf.mxu0
      %v10766 = vpop.f32.mrf.mxu0
      %v10767 = vadd.f32 0.0, %v10766
      %v10768 = vpop.f32.mrf.mxu0
      %10769 = vmatprep.mubr.bf16.mxu0 %v10174
      %10770 = vmatmul.mubr.bf16.gmra.mxu0 %v10173
      %v10771 = vpop.f32.mrf.mxu0
      %v10772 = vadd.f32 0.0, %v10771
      %v10773 = vpop.f32.mrf.mxu0
      %v10774 = vpop.f32.mrf.mxu0
      %v10775 = vadd.f32 0.0, %v10774
      %v10776 = vpop.f32.mrf.mxu0
      %10777 = vmatprep.mubr.bf16.mxu0 %v10176
      %10778 = vmatmul.mubr.bf16.gmra.mxu0 %v10175
      %v10779 = vpop.f32.mrf.mxu0
      %v10780 = vadd.f32 0.0, %v10779
      %v10781 = vpop.f32.mrf.mxu0
      %v10782 = vpop.f32.mrf.mxu0
      %v10783 = vadd.f32 0.0, %v10782
      %v10784 = vpop.f32.mrf.mxu0
      %10785 = vdwg.mxu0
      %10786 = vmatprep.subr.bf16.mxu0 0
      %10787 = vmatpush1.bf16.msra.mxu0 %v10472
      %10788 = vmatprep.subr.bf16.mxu0 0
      %10789 = vmatpush1.bf16.msra.mxu0 %v10471
      %10790 = vmatprep.subr.bf16.mxu0 0
      %10791 = vmatpush1.bf16.msra.mxu0 %v10470
      %10792 = vmatprep.subr.bf16.mxu0 0
      %10793 = vmatpush1.bf16.msra.mxu0 %v10469
      %10794 = vmatprep.subr.bf16.mxu0 0
      %10795 = vmatpush1.bf16.msra.mxu0 %v10468
      %10796 = vmatprep.subr.bf16.mxu0 0
      %10797 = vmatpush1.bf16.msra.mxu0 %v10467
      %10798 = vmatprep.subr.bf16.mxu0 0
      %10799 = vmatpush1.bf16.msra.mxu0 %v10466
      %10800 = vmatprep.subr.bf16.mxu0 0
      %10801 = vmatpush1.bf16.msra.mxu0 %v10465
      %10802 = vmatprep.subr.bf16.mxu0 0
      %10803 = vmatpush2.bf16.msra.mxu0 %v10480
      %10804 = vmatprep.subr.bf16.mxu0 0
      %10805 = vmatpush2.bf16.msra.mxu0 %v10479
      %10806 = vmatprep.subr.bf16.mxu0 0
      %10807 = vmatpush2.bf16.msra.mxu0 %v10478
      %10808 = vmatprep.subr.bf16.mxu0 0
      %10809 = vmatpush2.bf16.msra.mxu0 %v10477
      %10810 = vmatprep.subr.bf16.mxu0 0
      %10811 = vmatpush2.bf16.msra.mxu0 %v10476
      %10812 = vmatprep.subr.bf16.mxu0 0
      %10813 = vmatpush2.bf16.msra.mxu0 %v10475
      %10814 = vmatprep.subr.bf16.mxu0 0
      %10815 = vmatpush2.bf16.msra.mxu0 %v10474
      %10816 = vmatprep.subr.bf16.mxu0 0
      %10817 = vmatpush2.bf16.msra.mxu0 %v10473
      %10818 = vmatprep.mubr.bf16.mxu0 %v10306
      %10819 = vmatmul.mubr.bf16.gmra.mxu0 %v10305
      %v10820 = vpop.f32.mrf.mxu0
      %v10821 = vadd.f32 0.0, %v10820
      %v10822 = vpop.f32.mrf.mxu0
      %v10823 = vpop.f32.mrf.mxu0
      %v10824 = vadd.f32 0.0, %v10823
      %v10825 = vpop.f32.mrf.mxu0
      %10826 = vmatprep.mubr.bf16.mxu0 %v10308
      %10827 = vmatmul.mubr.bf16.gmra.mxu0 %v10307
      %v10828 = vpop.f32.mrf.mxu0
      %v10829 = vadd.f32 0.0, %v10828
      %v10830 = vpop.f32.mrf.mxu0
      %v10831 = vpop.f32.mrf.mxu0
      %v10832 = vadd.f32 0.0, %v10831
      %v10833 = vpop.f32.mrf.mxu0
      %10834 = vmatprep.mubr.bf16.mxu0 %v10310
      %10835 = vmatmul.mubr.bf16.gmra.mxu0 %v10309
      %v10836 = vpop.f32.mrf.mxu0
      %v10837 = vadd.f32 0.0, %v10836
      %v10838 = vpop.f32.mrf.mxu0
      %v10839 = vpop.f32.mrf.mxu0
      %v10840 = vadd.f32 0.0, %v10839
      %v10841 = vpop.f32.mrf.mxu0
      %10842 = vmatprep.mubr.bf16.mxu0 %v10312
      %10843 = vmatmul.mubr.bf16.gmra.mxu0 %v10311
      %v10844 = vpop.f32.mrf.mxu0
      %v10845 = vadd.f32 0.0, %v10844
      %v10846 = vpop.f32.mrf.mxu0
      %v10847 = vpop.f32.mrf.mxu0
      %v10848 = vadd.f32 0.0, %v10847
      %v10849 = vpop.f32.mrf.mxu0
      %10850 = vmatprep.mubr.bf16.mxu0 %v10314
      %10851 = vmatmul.mubr.bf16.gmra.mxu0 %v10313
      %v10852 = vpop.f32.mrf.mxu0
      %v10853 = vadd.f32 0.0, %v10852
      %v10854 = vpop.f32.mrf.mxu0
      %v10855 = vpop.f32.mrf.mxu0
      %v10856 = vadd.f32 0.0, %v10855
      %v10857 = vpop.f32.mrf.mxu0
      %10858 = vmatprep.mubr.bf16.mxu0 %v10316
      %10859 = vmatmul.mubr.bf16.gmra.mxu0 %v10315
      %v10860 = vpop.f32.mrf.mxu0
      %v10861 = vadd.f32 0.0, %v10860
      %v10862 = vpop.f32.mrf.mxu0
      %v10863 = vpop.f32.mrf.mxu0
      %v10864 = vadd.f32 0.0, %v10863
      %v10865 = vpop.f32.mrf.mxu0
      %10866 = vmatprep.mubr.bf16.mxu0 %v10318
      %10867 = vmatmul.mubr.bf16.gmra.mxu0 %v10317
      %v10868 = vpop.f32.mrf.mxu0
      %v10869 = vadd.f32 0.0, %v10868
      %v10870 = vpop.f32.mrf.mxu0
      %v10871 = vpop.f32.mrf.mxu0
      %v10872 = vadd.f32 0.0, %v10871
      %v10873 = vpop.f32.mrf.mxu0
      %10874 = vmatprep.mubr.bf16.mxu0 %v10320
      %10875 = vmatmul.mubr.bf16.gmra.mxu0 %v10319
      %v10876 = vpop.f32.mrf.mxu0
      %v10877 = vadd.f32 0.0, %v10876
      %v10878 = vpop.f32.mrf.mxu0
      %v10879 = vpop.f32.mrf.mxu0
      %v10880 = vadd.f32 0.0, %v10879
      %v10881 = vpop.f32.mrf.mxu0
      %10882 = vmatprep.mubr.bf16.mxu0 %v10322
      %10883 = vmatmul.mubr.bf16.gmra.mxu0 %v10321
      %v10884 = vpop.f32.mrf.mxu0
      %v10885 = vadd.f32 0.0, %v10884
      %v10886 = vpop.f32.mrf.mxu0
      %v10887 = vpop.f32.mrf.mxu0
      %v10888 = vadd.f32 0.0, %v10887
      %v10889 = vpop.f32.mrf.mxu0
      %10890 = vmatprep.mubr.bf16.mxu0 %v10324
      %10891 = vmatmul.mubr.bf16.gmra.mxu0 %v10323
      %v10892 = vpop.f32.mrf.mxu0
      %v10893 = vadd.f32 0.0, %v10892
      %v10894 = vpop.f32.mrf.mxu0
      %v10895 = vpop.f32.mrf.mxu0
      %v10896 = vadd.f32 0.0, %v10895
      %v10897 = vpop.f32.mrf.mxu0
      %10898 = vmatprep.mubr.bf16.mxu0 %v10326
      %10899 = vmatmul.mubr.bf16.gmra.mxu0 %v10325
      %v10900 = vpop.f32.mrf.mxu0
      %v10901 = vadd.f32 0.0, %v10900
      %v10902 = vpop.f32.mrf.mxu0
      %v10903 = vpop.f32.mrf.mxu0
      %v10904 = vadd.f32 0.0, %v10903
      %v10905 = vpop.f32.mrf.mxu0
      %10906 = vmatprep.mubr.bf16.mxu0 %v10328
      %10907 = vmatmul.mubr.bf16.gmra.mxu0 %v10327
      %v10908 = vpop.f32.mrf.mxu0
      %v10909 = vadd.f32 0.0, %v10908
      %v10910 = vpop.f32.mrf.mxu0
      %v10911 = vpop.f32.mrf.mxu0
      %v10912 = vadd.f32 0.0, %v10911
      %v10913 = vpop.f32.mrf.mxu0
      %10914 = vmatprep.mubr.bf16.mxu0 %v10330
      %10915 = vmatmul.mubr.bf16.gmra.mxu0 %v10329
      %v10916 = vpop.f32.mrf.mxu0
      %v10917 = vadd.f32 0.0, %v10916
      %v10918 = vpop.f32.mrf.mxu0
      %v10919 = vpop.f32.mrf.mxu0
      %v10920 = vadd.f32 0.0, %v10919
      %v10921 = vpop.f32.mrf.mxu0
      %10922 = vmatprep.mubr.bf16.mxu0 %v10332
      %10923 = vmatmul.mubr.bf16.gmra.mxu0 %v10331
      %v10924 = vpop.f32.mrf.mxu0
      %v10925 = vadd.f32 0.0, %v10924
      %v10926 = vpop.f32.mrf.mxu0
      %v10927 = vpop.f32.mrf.mxu0
      %v10928 = vadd.f32 0.0, %v10927
      %v10929 = vpop.f32.mrf.mxu0
      %10930 = vmatprep.mubr.bf16.mxu0 %v10334
      %10931 = vmatmul.mubr.bf16.gmra.mxu0 %v10333
      %v10932 = vpop.f32.mrf.mxu0
      %v10933 = vadd.f32 0.0, %v10932
      %v10934 = vpop.f32.mrf.mxu0
      %v10935 = vpop.f32.mrf.mxu0
      %v10936 = vadd.f32 0.0, %v10935
      %v10937 = vpop.f32.mrf.mxu0
      %10938 = vmatprep.mubr.bf16.mxu0 %v10336
      %10939 = vmatmul.mubr.bf16.gmra.mxu0 %v10335
      %v10940 = vpop.f32.mrf.mxu0
      %v10941 = vadd.f32 0.0, %v10940
      %v10942 = vpop.f32.mrf.mxu0
      %v10943 = vpop.f32.mrf.mxu0
      %v10944 = vadd.f32 0.0, %v10943
      %v10945 = vpop.f32.mrf.mxu0
      %10946 = vmatprep.mubr.bf16.mxu0 %v10338
      %10947 = vmatmul.mubr.bf16.gmra.mxu0 %v10337
      %v10948 = vpop.f32.mrf.mxu0
      %v10949 = vadd.f32 0.0, %v10948
      %v10950 = vpop.f32.mrf.mxu0
      %v10951 = vpop.f32.mrf.mxu0
      %v10952 = vadd.f32 0.0, %v10951
      %v10953 = vpop.f32.mrf.mxu0
      %10954 = vmatprep.mubr.bf16.mxu0 %v10340
      %10955 = vmatmul.mubr.bf16.gmra.mxu0 %v10339
      %v10956 = vpop.f32.mrf.mxu0
      %v10957 = vadd.f32 0.0, %v10956
      %v10958 = vpop.f32.mrf.mxu0
      %v10959 = vpop.f32.mrf.mxu0
      %v10960 = vadd.f32 0.0, %v10959
      %v10961 = vpop.f32.mrf.mxu0
      %10962 = vmatprep.mubr.bf16.mxu0 %v10342
      %10963 = vmatmul.mubr.bf16.gmra.mxu0 %v10341
      %v10964 = vpop.f32.mrf.mxu0
      %v10965 = vadd.f32 0.0, %v10964
      %v10966 = vpop.f32.mrf.mxu0
      %v10967 = vpop.f32.mrf.mxu0
      %v10968 = vadd.f32 0.0, %v10967
      %v10969 = vpop.f32.mrf.mxu0
      %10970 = vmatprep.mubr.bf16.mxu0 %v10344
      %10971 = vmatmul.mubr.bf16.gmra.mxu0 %v10343
      %v10972 = vpop.f32.mrf.mxu0
      %v10973 = vadd.f32 0.0, %v10972
      %v10974 = vpop.f32.mrf.mxu0
      %v10975 = vpop.f32.mrf.mxu0
      %v10976 = vadd.f32 0.0, %v10975
      %v10977 = vpop.f32.mrf.mxu0
      %10978 = vmatprep.mubr.bf16.mxu0 %v10346
      %10979 = vmatmul.mubr.bf16.gmra.mxu0 %v10345
      %v10980 = vpop.f32.mrf.mxu0
      %v10981 = vadd.f32 0.0, %v10980
      %v10982 = vpop.f32.mrf.mxu0
      %v10983 = vpop.f32.mrf.mxu0
      %v10984 = vadd.f32 0.0, %v10983
      %v10985 = vpop.f32.mrf.mxu0
      %10986 = vmatprep.mubr.bf16.mxu0 %v10348
      %10987 = vmatmul.mubr.bf16.gmra.mxu0 %v10347
      %v10988 = vpop.f32.mrf.mxu0
      %v10989 = vadd.f32 0.0, %v10988
      %v10990 = vpop.f32.mrf.mxu0
      %v10991 = vpop.f32.mrf.mxu0
      %v10992 = vadd.f32 0.0, %v10991
      %v10993 = vpop.f32.mrf.mxu0
      %10994 = vmatprep.mubr.bf16.mxu0 %v10350
      %10995 = vmatmul.mubr.bf16.gmra.mxu0 %v10349
      %v10996 = vpop.f32.mrf.mxu0
      %v10997 = vadd.f32 0.0, %v10996
      %v10998 = vpop.f32.mrf.mxu0
      %v10999 = vpop.f32.mrf.mxu0
      %v11000 = vadd.f32 0.0, %v10999
      %v11001 = vpop.f32.mrf.mxu0
      %11002 = vmatprep.mubr.bf16.mxu0 %v10352
      %11003 = vmatmul.mubr.bf16.gmra.mxu0 %v10351
      %v11004 = vpop.f32.mrf.mxu0
      %v11005 = vadd.f32 0.0, %v11004
      %v11006 = vpop.f32.mrf.mxu0
      %v11007 = vpop.f32.mrf.mxu0
      %v11008 = vadd.f32 0.0, %v11007
      %v11009 = vpop.f32.mrf.mxu0
      %11010 = vmatprep.mubr.bf16.mxu0 %v10354
      %11011 = vmatmul.mubr.bf16.gmra.mxu0 %v10353
      %v11012 = vpop.f32.mrf.mxu0
      %v11013 = vadd.f32 0.0, %v11012
      %v11014 = vpop.f32.mrf.mxu0
      %v11015 = vpop.f32.mrf.mxu0
      %v11016 = vadd.f32 0.0, %v11015
      %v11017 = vpop.f32.mrf.mxu0
      %11018 = vmatprep.mubr.bf16.mxu0 %v10356
      %11019 = vmatmul.mubr.bf16.gmra.mxu0 %v10355
      %v11020 = vpop.f32.mrf.mxu0
      %v11021 = vadd.f32 0.0, %v11020
      %v11022 = vpop.f32.mrf.mxu0
      %v11023 = vpop.f32.mrf.mxu0
      %v11024 = vadd.f32 0.0, %v11023
      %v11025 = vpop.f32.mrf.mxu0
      %11026 = vmatprep.mubr.bf16.mxu0 %v10358
      %11027 = vmatmul.mubr.bf16.gmra.mxu0 %v10357
      %v11028 = vpop.f32.mrf.mxu0
      %v11029 = vadd.f32 0.0, %v11028
      %v11030 = vpop.f32.mrf.mxu0
      %v11031 = vpop.f32.mrf.mxu0
      %v11032 = vadd.f32 0.0, %v11031
      %v11033 = vpop.f32.mrf.mxu0
      %11034 = vmatprep.mubr.bf16.mxu0 %v10360
      %11035 = vmatmul.mubr.bf16.gmra.mxu0 %v10359
      %v11036 = vpop.f32.mrf.mxu0
      %v11037 = vadd.f32 0.0, %v11036
      %v11038 = vpop.f32.mrf.mxu0
      %v11039 = vpop.f32.mrf.mxu0
      %v11040 = vadd.f32 0.0, %v11039
      %v11041 = vpop.f32.mrf.mxu0
      %11042 = vmatprep.mubr.bf16.mxu0 %v10362
      %11043 = vmatmul.mubr.bf16.gmra.mxu0 %v10361
      %v11044 = vpop.f32.mrf.mxu0
      %v11045 = vadd.f32 0.0, %v11044
      %v11046 = vpop.f32.mrf.mxu0
      %v11047 = vpop.f32.mrf.mxu0
      %v11048 = vadd.f32 0.0, %v11047
      %v11049 = vpop.f32.mrf.mxu0
      %11050 = vmatprep.mubr.bf16.mxu0 %v10364
      %11051 = vmatmul.mubr.bf16.gmra.mxu0 %v10363
      %v11052 = vpop.f32.mrf.mxu0
      %v11053 = vadd.f32 0.0, %v11052
      %v11054 = vpop.f32.mrf.mxu0
      %v11055 = vpop.f32.mrf.mxu0
      %v11056 = vadd.f32 0.0, %v11055
      %v11057 = vpop.f32.mrf.mxu0
      %11058 = vmatprep.mubr.bf16.mxu0 %v10366
      %11059 = vmatmul.mubr.bf16.gmra.mxu0 %v10365
      %v11060 = vpop.f32.mrf.mxu0
      %v11061 = vadd.f32 0.0, %v11060
      %v11062 = vpop.f32.mrf.mxu0
      %v11063 = vpop.f32.mrf.mxu0
      %v11064 = vadd.f32 0.0, %v11063
      %v11065 = vpop.f32.mrf.mxu0
      %11066 = vmatprep.mubr.bf16.mxu0 %v10368
      %11067 = vmatmul.mubr.bf16.gmra.mxu0 %v10367
      %v11068 = vpop.f32.mrf.mxu0
      %v11069 = vadd.f32 0.0, %v11068
      %v11070 = vpop.f32.mrf.mxu0
      %v11071 = vpop.f32.mrf.mxu0
      %v11072 = vadd.f32 0.0, %v11071
      %v11073 = vpop.f32.mrf.mxu0
      %11074 = vdwg.mxu0
      %v11075 = vxor.u32 %v10532, 2147483648
      %v11076 = vxor.u32 %v10535, 2147483648
      %v11077 = vxor.u32 %v10540, 2147483648
      %v11078 = vxor.u32 %v10543, 2147483648
      %v11079 = vxor.u32 %v10548, 2147483648
      %v11080 = vxor.u32 %v10551, 2147483648
      %v11081 = vxor.u32 %v10556, 2147483648
      %v11082 = vxor.u32 %v10559, 2147483648
      %v11083 = vxor.u32 %v10564, 2147483648
      %v11084 = vxor.u32 %v10567, 2147483648
      %v11085 = vxor.u32 %v10572, 2147483648
      %v11086 = vxor.u32 %v10575, 2147483648
      %v11087 = vxor.u32 %v10580, 2147483648
      %v11088 = vxor.u32 %v10583, 2147483648
      %v11089 = vxor.u32 %v10588, 2147483648
      %v11090 = vxor.u32 %v10591, 2147483648
      %v11091 = vxor.u32 %v10596, 2147483648
      %v11092 = vxor.u32 %v10599, 2147483648
      %v11093 = vxor.u32 %v10604, 2147483648
      %v11094 = vxor.u32 %v10607, 2147483648
      %v11095 = vxor.u32 %v10612, 2147483648
      %v11096 = vxor.u32 %v10615, 2147483648
      %v11097 = vxor.u32 %v10620, 2147483648
      %v11098 = vxor.u32 %v10623, 2147483648
      %v11099 = vxor.u32 %v10628, 2147483648
      %v11100 = vxor.u32 %v10631, 2147483648
      %v11101 = vxor.u32 %v10636, 2147483648
      %v11102 = vxor.u32 %v10639, 2147483648
      %v11103 = vxor.u32 %v10644, 2147483648
      %v11104 = vxor.u32 %v10647, 2147483648
      %v11105 = vxor.u32 %v10652, 2147483648
      %v11106 = vxor.u32 %v10655, 2147483648
      %v11107 = vxor.u32 %v10660, 2147483648
      %v11108 = vxor.u32 %v10663, 2147483648
      %v11109 = vxor.u32 %v10668, 2147483648
      %v11110 = vxor.u32 %v10671, 2147483648
      %v11111 = vxor.u32 %v10676, 2147483648
      %v11112 = vxor.u32 %v10679, 2147483648
      %v11113 = vxor.u32 %v10684, 2147483648
      %v11114 = vxor.u32 %v10687, 2147483648
      %v11115 = vxor.u32 %v10692, 2147483648
      %v11116 = vxor.u32 %v10695, 2147483648
      %v11117 = vxor.u32 %v10700, 2147483648
      %v11118 = vxor.u32 %v10703, 2147483648
      %v11119 = vxor.u32 %v10708, 2147483648
      %v11120 = vxor.u32 %v10711, 2147483648
      %v11121 = vxor.u32 %v10716, 2147483648
      %v11122 = vxor.u32 %v10719, 2147483648
      %v11123 = vxor.u32 %v10724, 2147483648
      %v11124 = vxor.u32 %v10727, 2147483648
      %v11125 = vxor.u32 %v10732, 2147483648
      %v11126 = vxor.u32 %v10735, 2147483648
      %v11127 = vxor.u32 %v10740, 2147483648
      %v11128 = vxor.u32 %v10743, 2147483648
      %v11129 = vxor.u32 %v10748, 2147483648
      %v11130 = vxor.u32 %v10751, 2147483648
      %v11131 = vxor.u32 %v10756, 2147483648
      %v11132 = vxor.u32 %v10759, 2147483648
      %v11133 = vxor.u32 %v10764, 2147483648
      %v11134 = vxor.u32 %v10767, 2147483648
      %v11135 = vxor.u32 %v10772, 2147483648
      %v11136 = vxor.u32 %v10775, 2147483648
      %v11137 = vxor.u32 %v10780, 2147483648
      %v11138 = vxor.u32 %v10783, 2147483648
      %v11139 = vmul.f32 %v11075, 1.442695
      %v11140 = vpow.pop %v11139
      %v11141 = vmul.f32 %v11076, 1.442695
      %v11142 = vpow.pop %v11141
      %v11143 = vmul.f32 %v11077, 1.442695
      %v11144 = vpow.pop %v11143
      %v11145 = vmul.f32 %v11078, 1.442695
      %v11146 = vpow.pop %v11145
      %v11147 = vmul.f32 %v11079, 1.442695
      %v11148 = vpow.pop %v11147
      %v11149 = vmul.f32 %v11080, 1.442695
      %v11150 = vpow.pop %v11149
      %v11151 = vmul.f32 %v11081, 1.442695
      %v11152 = vpow.pop %v11151
      %v11153 = vmul.f32 %v11082, 1.442695
      %v11154 = vpow.pop %v11153
      %v11155 = vmul.f32 %v11083, 1.442695
      %v11156 = vpow.pop %v11155
      %v11157 = vmul.f32 %v11084, 1.442695
      %v11158 = vpow.pop %v11157
      %v11159 = vmul.f32 %v11085, 1.442695
      %v11160 = vpow.pop %v11159
      %v11161 = vmul.f32 %v11086, 1.442695
      %v11162 = vpow.pop %v11161
      %v11163 = vmul.f32 %v11087, 1.442695
      %v11164 = vpow.pop %v11163
      %v11165 = vmul.f32 %v11088, 1.442695
      %v11166 = vpow.pop %v11165
      %v11167 = vmul.f32 %v11089, 1.442695
      %v11168 = vpow.pop %v11167
      %v11169 = vmul.f32 %v11090, 1.442695
      %v11170 = vpow.pop %v11169
      %v11171 = vmul.f32 %v11091, 1.442695
      %v11172 = vpow.pop %v11171
      %v11173 = vmul.f32 %v11092, 1.442695
      %v11174 = vpow.pop %v11173
      %v11175 = vmul.f32 %v11093, 1.442695
      %v11176 = vpow.pop %v11175
      %v11177 = vmul.f32 %v11094, 1.442695
      %v11178 = vpow.pop %v11177
      %v11179 = vmul.f32 %v11095, 1.442695
      %v11180 = vpow.pop %v11179
      %v11181 = vmul.f32 %v11096, 1.442695
      %v11182 = vpow.pop %v11181
      %v11183 = vmul.f32 %v11097, 1.442695
      %v11184 = vpow.pop %v11183
      %v11185 = vmul.f32 %v11098, 1.442695
      %v11186 = vpow.pop %v11185
      %v11187 = vmul.f32 %v11099, 1.442695
      %v11188 = vpow.pop %v11187
      %v11189 = vmul.f32 %v11100, 1.442695
      %v11190 = vpow.pop %v11189
      %v11191 = vmul.f32 %v11101, 1.442695
      %v11192 = vpow.pop %v11191
      %v11193 = vmul.f32 %v11102, 1.442695
      %v11194 = vpow.pop %v11193
      %v11195 = vmul.f32 %v11103, 1.442695
      %v11196 = vpow.pop %v11195
      %v11197 = vmul.f32 %v11104, 1.442695
      %v11198 = vpow.pop %v11197
      %v11199 = vmul.f32 %v11105, 1.442695
      %v11200 = vpow.pop %v11199
      %v11201 = vmul.f32 %v11106, 1.442695
      %v11202 = vpow.pop %v11201
      %v11203 = vmul.f32 %v11107, 1.442695
      %v11204 = vpow.pop %v11203
      %v11205 = vmul.f32 %v11108, 1.442695
      %v11206 = vpow.pop %v11205
      %v11207 = vmul.f32 %v11109, 1.442695
      %v11208 = vpow.pop %v11207
      %v11209 = vmul.f32 %v11110, 1.442695
      %v11210 = vpow.pop %v11209
      %v11211 = vmul.f32 %v11111, 1.442695
      %v11212 = vpow.pop %v11211
      %v11213 = vmul.f32 %v11112, 1.442695
      %v11214 = vpow.pop %v11213
      %v11215 = vmul.f32 %v11113, 1.442695
      %v11216 = vpow.pop %v11215
      %v11217 = vmul.f32 %v11114, 1.442695
      %v11218 = vpow.pop %v11217
      %v11219 = vmul.f32 %v11115, 1.442695
      %v11220 = vpow.pop %v11219
      %v11221 = vmul.f32 %v11116, 1.442695
      %v11222 = vpow.pop %v11221
      %v11223 = vmul.f32 %v11117, 1.442695
      %v11224 = vpow.pop %v11223
      %v11225 = vmul.f32 %v11118, 1.442695
      %v11226 = vpow.pop %v11225
      %v11227 = vmul.f32 %v11119, 1.442695
      %v11228 = vpow.pop %v11227
      %v11229 = vmul.f32 %v11120, 1.442695
      %v11230 = vpow.pop %v11229
      %v11231 = vmul.f32 %v11121, 1.442695
      %v11232 = vpow.pop %v11231
      %v11233 = vmul.f32 %v11122, 1.442695
      %v11234 = vpow.pop %v11233
      %v11235 = vmul.f32 %v11123, 1.442695
      %v11236 = vpow.pop %v11235
      %v11237 = vmul.f32 %v11124, 1.442695
      %v11238 = vpow.pop %v11237
      %v11239 = vmul.f32 %v11125, 1.442695
      %v11240 = vpow.pop %v11239
      %v11241 = vmul.f32 %v11126, 1.442695
      %v11242 = vpow.pop %v11241
      %v11243 = vmul.f32 %v11127, 1.442695
      %v11244 = vpow.pop %v11243
      %v11245 = vmul.f32 %v11128, 1.442695
      %v11246 = vpow.pop %v11245
      %v11247 = vmul.f32 %v11129, 1.442695
      %v11248 = vpow.pop %v11247
      %v11249 = vmul.f32 %v11130, 1.442695
      %v11250 = vpow.pop %v11249
      %v11251 = vmul.f32 %v11131, 1.442695
      %v11252 = vpow.pop %v11251
      %v11253 = vmul.f32 %v11132, 1.442695
      %v11254 = vpow.pop %v11253
      %v11255 = vmul.f32 %v11133, 1.442695
      %v11256 = vpow.pop %v11255
      %v11257 = vmul.f32 %v11134, 1.442695
      %v11258 = vpow.pop %v11257
      %v11259 = vmul.f32 %v11135, 1.442695
      %v11260 = vpow.pop %v11259
      %v11261 = vmul.f32 %v11136, 1.442695
      %v11262 = vpow.pop %v11261
      %v11263 = vmul.f32 %v11137, 1.442695
      %v11264 = vpow.pop %v11263
      %v11265 = vmul.f32 %v11138, 1.442695
      %v11266 = vpow.pop %v11265
      %v11267 = vadd.f32 %v11140, 1.0
      %v11268 = vadd.f32 %v11142, 1.0
      %v11269 = vadd.f32 %v11144, 1.0
      %v11270 = vadd.f32 %v11146, 1.0
      %v11271 = vadd.f32 %v11148, 1.0
      %v11272 = vadd.f32 %v11150, 1.0
      %v11273 = vadd.f32 %v11152, 1.0
      %v11274 = vadd.f32 %v11154, 1.0
      %v11275 = vadd.f32 %v11156, 1.0
      %v11276 = vadd.f32 %v11158, 1.0
      %v11277 = vadd.f32 %v11160, 1.0
      %v11278 = vadd.f32 %v11162, 1.0
      %v11279 = vadd.f32 %v11164, 1.0
      %v11280 = vadd.f32 %v11166, 1.0
      %v11281 = vadd.f32 %v11168, 1.0
      %v11282 = vadd.f32 %v11170, 1.0
      %v11283 = vadd.f32 %v11172, 1.0
      %v11284 = vadd.f32 %v11174, 1.0
      %v11285 = vadd.f32 %v11176, 1.0
      %v11286 = vadd.f32 %v11178, 1.0
      %v11287 = vadd.f32 %v11180, 1.0
      %v11288 = vadd.f32 %v11182, 1.0
      %v11289 = vadd.f32 %v11184, 1.0
      %v11290 = vadd.f32 %v11186, 1.0
      %v11291 = vadd.f32 %v11188, 1.0
      %v11292 = vadd.f32 %v11190, 1.0
      %v11293 = vadd.f32 %v11192, 1.0
      %v11294 = vadd.f32 %v11194, 1.0
      %v11295 = vadd.f32 %v11196, 1.0
      %v11296 = vadd.f32 %v11198, 1.0
      %v11297 = vadd.f32 %v11200, 1.0
      %v11298 = vadd.f32 %v11202, 1.0
      %v11299 = vadd.f32 %v11204, 1.0
      %v11300 = vadd.f32 %v11206, 1.0
      %v11301 = vadd.f32 %v11208, 1.0
      %v11302 = vadd.f32 %v11210, 1.0
      %v11303 = vadd.f32 %v11212, 1.0
      %v11304 = vadd.f32 %v11214, 1.0
      %v11305 = vadd.f32 %v11216, 1.0
      %v11306 = vadd.f32 %v11218, 1.0
      %v11307 = vadd.f32 %v11220, 1.0
      %v11308 = vadd.f32 %v11222, 1.0
      %v11309 = vadd.f32 %v11224, 1.0
      %v11310 = vadd.f32 %v11226, 1.0
      %v11311 = vadd.f32 %v11228, 1.0
      %v11312 = vadd.f32 %v11230, 1.0
      %v11313 = vadd.f32 %v11232, 1.0
      %v11314 = vadd.f32 %v11234, 1.0
      %v11315 = vadd.f32 %v11236, 1.0
      %v11316 = vadd.f32 %v11238, 1.0
      %v11317 = vadd.f32 %v11240, 1.0
      %v11318 = vadd.f32 %v11242, 1.0
      %v11319 = vadd.f32 %v11244, 1.0
      %v11320 = vadd.f32 %v11246, 1.0
      %v11321 = vadd.f32 %v11248, 1.0
      %v11322 = vadd.f32 %v11250, 1.0
      %v11323 = vadd.f32 %v11252, 1.0
      %v11324 = vadd.f32 %v11254, 1.0
      %v11325 = vadd.f32 %v11256, 1.0
      %v11326 = vadd.f32 %v11258, 1.0
      %v11327 = vadd.f32 %v11260, 1.0
      %v11328 = vadd.f32 %v11262, 1.0
      %v11329 = vadd.f32 %v11264, 1.0
      %v11330 = vadd.f32 %v11266, 1.0
      %v11331 = vrcp.pop %v11267
      %v11332 = vmul.f32 1.0, %v11331
      %v11333 = vrcp.pop %v11268
      %v11334 = vmul.f32 1.0, %v11333
      %v11335 = vrcp.pop %v11269
      %v11336 = vmul.f32 1.0, %v11335
      %v11337 = vrcp.pop %v11270
      %v11338 = vmul.f32 1.0, %v11337
      %v11339 = vrcp.pop %v11271
      %v11340 = vmul.f32 1.0, %v11339
      %v11341 = vrcp.pop %v11272
      %v11342 = vmul.f32 1.0, %v11341
      %v11343 = vrcp.pop %v11273
      %v11344 = vmul.f32 1.0, %v11343
      %v11345 = vrcp.pop %v11274
      %v11346 = vmul.f32 1.0, %v11345
      %v11347 = vrcp.pop %v11275
      %v11348 = vmul.f32 1.0, %v11347
      %v11349 = vrcp.pop %v11276
      %v11350 = vmul.f32 1.0, %v11349
      %v11351 = vrcp.pop %v11277
      %v11352 = vmul.f32 1.0, %v11351
      %v11353 = vrcp.pop %v11278
      %v11354 = vmul.f32 1.0, %v11353
      %v11355 = vrcp.pop %v11279
      %v11356 = vmul.f32 1.0, %v11355
      %v11357 = vrcp.pop %v11280
      %v11358 = vmul.f32 1.0, %v11357
      %v11359 = vrcp.pop %v11281
      %v11360 = vmul.f32 1.0, %v11359
      %v11361 = vrcp.pop %v11282
      %v11362 = vmul.f32 1.0, %v11361
      %v11363 = vrcp.pop %v11283
      %v11364 = vmul.f32 1.0, %v11363
      %v11365 = vrcp.pop %v11284
      %v11366 = vmul.f32 1.0, %v11365
      %v11367 = vrcp.pop %v11285
      %v11368 = vmul.f32 1.0, %v11367
      %v11369 = vrcp.pop %v11286
      %v11370 = vmul.f32 1.0, %v11369
      %v11371 = vrcp.pop %v11287
      %v11372 = vmul.f32 1.0, %v11371
      %v11373 = vrcp.pop %v11288
      %v11374 = vmul.f32 1.0, %v11373
      %v11375 = vrcp.pop %v11289
      %v11376 = vmul.f32 1.0, %v11375
      %v11377 = vrcp.pop %v11290
      %v11378 = vmul.f32 1.0, %v11377
      %v11379 = vrcp.pop %v11291
      %v11380 = vmul.f32 1.0, %v11379
      %v11381 = vrcp.pop %v11292
      %v11382 = vmul.f32 1.0, %v11381
      %v11383 = vrcp.pop %v11293
      %v11384 = vmul.f32 1.0, %v11383
      %v11385 = vrcp.pop %v11294
      %v11386 = vmul.f32 1.0, %v11385
      %v11387 = vrcp.pop %v11295
      %v11388 = vmul.f32 1.0, %v11387
      %v11389 = vrcp.pop %v11296
      %v11390 = vmul.f32 1.0, %v11389
      %v11391 = vrcp.pop %v11297
      %v11392 = vmul.f32 1.0, %v11391
      %v11393 = vrcp.pop %v11298
      %v11394 = vmul.f32 1.0, %v11393
      %v11395 = vrcp.pop %v11299
      %v11396 = vmul.f32 1.0, %v11395
      %v11397 = vrcp.pop %v11300
      %v11398 = vmul.f32 1.0, %v11397
      %v11399 = vrcp.pop %v11301
      %v11400 = vmul.f32 1.0, %v11399
      %v11401 = vrcp.pop %v11302
      %v11402 = vmul.f32 1.0, %v11401
      %v11403 = vrcp.pop %v11303
      %v11404 = vmul.f32 1.0, %v11403
      %v11405 = vrcp.pop %v11304
      %v11406 = vmul.f32 1.0, %v11405
      %v11407 = vrcp.pop %v11305
      %v11408 = vmul.f32 1.0, %v11407
      %v11409 = vrcp.pop %v11306
      %v11410 = vmul.f32 1.0, %v11409
      %v11411 = vrcp.pop %v11307
      %v11412 = vmul.f32 1.0, %v11411
      %v11413 = vrcp.pop %v11308
      %v11414 = vmul.f32 1.0, %v11413
      %v11415 = vrcp.pop %v11309
      %v11416 = vmul.f32 1.0, %v11415
      %v11417 = vrcp.pop %v11310
      %v11418 = vmul.f32 1.0, %v11417
      %v11419 = vrcp.pop %v11311
      %v11420 = vmul.f32 1.0, %v11419
      %v11421 = vrcp.pop %v11312
      %v11422 = vmul.f32 1.0, %v11421
      %v11423 = vrcp.pop %v11313
      %v11424 = vmul.f32 1.0, %v11423
      %v11425 = vrcp.pop %v11314
      %v11426 = vmul.f32 1.0, %v11425
      %v11427 = vrcp.pop %v11315
      %v11428 = vmul.f32 1.0, %v11427
      %v11429 = vrcp.pop %v11316
      %v11430 = vmul.f32 1.0, %v11429
      %v11431 = vrcp.pop %v11317
      %v11432 = vmul.f32 1.0, %v11431
      %v11433 = vrcp.pop %v11318
      %v11434 = vmul.f32 1.0, %v11433
      %v11435 = vrcp.pop %v11319
      %v11436 = vmul.f32 1.0, %v11435
      %v11437 = vrcp.pop %v11320
      %v11438 = vmul.f32 1.0, %v11437
      %v11439 = vrcp.pop %v11321
      %v11440 = vmul.f32 1.0, %v11439
      %v11441 = vrcp.pop %v11322
      %v11442 = vmul.f32 1.0, %v11441
      %v11443 = vrcp.pop %v11323
      %v11444 = vmul.f32 1.0, %v11443
      %v11445 = vrcp.pop %v11324
      %v11446 = vmul.f32 1.0, %v11445
      %v11447 = vrcp.pop %v11325
      %v11448 = vmul.f32 1.0, %v11447
      %v11449 = vrcp.pop %v11326
      %v11450 = vmul.f32 1.0, %v11449
      %v11451 = vrcp.pop %v11327
      %v11452 = vmul.f32 1.0, %v11451
      %v11453 = vrcp.pop %v11328
      %v11454 = vmul.f32 1.0, %v11453
      %v11455 = vrcp.pop %v11329
      %v11456 = vmul.f32 1.0, %v11455
      %v11457 = vrcp.pop %v11330
      %v11458 = vmul.f32 1.0, %v11457
      %11459 = vst [vmem:[%s199] sm:$0xff] %v11332
      %11460 = vst [vmem:[%s199 + $0x8] sm:$0xff] %v11334
      %11461 = vst [vmem:[%s199 + $0x10] sm:$0xff] %v11336
      %11462 = vst [vmem:[%s199 + $0x18] sm:$0xff] %v11338
      %11463 = vst [vmem:[%s199 + $0x20] sm:$0xff] %v11340
      %11464 = vst [vmem:[%s199 + $0x28] sm:$0xff] %v11342
      %11465 = vst [vmem:[%s199 + $0x30] sm:$0xff] %v11344
      %11466 = vst [vmem:[%s199 + $0x38] sm:$0xff] %v11346
      %11467 = vst [vmem:[%s199 + $0x40] sm:$0xff] %v11348
      %11468 = vst [vmem:[%s199 + $0x48] sm:$0xff] %v11350
      %11469 = vst [vmem:[%s199 + $0x50] sm:$0xff] %v11352
      %11470 = vst [vmem:[%s199 + $0x58] sm:$0xff] %v11354
      %11471 = vst [vmem:[%s199 + $0x60] sm:$0xff] %v11356
      %11472 = vst [vmem:[%s199 + $0x68] sm:$0xff] %v11358
      %11473 = vst [vmem:[%s199 + $0x70] sm:$0xff] %v11360
      %11474 = vst [vmem:[%s199 + $0x78] sm:$0xff] %v11362
      %11475 = vst [vmem:[%s199 + $0x80] sm:$0xff] %v11364
      %11476 = vst [vmem:[%s199 + $0x88] sm:$0xff] %v11366
      %11477 = vst [vmem:[%s199 + $0x90] sm:$0xff] %v11368
      %11478 = vst [vmem:[%s199 + $0x98] sm:$0xff] %v11370
      %11479 = vst [vmem:[%s199 + $0xa0] sm:$0xff] %v11372
      %11480 = vst [vmem:[%s199 + $0xa8] sm:$0xff] %v11374
      %11481 = vst [vmem:[%s199 + $0xb0] sm:$0xff] %v11376
      %11482 = vst [vmem:[%s199 + $0xb8] sm:$0xff] %v11378
      %11483 = vst [vmem:[%s199 + $0xc0] sm:$0xff] %v11380
      %11484 = vst [vmem:[%s199 + $0xc8] sm:$0xff] %v11382
      %11485 = vst [vmem:[%s199 + $0xd0] sm:$0xff] %v11384
      %11486 = vst [vmem:[%s199 + $0xd8] sm:$0xff] %v11386
      %11487 = vst [vmem:[%s199 + $0xe0] sm:$0xff] %v11388
      %11488 = vst [vmem:[%s199 + $0xe8] sm:$0xff] %v11390
      %11489 = vst [vmem:[%s199 + $0xf0] sm:$0xff] %v11392
      %11490 = vst [vmem:[%s199 + $0xf8] sm:$0xff] %v11394
      %11491 = vst [vmem:[%s199 + $0x100] sm:$0xff] %v11396
      %11492 = vst [vmem:[%s199 + $0x108] sm:$0xff] %v11398
      %11493 = vst [vmem:[%s199 + $0x110] sm:$0xff] %v11400
      %11494 = vst [vmem:[%s199 + $0x118] sm:$0xff] %v11402
      %11495 = vst [vmem:[%s199 + $0x120] sm:$0xff] %v11404
      %11496 = vst [vmem:[%s199 + $0x128] sm:$0xff] %v11406
      %11497 = vst [vmem:[%s199 + $0x130] sm:$0xff] %v11408
      %11498 = vst [vmem:[%s199 + $0x138] sm:$0xff] %v11410
      %11499 = vst [vmem:[%s199 + $0x140] sm:$0xff] %v11412
      %11500 = vst [vmem:[%s199 + $0x148] sm:$0xff] %v11414
      %11501 = vst [vmem:[%s199 + $0x150] sm:$0xff] %v11416
      %11502 = vst [vmem:[%s199 + $0x158] sm:$0xff] %v11418
      %11503 = vst [vmem:[%s199 + $0x160] sm:$0xff] %v11420
      %11504 = vst [vmem:[%s199 + $0x168] sm:$0xff] %v11422
      %11505 = vst [vmem:[%s199 + $0x170] sm:$0xff] %v11424
      %11506 = vst [vmem:[%s199 + $0x178] sm:$0xff] %v11426
      %11507 = vst [vmem:[%s199 + $0x180] sm:$0xff] %v11428
      %11508 = vst [vmem:[%s199 + $0x188] sm:$0xff] %v11430
      %11509 = vst [vmem:[%s199 + $0x190] sm:$0xff] %v11432
      %11510 = vst [vmem:[%s199 + $0x198] sm:$0xff] %v11434
      %11511 = vst [vmem:[%s199 + $0x1a0] sm:$0xff] %v11436
      %11512 = vst [vmem:[%s199 + $0x1a8] sm:$0xff] %v11438
      %11513 = vst [vmem:[%s199 + $0x1b0] sm:$0xff] %v11440
      %11514 = vst [vmem:[%s199 + $0x1b8] sm:$0xff] %v11442
      %11515 = vst [vmem:[%s199 + $0x1c0] sm:$0xff] %v11444
      %11516 = vst [vmem:[%s199 + $0x1c8] sm:$0xff] %v11446
      %11517 = vst [vmem:[%s199 + $0x1d0] sm:$0xff] %v11448
      %11518 = vst [vmem:[%s199 + $0x1d8] sm:$0xff] %v11450
      %11519 = vst [vmem:[%s199 + $0x1e0] sm:$0xff] %v11452
      %11520 = vst [vmem:[%s199 + $0x1e8] sm:$0xff] %v11454
      %11521 = vst [vmem:[%s199 + $0x1f0] sm:$0xff] %v11456
      %11522 = vst [vmem:[%s199 + $0x1f8] sm:$0xff] %v11458
      %v11523 = vxor.u32 %v10821, 2147483648
      %v11524 = vxor.u32 %v10824, 2147483648
      %v11525 = vxor.u32 %v10829, 2147483648
      %v11526 = vxor.u32 %v10832, 2147483648
      %v11527 = vxor.u32 %v10837, 2147483648
      %v11528 = vxor.u32 %v10840, 2147483648
      %v11529 = vxor.u32 %v10845, 2147483648
      %v11530 = vxor.u32 %v10848, 2147483648
      %v11531 = vxor.u32 %v10853, 2147483648
      %v11532 = vxor.u32 %v10856, 2147483648
      %v11533 = vxor.u32 %v10861, 2147483648
      %v11534 = vxor.u32 %v10864, 2147483648
      %v11535 = vxor.u32 %v10869, 2147483648
      %v11536 = vxor.u32 %v10872, 2147483648
      %v11537 = vxor.u32 %v10877, 2147483648
      %v11538 = vxor.u32 %v10880, 2147483648
      %v11539 = vxor.u32 %v10885, 2147483648
      %v11540 = vxor.u32 %v10888, 2147483648
      %v11541 = vxor.u32 %v10893, 2147483648
      %v11542 = vxor.u32 %v10896, 2147483648
      %v11543 = vxor.u32 %v10901, 2147483648
      %v11544 = vxor.u32 %v10904, 2147483648
      %v11545 = vxor.u32 %v10909, 2147483648
      %v11546 = vxor.u32 %v10912, 2147483648
      %v11547 = vxor.u32 %v10917, 2147483648
      %v11548 = vxor.u32 %v10920, 2147483648
      %v11549 = vxor.u32 %v10925, 2147483648
      %v11550 = vxor.u32 %v10928, 2147483648
      %v11551 = vxor.u32 %v10933, 2147483648
      %v11552 = vxor.u32 %v10936, 2147483648
      %v11553 = vxor.u32 %v10941, 2147483648
      %v11554 = vxor.u32 %v10944, 2147483648
      %v11555 = vxor.u32 %v10949, 2147483648
      %v11556 = vxor.u32 %v10952, 2147483648
      %v11557 = vxor.u32 %v10957, 2147483648
      %v11558 = vxor.u32 %v10960, 2147483648
      %v11559 = vxor.u32 %v10965, 2147483648
      %v11560 = vxor.u32 %v10968, 2147483648
      %v11561 = vxor.u32 %v10973, 2147483648
      %v11562 = vxor.u32 %v10976, 2147483648
      %v11563 = vxor.u32 %v10981, 2147483648
      %v11564 = vxor.u32 %v10984, 2147483648
      %v11565 = vxor.u32 %v10989, 2147483648
      %v11566 = vxor.u32 %v10992, 2147483648
      %v11567 = vxor.u32 %v10997, 2147483648
      %v11568 = vxor.u32 %v11000, 2147483648
      %v11569 = vxor.u32 %v11005, 2147483648
      %v11570 = vxor.u32 %v11008, 2147483648
      %v11571 = vxor.u32 %v11013, 2147483648
      %v11572 = vxor.u32 %v11016, 2147483648
      %v11573 = vxor.u32 %v11021, 2147483648
      %v11574 = vxor.u32 %v11024, 2147483648
      %v11575 = vxor.u32 %v11029, 2147483648
      %v11576 = vxor.u32 %v11032, 2147483648
      %v11577 = vxor.u32 %v11037, 2147483648
      %v11578 = vxor.u32 %v11040, 2147483648
      %v11579 = vxor.u32 %v11045, 2147483648
      %v11580 = vxor.u32 %v11048, 2147483648
      %v11581 = vxor.u32 %v11053, 2147483648
      %v11582 = vxor.u32 %v11056, 2147483648
      %v11583 = vxor.u32 %v11061, 2147483648
      %v11584 = vxor.u32 %v11064, 2147483648
      %v11585 = vxor.u32 %v11069, 2147483648
      %v11586 = vxor.u32 %v11072, 2147483648
      %v11587 = vmul.f32 %v11523, 1.442695
      %v11588 = vpow.pop %v11587
      %v11589 = vmul.f32 %v11524, 1.442695
      %v11590 = vpow.pop %v11589
      %v11591 = vmul.f32 %v11525, 1.442695
      %v11592 = vpow.pop %v11591
      %v11593 = vmul.f32 %v11526, 1.442695
      %v11594 = vpow.pop %v11593
      %v11595 = vmul.f32 %v11527, 1.442695
      %v11596 = vpow.pop %v11595
      %v11597 = vmul.f32 %v11528, 1.442695
      %v11598 = vpow.pop %v11597
      %v11599 = vmul.f32 %v11529, 1.442695
      %v11600 = vpow.pop %v11599
      %v11601 = vmul.f32 %v11530, 1.442695
      %v11602 = vpow.pop %v11601
      %v11603 = vmul.f32 %v11531, 1.442695
      %v11604 = vpow.pop %v11603
      %v11605 = vmul.f32 %v11532, 1.442695
      %v11606 = vpow.pop %v11605
      %v11607 = vmul.f32 %v11533, 1.442695
      %v11608 = vpow.pop %v11607
      %v11609 = vmul.f32 %v11534, 1.442695
      %v11610 = vpow.pop %v11609
      %v11611 = vmul.f32 %v11535, 1.442695
      %v11612 = vpow.pop %v11611
      %v11613 = vmul.f32 %v11536, 1.442695
      %v11614 = vpow.pop %v11613
      %v11615 = vmul.f32 %v11537, 1.442695
      %v11616 = vpow.pop %v11615
      %v11617 = vmul.f32 %v11538, 1.442695
      %v11618 = vpow.pop %v11617
      %v11619 = vmul.f32 %v11539, 1.442695
      %v11620 = vpow.pop %v11619
      %v11621 = vmul.f32 %v11540, 1.442695
      %v11622 = vpow.pop %v11621
      %v11623 = vmul.f32 %v11541, 1.442695
      %v11624 = vpow.pop %v11623
      %v11625 = vmul.f32 %v11542, 1.442695
      %v11626 = vpow.pop %v11625
      %v11627 = vmul.f32 %v11543, 1.442695
      %v11628 = vpow.pop %v11627
      %v11629 = vmul.f32 %v11544, 1.442695
      %v11630 = vpow.pop %v11629
      %v11631 = vmul.f32 %v11545, 1.442695
      %v11632 = vpow.pop %v11631
      %v11633 = vmul.f32 %v11546, 1.442695
      %v11634 = vpow.pop %v11633
      %v11635 = vmul.f32 %v11547, 1.442695
      %v11636 = vpow.pop %v11635
      %v11637 = vmul.f32 %v11548, 1.442695
      %v11638 = vpow.pop %v11637
      %v11639 = vmul.f32 %v11549, 1.442695
      %v11640 = vpow.pop %v11639
      %v11641 = vmul.f32 %v11550, 1.442695
      %v11642 = vpow.pop %v11641
      %v11643 = vmul.f32 %v11551, 1.442695
      %v11644 = vpow.pop %v11643
      %v11645 = vmul.f32 %v11552, 1.442695
      %v11646 = vpow.pop %v11645
      %v11647 = vmul.f32 %v11553, 1.442695
      %v11648 = vpow.pop %v11647
      %v11649 = vmul.f32 %v11554, 1.442695
      %v11650 = vpow.pop %v11649
      %v11651 = vmul.f32 %v11555, 1.442695
      %v11652 = vpow.pop %v11651
      %v11653 = vmul.f32 %v11556, 1.442695
      %v11654 = vpow.pop %v11653
      %v11655 = vmul.f32 %v11557, 1.442695
      %v11656 = vpow.pop %v11655
      %v11657 = vmul.f32 %v11558, 1.442695
      %v11658 = vpow.pop %v11657
      %v11659 = vmul.f32 %v11559, 1.442695
      %v11660 = vpow.pop %v11659
      %v11661 = vmul.f32 %v11560, 1.442695
      %v11662 = vpow.pop %v11661
      %v11663 = vmul.f32 %v11561, 1.442695
      %v11664 = vpow.pop %v11663
      %v11665 = vmul.f32 %v11562, 1.442695
      %v11666 = vpow.pop %v11665
      %v11667 = vmul.f32 %v11563, 1.442695
      %v11668 = vpow.pop %v11667
      %v11669 = vmul.f32 %v11564, 1.442695
      %v11670 = vpow.pop %v11669
      %v11671 = vmul.f32 %v11565, 1.442695
      %v11672 = vpow.pop %v11671
      %v11673 = vmul.f32 %v11566, 1.442695
      %v11674 = vpow.pop %v11673
      %v11675 = vmul.f32 %v11567, 1.442695
      %v11676 = vpow.pop %v11675
      %v11677 = vmul.f32 %v11568, 1.442695
      %v11678 = vpow.pop %v11677
      %v11679 = vmul.f32 %v11569, 1.442695
      %v11680 = vpow.pop %v11679
      %v11681 = vmul.f32 %v11570, 1.442695
      %v11682 = vpow.pop %v11681
      %v11683 = vmul.f32 %v11571, 1.442695
      %v11684 = vpow.pop %v11683
      %v11685 = vmul.f32 %v11572, 1.442695
      %v11686 = vpow.pop %v11685
      %v11687 = vmul.f32 %v11573, 1.442695
      %v11688 = vpow.pop %v11687
      %v11689 = vmul.f32 %v11574, 1.442695
      %v11690 = vpow.pop %v11689
      %v11691 = vmul.f32 %v11575, 1.442695
      %v11692 = vpow.pop %v11691
      %v11693 = vmul.f32 %v11576, 1.442695
      %v11694 = vpow.pop %v11693
      %v11695 = vmul.f32 %v11577, 1.442695
      %v11696 = vpow.pop %v11695
      %v11697 = vmul.f32 %v11578, 1.442695
      %v11698 = vpow.pop %v11697
      %v11699 = vmul.f32 %v11579, 1.442695
      %v11700 = vpow.pop %v11699
      %v11701 = vmul.f32 %v11580, 1.442695
      %v11702 = vpow.pop %v11701
      %v11703 = vmul.f32 %v11581, 1.442695
      %v11704 = vpow.pop %v11703
      %v11705 = vmul.f32 %v11582, 1.442695
      %v11706 = vpow.pop %v11705
      %v11707 = vmul.f32 %v11583, 1.442695
      %v11708 = vpow.pop %v11707
      %v11709 = vmul.f32 %v11584, 1.442695
      %v11710 = vpow.pop %v11709
      %v11711 = vmul.f32 %v11585, 1.442695
      %v11712 = vpow.pop %v11711
      %v11713 = vmul.f32 %v11586, 1.442695
      %v11714 = vpow.pop %v11713
      %v11715 = vadd.f32 %v11588, 1.0
      %v11716 = vadd.f32 %v11590, 1.0
      %v11717 = vadd.f32 %v11592, 1.0
      %v11718 = vadd.f32 %v11594, 1.0
      %v11719 = vadd.f32 %v11596, 1.0
      %v11720 = vadd.f32 %v11598, 1.0
      %v11721 = vadd.f32 %v11600, 1.0
      %v11722 = vadd.f32 %v11602, 1.0
      %v11723 = vadd.f32 %v11604, 1.0
      %v11724 = vadd.f32 %v11606, 1.0
      %v11725 = vadd.f32 %v11608, 1.0
      %v11726 = vadd.f32 %v11610, 1.0
      %v11727 = vadd.f32 %v11612, 1.0
      %v11728 = vadd.f32 %v11614, 1.0
      %v11729 = vadd.f32 %v11616, 1.0
      %v11730 = vadd.f32 %v11618, 1.0
      %v11731 = vadd.f32 %v11620, 1.0
      %v11732 = vadd.f32 %v11622, 1.0
      %v11733 = vadd.f32 %v11624, 1.0
      %v11734 = vadd.f32 %v11626, 1.0
      %v11735 = vadd.f32 %v11628, 1.0
      %v11736 = vadd.f32 %v11630, 1.0
      %v11737 = vadd.f32 %v11632, 1.0
      %v11738 = vadd.f32 %v11634, 1.0
      %v11739 = vadd.f32 %v11636, 1.0
      %v11740 = vadd.f32 %v11638, 1.0
      %v11741 = vadd.f32 %v11640, 1.0
      %v11742 = vadd.f32 %v11642, 1.0
      %v11743 = vadd.f32 %v11644, 1.0
      %v11744 = vadd.f32 %v11646, 1.0
      %v11745 = vadd.f32 %v11648, 1.0
      %v11746 = vadd.f32 %v11650, 1.0
      %v11747 = vadd.f32 %v11652, 1.0
      %v11748 = vadd.f32 %v11654, 1.0
      %v11749 = vadd.f32 %v11656, 1.0
      %v11750 = vadd.f32 %v11658, 1.0
      %v11751 = vadd.f32 %v11660, 1.0
      %v11752 = vadd.f32 %v11662, 1.0
      %v11753 = vadd.f32 %v11664, 1.0
      %v11754 = vadd.f32 %v11666, 1.0
      %v11755 = vadd.f32 %v11668, 1.0
      %v11756 = vadd.f32 %v11670, 1.0
      %v11757 = vadd.f32 %v11672, 1.0
      %v11758 = vadd.f32 %v11674, 1.0
      %v11759 = vadd.f32 %v11676, 1.0
      %v11760 = vadd.f32 %v11678, 1.0
      %v11761 = vadd.f32 %v11680, 1.0
      %v11762 = vadd.f32 %v11682, 1.0
      %v11763 = vadd.f32 %v11684, 1.0
      %v11764 = vadd.f32 %v11686, 1.0
      %v11765 = vadd.f32 %v11688, 1.0
      %v11766 = vadd.f32 %v11690, 1.0
      %v11767 = vadd.f32 %v11692, 1.0
      %v11768 = vadd.f32 %v11694, 1.0
      %v11769 = vadd.f32 %v11696, 1.0
      %v11770 = vadd.f32 %v11698, 1.0
      %v11771 = vadd.f32 %v11700, 1.0
      %v11772 = vadd.f32 %v11702, 1.0
      %v11773 = vadd.f32 %v11704, 1.0
      %v11774 = vadd.f32 %v11706, 1.0
      %v11775 = vadd.f32 %v11708, 1.0
      %v11776 = vadd.f32 %v11710, 1.0
      %v11777 = vadd.f32 %v11712, 1.0
      %v11778 = vadd.f32 %v11714, 1.0
      %v11779 = vrcp.pop %v11715
      %v11780 = vmul.f32 1.0, %v11779
      %v11781 = vrcp.pop %v11716
      %v11782 = vmul.f32 1.0, %v11781
      %v11783 = vrcp.pop %v11717
      %v11784 = vmul.f32 1.0, %v11783
      %v11785 = vrcp.pop %v11718
      %v11786 = vmul.f32 1.0, %v11785
      %v11787 = vrcp.pop %v11719
      %v11788 = vmul.f32 1.0, %v11787
      %v11789 = vrcp.pop %v11720
      %v11790 = vmul.f32 1.0, %v11789
      %v11791 = vrcp.pop %v11721
      %v11792 = vmul.f32 1.0, %v11791
      %v11793 = vrcp.pop %v11722
      %v11794 = vmul.f32 1.0, %v11793
      %v11795 = vrcp.pop %v11723
      %v11796 = vmul.f32 1.0, %v11795
      %v11797 = vrcp.pop %v11724
      %v11798 = vmul.f32 1.0, %v11797
      %v11799 = vrcp.pop %v11725
      %v11800 = vmul.f32 1.0, %v11799
      %v11801 = vrcp.pop %v11726
      %v11802 = vmul.f32 1.0, %v11801
      %v11803 = vrcp.pop %v11727
      %v11804 = vmul.f32 1.0, %v11803
      %v11805 = vrcp.pop %v11728
      %v11806 = vmul.f32 1.0, %v11805
      %v11807 = vrcp.pop %v11729
      %v11808 = vmul.f32 1.0, %v11807
      %v11809 = vrcp.pop %v11730
      %v11810 = vmul.f32 1.0, %v11809
      %v11811 = vrcp.pop %v11731
      %v11812 = vmul.f32 1.0, %v11811
      %v11813 = vrcp.pop %v11732
      %v11814 = vmul.f32 1.0, %v11813
      %v11815 = vrcp.pop %v11733
      %v11816 = vmul.f32 1.0, %v11815
      %v11817 = vrcp.pop %v11734
      %v11818 = vmul.f32 1.0, %v11817
      %v11819 = vrcp.pop %v11735
      %v11820 = vmul.f32 1.0, %v11819
      %v11821 = vrcp.pop %v11736
      %v11822 = vmul.f32 1.0, %v11821
      %v11823 = vrcp.pop %v11737
      %v11824 = vmul.f32 1.0, %v11823
      %v11825 = vrcp.pop %v11738
      %v11826 = vmul.f32 1.0, %v11825
      %v11827 = vrcp.pop %v11739
      %v11828 = vmul.f32 1.0, %v11827
      %v11829 = vrcp.pop %v11740
      %v11830 = vmul.f32 1.0, %v11829
      %v11831 = vrcp.pop %v11741
      %v11832 = vmul.f32 1.0, %v11831
      %v11833 = vrcp.pop %v11742
      %v11834 = vmul.f32 1.0, %v11833
      %v11835 = vrcp.pop %v11743
      %v11836 = vmul.f32 1.0, %v11835
      %v11837 = vrcp.pop %v11744
      %v11838 = vmul.f32 1.0, %v11837
      %v11839 = vrcp.pop %v11745
      %v11840 = vmul.f32 1.0, %v11839
      %v11841 = vrcp.pop %v11746
      %v11842 = vmul.f32 1.0, %v11841
      %v11843 = vrcp.pop %v11747
      %v11844 = vmul.f32 1.0, %v11843
      %v11845 = vrcp.pop %v11748
      %v11846 = vmul.f32 1.0, %v11845
      %v11847 = vrcp.pop %v11749
      %v11848 = vmul.f32 1.0, %v11847
      %v11849 = vrcp.pop %v11750
      %v11850 = vmul.f32 1.0, %v11849
      %v11851 = vrcp.pop %v11751
      %v11852 = vmul.f32 1.0, %v11851
      %v11853 = vrcp.pop %v11752
      %v11854 = vmul.f32 1.0, %v11853
      %v11855 = vrcp.pop %v11753
      %v11856 = vmul.f32 1.0, %v11855
      %v11857 = vrcp.pop %v11754
      %v11858 = vmul.f32 1.0, %v11857
      %v11859 = vrcp.pop %v11755
      %v11860 = vmul.f32 1.0, %v11859
      %v11861 = vrcp.pop %v11756
      %v11862 = vmul.f32 1.0, %v11861
      %v11863 = vrcp.pop %v11757
      %v11864 = vmul.f32 1.0, %v11863
      %v11865 = vrcp.pop %v11758
      %v11866 = vmul.f32 1.0, %v11865
      %v11867 = vrcp.pop %v11759
      %v11868 = vmul.f32 1.0, %v11867
      %v11869 = vrcp.pop %v11760
      %v11870 = vmul.f32 1.0, %v11869
      %v11871 = vrcp.pop %v11761
      %v11872 = vmul.f32 1.0, %v11871
      %v11873 = vrcp.pop %v11762
      %v11874 = vmul.f32 1.0, %v11873
      %v11875 = vrcp.pop %v11763
      %v11876 = vmul.f32 1.0, %v11875
      %v11877 = vrcp.pop %v11764
      %v11878 = vmul.f32 1.0, %v11877
      %v11879 = vrcp.pop %v11765
      %v11880 = vmul.f32 1.0, %v11879
      %v11881 = vrcp.pop %v11766
      %v11882 = vmul.f32 1.0, %v11881
      %v11883 = vrcp.pop %v11767
      %v11884 = vmul.f32 1.0, %v11883
      %v11885 = vrcp.pop %v11768
      %v11886 = vmul.f32 1.0, %v11885
      %v11887 = vrcp.pop %v11769
      %v11888 = vmul.f32 1.0, %v11887
      %v11889 = vrcp.pop %v11770
      %v11890 = vmul.f32 1.0, %v11889
      %v11891 = vrcp.pop %v11771
      %v11892 = vmul.f32 1.0, %v11891
      %v11893 = vrcp.pop %v11772
      %v11894 = vmul.f32 1.0, %v11893
      %v11895 = vrcp.pop %v11773
      %v11896 = vmul.f32 1.0, %v11895
      %v11897 = vrcp.pop %v11774
      %v11898 = vmul.f32 1.0, %v11897
      %v11899 = vrcp.pop %v11775
      %v11900 = vmul.f32 1.0, %v11899
      %v11901 = vrcp.pop %v11776
      %v11902 = vmul.f32 1.0, %v11901
      %v11903 = vrcp.pop %v11777
      %v11904 = vmul.f32 1.0, %v11903
      %v11905 = vrcp.pop %v11778
      %v11906 = vmul.f32 1.0, %v11905
      %11907 = vst [vmem:[%s199 + $0x200] sm:$0xff] %v11780
      %11908 = vst [vmem:[%s199 + $0x208] sm:$0xff] %v11782
      %11909 = vst [vmem:[%s199 + $0x210] sm:$0xff] %v11784
      %11910 = vst [vmem:[%s199 + $0x218] sm:$0xff] %v11786
      %11911 = vst [vmem:[%s199 + $0x220] sm:$0xff] %v11788
      %11912 = vst [vmem:[%s199 + $0x228] sm:$0xff] %v11790
      %11913 = vst [vmem:[%s199 + $0x230] sm:$0xff] %v11792
      %11914 = vst [vmem:[%s199 + $0x238] sm:$0xff] %v11794
      %11915 = vst [vmem:[%s199 + $0x240] sm:$0xff] %v11796
      %11916 = vst [vmem:[%s199 + $0x248] sm:$0xff] %v11798
      %11917 = vst [vmem:[%s199 + $0x250] sm:$0xff] %v11800
      %11918 = vst [vmem:[%s199 + $0x258] sm:$0xff] %v11802
      %11919 = vst [vmem:[%s199 + $0x260] sm:$0xff] %v11804
      %11920 = vst [vmem:[%s199 + $0x268] sm:$0xff] %v11806
      %11921 = vst [vmem:[%s199 + $0x270] sm:$0xff] %v11808
      %11922 = vst [vmem:[%s199 + $0x278] sm:$0xff] %v11810
      %11923 = vst [vmem:[%s199 + $0x280] sm:$0xff] %v11812
      %11924 = vst [vmem:[%s199 + $0x288] sm:$0xff] %v11814
      %11925 = vst [vmem:[%s199 + $0x290] sm:$0xff] %v11816
      %11926 = vst [vmem:[%s199 + $0x298] sm:$0xff] %v11818
      %11927 = vst [vmem:[%s199 + $0x2a0] sm:$0xff] %v11820
      %11928 = vst [vmem:[%s199 + $0x2a8] sm:$0xff] %v11822
      %11929 = vst [vmem:[%s199 + $0x2b0] sm:$0xff] %v11824
      %11930 = vst [vmem:[%s199 + $0x2b8] sm:$0xff] %v11826
      %11931 = vst [vmem:[%s199 + $0x2c0] sm:$0xff] %v11828
      %11932 = vst [vmem:[%s199 + $0x2c8] sm:$0xff] %v11830
      %11933 = vst [vmem:[%s199 + $0x2d0] sm:$0xff] %v11832
      %11934 = vst [vmem:[%s199 + $0x2d8] sm:$0xff] %v11834
      %11935 = vst [vmem:[%s199 + $0x2e0] sm:$0xff] %v11836
      %11936 = vst [vmem:[%s199 + $0x2e8] sm:$0xff] %v11838
      %11937 = vst [vmem:[%s199 + $0x2f0] sm:$0xff] %v11840
      %11938 = vst [vmem:[%s199 + $0x2f8] sm:$0xff] %v11842
      %11939 = vst [vmem:[%s199 + $0x300] sm:$0xff] %v11844
      %11940 = vst [vmem:[%s199 + $0x308] sm:$0xff] %v11846
      %11941 = vst [vmem:[%s199 + $0x310] sm:$0xff] %v11848
      %11942 = vst [vmem:[%s199 + $0x318] sm:$0xff] %v11850
      %11943 = vst [vmem:[%s199 + $0x320] sm:$0xff] %v11852
      %11944 = vst [vmem:[%s199 + $0x328] sm:$0xff] %v11854
      %11945 = vst [vmem:[%s199 + $0x330] sm:$0xff] %v11856
      %11946 = vst [vmem:[%s199 + $0x338] sm:$0xff] %v11858
      %11947 = vst [vmem:[%s199 + $0x340] sm:$0xff] %v11860
      %11948 = vst [vmem:[%s199 + $0x348] sm:$0xff] %v11862
      %11949 = vst [vmem:[%s199 + $0x350] sm:$0xff] %v11864
      %11950 = vst [vmem:[%s199 + $0x358] sm:$0xff] %v11866
      %11951 = vst [vmem:[%s199 + $0x360] sm:$0xff] %v11868
      %11952 = vst [vmem:[%s199 + $0x368] sm:$0xff] %v11870
      %11953 = vst [vmem:[%s199 + $0x370] sm:$0xff] %v11872
      %11954 = vst [vmem:[%s199 + $0x378] sm:$0xff] %v11874
      %11955 = vst [vmem:[%s199 + $0x380] sm:$0xff] %v11876
      %11956 = vst [vmem:[%s199 + $0x388] sm:$0xff] %v11878
      %11957 = vst [vmem:[%s199 + $0x390] sm:$0xff] %v11880
      %11958 = vst [vmem:[%s199 + $0x398] sm:$0xff] %v11882
      %11959 = vst [vmem:[%s199 + $0x3a0] sm:$0xff] %v11884
      %11960 = vst [vmem:[%s199 + $0x3a8] sm:$0xff] %v11886
      %11961 = vst [vmem:[%s199 + $0x3b0] sm:$0xff] %v11888
      %11962 = vst [vmem:[%s199 + $0x3b8] sm:$0xff] %v11890
      %11963 = vst [vmem:[%s199 + $0x3c0] sm:$0xff] %v11892
      %11964 = vst [vmem:[%s199 + $0x3c8] sm:$0xff] %v11894
      %11965 = vst [vmem:[%s199 + $0x3d0] sm:$0xff] %v11896
      %11966 = vst [vmem:[%s199 + $0x3d8] sm:$0xff] %v11898
      %11967 = vst [vmem:[%s199 + $0x3e0] sm:$0xff] %v11900
      %11968 = vst [vmem:[%s199 + $0x3e8] sm:$0xff] %v11902
      %11969 = vst [vmem:[%s199 + $0x3f0] sm:$0xff] %v11904
      %11970 = vst [vmem:[%s199 + $0x3f8] sm:$0xff] %v11906
      %s11971 = smul.u32 128, %s15
      %p11972 = scmp.lt.s32.totalorder %s11971, 255
      %s11973 = scalar_select %p11972, %s11971, 255
      %s11974 = smul.addr %s11973, 8
      %s11975 = scalar_lea.vmem %s4, %s11974
      // Predicated region
      $region37: #{mlp_forward.1} parent=35 // pred_check
        %p11976 = pneg %p122
      $region38: #{mlp_forward.1} parent=35 // pred_check_branch
        %11978 = sbr.rel (%p11976) target = $region40
      $region39: #{mlp_forward.1} parent=35 // pred_region
        %s11979 = smul.u32 128, %s15
      $region40: #{mlp_forward.1} parent=35 // pred_fallthru
        _
    $region36: #{mlp_forward.1} parent=5 // pred_fallthru
      _
    %p11980 = scmp.le.s32.totalorder 2, %s10
    // Predicated region
    $region41: #{mlp_forward.1} parent=5 // pred_check
      %p11981 = pneg %p11980
    $region42: #{mlp_forward.1} parent=5 // pred_check_branch
      %11983 = sbr.rel (%p11981) target = $region44
    $region43: #{mlp_forward.1} parent=5 // pred_region
      %s11984 = ssub.s32 %s10, 2
      // Predicated region
      $region45: #{mlp_forward.1} parent=43 // pred_check
        %p11985 = pneg %p128
      $region46: #{mlp_forward.1} parent=43 // pred_check_branch
        %11987 = sbr.rel (%p11985) target = $region48
      $region47: #{mlp_forward.1} parent=43 // pred_region
        %s11988 = smul.u32 128, %s16
        %p11989 = scmp.lt.s32.totalorder %s11988, 255
        %s11990 = scalar_select %p11989, %s11988, 255
        %s11991 = smul.addr %s11990, 8
        %s11992 = scalar_lea.vmem %s4, %s11991
      $region48: #{mlp_forward.1} parent=43 // pred_fallthru
        _
    $region44: #{mlp_forward.1} parent=5 // pred_fallthru
      _
  $region6: #{mlp_forward.1} parent=0 // loop_footer
    %s14 = sadd.s32 1, %s10
  $region7: #{mlp_forward.1} parent=0 // loop_footer_branch
    %9 = sbr.rel target = $region3
  $region8: #{mlp_forward.1} parent=0 // loop_exit
    _

</llo_original>
